<compile_context>
chip_gen: v7x
topology: tpu7x:2x2x1
jax: 0.10.0
libtpu: 0.0.40
codegen_flags: <defaults>
</compile_context>

<pallas_src>
import jax
import jax.numpy as jnp
from jax.experimental import pallas as pl
from jax.experimental.pallas import tpu as pltpu


def _outconv_kernel(x_ref, w_ref, b_ref, o_ref):
    # x_ref: (Cin, ts)   w_ref: (Cout, Cin)   b_ref: (Cout, 1)   o_ref: (Cout, ts)
    y = jnp.dot(w_ref[...], x_ref[...],
                preferred_element_type=jnp.float32,
                precision=jax.lax.Precision.HIGHEST)     # (Cout, ts), f32
    o_ref[...] = (y + b_ref[...]).astype(o_ref.dtype)


def outconv_1x1x1(x, w, b, *, spatial_tile=None):
    """1x1x1 Conv3d.  x: (B, Cin, D, H, W); w: (Cout, Cin); b: (Cout,)."""
    B, Cin, D, H, W = x.shape
    Cout = w.shape[0]
    S = D * H * W

    x3 = x.reshape(B, Cin, S)                 # contiguous reshape, no data movement
    w2 = w.astype(x.dtype)                    # tiny, resident weight block
    b2 = b.astype(jnp.float32).reshape(Cout, 1)

    if spatial_tile is None:
        # ~8 MiB of (x + out) block per grid step; double-buffered that is
        # ~16-20 MiB, which the explicit vmem_limit_bytes below accommodates on
        # every generation (v5e scoped default is only 16 MiB, v7x physical 64).
        per_lane_bytes = (Cin + Cout) * x.dtype.itemsize
        cap = max(128, ((8 << 20) // max(per_lane_bytes, 1)) // 128 * 128)
        ts = min(pl.cdiv(S, 128) * 128, cap)
    else:
        ts = spatial_tile

    # Guarantee at least 2 grid programs so v7x's second TensorCore isn't idle
    # (e.g. B = 1 inference with a single spatial tile).
    if B * pl.cdiv(S, ts) < 2 and S > 128:
        ts = pl.cdiv(pl.cdiv(S, 2), 128) * 128

    grid = (B, pl.cdiv(S, ts))
    out = pl.pallas_call(
        _outconv_kernel,
        out_shape=jax.ShapeDtypeStruct((B, Cout, S), x.dtype),
        grid=grid,
        in_specs=[
            pl.BlockSpec((None, Cin, ts), lambda bi, si: (bi, 0, si)),
            pl.BlockSpec((Cout, Cin), lambda bi, si: (0, 0)),
            pl.BlockSpec((Cout, 1), lambda bi, si: (0, 0)),
        ],
        out_specs=pl.BlockSpec((None, Cout, ts), lambda bi, si: (bi, 0, si)),
        compiler_params=pltpu.CompilerParams(
            dimension_semantics=("parallel", "parallel"),
            vmem_limit_bytes=40 << 20),
    )(x3, w2, b2)

    return out.reshape(B, Cout, D, H, W)


if __name__ == "__main__":
    key = jax.random.PRNGKey(0)
    k_x, k_w, k_b = jax.random.split(key, 3)

    # OutConv(in_channels=32, out_channels=n_classes=2) at 16^3 resolution,
    # matching the UNet that uses this module.
    B, Cin, Cout, R = 2, 32, 2, 16
    x = jax.random.normal(k_x, (B, Cin, R, R, R), jnp.float32)
    w = 0.05 * jax.random.normal(k_w, (Cout, Cin), jnp.float32)
    b = 0.05 * jax.random.normal(k_b, (Cout,), jnp.float32)

    fwd = jax.jit(outconv_1x1x1)
    out = jax.block_until_ready(fwd(x, w, b))
    assert out.shape == (B, Cout, R, R, R)

    ref = jnp.einsum("oc,bcdhw->bodhw", w, x,
                     precision=jax.lax.Precision.HIGHEST)
    ref = ref + b[None, :, None, None, None]
    assert bool(jnp.all(jnp.isfinite(out)))
    assert bool(jnp.allclose(out, ref, atol=1e-4, rtol=1e-4)), \
        float(jnp.max(jnp.abs(out - ref)))
    print("KERNEL_OK")
</pallas_src>

<mosaic_0001>
module attributes {stable_mosaic.version = 11 : i64} {
  func.func @_outconv_kernel(%arg0: i32, %arg1: i32, %arg2: memref<1x32x4096xf32, #tpu.memory_space<vmem>>, %arg3: memref<2x32xf32, #tpu.memory_space<vmem>>, %arg4: memref<2x1xf32, #tpu.memory_space<vmem>>, %arg5: memref<1x2x4096xf32, #tpu.memory_space<vmem>>) attributes {dimension_semantics = [#tpu.dimension_semantics<parallel>, #tpu.dimension_semantics<parallel>], iteration_bounds = array<i64: 2, 1>, scalar_prefetch = 0 : i64, scratch_operands = 0 : i64, tpu.core_type = #tpu.core_type<tc>, window_params = [{transform_indices = @transform_0, window_bounds = array<i64: 1, 32, 4096>}, {pipeline_mode = #tpu.pipeline_mode<synchronous>, transform_indices = @transform_1, window_bounds = array<i64: 2, 32>}, {pipeline_mode = #tpu.pipeline_mode<synchronous>, transform_indices = @transform_2, window_bounds = array<i64: 2, 1>}, {transform_indices = @transform_3, window_bounds = array<i64: 1, 2, 4096>}]} {
    %c0 = arith.constant 0 : index
    %c0_0 = arith.constant 0 : index
    %0 = vector.load %arg3[%c0, %c0_0] : memref<2x32xf32, #tpu.memory_space<vmem>>, vector<2x32xf32>
    %c0_1 = arith.constant 0 : index
    %c0_2 = arith.constant 0 : index
    %c0_3 = arith.constant 0 : index
    %1 = vector.load %arg2[%c0_1, %c0_2, %c0_3] : memref<1x32x4096xf32, #tpu.memory_space<vmem>>, vector<1x32x4096xf32>
    %2 = vector.shape_cast %1 : vector<1x32x4096xf32> to vector<32x4096xf32>
    %cst = arith.constant dense<0.000000e+00> : vector<2x4096xf32>
    %3 = tpu.matmul %0, %2, %cst {dimension_numbers = #tpu.dot_dimension_numbers<[1], [0], [0], [1], [0, 0, 1, 1], [], []>, precision = #tpu.contract_precision<fp32>} : vector<2x32xf32>, vector<32x4096xf32>, vector<2x4096xf32> -> vector<2x4096xf32>
    %c0_4 = arith.constant 0 : index
    %c0_5 = arith.constant 0 : index
    %4 = vector.load %arg4[%c0_4, %c0_5] : memref<2x1xf32, #tpu.memory_space<vmem>>, vector<2x1xf32>
    %5 = vector.broadcast %4 : vector<2x1xf32> to vector<2x4096xf32>
    %6 = arith.addf %3, %5 : vector<2x4096xf32>
    %c0_6 = arith.constant 0 : index
    %c0_7 = arith.constant 0 : index
    %c0_8 = arith.constant 0 : index
    %7 = vector.load %arg5[%c0_6, %c0_7, %c0_8] : memref<1x2x4096xf32, #tpu.memory_space<vmem>>, vector<1x2x4096xf32>
    %8 = vector.shape_cast %7 : vector<1x2x4096xf32> to vector<2x4096xf32>
    %9 = vector.shape_cast %6 : vector<2x4096xf32> to vector<1x2x4096xf32>
    tpu.vector_store %arg5[%c0_6, %c0_7, %c0_8], %9 {strides = array<i32>} : memref<1x2x4096xf32, #tpu.memory_space<vmem>>, vector<1x2x4096xf32>,
    return
  }
  func.func @transform_0(%arg0: i32, %arg1: i32) -> (i32, i32, i32) {
    %c0_i32 = arith.constant 0 : i32
    %c0_i32_0 = arith.constant 0 : i32
    return %arg0, %c0_i32, %arg1 : i32, i32, i32
  }
  func.func @transform_1(%arg0: i32, %arg1: i32) -> (i32, i32) {
    %c0_i32 = arith.constant 0 : i32
    %c0_i32_0 = arith.constant 0 : i32
    %c0_i32_1 = arith.constant 0 : i32
    return %c0_i32, %c0_i32_0 : i32, i32
  }
  func.func @transform_2(%arg0: i32, %arg1: i32) -> (i32, i32) {
    %c0_i32 = arith.constant 0 : i32
    %c0_i32_0 = arith.constant 0 : i32
    %c0_i32_1 = arith.constant 0 : i32
    return %c0_i32, %c0_i32_0 : i32, i32
  }
  func.func @transform_3(%arg0: i32, %arg1: i32) -> (i32, i32, i32) {
    %c0_i32 = arith.constant 0 : i32
    %c0_i32_0 = arith.constant 0 : i32
    return %arg0, %c0_i32, %arg1 : i32, i32, i32
  }
}

</mosaic_0001>

<llo_original>
// kernel: outconv_1x1x1.1
$region0: #{outconv_1x1x1.1}
  #allocation0 [shape = 'u32[]', space=smem, size = 0x4, offset = 0x4, fixed_abs, tag = 'smem constant byte address 0x4 - core index']
  #allocation1 [shape = 'u32[144,128]{1,0:T(1,128)}', space=vmem, size = 0x12000, scoped, tag = 'internal scratch']
  %s0 = inlined_call_operand.vmem [shape: f32[2,32,4096], index: 0, kind: input, shape index: {}]
  %s1 = inlined_call_operand.vmem [shape: f32[2,32], index: 1, kind: input, shape index: {}]
  %s2 = inlined_call_operand.vmem [shape: f32[2,1], index: 2, kind: input, shape index: {}]
  %s3 = inlined_call_operand.vmem [shape: f32[2,2,4096], index: 3, kind: output, shape index: {}]
  %s4 = sld [smem:[#allocation0]]
  $region45: #{outconv_1x1x1.1} parent=0
    _
  %s6 = ssub.s32 1, %s4
  %s7 = scalar_select 0, %s6, %s4
  loop: start=0, step=1, limit=4
  $region2: #{outconv_1x1x1.1} parent=0 // loop_pre_header
    _
  $region3: #{outconv_1x1x1.1} parent=0 // loop_header
    %s9 = sphi 0, %s13
    %p10 = scmp.ge.s32.totalorder %s9, 4
    %s16 = sphi 0, %s28
    %s17 = sphi 0, %s24
    %s18 = sphi 0, %s16
    %s19 = sphi 0, %s17
    %s20 = sphi 0, %s18
    %s21 = sphi 0, %s19
    %s33 = sphi 0, %s35
    %s36 = sphi 0, %s33
    %s37 = sphi 0, %s36
    %s53 = sphi 0, %s37
    %s57 = sphi 0, %s57
    %s59 = sphi 0, %s57
    %s60 = sphi 0, %s59
    %s74 = sphi 0, %s60
    %s78 = sphi 0, %s78
    %s80 = sphi 0, %s78
    %s81 = sphi 0, %s80
    %s95 = sphi 0, %s81
    %s103 = sphi 0, %s105
    %s106 = sphi 0, %s103
    %s107 = sphi 0, %s106
    %s123 = sphi 0, %s107
  $region4: #{outconv_1x1x1.1} parent=0 // loop_header_branch
    %12 = sbr.rel (%p10) target = $region8
  $region5: #{outconv_1x1x1.1} parent=0 // loop_body
    %s14 = ssub.s32 %s9, 1
    %s15 = ssub.s32 %s9, 2
    %s22 = sadd.s32 1, %s17
    %p23 = scmp.ge.s32.totalorder %s22, 1
    %s24 = scalar_select %p23, 0, %s22
    %s25 = sadd.s32 1, %s16
    %s26 = scalar_select %p23, %s25, %s16
    %p27 = scmp.ge.s32.totalorder %s26, 2
    %s28 = scalar_select %p27, 0, %s26
    %s29 = ssub.s32 %s16, %s28
    %s30 = ssub.s32 %s17, %s24
    %s31 = sor.u32 %s29, %s30
    %p32 = scmp.eq.s32.totalorder %s31, 0
    %s34 = sadd.s32 %s33, 1
    %s35 = scalar_select %p32, %s33, %s34
    %p38 = pneg %p32
    %p39 = scmp.eq.s32.totalorder %s9, 1
    %p40 = por %p38, %p39
    %p41 = scmp.ne.s32.totalorder %s33, %s36
    %p42 = scmp.eq.s32.totalorder %s9, 0
    %p43 = por %p41, %p42
    %p44 = scmp.ne.s32.totalorder %s33, %s36
    %p45 = scmp.eq.s32.totalorder %s14, 1
    %p46 = por %p44, %p45
    %p47 = scmp.ne.s32.totalorder %s36, %s37
    %p48 = scmp.eq.s32.totalorder %s14, 0
    %p49 = por %p47, %p48
    %p50 = scmp.ne.s32.totalorder %s36, %s37
    %p51 = scmp.eq.s32.totalorder %s15, 1
    %p52 = por %p50, %p51
    %p54 = scmp.ne.s32.totalorder %s37, %s53
    %p55 = scmp.eq.s32.totalorder %s15, 0
    %p56 = por %p54, %p55
    %s58 = sadd.s32 %s57, 1
    %p61 = scmp.eq.s32.totalorder %s9, 1
    %p62 = scmp.ne.s32.totalorder %s57, %s59
    %p63 = scmp.eq.s32.totalorder %s9, 0
    %p64 = por %p62, %p63
    %p65 = scmp.ne.s32.totalorder %s57, %s59
    %p66 = scmp.eq.s32.totalorder %s14, 1
    %p67 = por %p65, %p66
    %p68 = scmp.ne.s32.totalorder %s59, %s60
    %p69 = scmp.eq.s32.totalorder %s14, 0
    %p70 = por %p68, %p69
    %p71 = scmp.ne.s32.totalorder %s59, %s60
    %p72 = scmp.eq.s32.totalorder %s15, 1
    %p73 = por %p71, %p72
    %p75 = scmp.ne.s32.totalorder %s60, %s74
    %p76 = scmp.eq.s32.totalorder %s15, 0
    %p77 = por %p75, %p76
    %s79 = sadd.s32 %s78, 1
    %p82 = scmp.eq.s32.totalorder %s9, 1
    %p83 = scmp.ne.s32.totalorder %s78, %s80
    %p84 = scmp.eq.s32.totalorder %s9, 0
    %p85 = por %p83, %p84
    %p86 = scmp.ne.s32.totalorder %s78, %s80
    %p87 = scmp.eq.s32.totalorder %s14, 1
    %p88 = por %p86, %p87
    %p89 = scmp.ne.s32.totalorder %s80, %s81
    %p90 = scmp.eq.s32.totalorder %s14, 0
    %p91 = por %p89, %p90
    %p92 = scmp.ne.s32.totalorder %s80, %s81
    %p93 = scmp.eq.s32.totalorder %s15, 1
    %p94 = por %p92, %p93
    %p96 = scmp.ne.s32.totalorder %s81, %s95
    %p97 = scmp.eq.s32.totalorder %s15, 0
    %p98 = por %p96, %p97
    %s99 = ssub.s32 %s16, %s28
    %s100 = ssub.s32 %s17, %s24
    %s101 = sor.u32 %s99, %s100
    %p102 = scmp.eq.s32.totalorder %s101, 0
    %s104 = sadd.s32 %s103, 1
    %s105 = scalar_select %p102, %s103, %s104
    %p108 = pneg %p102
    %p109 = scmp.eq.s32.totalorder %s9, 1
    %p110 = por %p108, %p109
    %p111 = scmp.ne.s32.totalorder %s103, %s106
    %p112 = scmp.eq.s32.totalorder %s9, 0
    %p113 = por %p111, %p112
    %p114 = scmp.ne.s32.totalorder %s103, %s106
    %p115 = scmp.eq.s32.totalorder %s14, 1
    %p116 = por %p114, %p115
    %p117 = scmp.ne.s32.totalorder %s106, %s107
    %p118 = scmp.eq.s32.totalorder %s14, 0
    %p119 = por %p117, %p118
    %p120 = scmp.ne.s32.totalorder %s106, %s107
    %p121 = scmp.eq.s32.totalorder %s15, 1
    %p122 = por %p120, %p121
    %p124 = scmp.ne.s32.totalorder %s107, %s123
    %p125 = scmp.eq.s32.totalorder %s15, 0
    %p126 = por %p124, %p125
    %p127 = scmp.le.s32.totalorder 1, %s9
    %p128 = scmp.lt.s32.totalorder %s9, 3
    %p129 = pnand %p127, %p128
    %p130 = pneg %p129
    // Predicated region
    $region9: #{outconv_1x1x1.1} parent=5 // pred_check
      _
    $region10: #{outconv_1x1x1.1} parent=5 // pred_check_branch
      %132 = sbr.rel (%p129) target = $region12
    $region11: #{outconv_1x1x1.1} parent=5 // pred_region
      %s133 = ssub.s32 %s9, 1
      // Predicated region
      $region13: #{outconv_1x1x1.1} parent=11 // pred_check
        %p134 = pneg %p70
      $region14: #{outconv_1x1x1.1} parent=11 // pred_check_branch
        %136 = sbr.rel (%p134) target = $region16
      $region15: #{outconv_1x1x1.1} parent=11 // pred_region
        _
      $region16: #{outconv_1x1x1.1} parent=11 // pred_fallthru
        _
      // Predicated region
      $region17: #{outconv_1x1x1.1} parent=11 // pred_check
        %p137 = pneg %p91
      $region18: #{outconv_1x1x1.1} parent=11 // pred_check_branch
        %139 = sbr.rel (%p137) target = $region20
      $region19: #{outconv_1x1x1.1} parent=11 // pred_region
        _
      $region20: #{outconv_1x1x1.1} parent=11 // pred_fallthru
        _
    $region12: #{outconv_1x1x1.1} parent=5 // pred_fallthru
      _
    %p140 = scmp.lt.s32.totalorder %s9, 2
    // Predicated region
    $region21: #{outconv_1x1x1.1} parent=5 // pred_check
      %p141 = pneg %p140
    $region22: #{outconv_1x1x1.1} parent=5 // pred_check_branch
      %143 = sbr.rel (%p141) target = $region24
    $region23: #{outconv_1x1x1.1} parent=5 // pred_region
      // Predicated region
      $region25: #{outconv_1x1x1.1} parent=23 // pred_check
        %p144 = pneg %p43
      $region26: #{outconv_1x1x1.1} parent=23 // pred_check_branch
        %146 = sbr.rel (%p144) target = $region28
      $region27: #{outconv_1x1x1.1} parent=23 // pred_region
        %s147 = smul.u32 32, %s17
        %p148 = scmp.lt.s32.totalorder %s16, 1
        %s149 = scalar_select %p148, %s16, 1
        %p150 = scmp.lt.s32.totalorder %s147, 31
        %s151 = scalar_select %p150, %s147, 31
        %s152 = smul.addr %s149, 128
        %s153 = sadd.s32 %s151, %s152
        %s154 = smul.addr %s153, 8
        %s155 = scalar_lea.vmem %s0, %s154
        %s156 = smul.u32 32, %s17
      $region28: #{outconv_1x1x1.1} parent=23 // pred_fallthru
        _
    $region24: #{outconv_1x1x1.1} parent=5 // pred_fallthru
      _
    %p157 = scmp.le.s32.totalorder 1, %s9
    %p158 = scmp.lt.s32.totalorder %s9, 3
    %p159 = pnand %p157, %p158
    %p160 = pneg %p159
    // Predicated region
    $region29: #{outconv_1x1x1.1} parent=5 // pred_check
      _
    $region30: #{outconv_1x1x1.1} parent=5 // pred_check_branch
      %162 = sbr.rel (%p159) target = $region32
    $region31: #{outconv_1x1x1.1} parent=5 // pred_region
      %s163 = ssub.s32 %s9, 1
      %s164 = smul.u32 32, %s19
      %p165 = scmp.lt.s32.totalorder %s18, 1
      %s166 = scalar_select %p165, %s18, 1
      %p167 = scmp.lt.s32.totalorder %s164, 31
      %s168 = scalar_select %p167, %s164, 31
      %s169 = smul.addr %s166, 128
      %s170 = sadd.s32 %s168, %s169
      %s171 = smul.addr %s170, 8
      %s172 = scalar_lea.vmem %s0, %s171
      %p173 = pneg %p49
      %p174 = pneg %p46
      %p175 = pneg %p70
      %p176 = pneg %p67
      %p177 = pneg %p91
      %p178 = pneg %p88
      %p179 = pneg %p119
      %p180 = pneg %p116
      %s181 = smul.u32 32, %s19
      %p182 = scmp.lt.s32.totalorder %s18, 1
      %s183 = scalar_select %p182, %s18, 1
      %p184 = scmp.lt.s32.totalorder %s181, 31
      %s185 = scalar_select %p184, %s181, 31
      %s186 = smul.addr %s183, 32
      %s187 = sadd.s32 %s185, %s186
      %s188 = smul.addr %s187, 2
      %s189 = scalar_lea.vmem %s3, %s188
      %s190 = smul.u32 32, %s19
      %p191 = scmp.lt.s32.totalorder %s18, 1
      %s192 = scalar_select %p191, %s18, 1
      %p193 = scmp.lt.s32.totalorder %s190, 31
      %s194 = scalar_select %p193, %s190, 31
      %s195 = smul.addr %s192, 128
      %s196 = sadd.s32 %s194, %s195
      %s197 = smul.addr %s196, 8
      %s198 = scalar_lea.vmem %s0, %s197
      %s199 = smul.u32 32, %s19
      %s200 = smul.u32 32, %s19
      %p201 = scmp.lt.s32.totalorder %s18, 1
      %s202 = scalar_select %p201, %s18, 1
      %p203 = scmp.lt.s32.totalorder %s200, 31
      %s204 = scalar_select %p203, %s200, 31
      %s205 = smul.addr %s202, 32
      %s206 = sadd.s32 %s204, %s205
      %s207 = smul.addr %s206, 2
      %s208 = scalar_lea.vmem %s3, %s207
      %s209 = smul.u32 32, %s19
      %v210 = vld [vmem:[%s1] sm:$0x3]
      %v211 = vld [vmem:[%s198] sm:$0xff]
      %v212 = vld [vmem:[%s198 + $0x8] sm:$0xff]
      %v213 = vld [vmem:[%s198 + $0x10] sm:$0xff]
      %v214 = vld [vmem:[%s198 + $0x18] sm:$0xff]
      %v215 = vld [vmem:[%s198 + $0x20] sm:$0xff]
      %v216 = vld [vmem:[%s198 + $0x28] sm:$0xff]
      %v217 = vld [vmem:[%s198 + $0x30] sm:$0xff]
      %v218 = vld [vmem:[%s198 + $0x38] sm:$0xff]
      %v219 = vld [vmem:[%s198 + $0x40] sm:$0xff]
      %v220 = vld [vmem:[%s198 + $0x48] sm:$0xff]
      %v221 = vld [vmem:[%s198 + $0x50] sm:$0xff]
      %v222 = vld [vmem:[%s198 + $0x58] sm:$0xff]
      %v223 = vld [vmem:[%s198 + $0x60] sm:$0xff]
      %v224 = vld [vmem:[%s198 + $0x68] sm:$0xff]
      %v225 = vld [vmem:[%s198 + $0x70] sm:$0xff]
      %v226 = vld [vmem:[%s198 + $0x78] sm:$0xff]
      %v227 = vld [vmem:[%s198 + $0x80] sm:$0xff]
      %v228 = vld [vmem:[%s198 + $0x88] sm:$0xff]
      %v229 = vld [vmem:[%s198 + $0x90] sm:$0xff]
      %v230 = vld [vmem:[%s198 + $0x98] sm:$0xff]
      %v231 = vld [vmem:[%s198 + $0xa0] sm:$0xff]
      %v232 = vld [vmem:[%s198 + $0xa8] sm:$0xff]
      %v233 = vld [vmem:[%s198 + $0xb0] sm:$0xff]
      %v234 = vld [vmem:[%s198 + $0xb8] sm:$0xff]
      %v235 = vld [vmem:[%s198 + $0xc0] sm:$0xff]
      %v236 = vld [vmem:[%s198 + $0xc8] sm:$0xff]
      %v237 = vld [vmem:[%s198 + $0xd0] sm:$0xff]
      %v238 = vld [vmem:[%s198 + $0xd8] sm:$0xff]
      %v239 = vld [vmem:[%s198 + $0xe0] sm:$0xff]
      %v240 = vld [vmem:[%s198 + $0xe8] sm:$0xff]
      %v241 = vld [vmem:[%s198 + $0xf0] sm:$0xff]
      %v242 = vld [vmem:[%s198 + $0xf8] sm:$0xff]
      %v243 = vld [vmem:[%s198 + $0x100] sm:$0xff]
      %v244 = vld [vmem:[%s198 + $0x108] sm:$0xff]
      %v245 = vld [vmem:[%s198 + $0x110] sm:$0xff]
      %v246 = vld [vmem:[%s198 + $0x118] sm:$0xff]
      %v247 = vld [vmem:[%s198 + $0x120] sm:$0xff]
      %v248 = vld [vmem:[%s198 + $0x128] sm:$0xff]
      %v249 = vld [vmem:[%s198 + $0x130] sm:$0xff]
      %v250 = vld [vmem:[%s198 + $0x138] sm:$0xff]
      %v251 = vld [vmem:[%s198 + $0x140] sm:$0xff]
      %v252 = vld [vmem:[%s198 + $0x148] sm:$0xff]
      %v253 = vld [vmem:[%s198 + $0x150] sm:$0xff]
      %v254 = vld [vmem:[%s198 + $0x158] sm:$0xff]
      %v255 = vld [vmem:[%s198 + $0x160] sm:$0xff]
      %v256 = vld [vmem:[%s198 + $0x168] sm:$0xff]
      %v257 = vld [vmem:[%s198 + $0x170] sm:$0xff]
      %v258 = vld [vmem:[%s198 + $0x178] sm:$0xff]
      %v259 = vld [vmem:[%s198 + $0x180] sm:$0xff]
      %v260 = vld [vmem:[%s198 + $0x188] sm:$0xff]
      %v261 = vld [vmem:[%s198 + $0x190] sm:$0xff]
      %v262 = vld [vmem:[%s198 + $0x198] sm:$0xff]
      %v263 = vld [vmem:[%s198 + $0x1a0] sm:$0xff]
      %v264 = vld [vmem:[%s198 + $0x1a8] sm:$0xff]
      %v265 = vld [vmem:[%s198 + $0x1b0] sm:$0xff]
      %v266 = vld [vmem:[%s198 + $0x1b8] sm:$0xff]
      %v267 = vld [vmem:[%s198 + $0x1c0] sm:$0xff]
      %v268 = vld [vmem:[%s198 + $0x1c8] sm:$0xff]
      %v269 = vld [vmem:[%s198 + $0x1d0] sm:$0xff]
      %v270 = vld [vmem:[%s198 + $0x1d8] sm:$0xff]
      %v271 = vld [vmem:[%s198 + $0x1e0] sm:$0xff]
      %v272 = vld [vmem:[%s198 + $0x1e8] sm:$0xff]
      %v273 = vld [vmem:[%s198 + $0x1f0] sm:$0xff]
      %v274 = vld [vmem:[%s198 + $0x1f8] sm:$0xff]
      %v275 = vld [vmem:[%s198 + $0x200] sm:$0xff]
      %v276 = vld [vmem:[%s198 + $0x208] sm:$0xff]
      %v277 = vld [vmem:[%s198 + $0x210] sm:$0xff]
      %v278 = vld [vmem:[%s198 + $0x218] sm:$0xff]
      %v279 = vld [vmem:[%s198 + $0x220] sm:$0xff]
      %v280 = vld [vmem:[%s198 + $0x228] sm:$0xff]
      %v281 = vld [vmem:[%s198 + $0x230] sm:$0xff]
      %v282 = vld [vmem:[%s198 + $0x238] sm:$0xff]
      %v283 = vld [vmem:[%s198 + $0x240] sm:$0xff]
      %v284 = vld [vmem:[%s198 + $0x248] sm:$0xff]
      %v285 = vld [vmem:[%s198 + $0x250] sm:$0xff]
      %v286 = vld [vmem:[%s198 + $0x258] sm:$0xff]
      %v287 = vld [vmem:[%s198 + $0x260] sm:$0xff]
      %v288 = vld [vmem:[%s198 + $0x268] sm:$0xff]
      %v289 = vld [vmem:[%s198 + $0x270] sm:$0xff]
      %v290 = vld [vmem:[%s198 + $0x278] sm:$0xff]
      %v291 = vld [vmem:[%s198 + $0x280] sm:$0xff]
      %v292 = vld [vmem:[%s198 + $0x288] sm:$0xff]
      %v293 = vld [vmem:[%s198 + $0x290] sm:$0xff]
      %v294 = vld [vmem:[%s198 + $0x298] sm:$0xff]
      %v295 = vld [vmem:[%s198 + $0x2a0] sm:$0xff]
      %v296 = vld [vmem:[%s198 + $0x2a8] sm:$0xff]
      %v297 = vld [vmem:[%s198 + $0x2b0] sm:$0xff]
      %v298 = vld [vmem:[%s198 + $0x2b8] sm:$0xff]
      %v299 = vld [vmem:[%s198 + $0x2c0] sm:$0xff]
      %v300 = vld [vmem:[%s198 + $0x2c8] sm:$0xff]
      %v301 = vld [vmem:[%s198 + $0x2d0] sm:$0xff]
      %v302 = vld [vmem:[%s198 + $0x2d8] sm:$0xff]
      %v303 = vld [vmem:[%s198 + $0x2e0] sm:$0xff]
      %v304 = vld [vmem:[%s198 + $0x2e8] sm:$0xff]
      %v305 = vld [vmem:[%s198 + $0x2f0] sm:$0xff]
      %v306 = vld [vmem:[%s198 + $0x2f8] sm:$0xff]
      %v307 = vld [vmem:[%s198 + $0x300] sm:$0xff]
      %v308 = vld [vmem:[%s198 + $0x308] sm:$0xff]
      %v309 = vld [vmem:[%s198 + $0x310] sm:$0xff]
      %v310 = vld [vmem:[%s198 + $0x318] sm:$0xff]
      %v311 = vld [vmem:[%s198 + $0x320] sm:$0xff]
      %v312 = vld [vmem:[%s198 + $0x328] sm:$0xff]
      %v313 = vld [vmem:[%s198 + $0x330] sm:$0xff]
      %v314 = vld [vmem:[%s198 + $0x338] sm:$0xff]
      %v315 = vld [vmem:[%s198 + $0x340] sm:$0xff]
      %v316 = vld [vmem:[%s198 + $0x348] sm:$0xff]
      %v317 = vld [vmem:[%s198 + $0x350] sm:$0xff]
      %v318 = vld [vmem:[%s198 + $0x358] sm:$0xff]
      %v319 = vld [vmem:[%s198 + $0x360] sm:$0xff]
      %v320 = vld [vmem:[%s198 + $0x368] sm:$0xff]
      %v321 = vld [vmem:[%s198 + $0x370] sm:$0xff]
      %v322 = vld [vmem:[%s198 + $0x378] sm:$0xff]
      %v323 = vld [vmem:[%s198 + $0x380] sm:$0xff]
      %v324 = vld [vmem:[%s198 + $0x388] sm:$0xff]
      %v325 = vld [vmem:[%s198 + $0x390] sm:$0xff]
      %v326 = vld [vmem:[%s198 + $0x398] sm:$0xff]
      %v327 = vld [vmem:[%s198 + $0x3a0] sm:$0xff]
      %v328 = vld [vmem:[%s198 + $0x3a8] sm:$0xff]
      %v329 = vld [vmem:[%s198 + $0x3b0] sm:$0xff]
      %v330 = vld [vmem:[%s198 + $0x3b8] sm:$0xff]
      %v331 = vld [vmem:[%s198 + $0x3c0] sm:$0xff]
      %v332 = vld [vmem:[%s198 + $0x3c8] sm:$0xff]
      %v333 = vld [vmem:[%s198 + $0x3d0] sm:$0xff]
      %v334 = vld [vmem:[%s198 + $0x3d8] sm:$0xff]
      %v335 = vld [vmem:[%s198 + $0x3e0] sm:$0xff]
      %v336 = vld [vmem:[%s198 + $0x3e8] sm:$0xff]
      %v337 = vld [vmem:[%s198 + $0x3f0] sm:$0xff]
      %v338 = vld [vmem:[%s198 + $0x3f8] sm:$0xff]
      %v339 = vld [vmem:[%s2] sm:$0x3]
      %341 = vset.pattern.permute.xlu0 0
      %342 = vperm.xlu0 %341, %v339
      %v343 = vpop.permute.xlu0 %342
      %vm345 = vcmask 261120
      %v347 = vsel %vm345, %v210, 0
      %v349 = vand.u32 %v212, 4294901760
      %350 = vmatprep.subr.mxu0 %v349
      %v351 = vand.u32 %v211, 4294901760
      %352 = vmatpush1.msra.mxu0 %v351
      %v353 = vand.u32 %v244, 4294901760
      %354 = vmatprep.subr.mxu0 %v353
      %v355 = vand.u32 %v243, 4294901760
      %356 = vmatpush1.msra.mxu0 %v355
      %v357 = vand.u32 %v276, 4294901760
      %358 = vmatprep.subr.mxu0 %v357
      %v359 = vand.u32 %v275, 4294901760
      %360 = vmatpush1.msra.mxu0 %v359
      %v361 = vand.u32 %v308, 4294901760
      %362 = vmatprep.subr.mxu0 %v361
      %v363 = vand.u32 %v307, 4294901760
      %364 = vmatpush1.msra.mxu0 %v363
      %365 = vmatprep.subr.mxu0 0.0
      %366 = vmatpush1.msra.mxu0 0.0
      %367 = vmatprep.subr.mxu0 0.0
      %368 = vmatpush1.msra.mxu0 0.0
      %369 = vmatprep.subr.mxu0 0.0
      %370 = vmatpush1.msra.mxu0 0.0
      %371 = vmatprep.subr.mxu0 0.0
      %372 = vmatpush1.msra.mxu0 0.0
      %373 = vmatprep.subr.mxu0 0.0
      %374 = vmatpush1.msra.mxu0 0.0
      %375 = vmatprep.subr.mxu0 0.0
      %376 = vmatpush1.msra.mxu0 0.0
      %377 = vmatprep.subr.mxu0 0.0
      %378 = vmatpush1.msra.mxu0 0.0
      %379 = vmatprep.subr.mxu0 0.0
      %380 = vmatpush1.msra.mxu0 0.0
      %381 = vmatprep.subr.mxu0 0.0
      %382 = vmatpush1.msra.mxu0 0.0
      %383 = vmatprep.subr.mxu0 0.0
      %384 = vmatpush1.msra.mxu0 0.0
      %385 = vmatprep.subr.mxu0 0.0
      %386 = vmatpush1.msra.mxu0 0.0
      %387 = vmatprep.subr.mxu0 0.0
      %388 = vmatpush1.msra.mxu0 0.0
      %389 = vmatprep.subr.mxu0 0.0
      %390 = vmatpush1.msra.mxu0 0.0
      %391 = vmatprep.subr.mxu0 0.0
      %392 = vmatpush1.msra.mxu0 0.0
      %393 = vmatprep.subr.mxu0 0.0
      %394 = vmatpush1.msra.mxu0 0.0
      %395 = vmatprep.subr.mxu0 0.0
      %396 = vmatpush1.msra.mxu0 0.0
      %397 = vmatprep.subr.mxu0 0.0
      %398 = vmatpush1.msra.mxu0 0.0
      %399 = vmatprep.subr.mxu0 0.0
      %400 = vmatpush1.msra.mxu0 0.0
      %401 = vmatprep.subr.mxu0 0.0
      %402 = vmatpush1.msra.mxu0 0.0
      %403 = vmatprep.subr.mxu0 0.0
      %404 = vmatpush1.msra.mxu0 0.0
      %405 = vmatprep.subr.mxu0 0.0
      %406 = vmatpush1.msra.mxu0 0.0
      %407 = vmatprep.subr.mxu0 0.0
      %408 = vmatpush1.msra.mxu0 0.0
      %409 = vmatprep.subr.mxu0 0.0
      %410 = vmatpush1.msra.mxu0 0.0
      %411 = vmatprep.subr.mxu0 0.0
      %412 = vmatpush1.msra.mxu0 0.0
      %413 = vmatprep.subr.mxu0 0.0
      %414 = vmatpush1.msra.mxu0 0.0
      %415 = vmatprep.subr.mxu0 0.0
      %416 = vmatpush1.msra.mxu0 0.0
      %417 = vmatprep.subr.mxu0 0.0
      %418 = vmatpush1.msra.mxu0 0.0
      %419 = vmatprep.subr.mxu0 0.0
      %420 = vmatpush1.msra.mxu0 0.0
      %421 = vmatprep.mubr.f32.mxu0 0.0
      %v422 = vand.u32 %v347, 4294901760
      %v423 = vsub.f32 %v347, %v422
      %v424 = vand.u32 %v423, 4294901760
      %v425 = vsub.f32 %v423, %v424
      %v426 = vand.u32 %v425, 4294901760
      %427 = vmatmul.mubr.f32.gmra.mrb[0].mxu0 %v426
      %v428 = vpop.f32.mrb[0].mxu0
      %v429 = vadd.f32 %v343, %v428
      %v430 = vpop.f32.mrb[0].mxu0
      %v431 = vadd.f32 %v343, %v430
      %432 = vdwg.mxu0
      %v433 = vand.u32 %v212, 4294901760
      %v434 = vsub.f32 %v212, %v433
      %v435 = vand.u32 %v434, 4294901760
      %v436 = vsub.f32 %v434, %v435
      %v437 = vand.u32 %v436, 4294901760
      %438 = vmatprep.subr.mxu0 %v437
      %v439 = vand.u32 %v211, 4294901760
      %v440 = vsub.f32 %v211, %v439
      %v441 = vand.u32 %v440, 4294901760
      %v442 = vsub.f32 %v440, %v441
      %v443 = vand.u32 %v442, 4294901760
      %444 = vmatpush1.msra.mxu0 %v443
      %v445 = vand.u32 %v244, 4294901760
      %v446 = vsub.f32 %v244, %v445
      %v447 = vand.u32 %v446, 4294901760
      %v448 = vsub.f32 %v446, %v447
      %v449 = vand.u32 %v448, 4294901760
      %450 = vmatprep.subr.mxu0 %v449
      %v451 = vand.u32 %v243, 4294901760
      %v452 = vsub.f32 %v243, %v451
      %v453 = vand.u32 %v452, 4294901760
      %v454 = vsub.f32 %v452, %v453
      %v455 = vand.u32 %v454, 4294901760
      %456 = vmatpush1.msra.mxu0 %v455
      %v457 = vand.u32 %v276, 4294901760
      %v458 = vsub.f32 %v276, %v457
      %v459 = vand.u32 %v458, 4294901760
      %v460 = vsub.f32 %v458, %v459
      %v461 = vand.u32 %v460, 4294901760
      %462 = vmatprep.subr.mxu0 %v461
      %v463 = vand.u32 %v275, 4294901760
      %v464 = vsub.f32 %v275, %v463
      %v465 = vand.u32 %v464, 4294901760
      %v466 = vsub.f32 %v464, %v465
      %v467 = vand.u32 %v466, 4294901760
      %468 = vmatpush1.msra.mxu0 %v467
      %v469 = vand.u32 %v308, 4294901760
      %v470 = vsub.f32 %v308, %v469
      %v471 = vand.u32 %v470, 4294901760
      %v472 = vsub.f32 %v470, %v471
      %v473 = vand.u32 %v472, 4294901760
      %474 = vmatprep.subr.mxu0 %v473
      %v475 = vand.u32 %v307, 4294901760
      %v476 = vsub.f32 %v307, %v475
      %v477 = vand.u32 %v476, 4294901760
      %v478 = vsub.f32 %v476, %v477
      %v479 = vand.u32 %v478, 4294901760
      %480 = vmatpush1.msra.mxu0 %v479
      %481 = vmatprep.subr.mxu0 0.0
      %482 = vmatpush1.msra.mxu0 0.0
      %483 = vmatprep.subr.mxu0 0.0
      %484 = vmatpush1.msra.mxu0 0.0
      %485 = vmatprep.subr.mxu0 0.0
      %486 = vmatpush1.msra.mxu0 0.0
      %487 = vmatprep.subr.mxu0 0.0
      %488 = vmatpush1.msra.mxu0 0.0
      %489 = vmatprep.subr.mxu0 0.0
      %490 = vmatpush1.msra.mxu0 0.0
      %491 = vmatprep.subr.mxu0 0.0
      %492 = vmatpush1.msra.mxu0 0.0
      %493 = vmatprep.subr.mxu0 0.0
      %494 = vmatpush1.msra.mxu0 0.0
      %495 = vmatprep.subr.mxu0 0.0
      %496 = vmatpush1.msra.mxu0 0.0
      %497 = vmatprep.subr.mxu0 0.0
      %498 = vmatpush1.msra.mxu0 0.0
      %499 = vmatprep.subr.mxu0 0.0
      %500 = vmatpush1.msra.mxu0 0.0
      %501 = vmatprep.subr.mxu0 0.0
      %502 = vmatpush1.msra.mxu0 0.0
      %503 = vmatprep.subr.mxu0 0.0
      %504 = vmatpush1.msra.mxu0 0.0
      %505 = vmatprep.subr.mxu0 0.0
      %506 = vmatpush1.msra.mxu0 0.0
      %507 = vmatprep.subr.mxu0 0.0
      %508 = vmatpush1.msra.mxu0 0.0
      %509 = vmatprep.subr.mxu0 0.0
      %510 = vmatpush1.msra.mxu0 0.0
      %511 = vmatprep.subr.mxu0 0.0
      %512 = vmatpush1.msra.mxu0 0.0
      %513 = vmatprep.subr.mxu0 0.0
      %514 = vmatpush1.msra.mxu0 0.0
      %515 = vmatprep.subr.mxu0 0.0
      %516 = vmatpush1.msra.mxu0 0.0
      %517 = vmatprep.subr.mxu0 0.0
      %518 = vmatpush1.msra.mxu0 0.0
      %519 = vmatprep.subr.mxu0 0.0
      %520 = vmatpush1.msra.mxu0 0.0
      %521 = vmatprep.subr.mxu0 0.0
      %522 = vmatpush1.msra.mxu0 0.0
      %523 = vmatprep.subr.mxu0 0.0
      %524 = vmatpush1.msra.mxu0 0.0
      %525 = vmatprep.subr.mxu0 0.0
      %526 = vmatpush1.msra.mxu0 0.0
      %527 = vmatprep.subr.mxu0 0.0
      %528 = vmatpush1.msra.mxu0 0.0
      %529 = vmatprep.subr.mxu0 0.0
      %530 = vmatpush1.msra.mxu0 0.0
      %531 = vmatprep.subr.mxu0 0.0
      %532 = vmatpush1.msra.mxu0 0.0
      %533 = vmatprep.subr.mxu0 0.0
      %534 = vmatpush1.msra.mxu0 0.0
      %535 = vmatprep.subr.mxu0 0.0
      %536 = vmatpush1.msra.mxu0 0.0
      %537 = vmatprep.mubr.f32.mxu0 0.0
      %v538 = vand.u32 %v347, 4294901760
      %539 = vmatmul.mubr.f32.gmra.mrb[0].mxu0 %v538
      %v540 = vpop.f32.mrb[0].mxu0
      %v541 = vadd.f32 %v429, %v540
      %v542 = vpop.f32.mrb[0].mxu0
      %v543 = vadd.f32 %v431, %v542
      %544 = vdwg.mxu0
      %v545 = vand.u32 %v212, 4294901760
      %v546 = vsub.f32 %v212, %v545
      %547 = vmatprep.subr.mxu0 %v546
      %v548 = vand.u32 %v211, 4294901760
      %v549 = vsub.f32 %v211, %v548
      %550 = vmatpush1.msra.mxu0 %v549
      %v551 = vand.u32 %v244, 4294901760
      %v552 = vsub.f32 %v244, %v551
      %553 = vmatprep.subr.mxu0 %v552
      %v554 = vand.u32 %v243, 4294901760
      %v555 = vsub.f32 %v243, %v554
      %556 = vmatpush1.msra.mxu0 %v555
      %v557 = vand.u32 %v276, 4294901760
      %v558 = vsub.f32 %v276, %v557
      %559 = vmatprep.subr.mxu0 %v558
      %v560 = vand.u32 %v275, 4294901760
      %v561 = vsub.f32 %v275, %v560
      %562 = vmatpush1.msra.mxu0 %v561
      %v563 = vand.u32 %v308, 4294901760
      %v564 = vsub.f32 %v308, %v563
      %565 = vmatprep.subr.mxu0 %v564
      %v566 = vand.u32 %v307, 4294901760
      %v567 = vsub.f32 %v307, %v566
      %568 = vmatpush1.msra.mxu0 %v567
      %569 = vmatprep.subr.mxu0 0.0
      %570 = vmatpush1.msra.mxu0 0.0
      %571 = vmatprep.subr.mxu0 0.0
      %572 = vmatpush1.msra.mxu0 0.0
      %573 = vmatprep.subr.mxu0 0.0
      %574 = vmatpush1.msra.mxu0 0.0
      %575 = vmatprep.subr.mxu0 0.0
      %576 = vmatpush1.msra.mxu0 0.0
      %577 = vmatprep.subr.mxu0 0.0
      %578 = vmatpush1.msra.mxu0 0.0
      %579 = vmatprep.subr.mxu0 0.0
      %580 = vmatpush1.msra.mxu0 0.0
      %581 = vmatprep.subr.mxu0 0.0
      %582 = vmatpush1.msra.mxu0 0.0
      %583 = vmatprep.subr.mxu0 0.0
      %584 = vmatpush1.msra.mxu0 0.0
      %585 = vmatprep.subr.mxu0 0.0
      %586 = vmatpush1.msra.mxu0 0.0
      %587 = vmatprep.subr.mxu0 0.0
      %588 = vmatpush1.msra.mxu0 0.0
      %589 = vmatprep.subr.mxu0 0.0
      %590 = vmatpush1.msra.mxu0 0.0
      %591 = vmatprep.subr.mxu0 0.0
      %592 = vmatpush1.msra.mxu0 0.0
      %593 = vmatprep.subr.mxu0 0.0
      %594 = vmatpush1.msra.mxu0 0.0
      %595 = vmatprep.subr.mxu0 0.0
      %596 = vmatpush1.msra.mxu0 0.0
      %597 = vmatprep.subr.mxu0 0.0
      %598 = vmatpush1.msra.mxu0 0.0
      %599 = vmatprep.subr.mxu0 0.0
      %600 = vmatpush1.msra.mxu0 0.0
      %601 = vmatprep.subr.mxu0 0.0
      %602 = vmatpush1.msra.mxu0 0.0
      %603 = vmatprep.subr.mxu0 0.0
      %604 = vmatpush1.msra.mxu0 0.0
      %605 = vmatprep.subr.mxu0 0.0
      %606 = vmatpush1.msra.mxu0 0.0
      %607 = vmatprep.subr.mxu0 0.0
      %608 = vmatpush1.msra.mxu0 0.0
      %609 = vmatprep.subr.mxu0 0.0
      %610 = vmatpush1.msra.mxu0 0.0
      %611 = vmatprep.subr.mxu0 0.0
      %612 = vmatpush1.msra.mxu0 0.0
      %613 = vmatprep.subr.mxu0 0.0
      %614 = vmatpush1.msra.mxu0 0.0
      %615 = vmatprep.subr.mxu0 0.0
      %616 = vmatpush1.msra.mxu0 0.0
      %617 = vmatprep.subr.mxu0 0.0
      %618 = vmatpush1.msra.mxu0 0.0
      %619 = vmatprep.subr.mxu0 0.0
      %620 = vmatpush1.msra.mxu0 0.0
      %621 = vmatprep.subr.mxu0 0.0
      %622 = vmatpush1.msra.mxu0 0.0
      %623 = vmatprep.subr.mxu0 0.0
      %624 = vmatpush1.msra.mxu0 0.0
      %625 = vmatprep.mubr.f32.mxu0 0.0
      %v626 = vand.u32 %v347, 4294901760
      %v627 = vsub.f32 %v347, %v626
      %628 = vmatmul.mubr.f32.gmra.mrb[0].mxu0 %v627
      %v629 = vpop.f32.mrb[0].mxu0
      %v630 = vadd.f32 %v541, %v629
      %v631 = vpop.f32.mrb[0].mxu0
      %v632 = vadd.f32 %v543, %v631
      %633 = vdwg.mxu0
      %v634 = vand.u32 %v212, 4294901760
      %635 = vmatprep.subr.mxu0 %v634
      %v636 = vand.u32 %v211, 4294901760
      %637 = vmatpush1.msra.mxu0 %v636
      %v638 = vand.u32 %v244, 4294901760
      %639 = vmatprep.subr.mxu0 %v638
      %v640 = vand.u32 %v243, 4294901760
      %641 = vmatpush1.msra.mxu0 %v640
      %v642 = vand.u32 %v276, 4294901760
      %643 = vmatprep.subr.mxu0 %v642
      %v644 = vand.u32 %v275, 4294901760
      %645 = vmatpush1.msra.mxu0 %v644
      %v646 = vand.u32 %v308, 4294901760
      %647 = vmatprep.subr.mxu0 %v646
      %v648 = vand.u32 %v307, 4294901760
      %649 = vmatpush1.msra.mxu0 %v648
      %650 = vmatprep.subr.mxu0 0.0
      %651 = vmatpush1.msra.mxu0 0.0
      %652 = vmatprep.subr.mxu0 0.0
      %653 = vmatpush1.msra.mxu0 0.0
      %654 = vmatprep.subr.mxu0 0.0
      %655 = vmatpush1.msra.mxu0 0.0
      %656 = vmatprep.subr.mxu0 0.0
      %657 = vmatpush1.msra.mxu0 0.0
      %658 = vmatprep.subr.mxu0 0.0
      %659 = vmatpush1.msra.mxu0 0.0
      %660 = vmatprep.subr.mxu0 0.0
      %661 = vmatpush1.msra.mxu0 0.0
      %662 = vmatprep.subr.mxu0 0.0
      %663 = vmatpush1.msra.mxu0 0.0
      %664 = vmatprep.subr.mxu0 0.0
      %665 = vmatpush1.msra.mxu0 0.0
      %666 = vmatprep.subr.mxu0 0.0
      %667 = vmatpush1.msra.mxu0 0.0
      %668 = vmatprep.subr.mxu0 0.0
      %669 = vmatpush1.msra.mxu0 0.0
      %670 = vmatprep.subr.mxu0 0.0
      %671 = vmatpush1.msra.mxu0 0.0
      %672 = vmatprep.subr.mxu0 0.0
      %673 = vmatpush1.msra.mxu0 0.0
      %674 = vmatprep.subr.mxu0 0.0
      %675 = vmatpush1.msra.mxu0 0.0
      %676 = vmatprep.subr.mxu0 0.0
      %677 = vmatpush1.msra.mxu0 0.0
      %678 = vmatprep.subr.mxu0 0.0
      %679 = vmatpush1.msra.mxu0 0.0
      %680 = vmatprep.subr.mxu0 0.0
      %681 = vmatpush1.msra.mxu0 0.0
      %682 = vmatprep.subr.mxu0 0.0
      %683 = vmatpush1.msra.mxu0 0.0
      %684 = vmatprep.subr.mxu0 0.0
      %685 = vmatpush1.msra.mxu0 0.0
      %686 = vmatprep.subr.mxu0 0.0
      %687 = vmatpush1.msra.mxu0 0.0
      %688 = vmatprep.subr.mxu0 0.0
      %689 = vmatpush1.msra.mxu0 0.0
      %690 = vmatprep.subr.mxu0 0.0
      %691 = vmatpush1.msra.mxu0 0.0
      %692 = vmatprep.subr.mxu0 0.0
      %693 = vmatpush1.msra.mxu0 0.0
      %694 = vmatprep.subr.mxu0 0.0
      %695 = vmatpush1.msra.mxu0 0.0
      %696 = vmatprep.subr.mxu0 0.0
      %697 = vmatpush1.msra.mxu0 0.0
      %698 = vmatprep.subr.mxu0 0.0
      %699 = vmatpush1.msra.mxu0 0.0
      %700 = vmatprep.subr.mxu0 0.0
      %701 = vmatpush1.msra.mxu0 0.0
      %702 = vmatprep.subr.mxu0 0.0
      %703 = vmatpush1.msra.mxu0 0.0
      %704 = vmatprep.subr.mxu0 0.0
      %705 = vmatpush1.msra.mxu0 0.0
      %706 = vmatprep.mubr.f32.mxu0 0.0
      %v707 = vand.u32 %v347, 4294901760
      %v708 = vsub.f32 %v347, %v707
      %v709 = vand.u32 %v708, 4294901760
      %710 = vmatmul.mubr.f32.gmra.mrb[0].mxu0 %v709
      %v711 = vpop.f32.mrb[0].mxu0
      %v712 = vadd.f32 %v630, %v711
      %v713 = vpop.f32.mrb[0].mxu0
      %v714 = vadd.f32 %v632, %v713
      %715 = vdwg.mxu0
      %v716 = vand.u32 %v212, 4294901760
      %v717 = vsub.f32 %v212, %v716
      %v718 = vand.u32 %v717, 4294901760
      %719 = vmatprep.subr.mxu0 %v718
      %v720 = vand.u32 %v211, 4294901760
      %v721 = vsub.f32 %v211, %v720
      %v722 = vand.u32 %v721, 4294901760
      %723 = vmatpush1.msra.mxu0 %v722
      %v724 = vand.u32 %v244, 4294901760
      %v725 = vsub.f32 %v244, %v724
      %v726 = vand.u32 %v725, 4294901760
      %727 = vmatprep.subr.mxu0 %v726
      %v728 = vand.u32 %v243, 4294901760
      %v729 = vsub.f32 %v243, %v728
      %v730 = vand.u32 %v729, 4294901760
      %731 = vmatpush1.msra.mxu0 %v730
      %v732 = vand.u32 %v276, 4294901760
      %v733 = vsub.f32 %v276, %v732
      %v734 = vand.u32 %v733, 4294901760
      %735 = vmatprep.subr.mxu0 %v734
      %v736 = vand.u32 %v275, 4294901760
      %v737 = vsub.f32 %v275, %v736
      %v738 = vand.u32 %v737, 4294901760
      %739 = vmatpush1.msra.mxu0 %v738
      %v740 = vand.u32 %v308, 4294901760
      %v741 = vsub.f32 %v308, %v740
      %v742 = vand.u32 %v741, 4294901760
      %743 = vmatprep.subr.mxu0 %v742
      %v744 = vand.u32 %v307, 4294901760
      %v745 = vsub.f32 %v307, %v744
      %v746 = vand.u32 %v745, 4294901760
      %747 = vmatpush1.msra.mxu0 %v746
      %748 = vmatprep.subr.mxu0 0.0
      %749 = vmatpush1.msra.mxu0 0.0
      %750 = vmatprep.subr.mxu0 0.0
      %751 = vmatpush1.msra.mxu0 0.0
      %752 = vmatprep.subr.mxu0 0.0
      %753 = vmatpush1.msra.mxu0 0.0
      %754 = vmatprep.subr.mxu0 0.0
      %755 = vmatpush1.msra.mxu0 0.0
      %756 = vmatprep.subr.mxu0 0.0
      %757 = vmatpush1.msra.mxu0 0.0
      %758 = vmatprep.subr.mxu0 0.0
      %759 = vmatpush1.msra.mxu0 0.0
      %760 = vmatprep.subr.mxu0 0.0
      %761 = vmatpush1.msra.mxu0 0.0
      %762 = vmatprep.subr.mxu0 0.0
      %763 = vmatpush1.msra.mxu0 0.0
      %764 = vmatprep.subr.mxu0 0.0
      %765 = vmatpush1.msra.mxu0 0.0
      %766 = vmatprep.subr.mxu0 0.0
      %767 = vmatpush1.msra.mxu0 0.0
      %768 = vmatprep.subr.mxu0 0.0
      %769 = vmatpush1.msra.mxu0 0.0
      %770 = vmatprep.subr.mxu0 0.0
      %771 = vmatpush1.msra.mxu0 0.0
      %772 = vmatprep.subr.mxu0 0.0
      %773 = vmatpush1.msra.mxu0 0.0
      %774 = vmatprep.subr.mxu0 0.0
      %775 = vmatpush1.msra.mxu0 0.0
      %776 = vmatprep.subr.mxu0 0.0
      %777 = vmatpush1.msra.mxu0 0.0
      %778 = vmatprep.subr.mxu0 0.0
      %779 = vmatpush1.msra.mxu0 0.0
      %780 = vmatprep.subr.mxu0 0.0
      %781 = vmatpush1.msra.mxu0 0.0
      %782 = vmatprep.subr.mxu0 0.0
      %783 = vmatpush1.msra.mxu0 0.0
      %784 = vmatprep.subr.mxu0 0.0
      %785 = vmatpush1.msra.mxu0 0.0
      %786 = vmatprep.subr.mxu0 0.0
      %787 = vmatpush1.msra.mxu0 0.0
      %788 = vmatprep.subr.mxu0 0.0
      %789 = vmatpush1.msra.mxu0 0.0
      %790 = vmatprep.subr.mxu0 0.0
      %791 = vmatpush1.msra.mxu0 0.0
      %792 = vmatprep.subr.mxu0 0.0
      %793 = vmatpush1.msra.mxu0 0.0
      %794 = vmatprep.subr.mxu0 0.0
      %795 = vmatpush1.msra.mxu0 0.0
      %796 = vmatprep.subr.mxu0 0.0
      %797 = vmatpush1.msra.mxu0 0.0
      %798 = vmatprep.subr.mxu0 0.0
      %799 = vmatpush1.msra.mxu0 0.0
      %800 = vmatprep.subr.mxu0 0.0
      %801 = vmatpush1.msra.mxu0 0.0
      %802 = vmatprep.subr.mxu0 0.0
      %803 = vmatpush1.msra.mxu0 0.0
      %804 = vmatprep.mubr.f32.mxu0 0.0
      %v805 = vand.u32 %v347, 4294901760
      %806 = vmatmul.mubr.f32.gmra.mrb[0].mxu0 %v805
      %v807 = vpop.f32.mrb[0].mxu0
      %v808 = vadd.f32 %v712, %v807
      %v809 = vpop.f32.mrb[0].mxu0
      %v810 = vadd.f32 %v714, %v809
      %811 = vdwg.mxu0
      %v812 = vand.u32 %v212, 4294901760
      %813 = vmatprep.subr.mxu0 %v812
      %v814 = vand.u32 %v211, 4294901760
      %815 = vmatpush1.msra.mxu0 %v814
      %v816 = vand.u32 %v244, 4294901760
      %817 = vmatprep.subr.mxu0 %v816
      %v818 = vand.u32 %v243, 4294901760
      %819 = vmatpush1.msra.mxu0 %v818
      %v820 = vand.u32 %v276, 4294901760
      %821 = vmatprep.subr.mxu0 %v820
      %v822 = vand.u32 %v275, 4294901760
      %823 = vmatpush1.msra.mxu0 %v822
      %v824 = vand.u32 %v308, 4294901760
      %825 = vmatprep.subr.mxu0 %v824
      %v826 = vand.u32 %v307, 4294901760
      %827 = vmatpush1.msra.mxu0 %v826
      %828 = vmatprep.subr.mxu0 0.0
      %829 = vmatpush1.msra.mxu0 0.0
      %830 = vmatprep.subr.mxu0 0.0
      %831 = vmatpush1.msra.mxu0 0.0
      %832 = vmatprep.subr.mxu0 0.0
      %833 = vmatpush1.msra.mxu0 0.0
      %834 = vmatprep.subr.mxu0 0.0
      %835 = vmatpush1.msra.mxu0 0.0
      %836 = vmatprep.subr.mxu0 0.0
      %837 = vmatpush1.msra.mxu0 0.0
      %838 = vmatprep.subr.mxu0 0.0
      %839 = vmatpush1.msra.mxu0 0.0
      %840 = vmatprep.subr.mxu0 0.0
      %841 = vmatpush1.msra.mxu0 0.0
      %842 = vmatprep.subr.mxu0 0.0
      %843 = vmatpush1.msra.mxu0 0.0
      %844 = vmatprep.subr.mxu0 0.0
      %845 = vmatpush1.msra.mxu0 0.0
      %846 = vmatprep.subr.mxu0 0.0
      %847 = vmatpush1.msra.mxu0 0.0
      %848 = vmatprep.subr.mxu0 0.0
      %849 = vmatpush1.msra.mxu0 0.0
      %850 = vmatprep.subr.mxu0 0.0
      %851 = vmatpush1.msra.mxu0 0.0
      %852 = vmatprep.subr.mxu0 0.0
      %853 = vmatpush1.msra.mxu0 0.0
      %854 = vmatprep.subr.mxu0 0.0
      %855 = vmatpush1.msra.mxu0 0.0
      %856 = vmatprep.subr.mxu0 0.0
      %857 = vmatpush1.msra.mxu0 0.0
      %858 = vmatprep.subr.mxu0 0.0
      %859 = vmatpush1.msra.mxu0 0.0
      %860 = vmatprep.subr.mxu0 0.0
      %861 = vmatpush1.msra.mxu0 0.0
      %862 = vmatprep.subr.mxu0 0.0
      %863 = vmatpush1.msra.mxu0 0.0
      %864 = vmatprep.subr.mxu0 0.0
      %865 = vmatpush1.msra.mxu0 0.0
      %866 = vmatprep.subr.mxu0 0.0
      %867 = vmatpush1.msra.mxu0 0.0
      %868 = vmatprep.subr.mxu0 0.0
      %869 = vmatpush1.msra.mxu0 0.0
      %870 = vmatprep.subr.mxu0 0.0
      %871 = vmatpush1.msra.mxu0 0.0
      %872 = vmatprep.subr.mxu0 0.0
      %873 = vmatpush1.msra.mxu0 0.0
      %874 = vmatprep.subr.mxu0 0.0
      %875 = vmatpush1.msra.mxu0 0.0
      %876 = vmatprep.subr.mxu0 0.0
      %877 = vmatpush1.msra.mxu0 0.0
      %878 = vmatprep.subr.mxu0 0.0
      %879 = vmatpush1.msra.mxu0 0.0
      %880 = vmatprep.subr.mxu0 0.0
      %881 = vmatpush1.msra.mxu0 0.0
      %882 = vmatprep.subr.mxu0 0.0
      %883 = vmatpush1.msra.mxu0 0.0
      %884 = vmatprep.mubr.f32.mxu0 0.0
      %v885 = vand.u32 %v347, 4294901760
      %886 = vmatmul.mubr.f32.gmra.mrb[0].mxu0 %v885
      %v887 = vpop.f32.mrb[0].mxu0
      %v888 = vadd.f32 %v808, %v887
      %v889 = vpop.f32.mrb[0].mxu0
      %v890 = vadd.f32 %v810, %v889
      %891 = vdwg.mxu0
      %v892 = vand.u32 %v214, 4294901760
      %893 = vmatprep.subr.mxu0 %v892
      %v894 = vand.u32 %v213, 4294901760
      %895 = vmatpush1.msra.mxu0 %v894
      %v896 = vand.u32 %v246, 4294901760
      %897 = vmatprep.subr.mxu0 %v896
      %v898 = vand.u32 %v245, 4294901760
      %899 = vmatpush1.msra.mxu0 %v898
      %v900 = vand.u32 %v278, 4294901760
      %901 = vmatprep.subr.mxu0 %v900
      %v902 = vand.u32 %v277, 4294901760
      %903 = vmatpush1.msra.mxu0 %v902
      %v904 = vand.u32 %v310, 4294901760
      %905 = vmatprep.subr.mxu0 %v904
      %v906 = vand.u32 %v309, 4294901760
      %907 = vmatpush1.msra.mxu0 %v906
      %908 = vmatprep.subr.mxu0 0.0
      %909 = vmatpush1.msra.mxu0 0.0
      %910 = vmatprep.subr.mxu0 0.0
      %911 = vmatpush1.msra.mxu0 0.0
      %912 = vmatprep.subr.mxu0 0.0
      %913 = vmatpush1.msra.mxu0 0.0
      %914 = vmatprep.subr.mxu0 0.0
      %915 = vmatpush1.msra.mxu0 0.0
      %916 = vmatprep.subr.mxu0 0.0
      %917 = vmatpush1.msra.mxu0 0.0
      %918 = vmatprep.subr.mxu0 0.0
      %919 = vmatpush1.msra.mxu0 0.0
      %920 = vmatprep.subr.mxu0 0.0
      %921 = vmatpush1.msra.mxu0 0.0
      %922 = vmatprep.subr.mxu0 0.0
      %923 = vmatpush1.msra.mxu0 0.0
      %924 = vmatprep.subr.mxu0 0.0
      %925 = vmatpush1.msra.mxu0 0.0
      %926 = vmatprep.subr.mxu0 0.0
      %927 = vmatpush1.msra.mxu0 0.0
      %928 = vmatprep.subr.mxu0 0.0
      %929 = vmatpush1.msra.mxu0 0.0
      %930 = vmatprep.subr.mxu0 0.0
      %931 = vmatpush1.msra.mxu0 0.0
      %932 = vmatprep.subr.mxu0 0.0
      %933 = vmatpush1.msra.mxu0 0.0
      %934 = vmatprep.subr.mxu0 0.0
      %935 = vmatpush1.msra.mxu0 0.0
      %936 = vmatprep.subr.mxu0 0.0
      %937 = vmatpush1.msra.mxu0 0.0
      %938 = vmatprep.subr.mxu0 0.0
      %939 = vmatpush1.msra.mxu0 0.0
      %940 = vmatprep.subr.mxu0 0.0
      %941 = vmatpush1.msra.mxu0 0.0
      %942 = vmatprep.subr.mxu0 0.0
      %943 = vmatpush1.msra.mxu0 0.0
      %944 = vmatprep.subr.mxu0 0.0
      %945 = vmatpush1.msra.mxu0 0.0
      %946 = vmatprep.subr.mxu0 0.0
      %947 = vmatpush1.msra.mxu0 0.0
      %948 = vmatprep.subr.mxu0 0.0
      %949 = vmatpush1.msra.mxu0 0.0
      %950 = vmatprep.subr.mxu0 0.0
      %951 = vmatpush1.msra.mxu0 0.0
      %952 = vmatprep.subr.mxu0 0.0
      %953 = vmatpush1.msra.mxu0 0.0
      %954 = vmatprep.subr.mxu0 0.0
      %955 = vmatpush1.msra.mxu0 0.0
      %956 = vmatprep.subr.mxu0 0.0
      %957 = vmatpush1.msra.mxu0 0.0
      %958 = vmatprep.subr.mxu0 0.0
      %959 = vmatpush1.msra.mxu0 0.0
      %960 = vmatprep.subr.mxu0 0.0
      %961 = vmatpush1.msra.mxu0 0.0
      %962 = vmatprep.subr.mxu0 0.0
      %963 = vmatpush1.msra.mxu0 0.0
      %964 = vmatprep.mubr.f32.mxu0 0.0
      %v965 = vand.u32 %v347, 4294901760
      %v966 = vsub.f32 %v347, %v965
      %v967 = vand.u32 %v966, 4294901760
      %v968 = vsub.f32 %v966, %v967
      %v969 = vand.u32 %v968, 4294901760
      %970 = vmatmul.mubr.f32.gmra.mrb[0].mxu0 %v969
      %v971 = vpop.f32.mrb[0].mxu0
      %v972 = vadd.f32 %v343, %v971
      %v973 = vpop.f32.mrb[0].mxu0
      %v974 = vadd.f32 %v343, %v973
      %975 = vdwg.mxu0
      %v976 = vand.u32 %v214, 4294901760
      %v977 = vsub.f32 %v214, %v976
      %v978 = vand.u32 %v977, 4294901760
      %v979 = vsub.f32 %v977, %v978
      %v980 = vand.u32 %v979, 4294901760
      %981 = vmatprep.subr.mxu0 %v980
      %v982 = vand.u32 %v213, 4294901760
      %v983 = vsub.f32 %v213, %v982
      %v984 = vand.u32 %v983, 4294901760
      %v985 = vsub.f32 %v983, %v984
      %v986 = vand.u32 %v985, 4294901760
      %987 = vmatpush1.msra.mxu0 %v986
      %v988 = vand.u32 %v246, 4294901760
      %v989 = vsub.f32 %v246, %v988
      %v990 = vand.u32 %v989, 4294901760
      %v991 = vsub.f32 %v989, %v990
      %v992 = vand.u32 %v991, 4294901760
      %993 = vmatprep.subr.mxu0 %v992
      %v994 = vand.u32 %v245, 4294901760
      %v995 = vsub.f32 %v245, %v994
      %v996 = vand.u32 %v995, 4294901760
      %v997 = vsub.f32 %v995, %v996
      %v998 = vand.u32 %v997, 4294901760
      %999 = vmatpush1.msra.mxu0 %v998
      %v1000 = vand.u32 %v278, 4294901760
      %v1001 = vsub.f32 %v278, %v1000
      %v1002 = vand.u32 %v1001, 4294901760
      %v1003 = vsub.f32 %v1001, %v1002
      %v1004 = vand.u32 %v1003, 4294901760
      %1005 = vmatprep.subr.mxu0 %v1004
      %v1006 = vand.u32 %v277, 4294901760
      %v1007 = vsub.f32 %v277, %v1006
      %v1008 = vand.u32 %v1007, 4294901760
      %v1009 = vsub.f32 %v1007, %v1008
      %v1010 = vand.u32 %v1009, 4294901760
      %1011 = vmatpush1.msra.mxu0 %v1010
      %v1012 = vand.u32 %v310, 4294901760
      %v1013 = vsub.f32 %v310, %v1012
      %v1014 = vand.u32 %v1013, 4294901760
      %v1015 = vsub.f32 %v1013, %v1014
      %v1016 = vand.u32 %v1015, 4294901760
      %1017 = vmatprep.subr.mxu0 %v1016
      %v1018 = vand.u32 %v309, 4294901760
      %v1019 = vsub.f32 %v309, %v1018
      %v1020 = vand.u32 %v1019, 4294901760
      %v1021 = vsub.f32 %v1019, %v1020
      %v1022 = vand.u32 %v1021, 4294901760
      %1023 = vmatpush1.msra.mxu0 %v1022
      %1024 = vmatprep.subr.mxu0 0.0
      %1025 = vmatpush1.msra.mxu0 0.0
      %1026 = vmatprep.subr.mxu0 0.0
      %1027 = vmatpush1.msra.mxu0 0.0
      %1028 = vmatprep.subr.mxu0 0.0
      %1029 = vmatpush1.msra.mxu0 0.0
      %1030 = vmatprep.subr.mxu0 0.0
      %1031 = vmatpush1.msra.mxu0 0.0
      %1032 = vmatprep.subr.mxu0 0.0
      %1033 = vmatpush1.msra.mxu0 0.0
      %1034 = vmatprep.subr.mxu0 0.0
      %1035 = vmatpush1.msra.mxu0 0.0
      %1036 = vmatprep.subr.mxu0 0.0
      %1037 = vmatpush1.msra.mxu0 0.0
      %1038 = vmatprep.subr.mxu0 0.0
      %1039 = vmatpush1.msra.mxu0 0.0
      %1040 = vmatprep.subr.mxu0 0.0
      %1041 = vmatpush1.msra.mxu0 0.0
      %1042 = vmatprep.subr.mxu0 0.0
      %1043 = vmatpush1.msra.mxu0 0.0
      %1044 = vmatprep.subr.mxu0 0.0
      %1045 = vmatpush1.msra.mxu0 0.0
      %1046 = vmatprep.subr.mxu0 0.0
      %1047 = vmatpush1.msra.mxu0 0.0
      %1048 = vmatprep.subr.mxu0 0.0
      %1049 = vmatpush1.msra.mxu0 0.0
      %1050 = vmatprep.subr.mxu0 0.0
      %1051 = vmatpush1.msra.mxu0 0.0
      %1052 = vmatprep.subr.mxu0 0.0
      %1053 = vmatpush1.msra.mxu0 0.0
      %1054 = vmatprep.subr.mxu0 0.0
      %1055 = vmatpush1.msra.mxu0 0.0
      %1056 = vmatprep.subr.mxu0 0.0
      %1057 = vmatpush1.msra.mxu0 0.0
      %1058 = vmatprep.subr.mxu0 0.0
      %1059 = vmatpush1.msra.mxu0 0.0
      %1060 = vmatprep.subr.mxu0 0.0
      %1061 = vmatpush1.msra.mxu0 0.0
      %1062 = vmatprep.subr.mxu0 0.0
      %1063 = vmatpush1.msra.mxu0 0.0
      %1064 = vmatprep.subr.mxu0 0.0
      %1065 = vmatpush1.msra.mxu0 0.0
      %1066 = vmatprep.subr.mxu0 0.0
      %1067 = vmatpush1.msra.mxu0 0.0
      %1068 = vmatprep.subr.mxu0 0.0
      %1069 = vmatpush1.msra.mxu0 0.0
      %1070 = vmatprep.subr.mxu0 0.0
      %1071 = vmatpush1.msra.mxu0 0.0
      %1072 = vmatprep.subr.mxu0 0.0
      %1073 = vmatpush1.msra.mxu0 0.0
      %1074 = vmatprep.subr.mxu0 0.0
      %1075 = vmatpush1.msra.mxu0 0.0
      %1076 = vmatprep.subr.mxu0 0.0
      %1077 = vmatpush1.msra.mxu0 0.0
      %1078 = vmatprep.subr.mxu0 0.0
      %1079 = vmatpush1.msra.mxu0 0.0
      %1080 = vmatprep.mubr.f32.mxu0 0.0
      %v1081 = vand.u32 %v347, 4294901760
      %1082 = vmatmul.mubr.f32.gmra.mrb[0].mxu0 %v1081
      %v1083 = vpop.f32.mrb[0].mxu0
      %v1084 = vadd.f32 %v972, %v1083
      %v1085 = vpop.f32.mrb[0].mxu0
      %v1086 = vadd.f32 %v974, %v1085
      %1087 = vdwg.mxu0
      %v1088 = vand.u32 %v214, 4294901760
      %v1089 = vsub.f32 %v214, %v1088
      %1090 = vmatprep.subr.mxu0 %v1089
      %v1091 = vand.u32 %v213, 4294901760
      %v1092 = vsub.f32 %v213, %v1091
      %1093 = vmatpush1.msra.mxu0 %v1092
      %v1094 = vand.u32 %v246, 4294901760
      %v1095 = vsub.f32 %v246, %v1094
      %1096 = vmatprep.subr.mxu0 %v1095
      %v1097 = vand.u32 %v245, 4294901760
      %v1098 = vsub.f32 %v245, %v1097
      %1099 = vmatpush1.msra.mxu0 %v1098
      %v1100 = vand.u32 %v278, 4294901760
      %v1101 = vsub.f32 %v278, %v1100
      %1102 = vmatprep.subr.mxu0 %v1101
      %v1103 = vand.u32 %v277, 4294901760
      %v1104 = vsub.f32 %v277, %v1103
      %1105 = vmatpush1.msra.mxu0 %v1104
      %v1106 = vand.u32 %v310, 4294901760
      %v1107 = vsub.f32 %v310, %v1106
      %1108 = vmatprep.subr.mxu0 %v1107
      %v1109 = vand.u32 %v309, 4294901760
      %v1110 = vsub.f32 %v309, %v1109
      %1111 = vmatpush1.msra.mxu0 %v1110
      %1112 = vmatprep.subr.mxu0 0.0
      %1113 = vmatpush1.msra.mxu0 0.0
      %1114 = vmatprep.subr.mxu0 0.0
      %1115 = vmatpush1.msra.mxu0 0.0
      %1116 = vmatprep.subr.mxu0 0.0
      %1117 = vmatpush1.msra.mxu0 0.0
      %1118 = vmatprep.subr.mxu0 0.0
      %1119 = vmatpush1.msra.mxu0 0.0
      %1120 = vmatprep.subr.mxu0 0.0
      %1121 = vmatpush1.msra.mxu0 0.0
      %1122 = vmatprep.subr.mxu0 0.0
      %1123 = vmatpush1.msra.mxu0 0.0
      %1124 = vmatprep.subr.mxu0 0.0
      %1125 = vmatpush1.msra.mxu0 0.0
      %1126 = vmatprep.subr.mxu0 0.0
      %1127 = vmatpush1.msra.mxu0 0.0
      %1128 = vmatprep.subr.mxu0 0.0
      %1129 = vmatpush1.msra.mxu0 0.0
      %1130 = vmatprep.subr.mxu0 0.0
      %1131 = vmatpush1.msra.mxu0 0.0
      %1132 = vmatprep.subr.mxu0 0.0
      %1133 = vmatpush1.msra.mxu0 0.0
      %1134 = vmatprep.subr.mxu0 0.0
      %1135 = vmatpush1.msra.mxu0 0.0
      %1136 = vmatprep.subr.mxu0 0.0
      %1137 = vmatpush1.msra.mxu0 0.0
      %1138 = vmatprep.subr.mxu0 0.0
      %1139 = vmatpush1.msra.mxu0 0.0
      %1140 = vmatprep.subr.mxu0 0.0
      %1141 = vmatpush1.msra.mxu0 0.0
      %1142 = vmatprep.subr.mxu0 0.0
      %1143 = vmatpush1.msra.mxu0 0.0
      %1144 = vmatprep.subr.mxu0 0.0
      %1145 = vmatpush1.msra.mxu0 0.0
      %1146 = vmatprep.subr.mxu0 0.0
      %1147 = vmatpush1.msra.mxu0 0.0
      %1148 = vmatprep.subr.mxu0 0.0
      %1149 = vmatpush1.msra.mxu0 0.0
      %1150 = vmatprep.subr.mxu0 0.0
      %1151 = vmatpush1.msra.mxu0 0.0
      %1152 = vmatprep.subr.mxu0 0.0
      %1153 = vmatpush1.msra.mxu0 0.0
      %1154 = vmatprep.subr.mxu0 0.0
      %1155 = vmatpush1.msra.mxu0 0.0
      %1156 = vmatprep.subr.mxu0 0.0
      %1157 = vmatpush1.msra.mxu0 0.0
      %1158 = vmatprep.subr.mxu0 0.0
      %1159 = vmatpush1.msra.mxu0 0.0
      %1160 = vmatprep.subr.mxu0 0.0
      %1161 = vmatpush1.msra.mxu0 0.0
      %1162 = vmatprep.subr.mxu0 0.0
      %1163 = vmatpush1.msra.mxu0 0.0
      %1164 = vmatprep.subr.mxu0 0.0
      %1165 = vmatpush1.msra.mxu0 0.0
      %1166 = vmatprep.subr.mxu0 0.0
      %1167 = vmatpush1.msra.mxu0 0.0
      %1168 = vmatprep.mubr.f32.mxu0 0.0
      %v1169 = vand.u32 %v347, 4294901760
      %v1170 = vsub.f32 %v347, %v1169
      %1171 = vmatmul.mubr.f32.gmra.mrb[0].mxu0 %v1170
      %v1172 = vpop.f32.mrb[0].mxu0
      %v1173 = vadd.f32 %v1084, %v1172
      %v1174 = vpop.f32.mrb[0].mxu0
      %v1175 = vadd.f32 %v1086, %v1174
      %1176 = vdwg.mxu0
      %v1177 = vand.u32 %v214, 4294901760
      %1178 = vmatprep.subr.mxu0 %v1177
      %v1179 = vand.u32 %v213, 4294901760
      %1180 = vmatpush1.msra.mxu0 %v1179
      %v1181 = vand.u32 %v246, 4294901760
      %1182 = vmatprep.subr.mxu0 %v1181
      %v1183 = vand.u32 %v245, 4294901760
      %1184 = vmatpush1.msra.mxu0 %v1183
      %v1185 = vand.u32 %v278, 4294901760
      %1186 = vmatprep.subr.mxu0 %v1185
      %v1187 = vand.u32 %v277, 4294901760
      %1188 = vmatpush1.msra.mxu0 %v1187
      %v1189 = vand.u32 %v310, 4294901760
      %1190 = vmatprep.subr.mxu0 %v1189
      %v1191 = vand.u32 %v309, 4294901760
      %1192 = vmatpush1.msra.mxu0 %v1191
      %1193 = vmatprep.subr.mxu0 0.0
      %1194 = vmatpush1.msra.mxu0 0.0
      %1195 = vmatprep.subr.mxu0 0.0
      %1196 = vmatpush1.msra.mxu0 0.0
      %1197 = vmatprep.subr.mxu0 0.0
      %1198 = vmatpush1.msra.mxu0 0.0
      %1199 = vmatprep.subr.mxu0 0.0
      %1200 = vmatpush1.msra.mxu0 0.0
      %1201 = vmatprep.subr.mxu0 0.0
      %1202 = vmatpush1.msra.mxu0 0.0
      %1203 = vmatprep.subr.mxu0 0.0
      %1204 = vmatpush1.msra.mxu0 0.0
      %1205 = vmatprep.subr.mxu0 0.0
      %1206 = vmatpush1.msra.mxu0 0.0
      %1207 = vmatprep.subr.mxu0 0.0
      %1208 = vmatpush1.msra.mxu0 0.0
      %1209 = vmatprep.subr.mxu0 0.0
      %1210 = vmatpush1.msra.mxu0 0.0
      %1211 = vmatprep.subr.mxu0 0.0
      %1212 = vmatpush1.msra.mxu0 0.0
      %1213 = vmatprep.subr.mxu0 0.0
      %1214 = vmatpush1.msra.mxu0 0.0
      %1215 = vmatprep.subr.mxu0 0.0
      %1216 = vmatpush1.msra.mxu0 0.0
      %1217 = vmatprep.subr.mxu0 0.0
      %1218 = vmatpush1.msra.mxu0 0.0
      %1219 = vmatprep.subr.mxu0 0.0
      %1220 = vmatpush1.msra.mxu0 0.0
      %1221 = vmatprep.subr.mxu0 0.0
      %1222 = vmatpush1.msra.mxu0 0.0
      %1223 = vmatprep.subr.mxu0 0.0
      %1224 = vmatpush1.msra.mxu0 0.0
      %1225 = vmatprep.subr.mxu0 0.0
      %1226 = vmatpush1.msra.mxu0 0.0
      %1227 = vmatprep.subr.mxu0 0.0
      %1228 = vmatpush1.msra.mxu0 0.0
      %1229 = vmatprep.subr.mxu0 0.0
      %1230 = vmatpush1.msra.mxu0 0.0
      %1231 = vmatprep.subr.mxu0 0.0
      %1232 = vmatpush1.msra.mxu0 0.0
      %1233 = vmatprep.subr.mxu0 0.0
      %1234 = vmatpush1.msra.mxu0 0.0
      %1235 = vmatprep.subr.mxu0 0.0
      %1236 = vmatpush1.msra.mxu0 0.0
      %1237 = vmatprep.subr.mxu0 0.0
      %1238 = vmatpush1.msra.mxu0 0.0
      %1239 = vmatprep.subr.mxu0 0.0
      %1240 = vmatpush1.msra.mxu0 0.0
      %1241 = vmatprep.subr.mxu0 0.0
      %1242 = vmatpush1.msra.mxu0 0.0
      %1243 = vmatprep.subr.mxu0 0.0
      %1244 = vmatpush1.msra.mxu0 0.0
      %1245 = vmatprep.subr.mxu0 0.0
      %1246 = vmatpush1.msra.mxu0 0.0
      %1247 = vmatprep.subr.mxu0 0.0
      %1248 = vmatpush1.msra.mxu0 0.0
      %1249 = vmatprep.mubr.f32.mxu0 0.0
      %v1250 = vand.u32 %v347, 4294901760
      %v1251 = vsub.f32 %v347, %v1250
      %v1252 = vand.u32 %v1251, 4294901760
      %1253 = vmatmul.mubr.f32.gmra.mrb[0].mxu0 %v1252
      %v1254 = vpop.f32.mrb[0].mxu0
      %v1255 = vadd.f32 %v1173, %v1254
      %v1256 = vpop.f32.mrb[0].mxu0
      %v1257 = vadd.f32 %v1175, %v1256
      %1258 = vdwg.mxu0
      %v1259 = vand.u32 %v214, 4294901760
      %v1260 = vsub.f32 %v214, %v1259
      %v1261 = vand.u32 %v1260, 4294901760
      %1262 = vmatprep.subr.mxu0 %v1261
      %v1263 = vand.u32 %v213, 4294901760
      %v1264 = vsub.f32 %v213, %v1263
      %v1265 = vand.u32 %v1264, 4294901760
      %1266 = vmatpush1.msra.mxu0 %v1265
      %v1267 = vand.u32 %v246, 4294901760
      %v1268 = vsub.f32 %v246, %v1267
      %v1269 = vand.u32 %v1268, 4294901760
      %1270 = vmatprep.subr.mxu0 %v1269
      %v1271 = vand.u32 %v245, 4294901760
      %v1272 = vsub.f32 %v245, %v1271
      %v1273 = vand.u32 %v1272, 4294901760
      %1274 = vmatpush1.msra.mxu0 %v1273
      %v1275 = vand.u32 %v278, 4294901760
      %v1276 = vsub.f32 %v278, %v1275
      %v1277 = vand.u32 %v1276, 4294901760
      %1278 = vmatprep.subr.mxu0 %v1277
      %v1279 = vand.u32 %v277, 4294901760
      %v1280 = vsub.f32 %v277, %v1279
      %v1281 = vand.u32 %v1280, 4294901760
      %1282 = vmatpush1.msra.mxu0 %v1281
      %v1283 = vand.u32 %v310, 4294901760
      %v1284 = vsub.f32 %v310, %v1283
      %v1285 = vand.u32 %v1284, 4294901760
      %1286 = vmatprep.subr.mxu0 %v1285
      %v1287 = vand.u32 %v309, 4294901760
      %v1288 = vsub.f32 %v309, %v1287
      %v1289 = vand.u32 %v1288, 4294901760
      %1290 = vmatpush1.msra.mxu0 %v1289
      %1291 = vmatprep.subr.mxu0 0.0
      %1292 = vmatpush1.msra.mxu0 0.0
      %1293 = vmatprep.subr.mxu0 0.0
      %1294 = vmatpush1.msra.mxu0 0.0
      %1295 = vmatprep.subr.mxu0 0.0
      %1296 = vmatpush1.msra.mxu0 0.0
      %1297 = vmatprep.subr.mxu0 0.0
      %1298 = vmatpush1.msra.mxu0 0.0
      %1299 = vmatprep.subr.mxu0 0.0
      %1300 = vmatpush1.msra.mxu0 0.0
      %1301 = vmatprep.subr.mxu0 0.0
      %1302 = vmatpush1.msra.mxu0 0.0
      %1303 = vmatprep.subr.mxu0 0.0
      %1304 = vmatpush1.msra.mxu0 0.0
      %1305 = vmatprep.subr.mxu0 0.0
      %1306 = vmatpush1.msra.mxu0 0.0
      %1307 = vmatprep.subr.mxu0 0.0
      %1308 = vmatpush1.msra.mxu0 0.0
      %1309 = vmatprep.subr.mxu0 0.0
      %1310 = vmatpush1.msra.mxu0 0.0
      %1311 = vmatprep.subr.mxu0 0.0
      %1312 = vmatpush1.msra.mxu0 0.0
      %1313 = vmatprep.subr.mxu0 0.0
      %1314 = vmatpush1.msra.mxu0 0.0
      %1315 = vmatprep.subr.mxu0 0.0
      %1316 = vmatpush1.msra.mxu0 0.0
      %1317 = vmatprep.subr.mxu0 0.0
      %1318 = vmatpush1.msra.mxu0 0.0
      %1319 = vmatprep.subr.mxu0 0.0
      %1320 = vmatpush1.msra.mxu0 0.0
      %1321 = vmatprep.subr.mxu0 0.0
      %1322 = vmatpush1.msra.mxu0 0.0
      %1323 = vmatprep.subr.mxu0 0.0
      %1324 = vmatpush1.msra.mxu0 0.0
      %1325 = vmatprep.subr.mxu0 0.0
      %1326 = vmatpush1.msra.mxu0 0.0
      %1327 = vmatprep.subr.mxu0 0.0
      %1328 = vmatpush1.msra.mxu0 0.0
      %1329 = vmatprep.subr.mxu0 0.0
      %1330 = vmatpush1.msra.mxu0 0.0
      %1331 = vmatprep.subr.mxu0 0.0
      %1332 = vmatpush1.msra.mxu0 0.0
      %1333 = vmatprep.subr.mxu0 0.0
      %1334 = vmatpush1.msra.mxu0 0.0
      %1335 = vmatprep.subr.mxu0 0.0
      %1336 = vmatpush1.msra.mxu0 0.0
      %1337 = vmatprep.subr.mxu0 0.0
      %1338 = vmatpush1.msra.mxu0 0.0
      %1339 = vmatprep.subr.mxu0 0.0
      %1340 = vmatpush1.msra.mxu0 0.0
      %1341 = vmatprep.subr.mxu0 0.0
      %1342 = vmatpush1.msra.mxu0 0.0
      %1343 = vmatprep.subr.mxu0 0.0
      %1344 = vmatpush1.msra.mxu0 0.0
      %1345 = vmatprep.subr.mxu0 0.0
      %1346 = vmatpush1.msra.mxu0 0.0
      %1347 = vmatprep.mubr.f32.mxu0 0.0
      %v1348 = vand.u32 %v347, 4294901760
      %1349 = vmatmul.mubr.f32.gmra.mrb[0].mxu0 %v1348
      %v1350 = vpop.f32.mrb[0].mxu0
      %v1351 = vadd.f32 %v1255, %v1350
      %v1352 = vpop.f32.mrb[0].mxu0
      %v1353 = vadd.f32 %v1257, %v1352
      %1354 = vdwg.mxu0
      %v1355 = vand.u32 %v214, 4294901760
      %1356 = vmatprep.subr.mxu0 %v1355
      %v1357 = vand.u32 %v213, 4294901760
      %1358 = vmatpush1.msra.mxu0 %v1357
      %v1359 = vand.u32 %v246, 4294901760
      %1360 = vmatprep.subr.mxu0 %v1359
      %v1361 = vand.u32 %v245, 4294901760
      %1362 = vmatpush1.msra.mxu0 %v1361
      %v1363 = vand.u32 %v278, 4294901760
      %1364 = vmatprep.subr.mxu0 %v1363
      %v1365 = vand.u32 %v277, 4294901760
      %1366 = vmatpush1.msra.mxu0 %v1365
      %v1367 = vand.u32 %v310, 4294901760
      %1368 = vmatprep.subr.mxu0 %v1367
      %v1369 = vand.u32 %v309, 4294901760
      %1370 = vmatpush1.msra.mxu0 %v1369
      %1371 = vmatprep.subr.mxu0 0.0
      %1372 = vmatpush1.msra.mxu0 0.0
      %1373 = vmatprep.subr.mxu0 0.0
      %1374 = vmatpush1.msra.mxu0 0.0
      %1375 = vmatprep.subr.mxu0 0.0
      %1376 = vmatpush1.msra.mxu0 0.0
      %1377 = vmatprep.subr.mxu0 0.0
      %1378 = vmatpush1.msra.mxu0 0.0
      %1379 = vmatprep.subr.mxu0 0.0
      %1380 = vmatpush1.msra.mxu0 0.0
      %1381 = vmatprep.subr.mxu0 0.0
      %1382 = vmatpush1.msra.mxu0 0.0
      %1383 = vmatprep.subr.mxu0 0.0
      %1384 = vmatpush1.msra.mxu0 0.0
      %1385 = vmatprep.subr.mxu0 0.0
      %1386 = vmatpush1.msra.mxu0 0.0
      %1387 = vmatprep.subr.mxu0 0.0
      %1388 = vmatpush1.msra.mxu0 0.0
      %1389 = vmatprep.subr.mxu0 0.0
      %1390 = vmatpush1.msra.mxu0 0.0
      %1391 = vmatprep.subr.mxu0 0.0
      %1392 = vmatpush1.msra.mxu0 0.0
      %1393 = vmatprep.subr.mxu0 0.0
      %1394 = vmatpush1.msra.mxu0 0.0
      %1395 = vmatprep.subr.mxu0 0.0
      %1396 = vmatpush1.msra.mxu0 0.0
      %1397 = vmatprep.subr.mxu0 0.0
      %1398 = vmatpush1.msra.mxu0 0.0
      %1399 = vmatprep.subr.mxu0 0.0
      %1400 = vmatpush1.msra.mxu0 0.0
      %1401 = vmatprep.subr.mxu0 0.0
      %1402 = vmatpush1.msra.mxu0 0.0
      %1403 = vmatprep.subr.mxu0 0.0
      %1404 = vmatpush1.msra.mxu0 0.0
      %1405 = vmatprep.subr.mxu0 0.0
      %1406 = vmatpush1.msra.mxu0 0.0
      %1407 = vmatprep.subr.mxu0 0.0
      %1408 = vmatpush1.msra.mxu0 0.0
      %1409 = vmatprep.subr.mxu0 0.0
      %1410 = vmatpush1.msra.mxu0 0.0
      %1411 = vmatprep.subr.mxu0 0.0
      %1412 = vmatpush1.msra.mxu0 0.0
      %1413 = vmatprep.subr.mxu0 0.0
      %1414 = vmatpush1.msra.mxu0 0.0
      %1415 = vmatprep.subr.mxu0 0.0
      %1416 = vmatpush1.msra.mxu0 0.0
      %1417 = vmatprep.subr.mxu0 0.0
      %1418 = vmatpush1.msra.mxu0 0.0
      %1419 = vmatprep.subr.mxu0 0.0
      %1420 = vmatpush1.msra.mxu0 0.0
      %1421 = vmatprep.subr.mxu0 0.0
      %1422 = vmatpush1.msra.mxu0 0.0
      %1423 = vmatprep.subr.mxu0 0.0
      %1424 = vmatpush1.msra.mxu0 0.0
      %1425 = vmatprep.subr.mxu0 0.0
      %1426 = vmatpush1.msra.mxu0 0.0
      %1427 = vmatprep.mubr.f32.mxu0 0.0
      %v1428 = vand.u32 %v347, 4294901760
      %1429 = vmatmul.mubr.f32.gmra.mrb[0].mxu0 %v1428
      %v1430 = vpop.f32.mrb[0].mxu0
      %v1431 = vadd.f32 %v1351, %v1430
      %v1432 = vpop.f32.mrb[0].mxu0
      %v1433 = vadd.f32 %v1353, %v1432
      %1434 = vdwg.mxu0
      %v1435 = vand.u32 %v216, 4294901760
      %1436 = vmatprep.subr.mxu0 %v1435
      %v1437 = vand.u32 %v215, 4294901760
      %1438 = vmatpush1.msra.mxu0 %v1437
      %v1439 = vand.u32 %v248, 4294901760
      %1440 = vmatprep.subr.mxu0 %v1439
      %v1441 = vand.u32 %v247, 4294901760
      %1442 = vmatpush1.msra.mxu0 %v1441
      %v1443 = vand.u32 %v280, 4294901760
      %1444 = vmatprep.subr.mxu0 %v1443
      %v1445 = vand.u32 %v279, 4294901760
      %1446 = vmatpush1.msra.mxu0 %v1445
      %v1447 = vand.u32 %v312, 4294901760
      %1448 = vmatprep.subr.mxu0 %v1447
      %v1449 = vand.u32 %v311, 4294901760
      %1450 = vmatpush1.msra.mxu0 %v1449
      %1451 = vmatprep.subr.mxu0 0.0
      %1452 = vmatpush1.msra.mxu0 0.0
      %1453 = vmatprep.subr.mxu0 0.0
      %1454 = vmatpush1.msra.mxu0 0.0
      %1455 = vmatprep.subr.mxu0 0.0
      %1456 = vmatpush1.msra.mxu0 0.0
      %1457 = vmatprep.subr.mxu0 0.0
      %1458 = vmatpush1.msra.mxu0 0.0
      %1459 = vmatprep.subr.mxu0 0.0
      %1460 = vmatpush1.msra.mxu0 0.0
      %1461 = vmatprep.subr.mxu0 0.0
      %1462 = vmatpush1.msra.mxu0 0.0
      %1463 = vmatprep.subr.mxu0 0.0
      %1464 = vmatpush1.msra.mxu0 0.0
      %1465 = vmatprep.subr.mxu0 0.0
      %1466 = vmatpush1.msra.mxu0 0.0
      %1467 = vmatprep.subr.mxu0 0.0
      %1468 = vmatpush1.msra.mxu0 0.0
      %1469 = vmatprep.subr.mxu0 0.0
      %1470 = vmatpush1.msra.mxu0 0.0
      %1471 = vmatprep.subr.mxu0 0.0
      %1472 = vmatpush1.msra.mxu0 0.0
      %1473 = vmatprep.subr.mxu0 0.0
      %1474 = vmatpush1.msra.mxu0 0.0
      %1475 = vmatprep.subr.mxu0 0.0
      %1476 = vmatpush1.msra.mxu0 0.0
      %1477 = vmatprep.subr.mxu0 0.0
      %1478 = vmatpush1.msra.mxu0 0.0
      %1479 = vmatprep.subr.mxu0 0.0
      %1480 = vmatpush1.msra.mxu0 0.0
      %1481 = vmatprep.subr.mxu0 0.0
      %1482 = vmatpush1.msra.mxu0 0.0
      %1483 = vmatprep.subr.mxu0 0.0
      %1484 = vmatpush1.msra.mxu0 0.0
      %1485 = vmatprep.subr.mxu0 0.0
      %1486 = vmatpush1.msra.mxu0 0.0
      %1487 = vmatprep.subr.mxu0 0.0
      %1488 = vmatpush1.msra.mxu0 0.0
      %1489 = vmatprep.subr.mxu0 0.0
      %1490 = vmatpush1.msra.mxu0 0.0
      %1491 = vmatprep.subr.mxu0 0.0
      %1492 = vmatpush1.msra.mxu0 0.0
      %1493 = vmatprep.subr.mxu0 0.0
      %1494 = vmatpush1.msra.mxu0 0.0
      %1495 = vmatprep.subr.mxu0 0.0
      %1496 = vmatpush1.msra.mxu0 0.0
      %1497 = vmatprep.subr.mxu0 0.0
      %1498 = vmatpush1.msra.mxu0 0.0
      %1499 = vmatprep.subr.mxu0 0.0
      %1500 = vmatpush1.msra.mxu0 0.0
      %1501 = vmatprep.subr.mxu0 0.0
      %1502 = vmatpush1.msra.mxu0 0.0
      %1503 = vmatprep.subr.mxu0 0.0
      %1504 = vmatpush1.msra.mxu0 0.0
      %1505 = vmatprep.subr.mxu0 0.0
      %1506 = vmatpush1.msra.mxu0 0.0
      %1507 = vmatprep.mubr.f32.mxu0 0.0
      %v1508 = vand.u32 %v347, 4294901760
      %v1509 = vsub.f32 %v347, %v1508
      %v1510 = vand.u32 %v1509, 4294901760
      %v1511 = vsub.f32 %v1509, %v1510
      %v1512 = vand.u32 %v1511, 4294901760
      %1513 = vmatmul.mubr.f32.gmra.mrb[0].mxu0 %v1512
      %v1514 = vpop.f32.mrb[0].mxu0
      %v1515 = vadd.f32 %v343, %v1514
      %v1516 = vpop.f32.mrb[0].mxu0
      %v1517 = vadd.f32 %v343, %v1516
      %1518 = vdwg.mxu0
      %v1519 = vand.u32 %v216, 4294901760
      %v1520 = vsub.f32 %v216, %v1519
      %v1521 = vand.u32 %v1520, 4294901760
      %v1522 = vsub.f32 %v1520, %v1521
      %v1523 = vand.u32 %v1522, 4294901760
      %1524 = vmatprep.subr.mxu0 %v1523
      %v1525 = vand.u32 %v215, 4294901760
      %v1526 = vsub.f32 %v215, %v1525
      %v1527 = vand.u32 %v1526, 4294901760
      %v1528 = vsub.f32 %v1526, %v1527
      %v1529 = vand.u32 %v1528, 4294901760
      %1530 = vmatpush1.msra.mxu0 %v1529
      %v1531 = vand.u32 %v248, 4294901760
      %v1532 = vsub.f32 %v248, %v1531
      %v1533 = vand.u32 %v1532, 4294901760
      %v1534 = vsub.f32 %v1532, %v1533
      %v1535 = vand.u32 %v1534, 4294901760
      %1536 = vmatprep.subr.mxu0 %v1535
      %v1537 = vand.u32 %v247, 4294901760
      %v1538 = vsub.f32 %v247, %v1537
      %v1539 = vand.u32 %v1538, 4294901760
      %v1540 = vsub.f32 %v1538, %v1539
      %v1541 = vand.u32 %v1540, 4294901760
      %1542 = vmatpush1.msra.mxu0 %v1541
      %v1543 = vand.u32 %v280, 4294901760
      %v1544 = vsub.f32 %v280, %v1543
      %v1545 = vand.u32 %v1544, 4294901760
      %v1546 = vsub.f32 %v1544, %v1545
      %v1547 = vand.u32 %v1546, 4294901760
      %1548 = vmatprep.subr.mxu0 %v1547
      %v1549 = vand.u32 %v279, 4294901760
      %v1550 = vsub.f32 %v279, %v1549
      %v1551 = vand.u32 %v1550, 4294901760
      %v1552 = vsub.f32 %v1550, %v1551
      %v1553 = vand.u32 %v1552, 4294901760
      %1554 = vmatpush1.msra.mxu0 %v1553
      %v1555 = vand.u32 %v312, 4294901760
      %v1556 = vsub.f32 %v312, %v1555
      %v1557 = vand.u32 %v1556, 4294901760
      %v1558 = vsub.f32 %v1556, %v1557
      %v1559 = vand.u32 %v1558, 4294901760
      %1560 = vmatprep.subr.mxu0 %v1559
      %v1561 = vand.u32 %v311, 4294901760
      %v1562 = vsub.f32 %v311, %v1561
      %v1563 = vand.u32 %v1562, 4294901760
      %v1564 = vsub.f32 %v1562, %v1563
      %v1565 = vand.u32 %v1564, 4294901760
      %1566 = vmatpush1.msra.mxu0 %v1565
      %1567 = vmatprep.subr.mxu0 0.0
      %1568 = vmatpush1.msra.mxu0 0.0
      %1569 = vmatprep.subr.mxu0 0.0
      %1570 = vmatpush1.msra.mxu0 0.0
      %1571 = vmatprep.subr.mxu0 0.0
      %1572 = vmatpush1.msra.mxu0 0.0
      %1573 = vmatprep.subr.mxu0 0.0
      %1574 = vmatpush1.msra.mxu0 0.0
      %1575 = vmatprep.subr.mxu0 0.0
      %1576 = vmatpush1.msra.mxu0 0.0
      %1577 = vmatprep.subr.mxu0 0.0
      %1578 = vmatpush1.msra.mxu0 0.0
      %1579 = vmatprep.subr.mxu0 0.0
      %1580 = vmatpush1.msra.mxu0 0.0
      %1581 = vmatprep.subr.mxu0 0.0
      %1582 = vmatpush1.msra.mxu0 0.0
      %1583 = vmatprep.subr.mxu0 0.0
      %1584 = vmatpush1.msra.mxu0 0.0
      %1585 = vmatprep.subr.mxu0 0.0
      %1586 = vmatpush1.msra.mxu0 0.0
      %1587 = vmatprep.subr.mxu0 0.0
      %1588 = vmatpush1.msra.mxu0 0.0
      %1589 = vmatprep.subr.mxu0 0.0
      %1590 = vmatpush1.msra.mxu0 0.0
      %1591 = vmatprep.subr.mxu0 0.0
      %1592 = vmatpush1.msra.mxu0 0.0
      %1593 = vmatprep.subr.mxu0 0.0
      %1594 = vmatpush1.msra.mxu0 0.0
      %1595 = vmatprep.subr.mxu0 0.0
      %1596 = vmatpush1.msra.mxu0 0.0
      %1597 = vmatprep.subr.mxu0 0.0
      %1598 = vmatpush1.msra.mxu0 0.0
      %1599 = vmatprep.subr.mxu0 0.0
      %1600 = vmatpush1.msra.mxu0 0.0
      %1601 = vmatprep.subr.mxu0 0.0
      %1602 = vmatpush1.msra.mxu0 0.0
      %1603 = vmatprep.subr.mxu0 0.0
      %1604 = vmatpush1.msra.mxu0 0.0
      %1605 = vmatprep.subr.mxu0 0.0
      %1606 = vmatpush1.msra.mxu0 0.0
      %1607 = vmatprep.subr.mxu0 0.0
      %1608 = vmatpush1.msra.mxu0 0.0
      %1609 = vmatprep.subr.mxu0 0.0
      %1610 = vmatpush1.msra.mxu0 0.0
      %1611 = vmatprep.subr.mxu0 0.0
      %1612 = vmatpush1.msra.mxu0 0.0
      %1613 = vmatprep.subr.mxu0 0.0
      %1614 = vmatpush1.msra.mxu0 0.0
      %1615 = vmatprep.subr.mxu0 0.0
      %1616 = vmatpush1.msra.mxu0 0.0
      %1617 = vmatprep.subr.mxu0 0.0
      %1618 = vmatpush1.msra.mxu0 0.0
      %1619 = vmatprep.subr.mxu0 0.0
      %1620 = vmatpush1.msra.mxu0 0.0
      %1621 = vmatprep.subr.mxu0 0.0
      %1622 = vmatpush1.msra.mxu0 0.0
      %1623 = vmatprep.mubr.f32.mxu0 0.0
      %v1624 = vand.u32 %v347, 4294901760
      %1625 = vmatmul.mubr.f32.gmra.mrb[0].mxu0 %v1624
      %v1626 = vpop.f32.mrb[0].mxu0
      %v1627 = vadd.f32 %v1515, %v1626
      %v1628 = vpop.f32.mrb[0].mxu0
      %v1629 = vadd.f32 %v1517, %v1628
      %1630 = vdwg.mxu0
      %v1631 = vand.u32 %v216, 4294901760
      %v1632 = vsub.f32 %v216, %v1631
      %1633 = vmatprep.subr.mxu0 %v1632
      %v1634 = vand.u32 %v215, 4294901760
      %v1635 = vsub.f32 %v215, %v1634
      %1636 = vmatpush1.msra.mxu0 %v1635
      %v1637 = vand.u32 %v248, 4294901760
      %v1638 = vsub.f32 %v248, %v1637
      %1639 = vmatprep.subr.mxu0 %v1638
      %v1640 = vand.u32 %v247, 4294901760
      %v1641 = vsub.f32 %v247, %v1640
      %1642 = vmatpush1.msra.mxu0 %v1641
      %v1643 = vand.u32 %v280, 4294901760
      %v1644 = vsub.f32 %v280, %v1643
      %1645 = vmatprep.subr.mxu0 %v1644
      %v1646 = vand.u32 %v279, 4294901760
      %v1647 = vsub.f32 %v279, %v1646
      %1648 = vmatpush1.msra.mxu0 %v1647
      %v1649 = vand.u32 %v312, 4294901760
      %v1650 = vsub.f32 %v312, %v1649
      %1651 = vmatprep.subr.mxu0 %v1650
      %v1652 = vand.u32 %v311, 4294901760
      %v1653 = vsub.f32 %v311, %v1652
      %1654 = vmatpush1.msra.mxu0 %v1653
      %1655 = vmatprep.subr.mxu0 0.0
      %1656 = vmatpush1.msra.mxu0 0.0
      %1657 = vmatprep.subr.mxu0 0.0
      %1658 = vmatpush1.msra.mxu0 0.0
      %1659 = vmatprep.subr.mxu0 0.0
      %1660 = vmatpush1.msra.mxu0 0.0
      %1661 = vmatprep.subr.mxu0 0.0
      %1662 = vmatpush1.msra.mxu0 0.0
      %1663 = vmatprep.subr.mxu0 0.0
      %1664 = vmatpush1.msra.mxu0 0.0
      %1665 = vmatprep.subr.mxu0 0.0
      %1666 = vmatpush1.msra.mxu0 0.0
      %1667 = vmatprep.subr.mxu0 0.0
      %1668 = vmatpush1.msra.mxu0 0.0
      %1669 = vmatprep.subr.mxu0 0.0
      %1670 = vmatpush1.msra.mxu0 0.0
      %1671 = vmatprep.subr.mxu0 0.0
      %1672 = vmatpush1.msra.mxu0 0.0
      %1673 = vmatprep.subr.mxu0 0.0
      %1674 = vmatpush1.msra.mxu0 0.0
      %1675 = vmatprep.subr.mxu0 0.0
      %1676 = vmatpush1.msra.mxu0 0.0
      %1677 = vmatprep.subr.mxu0 0.0
      %1678 = vmatpush1.msra.mxu0 0.0
      %1679 = vmatprep.subr.mxu0 0.0
      %1680 = vmatpush1.msra.mxu0 0.0
      %1681 = vmatprep.subr.mxu0 0.0
      %1682 = vmatpush1.msra.mxu0 0.0
      %1683 = vmatprep.subr.mxu0 0.0
      %1684 = vmatpush1.msra.mxu0 0.0
      %1685 = vmatprep.subr.mxu0 0.0
      %1686 = vmatpush1.msra.mxu0 0.0
      %1687 = vmatprep.subr.mxu0 0.0
      %1688 = vmatpush1.msra.mxu0 0.0
      %1689 = vmatprep.subr.mxu0 0.0
      %1690 = vmatpush1.msra.mxu0 0.0
      %1691 = vmatprep.subr.mxu0 0.0
      %1692 = vmatpush1.msra.mxu0 0.0
      %1693 = vmatprep.subr.mxu0 0.0
      %1694 = vmatpush1.msra.mxu0 0.0
      %1695 = vmatprep.subr.mxu0 0.0
      %1696 = vmatpush1.msra.mxu0 0.0
      %1697 = vmatprep.subr.mxu0 0.0
      %1698 = vmatpush1.msra.mxu0 0.0
      %1699 = vmatprep.subr.mxu0 0.0
      %1700 = vmatpush1.msra.mxu0 0.0
      %1701 = vmatprep.subr.mxu0 0.0
      %1702 = vmatpush1.msra.mxu0 0.0
      %1703 = vmatprep.subr.mxu0 0.0
      %1704 = vmatpush1.msra.mxu0 0.0
      %1705 = vmatprep.subr.mxu0 0.0
      %1706 = vmatpush1.msra.mxu0 0.0
      %1707 = vmatprep.subr.mxu0 0.0
      %1708 = vmatpush1.msra.mxu0 0.0
      %1709 = vmatprep.subr.mxu0 0.0
      %1710 = vmatpush1.msra.mxu0 0.0
      %1711 = vmatprep.mubr.f32.mxu0 0.0
      %v1712 = vand.u32 %v347, 4294901760
      %v1713 = vsub.f32 %v347, %v1712
      %1714 = vmatmul.mubr.f32.gmra.mrb[0].mxu0 %v1713
      %v1715 = vpop.f32.mrb[0].mxu0
      %v1716 = vadd.f32 %v1627, %v1715
      %v1717 = vpop.f32.mrb[0].mxu0
      %v1718 = vadd.f32 %v1629, %v1717
      %1719 = vdwg.mxu0
      %v1720 = vand.u32 %v216, 4294901760
      %1721 = vmatprep.subr.mxu0 %v1720
      %v1722 = vand.u32 %v215, 4294901760
      %1723 = vmatpush1.msra.mxu0 %v1722
      %v1724 = vand.u32 %v248, 4294901760
      %1725 = vmatprep.subr.mxu0 %v1724
      %v1726 = vand.u32 %v247, 4294901760
      %1727 = vmatpush1.msra.mxu0 %v1726
      %v1728 = vand.u32 %v280, 4294901760
      %1729 = vmatprep.subr.mxu0 %v1728
      %v1730 = vand.u32 %v279, 4294901760
      %1731 = vmatpush1.msra.mxu0 %v1730
      %v1732 = vand.u32 %v312, 4294901760
      %1733 = vmatprep.subr.mxu0 %v1732
      %v1734 = vand.u32 %v311, 4294901760
      %1735 = vmatpush1.msra.mxu0 %v1734
      %1736 = vmatprep.subr.mxu0 0.0
      %1737 = vmatpush1.msra.mxu0 0.0
      %1738 = vmatprep.subr.mxu0 0.0
      %1739 = vmatpush1.msra.mxu0 0.0
      %1740 = vmatprep.subr.mxu0 0.0
      %1741 = vmatpush1.msra.mxu0 0.0
      %1742 = vmatprep.subr.mxu0 0.0
      %1743 = vmatpush1.msra.mxu0 0.0
      %1744 = vmatprep.subr.mxu0 0.0
      %1745 = vmatpush1.msra.mxu0 0.0
      %1746 = vmatprep.subr.mxu0 0.0
      %1747 = vmatpush1.msra.mxu0 0.0
      %1748 = vmatprep.subr.mxu0 0.0
      %1749 = vmatpush1.msra.mxu0 0.0
      %1750 = vmatprep.subr.mxu0 0.0
      %1751 = vmatpush1.msra.mxu0 0.0
      %1752 = vmatprep.subr.mxu0 0.0
      %1753 = vmatpush1.msra.mxu0 0.0
      %1754 = vmatprep.subr.mxu0 0.0
      %1755 = vmatpush1.msra.mxu0 0.0
      %1756 = vmatprep.subr.mxu0 0.0
      %1757 = vmatpush1.msra.mxu0 0.0
      %1758 = vmatprep.subr.mxu0 0.0
      %1759 = vmatpush1.msra.mxu0 0.0
      %1760 = vmatprep.subr.mxu0 0.0
      %1761 = vmatpush1.msra.mxu0 0.0
      %1762 = vmatprep.subr.mxu0 0.0
      %1763 = vmatpush1.msra.mxu0 0.0
      %1764 = vmatprep.subr.mxu0 0.0
      %1765 = vmatpush1.msra.mxu0 0.0
      %1766 = vmatprep.subr.mxu0 0.0
      %1767 = vmatpush1.msra.mxu0 0.0
      %1768 = vmatprep.subr.mxu0 0.0
      %1769 = vmatpush1.msra.mxu0 0.0
      %1770 = vmatprep.subr.mxu0 0.0
      %1771 = vmatpush1.msra.mxu0 0.0
      %1772 = vmatprep.subr.mxu0 0.0
      %1773 = vmatpush1.msra.mxu0 0.0
      %1774 = vmatprep.subr.mxu0 0.0
      %1775 = vmatpush1.msra.mxu0 0.0
      %1776 = vmatprep.subr.mxu0 0.0
      %1777 = vmatpush1.msra.mxu0 0.0
      %1778 = vmatprep.subr.mxu0 0.0
      %1779 = vmatpush1.msra.mxu0 0.0
      %1780 = vmatprep.subr.mxu0 0.0
      %1781 = vmatpush1.msra.mxu0 0.0
      %1782 = vmatprep.subr.mxu0 0.0
      %1783 = vmatpush1.msra.mxu0 0.0
      %1784 = vmatprep.subr.mxu0 0.0
      %1785 = vmatpush1.msra.mxu0 0.0
      %1786 = vmatprep.subr.mxu0 0.0
      %1787 = vmatpush1.msra.mxu0 0.0
      %1788 = vmatprep.subr.mxu0 0.0
      %1789 = vmatpush1.msra.mxu0 0.0
      %1790 = vmatprep.subr.mxu0 0.0
      %1791 = vmatpush1.msra.mxu0 0.0
      %1792 = vmatprep.mubr.f32.mxu0 0.0
      %v1793 = vand.u32 %v347, 4294901760
      %v1794 = vsub.f32 %v347, %v1793
      %v1795 = vand.u32 %v1794, 4294901760
      %1796 = vmatmul.mubr.f32.gmra.mrb[0].mxu0 %v1795
      %v1797 = vpop.f32.mrb[0].mxu0
      %v1798 = vadd.f32 %v1716, %v1797
      %v1799 = vpop.f32.mrb[0].mxu0
      %v1800 = vadd.f32 %v1718, %v1799
      %1801 = vdwg.mxu0
      %v1802 = vand.u32 %v216, 4294901760
      %v1803 = vsub.f32 %v216, %v1802
      %v1804 = vand.u32 %v1803, 4294901760
      %1805 = vmatprep.subr.mxu0 %v1804
      %v1806 = vand.u32 %v215, 4294901760
      %v1807 = vsub.f32 %v215, %v1806
      %v1808 = vand.u32 %v1807, 4294901760
      %1809 = vmatpush1.msra.mxu0 %v1808
      %v1810 = vand.u32 %v248, 4294901760
      %v1811 = vsub.f32 %v248, %v1810
      %v1812 = vand.u32 %v1811, 4294901760
      %1813 = vmatprep.subr.mxu0 %v1812
      %v1814 = vand.u32 %v247, 4294901760
      %v1815 = vsub.f32 %v247, %v1814
      %v1816 = vand.u32 %v1815, 4294901760
      %1817 = vmatpush1.msra.mxu0 %v1816
      %v1818 = vand.u32 %v280, 4294901760
      %v1819 = vsub.f32 %v280, %v1818
      %v1820 = vand.u32 %v1819, 4294901760
      %1821 = vmatprep.subr.mxu0 %v1820
      %v1822 = vand.u32 %v279, 4294901760
      %v1823 = vsub.f32 %v279, %v1822
      %v1824 = vand.u32 %v1823, 4294901760
      %1825 = vmatpush1.msra.mxu0 %v1824
      %v1826 = vand.u32 %v312, 4294901760
      %v1827 = vsub.f32 %v312, %v1826
      %v1828 = vand.u32 %v1827, 4294901760
      %1829 = vmatprep.subr.mxu0 %v1828
      %v1830 = vand.u32 %v311, 4294901760
      %v1831 = vsub.f32 %v311, %v1830
      %v1832 = vand.u32 %v1831, 4294901760
      %1833 = vmatpush1.msra.mxu0 %v1832
      %1834 = vmatprep.subr.mxu0 0.0
      %1835 = vmatpush1.msra.mxu0 0.0
      %1836 = vmatprep.subr.mxu0 0.0
      %1837 = vmatpush1.msra.mxu0 0.0
      %1838 = vmatprep.subr.mxu0 0.0
      %1839 = vmatpush1.msra.mxu0 0.0
      %1840 = vmatprep.subr.mxu0 0.0
      %1841 = vmatpush1.msra.mxu0 0.0
      %1842 = vmatprep.subr.mxu0 0.0
      %1843 = vmatpush1.msra.mxu0 0.0
      %1844 = vmatprep.subr.mxu0 0.0
      %1845 = vmatpush1.msra.mxu0 0.0
      %1846 = vmatprep.subr.mxu0 0.0
      %1847 = vmatpush1.msra.mxu0 0.0
      %1848 = vmatprep.subr.mxu0 0.0
      %1849 = vmatpush1.msra.mxu0 0.0
      %1850 = vmatprep.subr.mxu0 0.0
      %1851 = vmatpush1.msra.mxu0 0.0
      %1852 = vmatprep.subr.mxu0 0.0
      %1853 = vmatpush1.msra.mxu0 0.0
      %1854 = vmatprep.subr.mxu0 0.0
      %1855 = vmatpush1.msra.mxu0 0.0
      %1856 = vmatprep.subr.mxu0 0.0
      %1857 = vmatpush1.msra.mxu0 0.0
      %1858 = vmatprep.subr.mxu0 0.0
      %1859 = vmatpush1.msra.mxu0 0.0
      %1860 = vmatprep.subr.mxu0 0.0
      %1861 = vmatpush1.msra.mxu0 0.0
      %1862 = vmatprep.subr.mxu0 0.0
      %1863 = vmatpush1.msra.mxu0 0.0
      %1864 = vmatprep.subr.mxu0 0.0
      %1865 = vmatpush1.msra.mxu0 0.0
      %1866 = vmatprep.subr.mxu0 0.0
      %1867 = vmatpush1.msra.mxu0 0.0
      %1868 = vmatprep.subr.mxu0 0.0
      %1869 = vmatpush1.msra.mxu0 0.0
      %1870 = vmatprep.subr.mxu0 0.0
      %1871 = vmatpush1.msra.mxu0 0.0
      %1872 = vmatprep.subr.mxu0 0.0
      %1873 = vmatpush1.msra.mxu0 0.0
      %1874 = vmatprep.subr.mxu0 0.0
      %1875 = vmatpush1.msra.mxu0 0.0
      %1876 = vmatprep.subr.mxu0 0.0
      %1877 = vmatpush1.msra.mxu0 0.0
      %1878 = vmatprep.subr.mxu0 0.0
      %1879 = vmatpush1.msra.mxu0 0.0
      %1880 = vmatprep.subr.mxu0 0.0
      %1881 = vmatpush1.msra.mxu0 0.0
      %1882 = vmatprep.subr.mxu0 0.0
      %1883 = vmatpush1.msra.mxu0 0.0
      %1884 = vmatprep.subr.mxu0 0.0
      %1885 = vmatpush1.msra.mxu0 0.0
      %1886 = vmatprep.subr.mxu0 0.0
      %1887 = vmatpush1.msra.mxu0 0.0
      %1888 = vmatprep.subr.mxu0 0.0
      %1889 = vmatpush1.msra.mxu0 0.0
      %1890 = vmatprep.mubr.f32.mxu0 0.0
      %v1891 = vand.u32 %v347, 4294901760
      %1892 = vmatmul.mubr.f32.gmra.mrb[0].mxu0 %v1891
      %v1893 = vpop.f32.mrb[0].mxu0
      %v1894 = vadd.f32 %v1798, %v1893
      %v1895 = vpop.f32.mrb[0].mxu0
      %v1896 = vadd.f32 %v1800, %v1895
      %1897 = vdwg.mxu0
      %v1898 = vand.u32 %v216, 4294901760
      %1899 = vmatprep.subr.mxu0 %v1898
      %v1900 = vand.u32 %v215, 4294901760
      %1901 = vmatpush1.msra.mxu0 %v1900
      %v1902 = vand.u32 %v248, 4294901760
      %1903 = vmatprep.subr.mxu0 %v1902
      %v1904 = vand.u32 %v247, 4294901760
      %1905 = vmatpush1.msra.mxu0 %v1904
      %v1906 = vand.u32 %v280, 4294901760
      %1907 = vmatprep.subr.mxu0 %v1906
      %v1908 = vand.u32 %v279, 4294901760
      %1909 = vmatpush1.msra.mxu0 %v1908
      %v1910 = vand.u32 %v312, 4294901760
      %1911 = vmatprep.subr.mxu0 %v1910
      %v1912 = vand.u32 %v311, 4294901760
      %1913 = vmatpush1.msra.mxu0 %v1912
      %1914 = vmatprep.subr.mxu0 0.0
      %1915 = vmatpush1.msra.mxu0 0.0
      %1916 = vmatprep.subr.mxu0 0.0
      %1917 = vmatpush1.msra.mxu0 0.0
      %1918 = vmatprep.subr.mxu0 0.0
      %1919 = vmatpush1.msra.mxu0 0.0
      %1920 = vmatprep.subr.mxu0 0.0
      %1921 = vmatpush1.msra.mxu0 0.0
      %1922 = vmatprep.subr.mxu0 0.0
      %1923 = vmatpush1.msra.mxu0 0.0
      %1924 = vmatprep.subr.mxu0 0.0
      %1925 = vmatpush1.msra.mxu0 0.0
      %1926 = vmatprep.subr.mxu0 0.0
      %1927 = vmatpush1.msra.mxu0 0.0
      %1928 = vmatprep.subr.mxu0 0.0
      %1929 = vmatpush1.msra.mxu0 0.0
      %1930 = vmatprep.subr.mxu0 0.0
      %1931 = vmatpush1.msra.mxu0 0.0
      %1932 = vmatprep.subr.mxu0 0.0
      %1933 = vmatpush1.msra.mxu0 0.0
      %1934 = vmatprep.subr.mxu0 0.0
      %1935 = vmatpush1.msra.mxu0 0.0
      %1936 = vmatprep.subr.mxu0 0.0
      %1937 = vmatpush1.msra.mxu0 0.0
      %1938 = vmatprep.subr.mxu0 0.0
      %1939 = vmatpush1.msra.mxu0 0.0
      %1940 = vmatprep.subr.mxu0 0.0
      %1941 = vmatpush1.msra.mxu0 0.0
      %1942 = vmatprep.subr.mxu0 0.0
      %1943 = vmatpush1.msra.mxu0 0.0
      %1944 = vmatprep.subr.mxu0 0.0
      %1945 = vmatpush1.msra.mxu0 0.0
      %1946 = vmatprep.subr.mxu0 0.0
      %1947 = vmatpush1.msra.mxu0 0.0
      %1948 = vmatprep.subr.mxu0 0.0
      %1949 = vmatpush1.msra.mxu0 0.0
      %1950 = vmatprep.subr.mxu0 0.0
      %1951 = vmatpush1.msra.mxu0 0.0
      %1952 = vmatprep.subr.mxu0 0.0
      %1953 = vmatpush1.msra.mxu0 0.0
      %1954 = vmatprep.subr.mxu0 0.0
      %1955 = vmatpush1.msra.mxu0 0.0
      %1956 = vmatprep.subr.mxu0 0.0
      %1957 = vmatpush1.msra.mxu0 0.0
      %1958 = vmatprep.subr.mxu0 0.0
      %1959 = vmatpush1.msra.mxu0 0.0
      %1960 = vmatprep.subr.mxu0 0.0
      %1961 = vmatpush1.msra.mxu0 0.0
      %1962 = vmatprep.subr.mxu0 0.0
      %1963 = vmatpush1.msra.mxu0 0.0
      %1964 = vmatprep.subr.mxu0 0.0
      %1965 = vmatpush1.msra.mxu0 0.0
      %1966 = vmatprep.subr.mxu0 0.0
      %1967 = vmatpush1.msra.mxu0 0.0
      %1968 = vmatprep.subr.mxu0 0.0
      %1969 = vmatpush1.msra.mxu0 0.0
      %1970 = vmatprep.mubr.f32.mxu0 0.0
      %v1971 = vand.u32 %v347, 4294901760
      %1972 = vmatmul.mubr.f32.gmra.mrb[0].mxu0 %v1971
      %v1973 = vpop.f32.mrb[0].mxu0
      %v1974 = vadd.f32 %v1894, %v1973
      %v1975 = vpop.f32.mrb[0].mxu0
      %v1976 = vadd.f32 %v1896, %v1975
      %1977 = vdwg.mxu0
      %v1978 = vand.u32 %v218, 4294901760
      %1979 = vmatprep.subr.mxu0 %v1978
      %v1980 = vand.u32 %v217, 4294901760
      %1981 = vmatpush1.msra.mxu0 %v1980
      %v1982 = vand.u32 %v250, 4294901760
      %1983 = vmatprep.subr.mxu0 %v1982
      %v1984 = vand.u32 %v249, 4294901760
      %1985 = vmatpush1.msra.mxu0 %v1984
      %v1986 = vand.u32 %v282, 4294901760
      %1987 = vmatprep.subr.mxu0 %v1986
      %v1988 = vand.u32 %v281, 4294901760
      %1989 = vmatpush1.msra.mxu0 %v1988
      %v1990 = vand.u32 %v314, 4294901760
      %1991 = vmatprep.subr.mxu0 %v1990
      %v1992 = vand.u32 %v313, 4294901760
      %1993 = vmatpush1.msra.mxu0 %v1992
      %1994 = vmatprep.subr.mxu0 0.0
      %1995 = vmatpush1.msra.mxu0 0.0
      %1996 = vmatprep.subr.mxu0 0.0
      %1997 = vmatpush1.msra.mxu0 0.0
      %1998 = vmatprep.subr.mxu0 0.0
      %1999 = vmatpush1.msra.mxu0 0.0
      %2000 = vmatprep.subr.mxu0 0.0
      %2001 = vmatpush1.msra.mxu0 0.0
      %2002 = vmatprep.subr.mxu0 0.0
      %2003 = vmatpush1.msra.mxu0 0.0
      %2004 = vmatprep.subr.mxu0 0.0
      %2005 = vmatpush1.msra.mxu0 0.0
      %2006 = vmatprep.subr.mxu0 0.0
      %2007 = vmatpush1.msra.mxu0 0.0
      %2008 = vmatprep.subr.mxu0 0.0
      %2009 = vmatpush1.msra.mxu0 0.0
      %2010 = vmatprep.subr.mxu0 0.0
      %2011 = vmatpush1.msra.mxu0 0.0
      %2012 = vmatprep.subr.mxu0 0.0
      %2013 = vmatpush1.msra.mxu0 0.0
      %2014 = vmatprep.subr.mxu0 0.0
      %2015 = vmatpush1.msra.mxu0 0.0
      %2016 = vmatprep.subr.mxu0 0.0
      %2017 = vmatpush1.msra.mxu0 0.0
      %2018 = vmatprep.subr.mxu0 0.0
      %2019 = vmatpush1.msra.mxu0 0.0
      %2020 = vmatprep.subr.mxu0 0.0
      %2021 = vmatpush1.msra.mxu0 0.0
      %2022 = vmatprep.subr.mxu0 0.0
      %2023 = vmatpush1.msra.mxu0 0.0
      %2024 = vmatprep.subr.mxu0 0.0
      %2025 = vmatpush1.msra.mxu0 0.0
      %2026 = vmatprep.subr.mxu0 0.0
      %2027 = vmatpush1.msra.mxu0 0.0
      %2028 = vmatprep.subr.mxu0 0.0
      %2029 = vmatpush1.msra.mxu0 0.0
      %2030 = vmatprep.subr.mxu0 0.0
      %2031 = vmatpush1.msra.mxu0 0.0
      %2032 = vmatprep.subr.mxu0 0.0
      %2033 = vmatpush1.msra.mxu0 0.0
      %2034 = vmatprep.subr.mxu0 0.0
      %2035 = vmatpush1.msra.mxu0 0.0
      %2036 = vmatprep.subr.mxu0 0.0
      %2037 = vmatpush1.msra.mxu0 0.0
      %2038 = vmatprep.subr.mxu0 0.0
      %2039 = vmatpush1.msra.mxu0 0.0
      %2040 = vmatprep.subr.mxu0 0.0
      %2041 = vmatpush1.msra.mxu0 0.0
      %2042 = vmatprep.subr.mxu0 0.0
      %2043 = vmatpush1.msra.mxu0 0.0
      %2044 = vmatprep.subr.mxu0 0.0
      %2045 = vmatpush1.msra.mxu0 0.0
      %2046 = vmatprep.subr.mxu0 0.0
      %2047 = vmatpush1.msra.mxu0 0.0
      %2048 = vmatprep.subr.mxu0 0.0
      %2049 = vmatpush1.msra.mxu0 0.0
      %2050 = vmatprep.mubr.f32.mxu0 0.0
      %v2051 = vand.u32 %v347, 4294901760
      %v2052 = vsub.f32 %v347, %v2051
      %v2053 = vand.u32 %v2052, 4294901760
      %v2054 = vsub.f32 %v2052, %v2053
      %v2055 = vand.u32 %v2054, 4294901760
      %2056 = vmatmul.mubr.f32.gmra.mrb[0].mxu0 %v2055
      %v2057 = vpop.f32.mrb[0].mxu0
      %v2058 = vadd.f32 %v343, %v2057
      %v2059 = vpop.f32.mrb[0].mxu0
      %v2060 = vadd.f32 %v343, %v2059
      %2061 = vdwg.mxu0
      %v2062 = vand.u32 %v218, 4294901760
      %v2063 = vsub.f32 %v218, %v2062
      %v2064 = vand.u32 %v2063, 4294901760
      %v2065 = vsub.f32 %v2063, %v2064
      %v2066 = vand.u32 %v2065, 4294901760
      %2067 = vmatprep.subr.mxu0 %v2066
      %v2068 = vand.u32 %v217, 4294901760
      %v2069 = vsub.f32 %v217, %v2068
      %v2070 = vand.u32 %v2069, 4294901760
      %v2071 = vsub.f32 %v2069, %v2070
      %v2072 = vand.u32 %v2071, 4294901760
      %2073 = vmatpush1.msra.mxu0 %v2072
      %v2074 = vand.u32 %v250, 4294901760
      %v2075 = vsub.f32 %v250, %v2074
      %v2076 = vand.u32 %v2075, 4294901760
      %v2077 = vsub.f32 %v2075, %v2076
      %v2078 = vand.u32 %v2077, 4294901760
      %2079 = vmatprep.subr.mxu0 %v2078
      %v2080 = vand.u32 %v249, 4294901760
      %v2081 = vsub.f32 %v249, %v2080
      %v2082 = vand.u32 %v2081, 4294901760
      %v2083 = vsub.f32 %v2081, %v2082
      %v2084 = vand.u32 %v2083, 4294901760
      %2085 = vmatpush1.msra.mxu0 %v2084
      %v2086 = vand.u32 %v282, 4294901760
      %v2087 = vsub.f32 %v282, %v2086
      %v2088 = vand.u32 %v2087, 4294901760
      %v2089 = vsub.f32 %v2087, %v2088
      %v2090 = vand.u32 %v2089, 4294901760
      %2091 = vmatprep.subr.mxu0 %v2090
      %v2092 = vand.u32 %v281, 4294901760
      %v2093 = vsub.f32 %v281, %v2092
      %v2094 = vand.u32 %v2093, 4294901760
      %v2095 = vsub.f32 %v2093, %v2094
      %v2096 = vand.u32 %v2095, 4294901760
      %2097 = vmatpush1.msra.mxu0 %v2096
      %v2098 = vand.u32 %v314, 4294901760
      %v2099 = vsub.f32 %v314, %v2098
      %v2100 = vand.u32 %v2099, 4294901760
      %v2101 = vsub.f32 %v2099, %v2100
      %v2102 = vand.u32 %v2101, 4294901760
      %2103 = vmatprep.subr.mxu0 %v2102
      %v2104 = vand.u32 %v313, 4294901760
      %v2105 = vsub.f32 %v313, %v2104
      %v2106 = vand.u32 %v2105, 4294901760
      %v2107 = vsub.f32 %v2105, %v2106
      %v2108 = vand.u32 %v2107, 4294901760
      %2109 = vmatpush1.msra.mxu0 %v2108
      %2110 = vmatprep.subr.mxu0 0.0
      %2111 = vmatpush1.msra.mxu0 0.0
      %2112 = vmatprep.subr.mxu0 0.0
      %2113 = vmatpush1.msra.mxu0 0.0
      %2114 = vmatprep.subr.mxu0 0.0
      %2115 = vmatpush1.msra.mxu0 0.0
      %2116 = vmatprep.subr.mxu0 0.0
      %2117 = vmatpush1.msra.mxu0 0.0
      %2118 = vmatprep.subr.mxu0 0.0
      %2119 = vmatpush1.msra.mxu0 0.0
      %2120 = vmatprep.subr.mxu0 0.0
      %2121 = vmatpush1.msra.mxu0 0.0
      %2122 = vmatprep.subr.mxu0 0.0
      %2123 = vmatpush1.msra.mxu0 0.0
      %2124 = vmatprep.subr.mxu0 0.0
      %2125 = vmatpush1.msra.mxu0 0.0
      %2126 = vmatprep.subr.mxu0 0.0
      %2127 = vmatpush1.msra.mxu0 0.0
      %2128 = vmatprep.subr.mxu0 0.0
      %2129 = vmatpush1.msra.mxu0 0.0
      %2130 = vmatprep.subr.mxu0 0.0
      %2131 = vmatpush1.msra.mxu0 0.0
      %2132 = vmatprep.subr.mxu0 0.0
      %2133 = vmatpush1.msra.mxu0 0.0
      %2134 = vmatprep.subr.mxu0 0.0
      %2135 = vmatpush1.msra.mxu0 0.0
      %2136 = vmatprep.subr.mxu0 0.0
      %2137 = vmatpush1.msra.mxu0 0.0
      %2138 = vmatprep.subr.mxu0 0.0
      %2139 = vmatpush1.msra.mxu0 0.0
      %2140 = vmatprep.subr.mxu0 0.0
      %2141 = vmatpush1.msra.mxu0 0.0
      %2142 = vmatprep.subr.mxu0 0.0
      %2143 = vmatpush1.msra.mxu0 0.0
      %2144 = vmatprep.subr.mxu0 0.0
      %2145 = vmatpush1.msra.mxu0 0.0
      %2146 = vmatprep.subr.mxu0 0.0
      %2147 = vmatpush1.msra.mxu0 0.0
      %2148 = vmatprep.subr.mxu0 0.0
      %2149 = vmatpush1.msra.mxu0 0.0
      %2150 = vmatprep.subr.mxu0 0.0
      %2151 = vmatpush1.msra.mxu0 0.0
      %2152 = vmatprep.subr.mxu0 0.0
      %2153 = vmatpush1.msra.mxu0 0.0
      %2154 = vmatprep.subr.mxu0 0.0
      %2155 = vmatpush1.msra.mxu0 0.0
      %2156 = vmatprep.subr.mxu0 0.0
      %2157 = vmatpush1.msra.mxu0 0.0
      %2158 = vmatprep.subr.mxu0 0.0
      %2159 = vmatpush1.msra.mxu0 0.0
      %2160 = vmatprep.subr.mxu0 0.0
      %2161 = vmatpush1.msra.mxu0 0.0
      %2162 = vmatprep.subr.mxu0 0.0
      %2163 = vmatpush1.msra.mxu0 0.0
      %2164 = vmatprep.subr.mxu0 0.0
      %2165 = vmatpush1.msra.mxu0 0.0
      %2166 = vmatprep.mubr.f32.mxu0 0.0
      %v2167 = vand.u32 %v347, 4294901760
      %2168 = vmatmul.mubr.f32.gmra.mrb[0].mxu0 %v2167
      %v2169 = vpop.f32.mrb[0].mxu0
      %v2170 = vadd.f32 %v2058, %v2169
      %v2171 = vpop.f32.mrb[0].mxu0
      %v2172 = vadd.f32 %v2060, %v2171
      %2173 = vdwg.mxu0
      %v2174 = vand.u32 %v218, 4294901760
      %v2175 = vsub.f32 %v218, %v2174
      %2176 = vmatprep.subr.mxu0 %v2175
      %v2177 = vand.u32 %v217, 4294901760
      %v2178 = vsub.f32 %v217, %v2177
      %2179 = vmatpush1.msra.mxu0 %v2178
      %v2180 = vand.u32 %v250, 4294901760
      %v2181 = vsub.f32 %v250, %v2180
      %2182 = vmatprep.subr.mxu0 %v2181
      %v2183 = vand.u32 %v249, 4294901760
      %v2184 = vsub.f32 %v249, %v2183
      %2185 = vmatpush1.msra.mxu0 %v2184
      %v2186 = vand.u32 %v282, 4294901760
      %v2187 = vsub.f32 %v282, %v2186
      %2188 = vmatprep.subr.mxu0 %v2187
      %v2189 = vand.u32 %v281, 4294901760
      %v2190 = vsub.f32 %v281, %v2189
      %2191 = vmatpush1.msra.mxu0 %v2190
      %v2192 = vand.u32 %v314, 4294901760
      %v2193 = vsub.f32 %v314, %v2192
      %2194 = vmatprep.subr.mxu0 %v2193
      %v2195 = vand.u32 %v313, 4294901760
      %v2196 = vsub.f32 %v313, %v2195
      %2197 = vmatpush1.msra.mxu0 %v2196
      %2198 = vmatprep.subr.mxu0 0.0
      %2199 = vmatpush1.msra.mxu0 0.0
      %2200 = vmatprep.subr.mxu0 0.0
      %2201 = vmatpush1.msra.mxu0 0.0
      %2202 = vmatprep.subr.mxu0 0.0
      %2203 = vmatpush1.msra.mxu0 0.0
      %2204 = vmatprep.subr.mxu0 0.0
      %2205 = vmatpush1.msra.mxu0 0.0
      %2206 = vmatprep.subr.mxu0 0.0
      %2207 = vmatpush1.msra.mxu0 0.0
      %2208 = vmatprep.subr.mxu0 0.0
      %2209 = vmatpush1.msra.mxu0 0.0
      %2210 = vmatprep.subr.mxu0 0.0
      %2211 = vmatpush1.msra.mxu0 0.0
      %2212 = vmatprep.subr.mxu0 0.0
      %2213 = vmatpush1.msra.mxu0 0.0
      %2214 = vmatprep.subr.mxu0 0.0
      %2215 = vmatpush1.msra.mxu0 0.0
      %2216 = vmatprep.subr.mxu0 0.0
      %2217 = vmatpush1.msra.mxu0 0.0
      %2218 = vmatprep.subr.mxu0 0.0
      %2219 = vmatpush1.msra.mxu0 0.0
      %2220 = vmatprep.subr.mxu0 0.0
      %2221 = vmatpush1.msra.mxu0 0.0
      %2222 = vmatprep.subr.mxu0 0.0
      %2223 = vmatpush1.msra.mxu0 0.0
      %2224 = vmatprep.subr.mxu0 0.0
      %2225 = vmatpush1.msra.mxu0 0.0
      %2226 = vmatprep.subr.mxu0 0.0
      %2227 = vmatpush1.msra.mxu0 0.0
      %2228 = vmatprep.subr.mxu0 0.0
      %2229 = vmatpush1.msra.mxu0 0.0
      %2230 = vmatprep.subr.mxu0 0.0
      %2231 = vmatpush1.msra.mxu0 0.0
      %2232 = vmatprep.subr.mxu0 0.0
      %2233 = vmatpush1.msra.mxu0 0.0
      %2234 = vmatprep.subr.mxu0 0.0
      %2235 = vmatpush1.msra.mxu0 0.0
      %2236 = vmatprep.subr.mxu0 0.0
      %2237 = vmatpush1.msra.mxu0 0.0
      %2238 = vmatprep.subr.mxu0 0.0
      %2239 = vmatpush1.msra.mxu0 0.0
      %2240 = vmatprep.subr.mxu0 0.0
      %2241 = vmatpush1.msra.mxu0 0.0
      %2242 = vmatprep.subr.mxu0 0.0
      %2243 = vmatpush1.msra.mxu0 0.0
      %2244 = vmatprep.subr.mxu0 0.0
      %2245 = vmatpush1.msra.mxu0 0.0
      %2246 = vmatprep.subr.mxu0 0.0
      %2247 = vmatpush1.msra.mxu0 0.0
      %2248 = vmatprep.subr.mxu0 0.0
      %2249 = vmatpush1.msra.mxu0 0.0
      %2250 = vmatprep.subr.mxu0 0.0
      %2251 = vmatpush1.msra.mxu0 0.0
      %2252 = vmatprep.subr.mxu0 0.0
      %2253 = vmatpush1.msra.mxu0 0.0
      %2254 = vmatprep.mubr.f32.mxu0 0.0
      %v2255 = vand.u32 %v347, 4294901760
      %v2256 = vsub.f32 %v347, %v2255
      %2257 = vmatmul.mubr.f32.gmra.mrb[0].mxu0 %v2256
      %v2258 = vpop.f32.mrb[0].mxu0
      %v2259 = vadd.f32 %v2170, %v2258
      %v2260 = vpop.f32.mrb[0].mxu0
      %v2261 = vadd.f32 %v2172, %v2260
      %2262 = vdwg.mxu0
      %v2263 = vand.u32 %v218, 4294901760
      %2264 = vmatprep.subr.mxu0 %v2263
      %v2265 = vand.u32 %v217, 4294901760
      %2266 = vmatpush1.msra.mxu0 %v2265
      %v2267 = vand.u32 %v250, 4294901760
      %2268 = vmatprep.subr.mxu0 %v2267
      %v2269 = vand.u32 %v249, 4294901760
      %2270 = vmatpush1.msra.mxu0 %v2269
      %v2271 = vand.u32 %v282, 4294901760
      %2272 = vmatprep.subr.mxu0 %v2271
      %v2273 = vand.u32 %v281, 4294901760
      %2274 = vmatpush1.msra.mxu0 %v2273
      %v2275 = vand.u32 %v314, 4294901760
      %2276 = vmatprep.subr.mxu0 %v2275
      %v2277 = vand.u32 %v313, 4294901760
      %2278 = vmatpush1.msra.mxu0 %v2277
      %2279 = vmatprep.subr.mxu0 0.0
      %2280 = vmatpush1.msra.mxu0 0.0
      %2281 = vmatprep.subr.mxu0 0.0
      %2282 = vmatpush1.msra.mxu0 0.0
      %2283 = vmatprep.subr.mxu0 0.0
      %2284 = vmatpush1.msra.mxu0 0.0
      %2285 = vmatprep.subr.mxu0 0.0
      %2286 = vmatpush1.msra.mxu0 0.0
      %2287 = vmatprep.subr.mxu0 0.0
      %2288 = vmatpush1.msra.mxu0 0.0
      %2289 = vmatprep.subr.mxu0 0.0
      %2290 = vmatpush1.msra.mxu0 0.0
      %2291 = vmatprep.subr.mxu0 0.0
      %2292 = vmatpush1.msra.mxu0 0.0
      %2293 = vmatprep.subr.mxu0 0.0
      %2294 = vmatpush1.msra.mxu0 0.0
      %2295 = vmatprep.subr.mxu0 0.0
      %2296 = vmatpush1.msra.mxu0 0.0
      %2297 = vmatprep.subr.mxu0 0.0
      %2298 = vmatpush1.msra.mxu0 0.0
      %2299 = vmatprep.subr.mxu0 0.0
      %2300 = vmatpush1.msra.mxu0 0.0
      %2301 = vmatprep.subr.mxu0 0.0
      %2302 = vmatpush1.msra.mxu0 0.0
      %2303 = vmatprep.subr.mxu0 0.0
      %2304 = vmatpush1.msra.mxu0 0.0
      %2305 = vmatprep.subr.mxu0 0.0
      %2306 = vmatpush1.msra.mxu0 0.0
      %2307 = vmatprep.subr.mxu0 0.0
      %2308 = vmatpush1.msra.mxu0 0.0
      %2309 = vmatprep.subr.mxu0 0.0
      %2310 = vmatpush1.msra.mxu0 0.0
      %2311 = vmatprep.subr.mxu0 0.0
      %2312 = vmatpush1.msra.mxu0 0.0
      %2313 = vmatprep.subr.mxu0 0.0
      %2314 = vmatpush1.msra.mxu0 0.0
      %2315 = vmatprep.subr.mxu0 0.0
      %2316 = vmatpush1.msra.mxu0 0.0
      %2317 = vmatprep.subr.mxu0 0.0
      %2318 = vmatpush1.msra.mxu0 0.0
      %2319 = vmatprep.subr.mxu0 0.0
      %2320 = vmatpush1.msra.mxu0 0.0
      %2321 = vmatprep.subr.mxu0 0.0
      %2322 = vmatpush1.msra.mxu0 0.0
      %2323 = vmatprep.subr.mxu0 0.0
      %2324 = vmatpush1.msra.mxu0 0.0
      %2325 = vmatprep.subr.mxu0 0.0
      %2326 = vmatpush1.msra.mxu0 0.0
      %2327 = vmatprep.subr.mxu0 0.0
      %2328 = vmatpush1.msra.mxu0 0.0
      %2329 = vmatprep.subr.mxu0 0.0
      %2330 = vmatpush1.msra.mxu0 0.0
      %2331 = vmatprep.subr.mxu0 0.0
      %2332 = vmatpush1.msra.mxu0 0.0
      %2333 = vmatprep.subr.mxu0 0.0
      %2334 = vmatpush1.msra.mxu0 0.0
      %2335 = vmatprep.mubr.f32.mxu0 0.0
      %v2336 = vand.u32 %v347, 4294901760
      %v2337 = vsub.f32 %v347, %v2336
      %v2338 = vand.u32 %v2337, 4294901760
      %2339 = vmatmul.mubr.f32.gmra.mrb[0].mxu0 %v2338
      %v2340 = vpop.f32.mrb[0].mxu0
      %v2341 = vadd.f32 %v2259, %v2340
      %v2342 = vpop.f32.mrb[0].mxu0
      %v2343 = vadd.f32 %v2261, %v2342
      %2344 = vdwg.mxu0
      %v2345 = vand.u32 %v218, 4294901760
      %v2346 = vsub.f32 %v218, %v2345
      %v2347 = vand.u32 %v2346, 4294901760
      %2348 = vmatprep.subr.mxu0 %v2347
      %v2349 = vand.u32 %v217, 4294901760
      %v2350 = vsub.f32 %v217, %v2349
      %v2351 = vand.u32 %v2350, 4294901760
      %2352 = vmatpush1.msra.mxu0 %v2351
      %v2353 = vand.u32 %v250, 4294901760
      %v2354 = vsub.f32 %v250, %v2353
      %v2355 = vand.u32 %v2354, 4294901760
      %2356 = vmatprep.subr.mxu0 %v2355
      %v2357 = vand.u32 %v249, 4294901760
      %v2358 = vsub.f32 %v249, %v2357
      %v2359 = vand.u32 %v2358, 4294901760
      %2360 = vmatpush1.msra.mxu0 %v2359
      %v2361 = vand.u32 %v282, 4294901760
      %v2362 = vsub.f32 %v282, %v2361
      %v2363 = vand.u32 %v2362, 4294901760
      %2364 = vmatprep.subr.mxu0 %v2363
      %v2365 = vand.u32 %v281, 4294901760
      %v2366 = vsub.f32 %v281, %v2365
      %v2367 = vand.u32 %v2366, 4294901760
      %2368 = vmatpush1.msra.mxu0 %v2367
      %v2369 = vand.u32 %v314, 4294901760
      %v2370 = vsub.f32 %v314, %v2369
      %v2371 = vand.u32 %v2370, 4294901760
      %2372 = vmatprep.subr.mxu0 %v2371
      %v2373 = vand.u32 %v313, 4294901760
      %v2374 = vsub.f32 %v313, %v2373
      %v2375 = vand.u32 %v2374, 4294901760
      %2376 = vmatpush1.msra.mxu0 %v2375
      %2377 = vmatprep.subr.mxu0 0.0
      %2378 = vmatpush1.msra.mxu0 0.0
      %2379 = vmatprep.subr.mxu0 0.0
      %2380 = vmatpush1.msra.mxu0 0.0
      %2381 = vmatprep.subr.mxu0 0.0
      %2382 = vmatpush1.msra.mxu0 0.0
      %2383 = vmatprep.subr.mxu0 0.0
      %2384 = vmatpush1.msra.mxu0 0.0
      %2385 = vmatprep.subr.mxu0 0.0
      %2386 = vmatpush1.msra.mxu0 0.0
      %2387 = vmatprep.subr.mxu0 0.0
      %2388 = vmatpush1.msra.mxu0 0.0
      %2389 = vmatprep.subr.mxu0 0.0
      %2390 = vmatpush1.msra.mxu0 0.0
      %2391 = vmatprep.subr.mxu0 0.0
      %2392 = vmatpush1.msra.mxu0 0.0
      %2393 = vmatprep.subr.mxu0 0.0
      %2394 = vmatpush1.msra.mxu0 0.0
      %2395 = vmatprep.subr.mxu0 0.0
      %2396 = vmatpush1.msra.mxu0 0.0
      %2397 = vmatprep.subr.mxu0 0.0
      %2398 = vmatpush1.msra.mxu0 0.0
      %2399 = vmatprep.subr.mxu0 0.0
      %2400 = vmatpush1.msra.mxu0 0.0
      %2401 = vmatprep.subr.mxu0 0.0
      %2402 = vmatpush1.msra.mxu0 0.0
      %2403 = vmatprep.subr.mxu0 0.0
      %2404 = vmatpush1.msra.mxu0 0.0
      %2405 = vmatprep.subr.mxu0 0.0
      %2406 = vmatpush1.msra.mxu0 0.0
      %2407 = vmatprep.subr.mxu0 0.0
      %2408 = vmatpush1.msra.mxu0 0.0
      %2409 = vmatprep.subr.mxu0 0.0
      %2410 = vmatpush1.msra.mxu0 0.0
      %2411 = vmatprep.subr.mxu0 0.0
      %2412 = vmatpush1.msra.mxu0 0.0
      %2413 = vmatprep.subr.mxu0 0.0
      %2414 = vmatpush1.msra.mxu0 0.0
      %2415 = vmatprep.subr.mxu0 0.0
      %2416 = vmatpush1.msra.mxu0 0.0
      %2417 = vmatprep.subr.mxu0 0.0
      %2418 = vmatpush1.msra.mxu0 0.0
      %2419 = vmatprep.subr.mxu0 0.0
      %2420 = vmatpush1.msra.mxu0 0.0
      %2421 = vmatprep.subr.mxu0 0.0
      %2422 = vmatpush1.msra.mxu0 0.0
      %2423 = vmatprep.subr.mxu0 0.0
      %2424 = vmatpush1.msra.mxu0 0.0
      %2425 = vmatprep.subr.mxu0 0.0
      %2426 = vmatpush1.msra.mxu0 0.0
      %2427 = vmatprep.subr.mxu0 0.0
      %2428 = vmatpush1.msra.mxu0 0.0
      %2429 = vmatprep.subr.mxu0 0.0
      %2430 = vmatpush1.msra.mxu0 0.0
      %2431 = vmatprep.subr.mxu0 0.0
      %2432 = vmatpush1.msra.mxu0 0.0
      %2433 = vmatprep.mubr.f32.mxu0 0.0
      %v2434 = vand.u32 %v347, 4294901760
      %2435 = vmatmul.mubr.f32.gmra.mrb[0].mxu0 %v2434
      %v2436 = vpop.f32.mrb[0].mxu0
      %v2437 = vadd.f32 %v2341, %v2436
      %v2438 = vpop.f32.mrb[0].mxu0
      %v2439 = vadd.f32 %v2343, %v2438
      %2440 = vdwg.mxu0
      %v2441 = vand.u32 %v218, 4294901760
      %2442 = vmatprep.subr.mxu0 %v2441
      %v2443 = vand.u32 %v217, 4294901760
      %2444 = vmatpush1.msra.mxu0 %v2443
      %v2445 = vand.u32 %v250, 4294901760
      %2446 = vmatprep.subr.mxu0 %v2445
      %v2447 = vand.u32 %v249, 4294901760
      %2448 = vmatpush1.msra.mxu0 %v2447
      %v2449 = vand.u32 %v282, 4294901760
      %2450 = vmatprep.subr.mxu0 %v2449
      %v2451 = vand.u32 %v281, 4294901760
      %2452 = vmatpush1.msra.mxu0 %v2451
      %v2453 = vand.u32 %v314, 4294901760
      %2454 = vmatprep.subr.mxu0 %v2453
      %v2455 = vand.u32 %v313, 4294901760
      %2456 = vmatpush1.msra.mxu0 %v2455
      %2457 = vmatprep.subr.mxu0 0.0
      %2458 = vmatpush1.msra.mxu0 0.0
      %2459 = vmatprep.subr.mxu0 0.0
      %2460 = vmatpush1.msra.mxu0 0.0
      %2461 = vmatprep.subr.mxu0 0.0
      %2462 = vmatpush1.msra.mxu0 0.0
      %2463 = vmatprep.subr.mxu0 0.0
      %2464 = vmatpush1.msra.mxu0 0.0
      %2465 = vmatprep.subr.mxu0 0.0
      %2466 = vmatpush1.msra.mxu0 0.0
      %2467 = vmatprep.subr.mxu0 0.0
      %2468 = vmatpush1.msra.mxu0 0.0
      %2469 = vmatprep.subr.mxu0 0.0
      %2470 = vmatpush1.msra.mxu0 0.0
      %2471 = vmatprep.subr.mxu0 0.0
      %2472 = vmatpush1.msra.mxu0 0.0
      %2473 = vmatprep.subr.mxu0 0.0
      %2474 = vmatpush1.msra.mxu0 0.0
      %2475 = vmatprep.subr.mxu0 0.0
      %2476 = vmatpush1.msra.mxu0 0.0
      %2477 = vmatprep.subr.mxu0 0.0
      %2478 = vmatpush1.msra.mxu0 0.0
      %2479 = vmatprep.subr.mxu0 0.0
      %2480 = vmatpush1.msra.mxu0 0.0
      %2481 = vmatprep.subr.mxu0 0.0
      %2482 = vmatpush1.msra.mxu0 0.0
      %2483 = vmatprep.subr.mxu0 0.0
      %2484 = vmatpush1.msra.mxu0 0.0
      %2485 = vmatprep.subr.mxu0 0.0
      %2486 = vmatpush1.msra.mxu0 0.0
      %2487 = vmatprep.subr.mxu0 0.0
      %2488 = vmatpush1.msra.mxu0 0.0
      %2489 = vmatprep.subr.mxu0 0.0
      %2490 = vmatpush1.msra.mxu0 0.0
      %2491 = vmatprep.subr.mxu0 0.0
      %2492 = vmatpush1.msra.mxu0 0.0
      %2493 = vmatprep.subr.mxu0 0.0
      %2494 = vmatpush1.msra.mxu0 0.0
      %2495 = vmatprep.subr.mxu0 0.0
      %2496 = vmatpush1.msra.mxu0 0.0
      %2497 = vmatprep.subr.mxu0 0.0
      %2498 = vmatpush1.msra.mxu0 0.0
      %2499 = vmatprep.subr.mxu0 0.0
      %2500 = vmatpush1.msra.mxu0 0.0
      %2501 = vmatprep.subr.mxu0 0.0
      %2502 = vmatpush1.msra.mxu0 0.0
      %2503 = vmatprep.subr.mxu0 0.0
      %2504 = vmatpush1.msra.mxu0 0.0
      %2505 = vmatprep.subr.mxu0 0.0
      %2506 = vmatpush1.msra.mxu0 0.0
      %2507 = vmatprep.subr.mxu0 0.0
      %2508 = vmatpush1.msra.mxu0 0.0
      %2509 = vmatprep.subr.mxu0 0.0
      %2510 = vmatpush1.msra.mxu0 0.0
      %2511 = vmatprep.subr.mxu0 0.0
      %2512 = vmatpush1.msra.mxu0 0.0
      %2513 = vmatprep.mubr.f32.mxu0 0.0
      %v2514 = vand.u32 %v347, 4294901760
      %2515 = vmatmul.mubr.f32.gmra.mrb[0].mxu0 %v2514
      %v2516 = vpop.f32.mrb[0].mxu0
      %v2517 = vadd.f32 %v2437, %v2516
      %v2518 = vpop.f32.mrb[0].mxu0
      %v2519 = vadd.f32 %v2439, %v2518
      %2520 = vdwg.mxu0
      %v2521 = vand.u32 %v220, 4294901760
      %2522 = vmatprep.subr.mxu0 %v2521
      %v2523 = vand.u32 %v219, 4294901760
      %2524 = vmatpush1.msra.mxu0 %v2523
      %v2525 = vand.u32 %v252, 4294901760
      %2526 = vmatprep.subr.mxu0 %v2525
      %v2527 = vand.u32 %v251, 4294901760
      %2528 = vmatpush1.msra.mxu0 %v2527
      %v2529 = vand.u32 %v284, 4294901760
      %2530 = vmatprep.subr.mxu0 %v2529
      %v2531 = vand.u32 %v283, 4294901760
      %2532 = vmatpush1.msra.mxu0 %v2531
      %v2533 = vand.u32 %v316, 4294901760
      %2534 = vmatprep.subr.mxu0 %v2533
      %v2535 = vand.u32 %v315, 4294901760
      %2536 = vmatpush1.msra.mxu0 %v2535
      %2537 = vmatprep.subr.mxu0 0.0
      %2538 = vmatpush1.msra.mxu0 0.0
      %2539 = vmatprep.subr.mxu0 0.0
      %2540 = vmatpush1.msra.mxu0 0.0
      %2541 = vmatprep.subr.mxu0 0.0
      %2542 = vmatpush1.msra.mxu0 0.0
      %2543 = vmatprep.subr.mxu0 0.0
      %2544 = vmatpush1.msra.mxu0 0.0
      %2545 = vmatprep.subr.mxu0 0.0
      %2546 = vmatpush1.msra.mxu0 0.0
      %2547 = vmatprep.subr.mxu0 0.0
      %2548 = vmatpush1.msra.mxu0 0.0
      %2549 = vmatprep.subr.mxu0 0.0
      %2550 = vmatpush1.msra.mxu0 0.0
      %2551 = vmatprep.subr.mxu0 0.0
      %2552 = vmatpush1.msra.mxu0 0.0
      %2553 = vmatprep.subr.mxu0 0.0
      %2554 = vmatpush1.msra.mxu0 0.0
      %2555 = vmatprep.subr.mxu0 0.0
      %2556 = vmatpush1.msra.mxu0 0.0
      %2557 = vmatprep.subr.mxu0 0.0
      %2558 = vmatpush1.msra.mxu0 0.0
      %2559 = vmatprep.subr.mxu0 0.0
      %2560 = vmatpush1.msra.mxu0 0.0
      %2561 = vmatprep.subr.mxu0 0.0
      %2562 = vmatpush1.msra.mxu0 0.0
      %2563 = vmatprep.subr.mxu0 0.0
      %2564 = vmatpush1.msra.mxu0 0.0
      %2565 = vmatprep.subr.mxu0 0.0
      %2566 = vmatpush1.msra.mxu0 0.0
      %2567 = vmatprep.subr.mxu0 0.0
      %2568 = vmatpush1.msra.mxu0 0.0
      %2569 = vmatprep.subr.mxu0 0.0
      %2570 = vmatpush1.msra.mxu0 0.0
      %2571 = vmatprep.subr.mxu0 0.0
      %2572 = vmatpush1.msra.mxu0 0.0
      %2573 = vmatprep.subr.mxu0 0.0
      %2574 = vmatpush1.msra.mxu0 0.0
      %2575 = vmatprep.subr.mxu0 0.0
      %2576 = vmatpush1.msra.mxu0 0.0
      %2577 = vmatprep.subr.mxu0 0.0
      %2578 = vmatpush1.msra.mxu0 0.0
      %2579 = vmatprep.subr.mxu0 0.0
      %2580 = vmatpush1.msra.mxu0 0.0
      %2581 = vmatprep.subr.mxu0 0.0
      %2582 = vmatpush1.msra.mxu0 0.0
      %2583 = vmatprep.subr.mxu0 0.0
      %2584 = vmatpush1.msra.mxu0 0.0
      %2585 = vmatprep.subr.mxu0 0.0
      %2586 = vmatpush1.msra.mxu0 0.0
      %2587 = vmatprep.subr.mxu0 0.0
      %2588 = vmatpush1.msra.mxu0 0.0
      %2589 = vmatprep.subr.mxu0 0.0
      %2590 = vmatpush1.msra.mxu0 0.0
      %2591 = vmatprep.subr.mxu0 0.0
      %2592 = vmatpush1.msra.mxu0 0.0
      %2593 = vmatprep.mubr.f32.mxu0 0.0
      %v2594 = vand.u32 %v347, 4294901760
      %v2595 = vsub.f32 %v347, %v2594
      %v2596 = vand.u32 %v2595, 4294901760
      %v2597 = vsub.f32 %v2595, %v2596
      %v2598 = vand.u32 %v2597, 4294901760
      %2599 = vmatmul.mubr.f32.gmra.mrb[0].mxu0 %v2598
      %v2600 = vpop.f32.mrb[0].mxu0
      %v2601 = vadd.f32 %v343, %v2600
      %v2602 = vpop.f32.mrb[0].mxu0
      %v2603 = vadd.f32 %v343, %v2602
      %2604 = vdwg.mxu0
      %v2605 = vand.u32 %v220, 4294901760
      %v2606 = vsub.f32 %v220, %v2605
      %v2607 = vand.u32 %v2606, 4294901760
      %v2608 = vsub.f32 %v2606, %v2607
      %v2609 = vand.u32 %v2608, 4294901760
      %2610 = vmatprep.subr.mxu0 %v2609
      %v2611 = vand.u32 %v219, 4294901760
      %v2612 = vsub.f32 %v219, %v2611
      %v2613 = vand.u32 %v2612, 4294901760
      %v2614 = vsub.f32 %v2612, %v2613
      %v2615 = vand.u32 %v2614, 4294901760
      %2616 = vmatpush1.msra.mxu0 %v2615
      %v2617 = vand.u32 %v252, 4294901760
      %v2618 = vsub.f32 %v252, %v2617
      %v2619 = vand.u32 %v2618, 4294901760
      %v2620 = vsub.f32 %v2618, %v2619
      %v2621 = vand.u32 %v2620, 4294901760
      %2622 = vmatprep.subr.mxu0 %v2621
      %v2623 = vand.u32 %v251, 4294901760
      %v2624 = vsub.f32 %v251, %v2623
      %v2625 = vand.u32 %v2624, 4294901760
      %v2626 = vsub.f32 %v2624, %v2625
      %v2627 = vand.u32 %v2626, 4294901760
      %2628 = vmatpush1.msra.mxu0 %v2627
      %v2629 = vand.u32 %v284, 4294901760
      %v2630 = vsub.f32 %v284, %v2629
      %v2631 = vand.u32 %v2630, 4294901760
      %v2632 = vsub.f32 %v2630, %v2631
      %v2633 = vand.u32 %v2632, 4294901760
      %2634 = vmatprep.subr.mxu0 %v2633
      %v2635 = vand.u32 %v283, 4294901760
      %v2636 = vsub.f32 %v283, %v2635
      %v2637 = vand.u32 %v2636, 4294901760
      %v2638 = vsub.f32 %v2636, %v2637
      %v2639 = vand.u32 %v2638, 4294901760
      %2640 = vmatpush1.msra.mxu0 %v2639
      %v2641 = vand.u32 %v316, 4294901760
      %v2642 = vsub.f32 %v316, %v2641
      %v2643 = vand.u32 %v2642, 4294901760
      %v2644 = vsub.f32 %v2642, %v2643
      %v2645 = vand.u32 %v2644, 4294901760
      %2646 = vmatprep.subr.mxu0 %v2645
      %v2647 = vand.u32 %v315, 4294901760
      %v2648 = vsub.f32 %v315, %v2647
      %v2649 = vand.u32 %v2648, 4294901760
      %v2650 = vsub.f32 %v2648, %v2649
      %v2651 = vand.u32 %v2650, 4294901760
      %2652 = vmatpush1.msra.mxu0 %v2651
      %2653 = vmatprep.subr.mxu0 0.0
      %2654 = vmatpush1.msra.mxu0 0.0
      %2655 = vmatprep.subr.mxu0 0.0
      %2656 = vmatpush1.msra.mxu0 0.0
      %2657 = vmatprep.subr.mxu0 0.0
      %2658 = vmatpush1.msra.mxu0 0.0
      %2659 = vmatprep.subr.mxu0 0.0
      %2660 = vmatpush1.msra.mxu0 0.0
      %2661 = vmatprep.subr.mxu0 0.0
      %2662 = vmatpush1.msra.mxu0 0.0
      %2663 = vmatprep.subr.mxu0 0.0
      %2664 = vmatpush1.msra.mxu0 0.0
      %2665 = vmatprep.subr.mxu0 0.0
      %2666 = vmatpush1.msra.mxu0 0.0
      %2667 = vmatprep.subr.mxu0 0.0
      %2668 = vmatpush1.msra.mxu0 0.0
      %2669 = vmatprep.subr.mxu0 0.0
      %2670 = vmatpush1.msra.mxu0 0.0
      %2671 = vmatprep.subr.mxu0 0.0
      %2672 = vmatpush1.msra.mxu0 0.0
      %2673 = vmatprep.subr.mxu0 0.0
      %2674 = vmatpush1.msra.mxu0 0.0
      %2675 = vmatprep.subr.mxu0 0.0
      %2676 = vmatpush1.msra.mxu0 0.0
      %2677 = vmatprep.subr.mxu0 0.0
      %2678 = vmatpush1.msra.mxu0 0.0
      %2679 = vmatprep.subr.mxu0 0.0
      %2680 = vmatpush1.msra.mxu0 0.0
      %2681 = vmatprep.subr.mxu0 0.0
      %2682 = vmatpush1.msra.mxu0 0.0
      %2683 = vmatprep.subr.mxu0 0.0
      %2684 = vmatpush1.msra.mxu0 0.0
      %2685 = vmatprep.subr.mxu0 0.0
      %2686 = vmatpush1.msra.mxu0 0.0
      %2687 = vmatprep.subr.mxu0 0.0
      %2688 = vmatpush1.msra.mxu0 0.0
      %2689 = vmatprep.subr.mxu0 0.0
      %2690 = vmatpush1.msra.mxu0 0.0
      %2691 = vmatprep.subr.mxu0 0.0
      %2692 = vmatpush1.msra.mxu0 0.0
      %2693 = vmatprep.subr.mxu0 0.0
      %2694 = vmatpush1.msra.mxu0 0.0
      %2695 = vmatprep.subr.mxu0 0.0
      %2696 = vmatpush1.msra.mxu0 0.0
      %2697 = vmatprep.subr.mxu0 0.0
      %2698 = vmatpush1.msra.mxu0 0.0
      %2699 = vmatprep.subr.mxu0 0.0
      %2700 = vmatpush1.msra.mxu0 0.0
      %2701 = vmatprep.subr.mxu0 0.0
      %2702 = vmatpush1.msra.mxu0 0.0
      %2703 = vmatprep.subr.mxu0 0.0
      %2704 = vmatpush1.msra.mxu0 0.0
      %2705 = vmatprep.subr.mxu0 0.0
      %2706 = vmatpush1.msra.mxu0 0.0
      %2707 = vmatprep.subr.mxu0 0.0
      %2708 = vmatpush1.msra.mxu0 0.0
      %2709 = vmatprep.mubr.f32.mxu0 0.0
      %v2710 = vand.u32 %v347, 4294901760
      %2711 = vmatmul.mubr.f32.gmra.mrb[0].mxu0 %v2710
      %v2712 = vpop.f32.mrb[0].mxu0
      %v2713 = vadd.f32 %v2601, %v2712
      %v2714 = vpop.f32.mrb[0].mxu0
      %v2715 = vadd.f32 %v2603, %v2714
      %2716 = vdwg.mxu0
      %v2717 = vand.u32 %v220, 4294901760
      %v2718 = vsub.f32 %v220, %v2717
      %2719 = vmatprep.subr.mxu0 %v2718
      %v2720 = vand.u32 %v219, 4294901760
      %v2721 = vsub.f32 %v219, %v2720
      %2722 = vmatpush1.msra.mxu0 %v2721
      %v2723 = vand.u32 %v252, 4294901760
      %v2724 = vsub.f32 %v252, %v2723
      %2725 = vmatprep.subr.mxu0 %v2724
      %v2726 = vand.u32 %v251, 4294901760
      %v2727 = vsub.f32 %v251, %v2726
      %2728 = vmatpush1.msra.mxu0 %v2727
      %v2729 = vand.u32 %v284, 4294901760
      %v2730 = vsub.f32 %v284, %v2729
      %2731 = vmatprep.subr.mxu0 %v2730
      %v2732 = vand.u32 %v283, 4294901760
      %v2733 = vsub.f32 %v283, %v2732
      %2734 = vmatpush1.msra.mxu0 %v2733
      %v2735 = vand.u32 %v316, 4294901760
      %v2736 = vsub.f32 %v316, %v2735
      %2737 = vmatprep.subr.mxu0 %v2736
      %v2738 = vand.u32 %v315, 4294901760
      %v2739 = vsub.f32 %v315, %v2738
      %2740 = vmatpush1.msra.mxu0 %v2739
      %2741 = vmatprep.subr.mxu0 0.0
      %2742 = vmatpush1.msra.mxu0 0.0
      %2743 = vmatprep.subr.mxu0 0.0
      %2744 = vmatpush1.msra.mxu0 0.0
      %2745 = vmatprep.subr.mxu0 0.0
      %2746 = vmatpush1.msra.mxu0 0.0
      %2747 = vmatprep.subr.mxu0 0.0
      %2748 = vmatpush1.msra.mxu0 0.0
      %2749 = vmatprep.subr.mxu0 0.0
      %2750 = vmatpush1.msra.mxu0 0.0
      %2751 = vmatprep.subr.mxu0 0.0
      %2752 = vmatpush1.msra.mxu0 0.0
      %2753 = vmatprep.subr.mxu0 0.0
      %2754 = vmatpush1.msra.mxu0 0.0
      %2755 = vmatprep.subr.mxu0 0.0
      %2756 = vmatpush1.msra.mxu0 0.0
      %2757 = vmatprep.subr.mxu0 0.0
      %2758 = vmatpush1.msra.mxu0 0.0
      %2759 = vmatprep.subr.mxu0 0.0
      %2760 = vmatpush1.msra.mxu0 0.0
      %2761 = vmatprep.subr.mxu0 0.0
      %2762 = vmatpush1.msra.mxu0 0.0
      %2763 = vmatprep.subr.mxu0 0.0
      %2764 = vmatpush1.msra.mxu0 0.0
      %2765 = vmatprep.subr.mxu0 0.0
      %2766 = vmatpush1.msra.mxu0 0.0
      %2767 = vmatprep.subr.mxu0 0.0
      %2768 = vmatpush1.msra.mxu0 0.0
      %2769 = vmatprep.subr.mxu0 0.0
      %2770 = vmatpush1.msra.mxu0 0.0
      %2771 = vmatprep.subr.mxu0 0.0
      %2772 = vmatpush1.msra.mxu0 0.0
      %2773 = vmatprep.subr.mxu0 0.0
      %2774 = vmatpush1.msra.mxu0 0.0
      %2775 = vmatprep.subr.mxu0 0.0
      %2776 = vmatpush1.msra.mxu0 0.0
      %2777 = vmatprep.subr.mxu0 0.0
      %2778 = vmatpush1.msra.mxu0 0.0
      %2779 = vmatprep.subr.mxu0 0.0
      %2780 = vmatpush1.msra.mxu0 0.0
      %2781 = vmatprep.subr.mxu0 0.0
      %2782 = vmatpush1.msra.mxu0 0.0
      %2783 = vmatprep.subr.mxu0 0.0
      %2784 = vmatpush1.msra.mxu0 0.0
      %2785 = vmatprep.subr.mxu0 0.0
      %2786 = vmatpush1.msra.mxu0 0.0
      %2787 = vmatprep.subr.mxu0 0.0
      %2788 = vmatpush1.msra.mxu0 0.0
      %2789 = vmatprep.subr.mxu0 0.0
      %2790 = vmatpush1.msra.mxu0 0.0
      %2791 = vmatprep.subr.mxu0 0.0
      %2792 = vmatpush1.msra.mxu0 0.0
      %2793 = vmatprep.subr.mxu0 0.0
      %2794 = vmatpush1.msra.mxu0 0.0
      %2795 = vmatprep.subr.mxu0 0.0
      %2796 = vmatpush1.msra.mxu0 0.0
      %2797 = vmatprep.mubr.f32.mxu0 0.0
      %v2798 = vand.u32 %v347, 4294901760
      %v2799 = vsub.f32 %v347, %v2798
      %2800 = vmatmul.mubr.f32.gmra.mrb[0].mxu0 %v2799
      %v2801 = vpop.f32.mrb[0].mxu0
      %v2802 = vadd.f32 %v2713, %v2801
      %v2803 = vpop.f32.mrb[0].mxu0
      %v2804 = vadd.f32 %v2715, %v2803
      %2805 = vdwg.mxu0
      %v2806 = vand.u32 %v220, 4294901760
      %2807 = vmatprep.subr.mxu0 %v2806
      %v2808 = vand.u32 %v219, 4294901760
      %2809 = vmatpush1.msra.mxu0 %v2808
      %v2810 = vand.u32 %v252, 4294901760
      %2811 = vmatprep.subr.mxu0 %v2810
      %v2812 = vand.u32 %v251, 4294901760
      %2813 = vmatpush1.msra.mxu0 %v2812
      %v2814 = vand.u32 %v284, 4294901760
      %2815 = vmatprep.subr.mxu0 %v2814
      %v2816 = vand.u32 %v283, 4294901760
      %2817 = vmatpush1.msra.mxu0 %v2816
      %v2818 = vand.u32 %v316, 4294901760
      %2819 = vmatprep.subr.mxu0 %v2818
      %v2820 = vand.u32 %v315, 4294901760
      %2821 = vmatpush1.msra.mxu0 %v2820
      %2822 = vmatprep.subr.mxu0 0.0
      %2823 = vmatpush1.msra.mxu0 0.0
      %2824 = vmatprep.subr.mxu0 0.0
      %2825 = vmatpush1.msra.mxu0 0.0
      %2826 = vmatprep.subr.mxu0 0.0
      %2827 = vmatpush1.msra.mxu0 0.0
      %2828 = vmatprep.subr.mxu0 0.0
      %2829 = vmatpush1.msra.mxu0 0.0
      %2830 = vmatprep.subr.mxu0 0.0
      %2831 = vmatpush1.msra.mxu0 0.0
      %2832 = vmatprep.subr.mxu0 0.0
      %2833 = vmatpush1.msra.mxu0 0.0
      %2834 = vmatprep.subr.mxu0 0.0
      %2835 = vmatpush1.msra.mxu0 0.0
      %2836 = vmatprep.subr.mxu0 0.0
      %2837 = vmatpush1.msra.mxu0 0.0
      %2838 = vmatprep.subr.mxu0 0.0
      %2839 = vmatpush1.msra.mxu0 0.0
      %2840 = vmatprep.subr.mxu0 0.0
      %2841 = vmatpush1.msra.mxu0 0.0
      %2842 = vmatprep.subr.mxu0 0.0
      %2843 = vmatpush1.msra.mxu0 0.0
      %2844 = vmatprep.subr.mxu0 0.0
      %2845 = vmatpush1.msra.mxu0 0.0
      %2846 = vmatprep.subr.mxu0 0.0
      %2847 = vmatpush1.msra.mxu0 0.0
      %2848 = vmatprep.subr.mxu0 0.0
      %2849 = vmatpush1.msra.mxu0 0.0
      %2850 = vmatprep.subr.mxu0 0.0
      %2851 = vmatpush1.msra.mxu0 0.0
      %2852 = vmatprep.subr.mxu0 0.0
      %2853 = vmatpush1.msra.mxu0 0.0
      %2854 = vmatprep.subr.mxu0 0.0
      %2855 = vmatpush1.msra.mxu0 0.0
      %2856 = vmatprep.subr.mxu0 0.0
      %2857 = vmatpush1.msra.mxu0 0.0
      %2858 = vmatprep.subr.mxu0 0.0
      %2859 = vmatpush1.msra.mxu0 0.0
      %2860 = vmatprep.subr.mxu0 0.0
      %2861 = vmatpush1.msra.mxu0 0.0
      %2862 = vmatprep.subr.mxu0 0.0
      %2863 = vmatpush1.msra.mxu0 0.0
      %2864 = vmatprep.subr.mxu0 0.0
      %2865 = vmatpush1.msra.mxu0 0.0
      %2866 = vmatprep.subr.mxu0 0.0
      %2867 = vmatpush1.msra.mxu0 0.0
      %2868 = vmatprep.subr.mxu0 0.0
      %2869 = vmatpush1.msra.mxu0 0.0
      %2870 = vmatprep.subr.mxu0 0.0
      %2871 = vmatpush1.msra.mxu0 0.0
      %2872 = vmatprep.subr.mxu0 0.0
      %2873 = vmatpush1.msra.mxu0 0.0
      %2874 = vmatprep.subr.mxu0 0.0
      %2875 = vmatpush1.msra.mxu0 0.0
      %2876 = vmatprep.subr.mxu0 0.0
      %2877 = vmatpush1.msra.mxu0 0.0
      %2878 = vmatprep.mubr.f32.mxu0 0.0
      %v2879 = vand.u32 %v347, 4294901760
      %v2880 = vsub.f32 %v347, %v2879
      %v2881 = vand.u32 %v2880, 4294901760
      %2882 = vmatmul.mubr.f32.gmra.mrb[0].mxu0 %v2881
      %v2883 = vpop.f32.mrb[0].mxu0
      %v2884 = vadd.f32 %v2802, %v2883
      %v2885 = vpop.f32.mrb[0].mxu0
      %v2886 = vadd.f32 %v2804, %v2885
      %2887 = vdwg.mxu0
      %v2888 = vand.u32 %v220, 4294901760
      %v2889 = vsub.f32 %v220, %v2888
      %v2890 = vand.u32 %v2889, 4294901760
      %2891 = vmatprep.subr.mxu0 %v2890
      %v2892 = vand.u32 %v219, 4294901760
      %v2893 = vsub.f32 %v219, %v2892
      %v2894 = vand.u32 %v2893, 4294901760
      %2895 = vmatpush1.msra.mxu0 %v2894
      %v2896 = vand.u32 %v252, 4294901760
      %v2897 = vsub.f32 %v252, %v2896
      %v2898 = vand.u32 %v2897, 4294901760
      %2899 = vmatprep.subr.mxu0 %v2898
      %v2900 = vand.u32 %v251, 4294901760
      %v2901 = vsub.f32 %v251, %v2900
      %v2902 = vand.u32 %v2901, 4294901760
      %2903 = vmatpush1.msra.mxu0 %v2902
      %v2904 = vand.u32 %v284, 4294901760
      %v2905 = vsub.f32 %v284, %v2904
      %v2906 = vand.u32 %v2905, 4294901760
      %2907 = vmatprep.subr.mxu0 %v2906
      %v2908 = vand.u32 %v283, 4294901760
      %v2909 = vsub.f32 %v283, %v2908
      %v2910 = vand.u32 %v2909, 4294901760
      %2911 = vmatpush1.msra.mxu0 %v2910
      %v2912 = vand.u32 %v316, 4294901760
      %v2913 = vsub.f32 %v316, %v2912
      %v2914 = vand.u32 %v2913, 4294901760
      %2915 = vmatprep.subr.mxu0 %v2914
      %v2916 = vand.u32 %v315, 4294901760
      %v2917 = vsub.f32 %v315, %v2916
      %v2918 = vand.u32 %v2917, 4294901760
      %2919 = vmatpush1.msra.mxu0 %v2918
      %2920 = vmatprep.subr.mxu0 0.0
      %2921 = vmatpush1.msra.mxu0 0.0
      %2922 = vmatprep.subr.mxu0 0.0
      %2923 = vmatpush1.msra.mxu0 0.0
      %2924 = vmatprep.subr.mxu0 0.0
      %2925 = vmatpush1.msra.mxu0 0.0
      %2926 = vmatprep.subr.mxu0 0.0
      %2927 = vmatpush1.msra.mxu0 0.0
      %2928 = vmatprep.subr.mxu0 0.0
      %2929 = vmatpush1.msra.mxu0 0.0
      %2930 = vmatprep.subr.mxu0 0.0
      %2931 = vmatpush1.msra.mxu0 0.0
      %2932 = vmatprep.subr.mxu0 0.0
      %2933 = vmatpush1.msra.mxu0 0.0
      %2934 = vmatprep.subr.mxu0 0.0
      %2935 = vmatpush1.msra.mxu0 0.0
      %2936 = vmatprep.subr.mxu0 0.0
      %2937 = vmatpush1.msra.mxu0 0.0
      %2938 = vmatprep.subr.mxu0 0.0
      %2939 = vmatpush1.msra.mxu0 0.0
      %2940 = vmatprep.subr.mxu0 0.0
      %2941 = vmatpush1.msra.mxu0 0.0
      %2942 = vmatprep.subr.mxu0 0.0
      %2943 = vmatpush1.msra.mxu0 0.0
      %2944 = vmatprep.subr.mxu0 0.0
      %2945 = vmatpush1.msra.mxu0 0.0
      %2946 = vmatprep.subr.mxu0 0.0
      %2947 = vmatpush1.msra.mxu0 0.0
      %2948 = vmatprep.subr.mxu0 0.0
      %2949 = vmatpush1.msra.mxu0 0.0
      %2950 = vmatprep.subr.mxu0 0.0
      %2951 = vmatpush1.msra.mxu0 0.0
      %2952 = vmatprep.subr.mxu0 0.0
      %2953 = vmatpush1.msra.mxu0 0.0
      %2954 = vmatprep.subr.mxu0 0.0
      %2955 = vmatpush1.msra.mxu0 0.0
      %2956 = vmatprep.subr.mxu0 0.0
      %2957 = vmatpush1.msra.mxu0 0.0
      %2958 = vmatprep.subr.mxu0 0.0
      %2959 = vmatpush1.msra.mxu0 0.0
      %2960 = vmatprep.subr.mxu0 0.0
      %2961 = vmatpush1.msra.mxu0 0.0
      %2962 = vmatprep.subr.mxu0 0.0
      %2963 = vmatpush1.msra.mxu0 0.0
      %2964 = vmatprep.subr.mxu0 0.0
      %2965 = vmatpush1.msra.mxu0 0.0
      %2966 = vmatprep.subr.mxu0 0.0
      %2967 = vmatpush1.msra.mxu0 0.0
      %2968 = vmatprep.subr.mxu0 0.0
      %2969 = vmatpush1.msra.mxu0 0.0
      %2970 = vmatprep.subr.mxu0 0.0
      %2971 = vmatpush1.msra.mxu0 0.0
      %2972 = vmatprep.subr.mxu0 0.0
      %2973 = vmatpush1.msra.mxu0 0.0
      %2974 = vmatprep.subr.mxu0 0.0
      %2975 = vmatpush1.msra.mxu0 0.0
      %2976 = vmatprep.mubr.f32.mxu0 0.0
      %v2977 = vand.u32 %v347, 4294901760
      %2978 = vmatmul.mubr.f32.gmra.mrb[0].mxu0 %v2977
      %v2979 = vpop.f32.mrb[0].mxu0
      %v2980 = vadd.f32 %v2884, %v2979
      %v2981 = vpop.f32.mrb[0].mxu0
      %v2982 = vadd.f32 %v2886, %v2981
      %2983 = vdwg.mxu0
      %v2984 = vand.u32 %v220, 4294901760
      %2985 = vmatprep.subr.mxu0 %v2984
      %v2986 = vand.u32 %v219, 4294901760
      %2987 = vmatpush1.msra.mxu0 %v2986
      %v2988 = vand.u32 %v252, 4294901760
      %2989 = vmatprep.subr.mxu0 %v2988
      %v2990 = vand.u32 %v251, 4294901760
      %2991 = vmatpush1.msra.mxu0 %v2990
      %v2992 = vand.u32 %v284, 4294901760
      %2993 = vmatprep.subr.mxu0 %v2992
      %v2994 = vand.u32 %v283, 4294901760
      %2995 = vmatpush1.msra.mxu0 %v2994
      %v2996 = vand.u32 %v316, 4294901760
      %2997 = vmatprep.subr.mxu0 %v2996
      %v2998 = vand.u32 %v315, 4294901760
      %2999 = vmatpush1.msra.mxu0 %v2998
      %3000 = vmatprep.subr.mxu0 0.0
      %3001 = vmatpush1.msra.mxu0 0.0
      %3002 = vmatprep.subr.mxu0 0.0
      %3003 = vmatpush1.msra.mxu0 0.0
      %3004 = vmatprep.subr.mxu0 0.0
      %3005 = vmatpush1.msra.mxu0 0.0
      %3006 = vmatprep.subr.mxu0 0.0
      %3007 = vmatpush1.msra.mxu0 0.0
      %3008 = vmatprep.subr.mxu0 0.0
      %3009 = vmatpush1.msra.mxu0 0.0
      %3010 = vmatprep.subr.mxu0 0.0
      %3011 = vmatpush1.msra.mxu0 0.0
      %3012 = vmatprep.subr.mxu0 0.0
      %3013 = vmatpush1.msra.mxu0 0.0
      %3014 = vmatprep.subr.mxu0 0.0
      %3015 = vmatpush1.msra.mxu0 0.0
      %3016 = vmatprep.subr.mxu0 0.0
      %3017 = vmatpush1.msra.mxu0 0.0
      %3018 = vmatprep.subr.mxu0 0.0
      %3019 = vmatpush1.msra.mxu0 0.0
      %3020 = vmatprep.subr.mxu0 0.0
      %3021 = vmatpush1.msra.mxu0 0.0
      %3022 = vmatprep.subr.mxu0 0.0
      %3023 = vmatpush1.msra.mxu0 0.0
      %3024 = vmatprep.subr.mxu0 0.0
      %3025 = vmatpush1.msra.mxu0 0.0
      %3026 = vmatprep.subr.mxu0 0.0
      %3027 = vmatpush1.msra.mxu0 0.0
      %3028 = vmatprep.subr.mxu0 0.0
      %3029 = vmatpush1.msra.mxu0 0.0
      %3030 = vmatprep.subr.mxu0 0.0
      %3031 = vmatpush1.msra.mxu0 0.0
      %3032 = vmatprep.subr.mxu0 0.0
      %3033 = vmatpush1.msra.mxu0 0.0
      %3034 = vmatprep.subr.mxu0 0.0
      %3035 = vmatpush1.msra.mxu0 0.0
      %3036 = vmatprep.subr.mxu0 0.0
      %3037 = vmatpush1.msra.mxu0 0.0
      %3038 = vmatprep.subr.mxu0 0.0
      %3039 = vmatpush1.msra.mxu0 0.0
      %3040 = vmatprep.subr.mxu0 0.0
      %3041 = vmatpush1.msra.mxu0 0.0
      %3042 = vmatprep.subr.mxu0 0.0
      %3043 = vmatpush1.msra.mxu0 0.0
      %3044 = vmatprep.subr.mxu0 0.0
      %3045 = vmatpush1.msra.mxu0 0.0
      %3046 = vmatprep.subr.mxu0 0.0
      %3047 = vmatpush1.msra.mxu0 0.0
      %3048 = vmatprep.subr.mxu0 0.0
      %3049 = vmatpush1.msra.mxu0 0.0
      %3050 = vmatprep.subr.mxu0 0.0
      %3051 = vmatpush1.msra.mxu0 0.0
      %3052 = vmatprep.subr.mxu0 0.0
      %3053 = vmatpush1.msra.mxu0 0.0
      %3054 = vmatprep.subr.mxu0 0.0
      %3055 = vmatpush1.msra.mxu0 0.0
      %3056 = vmatprep.mubr.f32.mxu0 0.0
      %v3057 = vand.u32 %v347, 4294901760
      %3058 = vmatmul.mubr.f32.gmra.mrb[0].mxu0 %v3057
      %v3059 = vpop.f32.mrb[0].mxu0
      %v3060 = vadd.f32 %v2980, %v3059
      %v3061 = vpop.f32.mrb[0].mxu0
      %v3062 = vadd.f32 %v2982, %v3061
      %3063 = vdwg.mxu0
      %v3064 = vand.u32 %v222, 4294901760
      %3065 = vmatprep.subr.mxu0 %v3064
      %v3066 = vand.u32 %v221, 4294901760
      %3067 = vmatpush1.msra.mxu0 %v3066
      %v3068 = vand.u32 %v254, 4294901760
      %3069 = vmatprep.subr.mxu0 %v3068
      %v3070 = vand.u32 %v253, 4294901760
      %3071 = vmatpush1.msra.mxu0 %v3070
      %v3072 = vand.u32 %v286, 4294901760
      %3073 = vmatprep.subr.mxu0 %v3072
      %v3074 = vand.u32 %v285, 4294901760
      %3075 = vmatpush1.msra.mxu0 %v3074
      %v3076 = vand.u32 %v318, 4294901760
      %3077 = vmatprep.subr.mxu0 %v3076
      %v3078 = vand.u32 %v317, 4294901760
      %3079 = vmatpush1.msra.mxu0 %v3078
      %3080 = vmatprep.subr.mxu0 0.0
      %3081 = vmatpush1.msra.mxu0 0.0
      %3082 = vmatprep.subr.mxu0 0.0
      %3083 = vmatpush1.msra.mxu0 0.0
      %3084 = vmatprep.subr.mxu0 0.0
      %3085 = vmatpush1.msra.mxu0 0.0
      %3086 = vmatprep.subr.mxu0 0.0
      %3087 = vmatpush1.msra.mxu0 0.0
      %3088 = vmatprep.subr.mxu0 0.0
      %3089 = vmatpush1.msra.mxu0 0.0
      %3090 = vmatprep.subr.mxu0 0.0
      %3091 = vmatpush1.msra.mxu0 0.0
      %3092 = vmatprep.subr.mxu0 0.0
      %3093 = vmatpush1.msra.mxu0 0.0
      %3094 = vmatprep.subr.mxu0 0.0
      %3095 = vmatpush1.msra.mxu0 0.0
      %3096 = vmatprep.subr.mxu0 0.0
      %3097 = vmatpush1.msra.mxu0 0.0
      %3098 = vmatprep.subr.mxu0 0.0
      %3099 = vmatpush1.msra.mxu0 0.0
      %3100 = vmatprep.subr.mxu0 0.0
      %3101 = vmatpush1.msra.mxu0 0.0
      %3102 = vmatprep.subr.mxu0 0.0
      %3103 = vmatpush1.msra.mxu0 0.0
      %3104 = vmatprep.subr.mxu0 0.0
      %3105 = vmatpush1.msra.mxu0 0.0
      %3106 = vmatprep.subr.mxu0 0.0
      %3107 = vmatpush1.msra.mxu0 0.0
      %3108 = vmatprep.subr.mxu0 0.0
      %3109 = vmatpush1.msra.mxu0 0.0
      %3110 = vmatprep.subr.mxu0 0.0
      %3111 = vmatpush1.msra.mxu0 0.0
      %3112 = vmatprep.subr.mxu0 0.0
      %3113 = vmatpush1.msra.mxu0 0.0
      %3114 = vmatprep.subr.mxu0 0.0
      %3115 = vmatpush1.msra.mxu0 0.0
      %3116 = vmatprep.subr.mxu0 0.0
      %3117 = vmatpush1.msra.mxu0 0.0
      %3118 = vmatprep.subr.mxu0 0.0
      %3119 = vmatpush1.msra.mxu0 0.0
      %3120 = vmatprep.subr.mxu0 0.0
      %3121 = vmatpush1.msra.mxu0 0.0
      %3122 = vmatprep.subr.mxu0 0.0
      %3123 = vmatpush1.msra.mxu0 0.0
      %3124 = vmatprep.subr.mxu0 0.0
      %3125 = vmatpush1.msra.mxu0 0.0
      %3126 = vmatprep.subr.mxu0 0.0
      %3127 = vmatpush1.msra.mxu0 0.0
      %3128 = vmatprep.subr.mxu0 0.0
      %3129 = vmatpush1.msra.mxu0 0.0
      %3130 = vmatprep.subr.mxu0 0.0
      %3131 = vmatpush1.msra.mxu0 0.0
      %3132 = vmatprep.subr.mxu0 0.0
      %3133 = vmatpush1.msra.mxu0 0.0
      %3134 = vmatprep.subr.mxu0 0.0
      %3135 = vmatpush1.msra.mxu0 0.0
      %3136 = vmatprep.mubr.f32.mxu0 0.0
      %v3137 = vand.u32 %v347, 4294901760
      %v3138 = vsub.f32 %v347, %v3137
      %v3139 = vand.u32 %v3138, 4294901760
      %v3140 = vsub.f32 %v3138, %v3139
      %v3141 = vand.u32 %v3140, 4294901760
      %3142 = vmatmul.mubr.f32.gmra.mrb[0].mxu0 %v3141
      %v3143 = vpop.f32.mrb[0].mxu0
      %v3144 = vadd.f32 %v343, %v3143
      %v3145 = vpop.f32.mrb[0].mxu0
      %v3146 = vadd.f32 %v343, %v3145
      %3147 = vdwg.mxu0
      %v3148 = vand.u32 %v222, 4294901760
      %v3149 = vsub.f32 %v222, %v3148
      %v3150 = vand.u32 %v3149, 4294901760
      %v3151 = vsub.f32 %v3149, %v3150
      %v3152 = vand.u32 %v3151, 4294901760
      %3153 = vmatprep.subr.mxu0 %v3152
      %v3154 = vand.u32 %v221, 4294901760
      %v3155 = vsub.f32 %v221, %v3154
      %v3156 = vand.u32 %v3155, 4294901760
      %v3157 = vsub.f32 %v3155, %v3156
      %v3158 = vand.u32 %v3157, 4294901760
      %3159 = vmatpush1.msra.mxu0 %v3158
      %v3160 = vand.u32 %v254, 4294901760
      %v3161 = vsub.f32 %v254, %v3160
      %v3162 = vand.u32 %v3161, 4294901760
      %v3163 = vsub.f32 %v3161, %v3162
      %v3164 = vand.u32 %v3163, 4294901760
      %3165 = vmatprep.subr.mxu0 %v3164
      %v3166 = vand.u32 %v253, 4294901760
      %v3167 = vsub.f32 %v253, %v3166
      %v3168 = vand.u32 %v3167, 4294901760
      %v3169 = vsub.f32 %v3167, %v3168
      %v3170 = vand.u32 %v3169, 4294901760
      %3171 = vmatpush1.msra.mxu0 %v3170
      %v3172 = vand.u32 %v286, 4294901760
      %v3173 = vsub.f32 %v286, %v3172
      %v3174 = vand.u32 %v3173, 4294901760
      %v3175 = vsub.f32 %v3173, %v3174
      %v3176 = vand.u32 %v3175, 4294901760
      %3177 = vmatprep.subr.mxu0 %v3176
      %v3178 = vand.u32 %v285, 4294901760
      %v3179 = vsub.f32 %v285, %v3178
      %v3180 = vand.u32 %v3179, 4294901760
      %v3181 = vsub.f32 %v3179, %v3180
      %v3182 = vand.u32 %v3181, 4294901760
      %3183 = vmatpush1.msra.mxu0 %v3182
      %v3184 = vand.u32 %v318, 4294901760
      %v3185 = vsub.f32 %v318, %v3184
      %v3186 = vand.u32 %v3185, 4294901760
      %v3187 = vsub.f32 %v3185, %v3186
      %v3188 = vand.u32 %v3187, 4294901760
      %3189 = vmatprep.subr.mxu0 %v3188
      %v3190 = vand.u32 %v317, 4294901760
      %v3191 = vsub.f32 %v317, %v3190
      %v3192 = vand.u32 %v3191, 4294901760
      %v3193 = vsub.f32 %v3191, %v3192
      %v3194 = vand.u32 %v3193, 4294901760
      %3195 = vmatpush1.msra.mxu0 %v3194
      %3196 = vmatprep.subr.mxu0 0.0
      %3197 = vmatpush1.msra.mxu0 0.0
      %3198 = vmatprep.subr.mxu0 0.0
      %3199 = vmatpush1.msra.mxu0 0.0
      %3200 = vmatprep.subr.mxu0 0.0
      %3201 = vmatpush1.msra.mxu0 0.0
      %3202 = vmatprep.subr.mxu0 0.0
      %3203 = vmatpush1.msra.mxu0 0.0
      %3204 = vmatprep.subr.mxu0 0.0
      %3205 = vmatpush1.msra.mxu0 0.0
      %3206 = vmatprep.subr.mxu0 0.0
      %3207 = vmatpush1.msra.mxu0 0.0
      %3208 = vmatprep.subr.mxu0 0.0
      %3209 = vmatpush1.msra.mxu0 0.0
      %3210 = vmatprep.subr.mxu0 0.0
      %3211 = vmatpush1.msra.mxu0 0.0
      %3212 = vmatprep.subr.mxu0 0.0
      %3213 = vmatpush1.msra.mxu0 0.0
      %3214 = vmatprep.subr.mxu0 0.0
      %3215 = vmatpush1.msra.mxu0 0.0
      %3216 = vmatprep.subr.mxu0 0.0
      %3217 = vmatpush1.msra.mxu0 0.0
      %3218 = vmatprep.subr.mxu0 0.0
      %3219 = vmatpush1.msra.mxu0 0.0
      %3220 = vmatprep.subr.mxu0 0.0
      %3221 = vmatpush1.msra.mxu0 0.0
      %3222 = vmatprep.subr.mxu0 0.0
      %3223 = vmatpush1.msra.mxu0 0.0
      %3224 = vmatprep.subr.mxu0 0.0
      %3225 = vmatpush1.msra.mxu0 0.0
      %3226 = vmatprep.subr.mxu0 0.0
      %3227 = vmatpush1.msra.mxu0 0.0
      %3228 = vmatprep.subr.mxu0 0.0
      %3229 = vmatpush1.msra.mxu0 0.0
      %3230 = vmatprep.subr.mxu0 0.0
      %3231 = vmatpush1.msra.mxu0 0.0
      %3232 = vmatprep.subr.mxu0 0.0
      %3233 = vmatpush1.msra.mxu0 0.0
      %3234 = vmatprep.subr.mxu0 0.0
      %3235 = vmatpush1.msra.mxu0 0.0
      %3236 = vmatprep.subr.mxu0 0.0
      %3237 = vmatpush1.msra.mxu0 0.0
      %3238 = vmatprep.subr.mxu0 0.0
      %3239 = vmatpush1.msra.mxu0 0.0
      %3240 = vmatprep.subr.mxu0 0.0
      %3241 = vmatpush1.msra.mxu0 0.0
      %3242 = vmatprep.subr.mxu0 0.0
      %3243 = vmatpush1.msra.mxu0 0.0
      %3244 = vmatprep.subr.mxu0 0.0
      %3245 = vmatpush1.msra.mxu0 0.0
      %3246 = vmatprep.subr.mxu0 0.0
      %3247 = vmatpush1.msra.mxu0 0.0
      %3248 = vmatprep.subr.mxu0 0.0
      %3249 = vmatpush1.msra.mxu0 0.0
      %3250 = vmatprep.subr.mxu0 0.0
      %3251 = vmatpush1.msra.mxu0 0.0
      %3252 = vmatprep.mubr.f32.mxu0 0.0
      %v3253 = vand.u32 %v347, 4294901760
      %3254 = vmatmul.mubr.f32.gmra.mrb[0].mxu0 %v3253
      %v3255 = vpop.f32.mrb[0].mxu0
      %v3256 = vadd.f32 %v3144, %v3255
      %v3257 = vpop.f32.mrb[0].mxu0
      %v3258 = vadd.f32 %v3146, %v3257
      %3259 = vdwg.mxu0
      %v3260 = vand.u32 %v222, 4294901760
      %v3261 = vsub.f32 %v222, %v3260
      %3262 = vmatprep.subr.mxu0 %v3261
      %v3263 = vand.u32 %v221, 4294901760
      %v3264 = vsub.f32 %v221, %v3263
      %3265 = vmatpush1.msra.mxu0 %v3264
      %v3266 = vand.u32 %v254, 4294901760
      %v3267 = vsub.f32 %v254, %v3266
      %3268 = vmatprep.subr.mxu0 %v3267
      %v3269 = vand.u32 %v253, 4294901760
      %v3270 = vsub.f32 %v253, %v3269
      %3271 = vmatpush1.msra.mxu0 %v3270
      %v3272 = vand.u32 %v286, 4294901760
      %v3273 = vsub.f32 %v286, %v3272
      %3274 = vmatprep.subr.mxu0 %v3273
      %v3275 = vand.u32 %v285, 4294901760
      %v3276 = vsub.f32 %v285, %v3275
      %3277 = vmatpush1.msra.mxu0 %v3276
      %v3278 = vand.u32 %v318, 4294901760
      %v3279 = vsub.f32 %v318, %v3278
      %3280 = vmatprep.subr.mxu0 %v3279
      %v3281 = vand.u32 %v317, 4294901760
      %v3282 = vsub.f32 %v317, %v3281
      %3283 = vmatpush1.msra.mxu0 %v3282
      %3284 = vmatprep.subr.mxu0 0.0
      %3285 = vmatpush1.msra.mxu0 0.0
      %3286 = vmatprep.subr.mxu0 0.0
      %3287 = vmatpush1.msra.mxu0 0.0
      %3288 = vmatprep.subr.mxu0 0.0
      %3289 = vmatpush1.msra.mxu0 0.0
      %3290 = vmatprep.subr.mxu0 0.0
      %3291 = vmatpush1.msra.mxu0 0.0
      %3292 = vmatprep.subr.mxu0 0.0
      %3293 = vmatpush1.msra.mxu0 0.0
      %3294 = vmatprep.subr.mxu0 0.0
      %3295 = vmatpush1.msra.mxu0 0.0
      %3296 = vmatprep.subr.mxu0 0.0
      %3297 = vmatpush1.msra.mxu0 0.0
      %3298 = vmatprep.subr.mxu0 0.0
      %3299 = vmatpush1.msra.mxu0 0.0
      %3300 = vmatprep.subr.mxu0 0.0
      %3301 = vmatpush1.msra.mxu0 0.0
      %3302 = vmatprep.subr.mxu0 0.0
      %3303 = vmatpush1.msra.mxu0 0.0
      %3304 = vmatprep.subr.mxu0 0.0
      %3305 = vmatpush1.msra.mxu0 0.0
      %3306 = vmatprep.subr.mxu0 0.0
      %3307 = vmatpush1.msra.mxu0 0.0
      %3308 = vmatprep.subr.mxu0 0.0
      %3309 = vmatpush1.msra.mxu0 0.0
      %3310 = vmatprep.subr.mxu0 0.0
      %3311 = vmatpush1.msra.mxu0 0.0
      %3312 = vmatprep.subr.mxu0 0.0
      %3313 = vmatpush1.msra.mxu0 0.0
      %3314 = vmatprep.subr.mxu0 0.0
      %3315 = vmatpush1.msra.mxu0 0.0
      %3316 = vmatprep.subr.mxu0 0.0
      %3317 = vmatpush1.msra.mxu0 0.0
      %3318 = vmatprep.subr.mxu0 0.0
      %3319 = vmatpush1.msra.mxu0 0.0
      %3320 = vmatprep.subr.mxu0 0.0
      %3321 = vmatpush1.msra.mxu0 0.0
      %3322 = vmatprep.subr.mxu0 0.0
      %3323 = vmatpush1.msra.mxu0 0.0
      %3324 = vmatprep.subr.mxu0 0.0
      %3325 = vmatpush1.msra.mxu0 0.0
      %3326 = vmatprep.subr.mxu0 0.0
      %3327 = vmatpush1.msra.mxu0 0.0
      %3328 = vmatprep.subr.mxu0 0.0
      %3329 = vmatpush1.msra.mxu0 0.0
      %3330 = vmatprep.subr.mxu0 0.0
      %3331 = vmatpush1.msra.mxu0 0.0
      %3332 = vmatprep.subr.mxu0 0.0
      %3333 = vmatpush1.msra.mxu0 0.0
      %3334 = vmatprep.subr.mxu0 0.0
      %3335 = vmatpush1.msra.mxu0 0.0
      %3336 = vmatprep.subr.mxu0 0.0
      %3337 = vmatpush1.msra.mxu0 0.0
      %3338 = vmatprep.subr.mxu0 0.0
      %3339 = vmatpush1.msra.mxu0 0.0
      %3340 = vmatprep.mubr.f32.mxu0 0.0
      %v3341 = vand.u32 %v347, 4294901760
      %v3342 = vsub.f32 %v347, %v3341
      %3343 = vmatmul.mubr.f32.gmra.mrb[0].mxu0 %v3342
      %v3344 = vpop.f32.mrb[0].mxu0
      %v3345 = vadd.f32 %v3256, %v3344
      %v3346 = vpop.f32.mrb[0].mxu0
      %v3347 = vadd.f32 %v3258, %v3346
      %3348 = vdwg.mxu0
      %v3349 = vand.u32 %v222, 4294901760
      %3350 = vmatprep.subr.mxu0 %v3349
      %v3351 = vand.u32 %v221, 4294901760
      %3352 = vmatpush1.msra.mxu0 %v3351
      %v3353 = vand.u32 %v254, 4294901760
      %3354 = vmatprep.subr.mxu0 %v3353
      %v3355 = vand.u32 %v253, 4294901760
      %3356 = vmatpush1.msra.mxu0 %v3355
      %v3357 = vand.u32 %v286, 4294901760
      %3358 = vmatprep.subr.mxu0 %v3357
      %v3359 = vand.u32 %v285, 4294901760
      %3360 = vmatpush1.msra.mxu0 %v3359
      %v3361 = vand.u32 %v318, 4294901760
      %3362 = vmatprep.subr.mxu0 %v3361
      %v3363 = vand.u32 %v317, 4294901760
      %3364 = vmatpush1.msra.mxu0 %v3363
      %3365 = vmatprep.subr.mxu0 0.0
      %3366 = vmatpush1.msra.mxu0 0.0
      %3367 = vmatprep.subr.mxu0 0.0
      %3368 = vmatpush1.msra.mxu0 0.0
      %3369 = vmatprep.subr.mxu0 0.0
      %3370 = vmatpush1.msra.mxu0 0.0
      %3371 = vmatprep.subr.mxu0 0.0
      %3372 = vmatpush1.msra.mxu0 0.0
      %3373 = vmatprep.subr.mxu0 0.0
      %3374 = vmatpush1.msra.mxu0 0.0
      %3375 = vmatprep.subr.mxu0 0.0
      %3376 = vmatpush1.msra.mxu0 0.0
      %3377 = vmatprep.subr.mxu0 0.0
      %3378 = vmatpush1.msra.mxu0 0.0
      %3379 = vmatprep.subr.mxu0 0.0
      %3380 = vmatpush1.msra.mxu0 0.0
      %3381 = vmatprep.subr.mxu0 0.0
      %3382 = vmatpush1.msra.mxu0 0.0
      %3383 = vmatprep.subr.mxu0 0.0
      %3384 = vmatpush1.msra.mxu0 0.0
      %3385 = vmatprep.subr.mxu0 0.0
      %3386 = vmatpush1.msra.mxu0 0.0
      %3387 = vmatprep.subr.mxu0 0.0
      %3388 = vmatpush1.msra.mxu0 0.0
      %3389 = vmatprep.subr.mxu0 0.0
      %3390 = vmatpush1.msra.mxu0 0.0
      %3391 = vmatprep.subr.mxu0 0.0
      %3392 = vmatpush1.msra.mxu0 0.0
      %3393 = vmatprep.subr.mxu0 0.0
      %3394 = vmatpush1.msra.mxu0 0.0
      %3395 = vmatprep.subr.mxu0 0.0
      %3396 = vmatpush1.msra.mxu0 0.0
      %3397 = vmatprep.subr.mxu0 0.0
      %3398 = vmatpush1.msra.mxu0 0.0
      %3399 = vmatprep.subr.mxu0 0.0
      %3400 = vmatpush1.msra.mxu0 0.0
      %3401 = vmatprep.subr.mxu0 0.0
      %3402 = vmatpush1.msra.mxu0 0.0
      %3403 = vmatprep.subr.mxu0 0.0
      %3404 = vmatpush1.msra.mxu0 0.0
      %3405 = vmatprep.subr.mxu0 0.0
      %3406 = vmatpush1.msra.mxu0 0.0
      %3407 = vmatprep.subr.mxu0 0.0
      %3408 = vmatpush1.msra.mxu0 0.0
      %3409 = vmatprep.subr.mxu0 0.0
      %3410 = vmatpush1.msra.mxu0 0.0
      %3411 = vmatprep.subr.mxu0 0.0
      %3412 = vmatpush1.msra.mxu0 0.0
      %3413 = vmatprep.subr.mxu0 0.0
      %3414 = vmatpush1.msra.mxu0 0.0
      %3415 = vmatprep.subr.mxu0 0.0
      %3416 = vmatpush1.msra.mxu0 0.0
      %3417 = vmatprep.subr.mxu0 0.0
      %3418 = vmatpush1.msra.mxu0 0.0
      %3419 = vmatprep.subr.mxu0 0.0
      %3420 = vmatpush1.msra.mxu0 0.0
      %3421 = vmatprep.mubr.f32.mxu0 0.0
      %v3422 = vand.u32 %v347, 4294901760
      %v3423 = vsub.f32 %v347, %v3422
      %v3424 = vand.u32 %v3423, 4294901760
      %3425 = vmatmul.mubr.f32.gmra.mrb[0].mxu0 %v3424
      %v3426 = vpop.f32.mrb[0].mxu0
      %v3427 = vadd.f32 %v3345, %v3426
      %v3428 = vpop.f32.mrb[0].mxu0
      %v3429 = vadd.f32 %v3347, %v3428
      %3430 = vdwg.mxu0
      %v3431 = vand.u32 %v222, 4294901760
      %v3432 = vsub.f32 %v222, %v3431
      %v3433 = vand.u32 %v3432, 4294901760
      %3434 = vmatprep.subr.mxu0 %v3433
      %v3435 = vand.u32 %v221, 4294901760
      %v3436 = vsub.f32 %v221, %v3435
      %v3437 = vand.u32 %v3436, 4294901760
      %3438 = vmatpush1.msra.mxu0 %v3437
      %v3439 = vand.u32 %v254, 4294901760
      %v3440 = vsub.f32 %v254, %v3439
      %v3441 = vand.u32 %v3440, 4294901760
      %3442 = vmatprep.subr.mxu0 %v3441
      %v3443 = vand.u32 %v253, 4294901760
      %v3444 = vsub.f32 %v253, %v3443
      %v3445 = vand.u32 %v3444, 4294901760
      %3446 = vmatpush1.msra.mxu0 %v3445
      %v3447 = vand.u32 %v286, 4294901760
      %v3448 = vsub.f32 %v286, %v3447
      %v3449 = vand.u32 %v3448, 4294901760
      %3450 = vmatprep.subr.mxu0 %v3449
      %v3451 = vand.u32 %v285, 4294901760
      %v3452 = vsub.f32 %v285, %v3451
      %v3453 = vand.u32 %v3452, 4294901760
      %3454 = vmatpush1.msra.mxu0 %v3453
      %v3455 = vand.u32 %v318, 4294901760
      %v3456 = vsub.f32 %v318, %v3455
      %v3457 = vand.u32 %v3456, 4294901760
      %3458 = vmatprep.subr.mxu0 %v3457
      %v3459 = vand.u32 %v317, 4294901760
      %v3460 = vsub.f32 %v317, %v3459
      %v3461 = vand.u32 %v3460, 4294901760
      %3462 = vmatpush1.msra.mxu0 %v3461
      %3463 = vmatprep.subr.mxu0 0.0
      %3464 = vmatpush1.msra.mxu0 0.0
      %3465 = vmatprep.subr.mxu0 0.0
      %3466 = vmatpush1.msra.mxu0 0.0
      %3467 = vmatprep.subr.mxu0 0.0
      %3468 = vmatpush1.msra.mxu0 0.0
      %3469 = vmatprep.subr.mxu0 0.0
      %3470 = vmatpush1.msra.mxu0 0.0
      %3471 = vmatprep.subr.mxu0 0.0
      %3472 = vmatpush1.msra.mxu0 0.0
      %3473 = vmatprep.subr.mxu0 0.0
      %3474 = vmatpush1.msra.mxu0 0.0
      %3475 = vmatprep.subr.mxu0 0.0
      %3476 = vmatpush1.msra.mxu0 0.0
      %3477 = vmatprep.subr.mxu0 0.0
      %3478 = vmatpush1.msra.mxu0 0.0
      %3479 = vmatprep.subr.mxu0 0.0
      %3480 = vmatpush1.msra.mxu0 0.0
      %3481 = vmatprep.subr.mxu0 0.0
      %3482 = vmatpush1.msra.mxu0 0.0
      %3483 = vmatprep.subr.mxu0 0.0
      %3484 = vmatpush1.msra.mxu0 0.0
      %3485 = vmatprep.subr.mxu0 0.0
      %3486 = vmatpush1.msra.mxu0 0.0
      %3487 = vmatprep.subr.mxu0 0.0
      %3488 = vmatpush1.msra.mxu0 0.0
      %3489 = vmatprep.subr.mxu0 0.0
      %3490 = vmatpush1.msra.mxu0 0.0
      %3491 = vmatprep.subr.mxu0 0.0
      %3492 = vmatpush1.msra.mxu0 0.0
      %3493 = vmatprep.subr.mxu0 0.0
      %3494 = vmatpush1.msra.mxu0 0.0
      %3495 = vmatprep.subr.mxu0 0.0
      %3496 = vmatpush1.msra.mxu0 0.0
      %3497 = vmatprep.subr.mxu0 0.0
      %3498 = vmatpush1.msra.mxu0 0.0
      %3499 = vmatprep.subr.mxu0 0.0
      %3500 = vmatpush1.msra.mxu0 0.0
      %3501 = vmatprep.subr.mxu0 0.0
      %3502 = vmatpush1.msra.mxu0 0.0
      %3503 = vmatprep.subr.mxu0 0.0
      %3504 = vmatpush1.msra.mxu0 0.0
      %3505 = vmatprep.subr.mxu0 0.0
      %3506 = vmatpush1.msra.mxu0 0.0
      %3507 = vmatprep.subr.mxu0 0.0
      %3508 = vmatpush1.msra.mxu0 0.0
      %3509 = vmatprep.subr.mxu0 0.0
      %3510 = vmatpush1.msra.mxu0 0.0
      %3511 = vmatprep.subr.mxu0 0.0
      %3512 = vmatpush1.msra.mxu0 0.0
      %3513 = vmatprep.subr.mxu0 0.0
      %3514 = vmatpush1.msra.mxu0 0.0
      %3515 = vmatprep.subr.mxu0 0.0
      %3516 = vmatpush1.msra.mxu0 0.0
      %3517 = vmatprep.subr.mxu0 0.0
      %3518 = vmatpush1.msra.mxu0 0.0
      %3519 = vmatprep.mubr.f32.mxu0 0.0
      %v3520 = vand.u32 %v347, 4294901760
      %3521 = vmatmul.mubr.f32.gmra.mrb[0].mxu0 %v3520
      %v3522 = vpop.f32.mrb[0].mxu0
      %v3523 = vadd.f32 %v3427, %v3522
      %v3524 = vpop.f32.mrb[0].mxu0
      %v3525 = vadd.f32 %v3429, %v3524
      %3526 = vdwg.mxu0
      %v3527 = vand.u32 %v222, 4294901760
      %3528 = vmatprep.subr.mxu0 %v3527
      %v3529 = vand.u32 %v221, 4294901760
      %3530 = vmatpush1.msra.mxu0 %v3529
      %v3531 = vand.u32 %v254, 4294901760
      %3532 = vmatprep.subr.mxu0 %v3531
      %v3533 = vand.u32 %v253, 4294901760
      %3534 = vmatpush1.msra.mxu0 %v3533
      %v3535 = vand.u32 %v286, 4294901760
      %3536 = vmatprep.subr.mxu0 %v3535
      %v3537 = vand.u32 %v285, 4294901760
      %3538 = vmatpush1.msra.mxu0 %v3537
      %v3539 = vand.u32 %v318, 4294901760
      %3540 = vmatprep.subr.mxu0 %v3539
      %v3541 = vand.u32 %v317, 4294901760
      %3542 = vmatpush1.msra.mxu0 %v3541
      %3543 = vmatprep.subr.mxu0 0.0
      %3544 = vmatpush1.msra.mxu0 0.0
      %3545 = vmatprep.subr.mxu0 0.0
      %3546 = vmatpush1.msra.mxu0 0.0
      %3547 = vmatprep.subr.mxu0 0.0
      %3548 = vmatpush1.msra.mxu0 0.0
      %3549 = vmatprep.subr.mxu0 0.0
      %3550 = vmatpush1.msra.mxu0 0.0
      %3551 = vmatprep.subr.mxu0 0.0
      %3552 = vmatpush1.msra.mxu0 0.0
      %3553 = vmatprep.subr.mxu0 0.0
      %3554 = vmatpush1.msra.mxu0 0.0
      %3555 = vmatprep.subr.mxu0 0.0
      %3556 = vmatpush1.msra.mxu0 0.0
      %3557 = vmatprep.subr.mxu0 0.0
      %3558 = vmatpush1.msra.mxu0 0.0
      %3559 = vmatprep.subr.mxu0 0.0
      %3560 = vmatpush1.msra.mxu0 0.0
      %3561 = vmatprep.subr.mxu0 0.0
      %3562 = vmatpush1.msra.mxu0 0.0
      %3563 = vmatprep.subr.mxu0 0.0
      %3564 = vmatpush1.msra.mxu0 0.0
      %3565 = vmatprep.subr.mxu0 0.0
      %3566 = vmatpush1.msra.mxu0 0.0
      %3567 = vmatprep.subr.mxu0 0.0
      %3568 = vmatpush1.msra.mxu0 0.0
      %3569 = vmatprep.subr.mxu0 0.0
      %3570 = vmatpush1.msra.mxu0 0.0
      %3571 = vmatprep.subr.mxu0 0.0
      %3572 = vmatpush1.msra.mxu0 0.0
      %3573 = vmatprep.subr.mxu0 0.0
      %3574 = vmatpush1.msra.mxu0 0.0
      %3575 = vmatprep.subr.mxu0 0.0
      %3576 = vmatpush1.msra.mxu0 0.0
      %3577 = vmatprep.subr.mxu0 0.0
      %3578 = vmatpush1.msra.mxu0 0.0
      %3579 = vmatprep.subr.mxu0 0.0
      %3580 = vmatpush1.msra.mxu0 0.0
      %3581 = vmatprep.subr.mxu0 0.0
      %3582 = vmatpush1.msra.mxu0 0.0
      %3583 = vmatprep.subr.mxu0 0.0
      %3584 = vmatpush1.msra.mxu0 0.0
      %3585 = vmatprep.subr.mxu0 0.0
      %3586 = vmatpush1.msra.mxu0 0.0
      %3587 = vmatprep.subr.mxu0 0.0
      %3588 = vmatpush1.msra.mxu0 0.0
      %3589 = vmatprep.subr.mxu0 0.0
      %3590 = vmatpush1.msra.mxu0 0.0
      %3591 = vmatprep.subr.mxu0 0.0
      %3592 = vmatpush1.msra.mxu0 0.0
      %3593 = vmatprep.subr.mxu0 0.0
      %3594 = vmatpush1.msra.mxu0 0.0
      %3595 = vmatprep.subr.mxu0 0.0
      %3596 = vmatpush1.msra.mxu0 0.0
      %3597 = vmatprep.subr.mxu0 0.0
      %3598 = vmatpush1.msra.mxu0 0.0
      %3599 = vmatprep.mubr.f32.mxu0 0.0
      %v3600 = vand.u32 %v347, 4294901760
      %3601 = vmatmul.mubr.f32.gmra.mrb[0].mxu0 %v3600
      %v3602 = vpop.f32.mrb[0].mxu0
      %v3603 = vadd.f32 %v3523, %v3602
      %v3604 = vpop.f32.mrb[0].mxu0
      %v3605 = vadd.f32 %v3525, %v3604
      %3606 = vdwg.mxu0
      %v3607 = vand.u32 %v224, 4294901760
      %3608 = vmatprep.subr.mxu0 %v3607
      %v3609 = vand.u32 %v223, 4294901760
      %3610 = vmatpush1.msra.mxu0 %v3609
      %v3611 = vand.u32 %v256, 4294901760
      %3612 = vmatprep.subr.mxu0 %v3611
      %v3613 = vand.u32 %v255, 4294901760
      %3614 = vmatpush1.msra.mxu0 %v3613
      %v3615 = vand.u32 %v288, 4294901760
      %3616 = vmatprep.subr.mxu0 %v3615
      %v3617 = vand.u32 %v287, 4294901760
      %3618 = vmatpush1.msra.mxu0 %v3617
      %v3619 = vand.u32 %v320, 4294901760
      %3620 = vmatprep.subr.mxu0 %v3619
      %v3621 = vand.u32 %v319, 4294901760
      %3622 = vmatpush1.msra.mxu0 %v3621
      %3623 = vmatprep.subr.mxu0 0.0
      %3624 = vmatpush1.msra.mxu0 0.0
      %3625 = vmatprep.subr.mxu0 0.0
      %3626 = vmatpush1.msra.mxu0 0.0
      %3627 = vmatprep.subr.mxu0 0.0
      %3628 = vmatpush1.msra.mxu0 0.0
      %3629 = vmatprep.subr.mxu0 0.0
      %3630 = vmatpush1.msra.mxu0 0.0
      %3631 = vmatprep.subr.mxu0 0.0
      %3632 = vmatpush1.msra.mxu0 0.0
      %3633 = vmatprep.subr.mxu0 0.0
      %3634 = vmatpush1.msra.mxu0 0.0
      %3635 = vmatprep.subr.mxu0 0.0
      %3636 = vmatpush1.msra.mxu0 0.0
      %3637 = vmatprep.subr.mxu0 0.0
      %3638 = vmatpush1.msra.mxu0 0.0
      %3639 = vmatprep.subr.mxu0 0.0
      %3640 = vmatpush1.msra.mxu0 0.0
      %3641 = vmatprep.subr.mxu0 0.0
      %3642 = vmatpush1.msra.mxu0 0.0
      %3643 = vmatprep.subr.mxu0 0.0
      %3644 = vmatpush1.msra.mxu0 0.0
      %3645 = vmatprep.subr.mxu0 0.0
      %3646 = vmatpush1.msra.mxu0 0.0
      %3647 = vmatprep.subr.mxu0 0.0
      %3648 = vmatpush1.msra.mxu0 0.0
      %3649 = vmatprep.subr.mxu0 0.0
      %3650 = vmatpush1.msra.mxu0 0.0
      %3651 = vmatprep.subr.mxu0 0.0
      %3652 = vmatpush1.msra.mxu0 0.0
      %3653 = vmatprep.subr.mxu0 0.0
      %3654 = vmatpush1.msra.mxu0 0.0
      %3655 = vmatprep.subr.mxu0 0.0
      %3656 = vmatpush1.msra.mxu0 0.0
      %3657 = vmatprep.subr.mxu0 0.0
      %3658 = vmatpush1.msra.mxu0 0.0
      %3659 = vmatprep.subr.mxu0 0.0
      %3660 = vmatpush1.msra.mxu0 0.0
      %3661 = vmatprep.subr.mxu0 0.0
      %3662 = vmatpush1.msra.mxu0 0.0
      %3663 = vmatprep.subr.mxu0 0.0
      %3664 = vmatpush1.msra.mxu0 0.0
      %3665 = vmatprep.subr.mxu0 0.0
      %3666 = vmatpush1.msra.mxu0 0.0
      %3667 = vmatprep.subr.mxu0 0.0
      %3668 = vmatpush1.msra.mxu0 0.0
      %3669 = vmatprep.subr.mxu0 0.0
      %3670 = vmatpush1.msra.mxu0 0.0
      %3671 = vmatprep.subr.mxu0 0.0
      %3672 = vmatpush1.msra.mxu0 0.0
      %3673 = vmatprep.subr.mxu0 0.0
      %3674 = vmatpush1.msra.mxu0 0.0
      %3675 = vmatprep.subr.mxu0 0.0
      %3676 = vmatpush1.msra.mxu0 0.0
      %3677 = vmatprep.subr.mxu0 0.0
      %3678 = vmatpush1.msra.mxu0 0.0
      %3679 = vmatprep.mubr.f32.mxu0 0.0
      %v3680 = vand.u32 %v347, 4294901760
      %v3681 = vsub.f32 %v347, %v3680
      %v3682 = vand.u32 %v3681, 4294901760
      %v3683 = vsub.f32 %v3681, %v3682
      %v3684 = vand.u32 %v3683, 4294901760
      %3685 = vmatmul.mubr.f32.gmra.mrb[0].mxu0 %v3684
      %v3686 = vpop.f32.mrb[0].mxu0
      %v3687 = vadd.f32 %v343, %v3686
      %v3688 = vpop.f32.mrb[0].mxu0
      %v3689 = vadd.f32 %v343, %v3688
      %3690 = vdwg.mxu0
      %v3691 = vand.u32 %v224, 4294901760
      %v3692 = vsub.f32 %v224, %v3691
      %v3693 = vand.u32 %v3692, 4294901760
      %v3694 = vsub.f32 %v3692, %v3693
      %v3695 = vand.u32 %v3694, 4294901760
      %3696 = vmatprep.subr.mxu0 %v3695
      %v3697 = vand.u32 %v223, 4294901760
      %v3698 = vsub.f32 %v223, %v3697
      %v3699 = vand.u32 %v3698, 4294901760
      %v3700 = vsub.f32 %v3698, %v3699
      %v3701 = vand.u32 %v3700, 4294901760
      %3702 = vmatpush1.msra.mxu0 %v3701
      %v3703 = vand.u32 %v256, 4294901760
      %v3704 = vsub.f32 %v256, %v3703
      %v3705 = vand.u32 %v3704, 4294901760
      %v3706 = vsub.f32 %v3704, %v3705
      %v3707 = vand.u32 %v3706, 4294901760
      %3708 = vmatprep.subr.mxu0 %v3707
      %v3709 = vand.u32 %v255, 4294901760
      %v3710 = vsub.f32 %v255, %v3709
      %v3711 = vand.u32 %v3710, 4294901760
      %v3712 = vsub.f32 %v3710, %v3711
      %v3713 = vand.u32 %v3712, 4294901760
      %3714 = vmatpush1.msra.mxu0 %v3713
      %v3715 = vand.u32 %v288, 4294901760
      %v3716 = vsub.f32 %v288, %v3715
      %v3717 = vand.u32 %v3716, 4294901760
      %v3718 = vsub.f32 %v3716, %v3717
      %v3719 = vand.u32 %v3718, 4294901760
      %3720 = vmatprep.subr.mxu0 %v3719
      %v3721 = vand.u32 %v287, 4294901760
      %v3722 = vsub.f32 %v287, %v3721
      %v3723 = vand.u32 %v3722, 4294901760
      %v3724 = vsub.f32 %v3722, %v3723
      %v3725 = vand.u32 %v3724, 4294901760
      %3726 = vmatpush1.msra.mxu0 %v3725
      %v3727 = vand.u32 %v320, 4294901760
      %v3728 = vsub.f32 %v320, %v3727
      %v3729 = vand.u32 %v3728, 4294901760
      %v3730 = vsub.f32 %v3728, %v3729
      %v3731 = vand.u32 %v3730, 4294901760
      %3732 = vmatprep.subr.mxu0 %v3731
      %v3733 = vand.u32 %v319, 4294901760
      %v3734 = vsub.f32 %v319, %v3733
      %v3735 = vand.u32 %v3734, 4294901760
      %v3736 = vsub.f32 %v3734, %v3735
      %v3737 = vand.u32 %v3736, 4294901760
      %3738 = vmatpush1.msra.mxu0 %v3737
      %3739 = vmatprep.subr.mxu0 0.0
      %3740 = vmatpush1.msra.mxu0 0.0
      %3741 = vmatprep.subr.mxu0 0.0
      %3742 = vmatpush1.msra.mxu0 0.0
      %3743 = vmatprep.subr.mxu0 0.0
      %3744 = vmatpush1.msra.mxu0 0.0
      %3745 = vmatprep.subr.mxu0 0.0
      %3746 = vmatpush1.msra.mxu0 0.0
      %3747 = vmatprep.subr.mxu0 0.0
      %3748 = vmatpush1.msra.mxu0 0.0
      %3749 = vmatprep.subr.mxu0 0.0
      %3750 = vmatpush1.msra.mxu0 0.0
      %3751 = vmatprep.subr.mxu0 0.0
      %3752 = vmatpush1.msra.mxu0 0.0
      %3753 = vmatprep.subr.mxu0 0.0
      %3754 = vmatpush1.msra.mxu0 0.0
      %3755 = vmatprep.subr.mxu0 0.0
      %3756 = vmatpush1.msra.mxu0 0.0
      %3757 = vmatprep.subr.mxu0 0.0
      %3758 = vmatpush1.msra.mxu0 0.0
      %3759 = vmatprep.subr.mxu0 0.0
      %3760 = vmatpush1.msra.mxu0 0.0
      %3761 = vmatprep.subr.mxu0 0.0
      %3762 = vmatpush1.msra.mxu0 0.0
      %3763 = vmatprep.subr.mxu0 0.0
      %3764 = vmatpush1.msra.mxu0 0.0
      %3765 = vmatprep.subr.mxu0 0.0
      %3766 = vmatpush1.msra.mxu0 0.0
      %3767 = vmatprep.subr.mxu0 0.0
      %3768 = vmatpush1.msra.mxu0 0.0
      %3769 = vmatprep.subr.mxu0 0.0
      %3770 = vmatpush1.msra.mxu0 0.0
      %3771 = vmatprep.subr.mxu0 0.0
      %3772 = vmatpush1.msra.mxu0 0.0
      %3773 = vmatprep.subr.mxu0 0.0
      %3774 = vmatpush1.msra.mxu0 0.0
      %3775 = vmatprep.subr.mxu0 0.0
      %3776 = vmatpush1.msra.mxu0 0.0
      %3777 = vmatprep.subr.mxu0 0.0
      %3778 = vmatpush1.msra.mxu0 0.0
      %3779 = vmatprep.subr.mxu0 0.0
      %3780 = vmatpush1.msra.mxu0 0.0
      %3781 = vmatprep.subr.mxu0 0.0
      %3782 = vmatpush1.msra.mxu0 0.0
      %3783 = vmatprep.subr.mxu0 0.0
      %3784 = vmatpush1.msra.mxu0 0.0
      %3785 = vmatprep.subr.mxu0 0.0
      %3786 = vmatpush1.msra.mxu0 0.0
      %3787 = vmatprep.subr.mxu0 0.0
      %3788 = vmatpush1.msra.mxu0 0.0
      %3789 = vmatprep.subr.mxu0 0.0
      %3790 = vmatpush1.msra.mxu0 0.0
      %3791 = vmatprep.subr.mxu0 0.0
      %3792 = vmatpush1.msra.mxu0 0.0
      %3793 = vmatprep.subr.mxu0 0.0
      %3794 = vmatpush1.msra.mxu0 0.0
      %3795 = vmatprep.mubr.f32.mxu0 0.0
      %v3796 = vand.u32 %v347, 4294901760
      %3797 = vmatmul.mubr.f32.gmra.mrb[0].mxu0 %v3796
      %v3798 = vpop.f32.mrb[0].mxu0
      %v3799 = vadd.f32 %v3687, %v3798
      %v3800 = vpop.f32.mrb[0].mxu0
      %v3801 = vadd.f32 %v3689, %v3800
      %3802 = vdwg.mxu0
      %v3803 = vand.u32 %v224, 4294901760
      %v3804 = vsub.f32 %v224, %v3803
      %3805 = vmatprep.subr.mxu0 %v3804
      %v3806 = vand.u32 %v223, 4294901760
      %v3807 = vsub.f32 %v223, %v3806
      %3808 = vmatpush1.msra.mxu0 %v3807
      %v3809 = vand.u32 %v256, 4294901760
      %v3810 = vsub.f32 %v256, %v3809
      %3811 = vmatprep.subr.mxu0 %v3810
      %v3812 = vand.u32 %v255, 4294901760
      %v3813 = vsub.f32 %v255, %v3812
      %3814 = vmatpush1.msra.mxu0 %v3813
      %v3815 = vand.u32 %v288, 4294901760
      %v3816 = vsub.f32 %v288, %v3815
      %3817 = vmatprep.subr.mxu0 %v3816
      %v3818 = vand.u32 %v287, 4294901760
      %v3819 = vsub.f32 %v287, %v3818
      %3820 = vmatpush1.msra.mxu0 %v3819
      %v3821 = vand.u32 %v320, 4294901760
      %v3822 = vsub.f32 %v320, %v3821
      %3823 = vmatprep.subr.mxu0 %v3822
      %v3824 = vand.u32 %v319, 4294901760
      %v3825 = vsub.f32 %v319, %v3824
      %3826 = vmatpush1.msra.mxu0 %v3825
      %3827 = vmatprep.subr.mxu0 0.0
      %3828 = vmatpush1.msra.mxu0 0.0
      %3829 = vmatprep.subr.mxu0 0.0
      %3830 = vmatpush1.msra.mxu0 0.0
      %3831 = vmatprep.subr.mxu0 0.0
      %3832 = vmatpush1.msra.mxu0 0.0
      %3833 = vmatprep.subr.mxu0 0.0
      %3834 = vmatpush1.msra.mxu0 0.0
      %3835 = vmatprep.subr.mxu0 0.0
      %3836 = vmatpush1.msra.mxu0 0.0
      %3837 = vmatprep.subr.mxu0 0.0
      %3838 = vmatpush1.msra.mxu0 0.0
      %3839 = vmatprep.subr.mxu0 0.0
      %3840 = vmatpush1.msra.mxu0 0.0
      %3841 = vmatprep.subr.mxu0 0.0
      %3842 = vmatpush1.msra.mxu0 0.0
      %3843 = vmatprep.subr.mxu0 0.0
      %3844 = vmatpush1.msra.mxu0 0.0
      %3845 = vmatprep.subr.mxu0 0.0
      %3846 = vmatpush1.msra.mxu0 0.0
      %3847 = vmatprep.subr.mxu0 0.0
      %3848 = vmatpush1.msra.mxu0 0.0
      %3849 = vmatprep.subr.mxu0 0.0
      %3850 = vmatpush1.msra.mxu0 0.0
      %3851 = vmatprep.subr.mxu0 0.0
      %3852 = vmatpush1.msra.mxu0 0.0
      %3853 = vmatprep.subr.mxu0 0.0
      %3854 = vmatpush1.msra.mxu0 0.0
      %3855 = vmatprep.subr.mxu0 0.0
      %3856 = vmatpush1.msra.mxu0 0.0
      %3857 = vmatprep.subr.mxu0 0.0
      %3858 = vmatpush1.msra.mxu0 0.0
      %3859 = vmatprep.subr.mxu0 0.0
      %3860 = vmatpush1.msra.mxu0 0.0
      %3861 = vmatprep.subr.mxu0 0.0
      %3862 = vmatpush1.msra.mxu0 0.0
      %3863 = vmatprep.subr.mxu0 0.0
      %3864 = vmatpush1.msra.mxu0 0.0
      %3865 = vmatprep.subr.mxu0 0.0
      %3866 = vmatpush1.msra.mxu0 0.0
      %3867 = vmatprep.subr.mxu0 0.0
      %3868 = vmatpush1.msra.mxu0 0.0
      %3869 = vmatprep.subr.mxu0 0.0
      %3870 = vmatpush1.msra.mxu0 0.0
      %3871 = vmatprep.subr.mxu0 0.0
      %3872 = vmatpush1.msra.mxu0 0.0
      %3873 = vmatprep.subr.mxu0 0.0
      %3874 = vmatpush1.msra.mxu0 0.0
      %3875 = vmatprep.subr.mxu0 0.0
      %3876 = vmatpush1.msra.mxu0 0.0
      %3877 = vmatprep.subr.mxu0 0.0
      %3878 = vmatpush1.msra.mxu0 0.0
      %3879 = vmatprep.subr.mxu0 0.0
      %3880 = vmatpush1.msra.mxu0 0.0
      %3881 = vmatprep.subr.mxu0 0.0
      %3882 = vmatpush1.msra.mxu0 0.0
      %3883 = vmatprep.mubr.f32.mxu0 0.0
      %v3884 = vand.u32 %v347, 4294901760
      %v3885 = vsub.f32 %v347, %v3884
      %3886 = vmatmul.mubr.f32.gmra.mrb[0].mxu0 %v3885
      %v3887 = vpop.f32.mrb[0].mxu0
      %v3888 = vadd.f32 %v3799, %v3887
      %v3889 = vpop.f32.mrb[0].mxu0
      %v3890 = vadd.f32 %v3801, %v3889
      %3891 = vdwg.mxu0
      %v3892 = vand.u32 %v224, 4294901760
      %3893 = vmatprep.subr.mxu0 %v3892
      %v3894 = vand.u32 %v223, 4294901760
      %3895 = vmatpush1.msra.mxu0 %v3894
      %v3896 = vand.u32 %v256, 4294901760
      %3897 = vmatprep.subr.mxu0 %v3896
      %v3898 = vand.u32 %v255, 4294901760
      %3899 = vmatpush1.msra.mxu0 %v3898
      %v3900 = vand.u32 %v288, 4294901760
      %3901 = vmatprep.subr.mxu0 %v3900
      %v3902 = vand.u32 %v287, 4294901760
      %3903 = vmatpush1.msra.mxu0 %v3902
      %v3904 = vand.u32 %v320, 4294901760
      %3905 = vmatprep.subr.mxu0 %v3904
      %v3906 = vand.u32 %v319, 4294901760
      %3907 = vmatpush1.msra.mxu0 %v3906
      %3908 = vmatprep.subr.mxu0 0.0
      %3909 = vmatpush1.msra.mxu0 0.0
      %3910 = vmatprep.subr.mxu0 0.0
      %3911 = vmatpush1.msra.mxu0 0.0
      %3912 = vmatprep.subr.mxu0 0.0
      %3913 = vmatpush1.msra.mxu0 0.0
      %3914 = vmatprep.subr.mxu0 0.0
      %3915 = vmatpush1.msra.mxu0 0.0
      %3916 = vmatprep.subr.mxu0 0.0
      %3917 = vmatpush1.msra.mxu0 0.0
      %3918 = vmatprep.subr.mxu0 0.0
      %3919 = vmatpush1.msra.mxu0 0.0
      %3920 = vmatprep.subr.mxu0 0.0
      %3921 = vmatpush1.msra.mxu0 0.0
      %3922 = vmatprep.subr.mxu0 0.0
      %3923 = vmatpush1.msra.mxu0 0.0
      %3924 = vmatprep.subr.mxu0 0.0
      %3925 = vmatpush1.msra.mxu0 0.0
      %3926 = vmatprep.subr.mxu0 0.0
      %3927 = vmatpush1.msra.mxu0 0.0
      %3928 = vmatprep.subr.mxu0 0.0
      %3929 = vmatpush1.msra.mxu0 0.0
      %3930 = vmatprep.subr.mxu0 0.0
      %3931 = vmatpush1.msra.mxu0 0.0
      %3932 = vmatprep.subr.mxu0 0.0
      %3933 = vmatpush1.msra.mxu0 0.0
      %3934 = vmatprep.subr.mxu0 0.0
      %3935 = vmatpush1.msra.mxu0 0.0
      %3936 = vmatprep.subr.mxu0 0.0
      %3937 = vmatpush1.msra.mxu0 0.0
      %3938 = vmatprep.subr.mxu0 0.0
      %3939 = vmatpush1.msra.mxu0 0.0
      %3940 = vmatprep.subr.mxu0 0.0
      %3941 = vmatpush1.msra.mxu0 0.0
      %3942 = vmatprep.subr.mxu0 0.0
      %3943 = vmatpush1.msra.mxu0 0.0
      %3944 = vmatprep.subr.mxu0 0.0
      %3945 = vmatpush1.msra.mxu0 0.0
      %3946 = vmatprep.subr.mxu0 0.0
      %3947 = vmatpush1.msra.mxu0 0.0
      %3948 = vmatprep.subr.mxu0 0.0
      %3949 = vmatpush1.msra.mxu0 0.0
      %3950 = vmatprep.subr.mxu0 0.0
      %3951 = vmatpush1.msra.mxu0 0.0
      %3952 = vmatprep.subr.mxu0 0.0
      %3953 = vmatpush1.msra.mxu0 0.0
      %3954 = vmatprep.subr.mxu0 0.0
      %3955 = vmatpush1.msra.mxu0 0.0
      %3956 = vmatprep.subr.mxu0 0.0
      %3957 = vmatpush1.msra.mxu0 0.0
      %3958 = vmatprep.subr.mxu0 0.0
      %3959 = vmatpush1.msra.mxu0 0.0
      %3960 = vmatprep.subr.mxu0 0.0
      %3961 = vmatpush1.msra.mxu0 0.0
      %3962 = vmatprep.subr.mxu0 0.0
      %3963 = vmatpush1.msra.mxu0 0.0
      %3964 = vmatprep.mubr.f32.mxu0 0.0
      %v3965 = vand.u32 %v347, 4294901760
      %v3966 = vsub.f32 %v347, %v3965
      %v3967 = vand.u32 %v3966, 4294901760
      %3968 = vmatmul.mubr.f32.gmra.mrb[0].mxu0 %v3967
      %v3969 = vpop.f32.mrb[0].mxu0
      %v3970 = vadd.f32 %v3888, %v3969
      %v3971 = vpop.f32.mrb[0].mxu0
      %v3972 = vadd.f32 %v3890, %v3971
      %3973 = vdwg.mxu0
      %v3974 = vand.u32 %v224, 4294901760
      %v3975 = vsub.f32 %v224, %v3974
      %v3976 = vand.u32 %v3975, 4294901760
      %3977 = vmatprep.subr.mxu0 %v3976
      %v3978 = vand.u32 %v223, 4294901760
      %v3979 = vsub.f32 %v223, %v3978
      %v3980 = vand.u32 %v3979, 4294901760
      %3981 = vmatpush1.msra.mxu0 %v3980
      %v3982 = vand.u32 %v256, 4294901760
      %v3983 = vsub.f32 %v256, %v3982
      %v3984 = vand.u32 %v3983, 4294901760
      %3985 = vmatprep.subr.mxu0 %v3984
      %v3986 = vand.u32 %v255, 4294901760
      %v3987 = vsub.f32 %v255, %v3986
      %v3988 = vand.u32 %v3987, 4294901760
      %3989 = vmatpush1.msra.mxu0 %v3988
      %v3990 = vand.u32 %v288, 4294901760
      %v3991 = vsub.f32 %v288, %v3990
      %v3992 = vand.u32 %v3991, 4294901760
      %3993 = vmatprep.subr.mxu0 %v3992
      %v3994 = vand.u32 %v287, 4294901760
      %v3995 = vsub.f32 %v287, %v3994
      %v3996 = vand.u32 %v3995, 4294901760
      %3997 = vmatpush1.msra.mxu0 %v3996
      %v3998 = vand.u32 %v320, 4294901760
      %v3999 = vsub.f32 %v320, %v3998
      %v4000 = vand.u32 %v3999, 4294901760
      %4001 = vmatprep.subr.mxu0 %v4000
      %v4002 = vand.u32 %v319, 4294901760
      %v4003 = vsub.f32 %v319, %v4002
      %v4004 = vand.u32 %v4003, 4294901760
      %4005 = vmatpush1.msra.mxu0 %v4004
      %4006 = vmatprep.subr.mxu0 0.0
      %4007 = vmatpush1.msra.mxu0 0.0
      %4008 = vmatprep.subr.mxu0 0.0
      %4009 = vmatpush1.msra.mxu0 0.0
      %4010 = vmatprep.subr.mxu0 0.0
      %4011 = vmatpush1.msra.mxu0 0.0
      %4012 = vmatprep.subr.mxu0 0.0
      %4013 = vmatpush1.msra.mxu0 0.0
      %4014 = vmatprep.subr.mxu0 0.0
      %4015 = vmatpush1.msra.mxu0 0.0
      %4016 = vmatprep.subr.mxu0 0.0
      %4017 = vmatpush1.msra.mxu0 0.0
      %4018 = vmatprep.subr.mxu0 0.0
      %4019 = vmatpush1.msra.mxu0 0.0
      %4020 = vmatprep.subr.mxu0 0.0
      %4021 = vmatpush1.msra.mxu0 0.0
      %4022 = vmatprep.subr.mxu0 0.0
      %4023 = vmatpush1.msra.mxu0 0.0
      %4024 = vmatprep.subr.mxu0 0.0
      %4025 = vmatpush1.msra.mxu0 0.0
      %4026 = vmatprep.subr.mxu0 0.0
      %4027 = vmatpush1.msra.mxu0 0.0
      %4028 = vmatprep.subr.mxu0 0.0
      %4029 = vmatpush1.msra.mxu0 0.0
      %4030 = vmatprep.subr.mxu0 0.0
      %4031 = vmatpush1.msra.mxu0 0.0
      %4032 = vmatprep.subr.mxu0 0.0
      %4033 = vmatpush1.msra.mxu0 0.0
      %4034 = vmatprep.subr.mxu0 0.0
      %4035 = vmatpush1.msra.mxu0 0.0
      %4036 = vmatprep.subr.mxu0 0.0
      %4037 = vmatpush1.msra.mxu0 0.0
      %4038 = vmatprep.subr.mxu0 0.0
      %4039 = vmatpush1.msra.mxu0 0.0
      %4040 = vmatprep.subr.mxu0 0.0
      %4041 = vmatpush1.msra.mxu0 0.0
      %4042 = vmatprep.subr.mxu0 0.0
      %4043 = vmatpush1.msra.mxu0 0.0
      %4044 = vmatprep.subr.mxu0 0.0
      %4045 = vmatpush1.msra.mxu0 0.0
      %4046 = vmatprep.subr.mxu0 0.0
      %4047 = vmatpush1.msra.mxu0 0.0
      %4048 = vmatprep.subr.mxu0 0.0
      %4049 = vmatpush1.msra.mxu0 0.0
      %4050 = vmatprep.subr.mxu0 0.0
      %4051 = vmatpush1.msra.mxu0 0.0
      %4052 = vmatprep.subr.mxu0 0.0
      %4053 = vmatpush1.msra.mxu0 0.0
      %4054 = vmatprep.subr.mxu0 0.0
      %4055 = vmatpush1.msra.mxu0 0.0
      %4056 = vmatprep.subr.mxu0 0.0
      %4057 = vmatpush1.msra.mxu0 0.0
      %4058 = vmatprep.subr.mxu0 0.0
      %4059 = vmatpush1.msra.mxu0 0.0
      %4060 = vmatprep.subr.mxu0 0.0
      %4061 = vmatpush1.msra.mxu0 0.0
      %4062 = vmatprep.mubr.f32.mxu0 0.0
      %v4063 = vand.u32 %v347, 4294901760
      %4064 = vmatmul.mubr.f32.gmra.mrb[0].mxu0 %v4063
      %v4065 = vpop.f32.mrb[0].mxu0
      %v4066 = vadd.f32 %v3970, %v4065
      %v4067 = vpop.f32.mrb[0].mxu0
      %v4068 = vadd.f32 %v3972, %v4067
      %4069 = vdwg.mxu0
      %v4070 = vand.u32 %v224, 4294901760
      %4071 = vmatprep.subr.mxu0 %v4070
      %v4072 = vand.u32 %v223, 4294901760
      %4073 = vmatpush1.msra.mxu0 %v4072
      %v4074 = vand.u32 %v256, 4294901760
      %4075 = vmatprep.subr.mxu0 %v4074
      %v4076 = vand.u32 %v255, 4294901760
      %4077 = vmatpush1.msra.mxu0 %v4076
      %v4078 = vand.u32 %v288, 4294901760
      %4079 = vmatprep.subr.mxu0 %v4078
      %v4080 = vand.u32 %v287, 4294901760
      %4081 = vmatpush1.msra.mxu0 %v4080
      %v4082 = vand.u32 %v320, 4294901760
      %4083 = vmatprep.subr.mxu0 %v4082
      %v4084 = vand.u32 %v319, 4294901760
      %4085 = vmatpush1.msra.mxu0 %v4084
      %4086 = vmatprep.subr.mxu0 0.0
      %4087 = vmatpush1.msra.mxu0 0.0
      %4088 = vmatprep.subr.mxu0 0.0
      %4089 = vmatpush1.msra.mxu0 0.0
      %4090 = vmatprep.subr.mxu0 0.0
      %4091 = vmatpush1.msra.mxu0 0.0
      %4092 = vmatprep.subr.mxu0 0.0
      %4093 = vmatpush1.msra.mxu0 0.0
      %4094 = vmatprep.subr.mxu0 0.0
      %4095 = vmatpush1.msra.mxu0 0.0
      %4096 = vmatprep.subr.mxu0 0.0
      %4097 = vmatpush1.msra.mxu0 0.0
      %4098 = vmatprep.subr.mxu0 0.0
      %4099 = vmatpush1.msra.mxu0 0.0
      %4100 = vmatprep.subr.mxu0 0.0
      %4101 = vmatpush1.msra.mxu0 0.0
      %4102 = vmatprep.subr.mxu0 0.0
      %4103 = vmatpush1.msra.mxu0 0.0
      %4104 = vmatprep.subr.mxu0 0.0
      %4105 = vmatpush1.msra.mxu0 0.0
      %4106 = vmatprep.subr.mxu0 0.0
      %4107 = vmatpush1.msra.mxu0 0.0
      %4108 = vmatprep.subr.mxu0 0.0
      %4109 = vmatpush1.msra.mxu0 0.0
      %4110 = vmatprep.subr.mxu0 0.0
      %4111 = vmatpush1.msra.mxu0 0.0
      %4112 = vmatprep.subr.mxu0 0.0
      %4113 = vmatpush1.msra.mxu0 0.0
      %4114 = vmatprep.subr.mxu0 0.0
      %4115 = vmatpush1.msra.mxu0 0.0
      %4116 = vmatprep.subr.mxu0 0.0
      %4117 = vmatpush1.msra.mxu0 0.0
      %4118 = vmatprep.subr.mxu0 0.0
      %4119 = vmatpush1.msra.mxu0 0.0
      %4120 = vmatprep.subr.mxu0 0.0
      %4121 = vmatpush1.msra.mxu0 0.0
      %4122 = vmatprep.subr.mxu0 0.0
      %4123 = vmatpush1.msra.mxu0 0.0
      %4124 = vmatprep.subr.mxu0 0.0
      %4125 = vmatpush1.msra.mxu0 0.0
      %4126 = vmatprep.subr.mxu0 0.0
      %4127 = vmatpush1.msra.mxu0 0.0
      %4128 = vmatprep.subr.mxu0 0.0
      %4129 = vmatpush1.msra.mxu0 0.0
      %4130 = vmatprep.subr.mxu0 0.0
      %4131 = vmatpush1.msra.mxu0 0.0
      %4132 = vmatprep.subr.mxu0 0.0
      %4133 = vmatpush1.msra.mxu0 0.0
      %4134 = vmatprep.subr.mxu0 0.0
      %4135 = vmatpush1.msra.mxu0 0.0
      %4136 = vmatprep.subr.mxu0 0.0
      %4137 = vmatpush1.msra.mxu0 0.0
      %4138 = vmatprep.subr.mxu0 0.0
      %4139 = vmatpush1.msra.mxu0 0.0
      %4140 = vmatprep.subr.mxu0 0.0
      %4141 = vmatpush1.msra.mxu0 0.0
      %4142 = vmatprep.mubr.f32.mxu0 0.0
      %v4143 = vand.u32 %v347, 4294901760
      %4144 = vmatmul.mubr.f32.gmra.mrb[0].mxu0 %v4143
      %v4145 = vpop.f32.mrb[0].mxu0
      %v4146 = vadd.f32 %v4066, %v4145
      %v4147 = vpop.f32.mrb[0].mxu0
      %v4148 = vadd.f32 %v4068, %v4147
      %4149 = vdwg.mxu0
      %v4150 = vand.u32 %v226, 4294901760
      %4151 = vmatprep.subr.mxu0 %v4150
      %v4152 = vand.u32 %v225, 4294901760
      %4153 = vmatpush1.msra.mxu0 %v4152
      %v4154 = vand.u32 %v258, 4294901760
      %4155 = vmatprep.subr.mxu0 %v4154
      %v4156 = vand.u32 %v257, 4294901760
      %4157 = vmatpush1.msra.mxu0 %v4156
      %v4158 = vand.u32 %v290, 4294901760
      %4159 = vmatprep.subr.mxu0 %v4158
      %v4160 = vand.u32 %v289, 4294901760
      %4161 = vmatpush1.msra.mxu0 %v4160
      %v4162 = vand.u32 %v322, 4294901760
      %4163 = vmatprep.subr.mxu0 %v4162
      %v4164 = vand.u32 %v321, 4294901760
      %4165 = vmatpush1.msra.mxu0 %v4164
      %4166 = vmatprep.subr.mxu0 0.0
      %4167 = vmatpush1.msra.mxu0 0.0
      %4168 = vmatprep.subr.mxu0 0.0
      %4169 = vmatpush1.msra.mxu0 0.0
      %4170 = vmatprep.subr.mxu0 0.0
      %4171 = vmatpush1.msra.mxu0 0.0
      %4172 = vmatprep.subr.mxu0 0.0
      %4173 = vmatpush1.msra.mxu0 0.0
      %4174 = vmatprep.subr.mxu0 0.0
      %4175 = vmatpush1.msra.mxu0 0.0
      %4176 = vmatprep.subr.mxu0 0.0
      %4177 = vmatpush1.msra.mxu0 0.0
      %4178 = vmatprep.subr.mxu0 0.0
      %4179 = vmatpush1.msra.mxu0 0.0
      %4180 = vmatprep.subr.mxu0 0.0
      %4181 = vmatpush1.msra.mxu0 0.0
      %4182 = vmatprep.subr.mxu0 0.0
      %4183 = vmatpush1.msra.mxu0 0.0
      %4184 = vmatprep.subr.mxu0 0.0
      %4185 = vmatpush1.msra.mxu0 0.0
      %4186 = vmatprep.subr.mxu0 0.0
      %4187 = vmatpush1.msra.mxu0 0.0
      %4188 = vmatprep.subr.mxu0 0.0
      %4189 = vmatpush1.msra.mxu0 0.0
      %4190 = vmatprep.subr.mxu0 0.0
      %4191 = vmatpush1.msra.mxu0 0.0
      %4192 = vmatprep.subr.mxu0 0.0
      %4193 = vmatpush1.msra.mxu0 0.0
      %4194 = vmatprep.subr.mxu0 0.0
      %4195 = vmatpush1.msra.mxu0 0.0
      %4196 = vmatprep.subr.mxu0 0.0
      %4197 = vmatpush1.msra.mxu0 0.0
      %4198 = vmatprep.subr.mxu0 0.0
      %4199 = vmatpush1.msra.mxu0 0.0
      %4200 = vmatprep.subr.mxu0 0.0
      %4201 = vmatpush1.msra.mxu0 0.0
      %4202 = vmatprep.subr.mxu0 0.0
      %4203 = vmatpush1.msra.mxu0 0.0
      %4204 = vmatprep.subr.mxu0 0.0
      %4205 = vmatpush1.msra.mxu0 0.0
      %4206 = vmatprep.subr.mxu0 0.0
      %4207 = vmatpush1.msra.mxu0 0.0
      %4208 = vmatprep.subr.mxu0 0.0
      %4209 = vmatpush1.msra.mxu0 0.0
      %4210 = vmatprep.subr.mxu0 0.0
      %4211 = vmatpush1.msra.mxu0 0.0
      %4212 = vmatprep.subr.mxu0 0.0
      %4213 = vmatpush1.msra.mxu0 0.0
      %4214 = vmatprep.subr.mxu0 0.0
      %4215 = vmatpush1.msra.mxu0 0.0
      %4216 = vmatprep.subr.mxu0 0.0
      %4217 = vmatpush1.msra.mxu0 0.0
      %4218 = vmatprep.subr.mxu0 0.0
      %4219 = vmatpush1.msra.mxu0 0.0
      %4220 = vmatprep.subr.mxu0 0.0
      %4221 = vmatpush1.msra.mxu0 0.0
      %4222 = vmatprep.mubr.f32.mxu0 0.0
      %v4223 = vand.u32 %v347, 4294901760
      %v4224 = vsub.f32 %v347, %v4223
      %v4225 = vand.u32 %v4224, 4294901760
      %v4226 = vsub.f32 %v4224, %v4225
      %v4227 = vand.u32 %v4226, 4294901760
      %4228 = vmatmul.mubr.f32.gmra.mrb[0].mxu0 %v4227
      %v4229 = vpop.f32.mrb[0].mxu0
      %v4230 = vadd.f32 %v343, %v4229
      %v4231 = vpop.f32.mrb[0].mxu0
      %v4232 = vadd.f32 %v343, %v4231
      %4233 = vdwg.mxu0
      %v4234 = vand.u32 %v226, 4294901760
      %v4235 = vsub.f32 %v226, %v4234
      %v4236 = vand.u32 %v4235, 4294901760
      %v4237 = vsub.f32 %v4235, %v4236
      %v4238 = vand.u32 %v4237, 4294901760
      %4239 = vmatprep.subr.mxu0 %v4238
      %v4240 = vand.u32 %v225, 4294901760
      %v4241 = vsub.f32 %v225, %v4240
      %v4242 = vand.u32 %v4241, 4294901760
      %v4243 = vsub.f32 %v4241, %v4242
      %v4244 = vand.u32 %v4243, 4294901760
      %4245 = vmatpush1.msra.mxu0 %v4244
      %v4246 = vand.u32 %v258, 4294901760
      %v4247 = vsub.f32 %v258, %v4246
      %v4248 = vand.u32 %v4247, 4294901760
      %v4249 = vsub.f32 %v4247, %v4248
      %v4250 = vand.u32 %v4249, 4294901760
      %4251 = vmatprep.subr.mxu0 %v4250
      %v4252 = vand.u32 %v257, 4294901760
      %v4253 = vsub.f32 %v257, %v4252
      %v4254 = vand.u32 %v4253, 4294901760
      %v4255 = vsub.f32 %v4253, %v4254
      %v4256 = vand.u32 %v4255, 4294901760
      %4257 = vmatpush1.msra.mxu0 %v4256
      %v4258 = vand.u32 %v290, 4294901760
      %v4259 = vsub.f32 %v290, %v4258
      %v4260 = vand.u32 %v4259, 4294901760
      %v4261 = vsub.f32 %v4259, %v4260
      %v4262 = vand.u32 %v4261, 4294901760
      %4263 = vmatprep.subr.mxu0 %v4262
      %v4264 = vand.u32 %v289, 4294901760
      %v4265 = vsub.f32 %v289, %v4264
      %v4266 = vand.u32 %v4265, 4294901760
      %v4267 = vsub.f32 %v4265, %v4266
      %v4268 = vand.u32 %v4267, 4294901760
      %4269 = vmatpush1.msra.mxu0 %v4268
      %v4270 = vand.u32 %v322, 4294901760
      %v4271 = vsub.f32 %v322, %v4270
      %v4272 = vand.u32 %v4271, 4294901760
      %v4273 = vsub.f32 %v4271, %v4272
      %v4274 = vand.u32 %v4273, 4294901760
      %4275 = vmatprep.subr.mxu0 %v4274
      %v4276 = vand.u32 %v321, 4294901760
      %v4277 = vsub.f32 %v321, %v4276
      %v4278 = vand.u32 %v4277, 4294901760
      %v4279 = vsub.f32 %v4277, %v4278
      %v4280 = vand.u32 %v4279, 4294901760
      %4281 = vmatpush1.msra.mxu0 %v4280
      %4282 = vmatprep.subr.mxu0 0.0
      %4283 = vmatpush1.msra.mxu0 0.0
      %4284 = vmatprep.subr.mxu0 0.0
      %4285 = vmatpush1.msra.mxu0 0.0
      %4286 = vmatprep.subr.mxu0 0.0
      %4287 = vmatpush1.msra.mxu0 0.0
      %4288 = vmatprep.subr.mxu0 0.0
      %4289 = vmatpush1.msra.mxu0 0.0
      %4290 = vmatprep.subr.mxu0 0.0
      %4291 = vmatpush1.msra.mxu0 0.0
      %4292 = vmatprep.subr.mxu0 0.0
      %4293 = vmatpush1.msra.mxu0 0.0
      %4294 = vmatprep.subr.mxu0 0.0
      %4295 = vmatpush1.msra.mxu0 0.0
      %4296 = vmatprep.subr.mxu0 0.0
      %4297 = vmatpush1.msra.mxu0 0.0
      %4298 = vmatprep.subr.mxu0 0.0
      %4299 = vmatpush1.msra.mxu0 0.0
      %4300 = vmatprep.subr.mxu0 0.0
      %4301 = vmatpush1.msra.mxu0 0.0
      %4302 = vmatprep.subr.mxu0 0.0
      %4303 = vmatpush1.msra.mxu0 0.0
      %4304 = vmatprep.subr.mxu0 0.0
      %4305 = vmatpush1.msra.mxu0 0.0
      %4306 = vmatprep.subr.mxu0 0.0
      %4307 = vmatpush1.msra.mxu0 0.0
      %4308 = vmatprep.subr.mxu0 0.0
      %4309 = vmatpush1.msra.mxu0 0.0
      %4310 = vmatprep.subr.mxu0 0.0
      %4311 = vmatpush1.msra.mxu0 0.0
      %4312 = vmatprep.subr.mxu0 0.0
      %4313 = vmatpush1.msra.mxu0 0.0
      %4314 = vmatprep.subr.mxu0 0.0
      %4315 = vmatpush1.msra.mxu0 0.0
      %4316 = vmatprep.subr.mxu0 0.0
      %4317 = vmatpush1.msra.mxu0 0.0
      %4318 = vmatprep.subr.mxu0 0.0
      %4319 = vmatpush1.msra.mxu0 0.0
      %4320 = vmatprep.subr.mxu0 0.0
      %4321 = vmatpush1.msra.mxu0 0.0
      %4322 = vmatprep.subr.mxu0 0.0
      %4323 = vmatpush1.msra.mxu0 0.0
      %4324 = vmatprep.subr.mxu0 0.0
      %4325 = vmatpush1.msra.mxu0 0.0
      %4326 = vmatprep.subr.mxu0 0.0
      %4327 = vmatpush1.msra.mxu0 0.0
      %4328 = vmatprep.subr.mxu0 0.0
      %4329 = vmatpush1.msra.mxu0 0.0
      %4330 = vmatprep.subr.mxu0 0.0
      %4331 = vmatpush1.msra.mxu0 0.0
      %4332 = vmatprep.subr.mxu0 0.0
      %4333 = vmatpush1.msra.mxu0 0.0
      %4334 = vmatprep.subr.mxu0 0.0
      %4335 = vmatpush1.msra.mxu0 0.0
      %4336 = vmatprep.subr.mxu0 0.0
      %4337 = vmatpush1.msra.mxu0 0.0
      %4338 = vmatprep.mubr.f32.mxu0 0.0
      %v4339 = vand.u32 %v347, 4294901760
      %4340 = vmatmul.mubr.f32.gmra.mrb[0].mxu0 %v4339
      %v4341 = vpop.f32.mrb[0].mxu0
      %v4342 = vadd.f32 %v4230, %v4341
      %v4343 = vpop.f32.mrb[0].mxu0
      %v4344 = vadd.f32 %v4232, %v4343
      %4345 = vdwg.mxu0
      %v4346 = vand.u32 %v226, 4294901760
      %v4347 = vsub.f32 %v226, %v4346
      %4348 = vmatprep.subr.mxu0 %v4347
      %v4349 = vand.u32 %v225, 4294901760
      %v4350 = vsub.f32 %v225, %v4349
      %4351 = vmatpush1.msra.mxu0 %v4350
      %v4352 = vand.u32 %v258, 4294901760
      %v4353 = vsub.f32 %v258, %v4352
      %4354 = vmatprep.subr.mxu0 %v4353
      %v4355 = vand.u32 %v257, 4294901760
      %v4356 = vsub.f32 %v257, %v4355
      %4357 = vmatpush1.msra.mxu0 %v4356
      %v4358 = vand.u32 %v290, 4294901760
      %v4359 = vsub.f32 %v290, %v4358
      %4360 = vmatprep.subr.mxu0 %v4359
      %v4361 = vand.u32 %v289, 4294901760
      %v4362 = vsub.f32 %v289, %v4361
      %4363 = vmatpush1.msra.mxu0 %v4362
      %v4364 = vand.u32 %v322, 4294901760
      %v4365 = vsub.f32 %v322, %v4364
      %4366 = vmatprep.subr.mxu0 %v4365
      %v4367 = vand.u32 %v321, 4294901760
      %v4368 = vsub.f32 %v321, %v4367
      %4369 = vmatpush1.msra.mxu0 %v4368
      %4370 = vmatprep.subr.mxu0 0.0
      %4371 = vmatpush1.msra.mxu0 0.0
      %4372 = vmatprep.subr.mxu0 0.0
      %4373 = vmatpush1.msra.mxu0 0.0
      %4374 = vmatprep.subr.mxu0 0.0
      %4375 = vmatpush1.msra.mxu0 0.0
      %4376 = vmatprep.subr.mxu0 0.0
      %4377 = vmatpush1.msra.mxu0 0.0
      %4378 = vmatprep.subr.mxu0 0.0
      %4379 = vmatpush1.msra.mxu0 0.0
      %4380 = vmatprep.subr.mxu0 0.0
      %4381 = vmatpush1.msra.mxu0 0.0
      %4382 = vmatprep.subr.mxu0 0.0
      %4383 = vmatpush1.msra.mxu0 0.0
      %4384 = vmatprep.subr.mxu0 0.0
      %4385 = vmatpush1.msra.mxu0 0.0
      %4386 = vmatprep.subr.mxu0 0.0
      %4387 = vmatpush1.msra.mxu0 0.0
      %4388 = vmatprep.subr.mxu0 0.0
      %4389 = vmatpush1.msra.mxu0 0.0
      %4390 = vmatprep.subr.mxu0 0.0
      %4391 = vmatpush1.msra.mxu0 0.0
      %4392 = vmatprep.subr.mxu0 0.0
      %4393 = vmatpush1.msra.mxu0 0.0
      %4394 = vmatprep.subr.mxu0 0.0
      %4395 = vmatpush1.msra.mxu0 0.0
      %4396 = vmatprep.subr.mxu0 0.0
      %4397 = vmatpush1.msra.mxu0 0.0
      %4398 = vmatprep.subr.mxu0 0.0
      %4399 = vmatpush1.msra.mxu0 0.0
      %4400 = vmatprep.subr.mxu0 0.0
      %4401 = vmatpush1.msra.mxu0 0.0
      %4402 = vmatprep.subr.mxu0 0.0
      %4403 = vmatpush1.msra.mxu0 0.0
      %4404 = vmatprep.subr.mxu0 0.0
      %4405 = vmatpush1.msra.mxu0 0.0
      %4406 = vmatprep.subr.mxu0 0.0
      %4407 = vmatpush1.msra.mxu0 0.0
      %4408 = vmatprep.subr.mxu0 0.0
      %4409 = vmatpush1.msra.mxu0 0.0
      %4410 = vmatprep.subr.mxu0 0.0
      %4411 = vmatpush1.msra.mxu0 0.0
      %4412 = vmatprep.subr.mxu0 0.0
      %4413 = vmatpush1.msra.mxu0 0.0
      %4414 = vmatprep.subr.mxu0 0.0
      %4415 = vmatpush1.msra.mxu0 0.0
      %4416 = vmatprep.subr.mxu0 0.0
      %4417 = vmatpush1.msra.mxu0 0.0
      %4418 = vmatprep.subr.mxu0 0.0
      %4419 = vmatpush1.msra.mxu0 0.0
      %4420 = vmatprep.subr.mxu0 0.0
      %4421 = vmatpush1.msra.mxu0 0.0
      %4422 = vmatprep.subr.mxu0 0.0
      %4423 = vmatpush1.msra.mxu0 0.0
      %4424 = vmatprep.subr.mxu0 0.0
      %4425 = vmatpush1.msra.mxu0 0.0
      %4426 = vmatprep.mubr.f32.mxu0 0.0
      %v4427 = vand.u32 %v347, 4294901760
      %v4428 = vsub.f32 %v347, %v4427
      %4429 = vmatmul.mubr.f32.gmra.mrb[0].mxu0 %v4428
      %v4430 = vpop.f32.mrb[0].mxu0
      %v4431 = vadd.f32 %v4342, %v4430
      %v4432 = vpop.f32.mrb[0].mxu0
      %v4433 = vadd.f32 %v4344, %v4432
      %4434 = vdwg.mxu0
      %v4435 = vand.u32 %v226, 4294901760
      %4436 = vmatprep.subr.mxu0 %v4435
      %v4437 = vand.u32 %v225, 4294901760
      %4438 = vmatpush1.msra.mxu0 %v4437
      %v4439 = vand.u32 %v258, 4294901760
      %4440 = vmatprep.subr.mxu0 %v4439
      %v4441 = vand.u32 %v257, 4294901760
      %4442 = vmatpush1.msra.mxu0 %v4441
      %v4443 = vand.u32 %v290, 4294901760
      %4444 = vmatprep.subr.mxu0 %v4443
      %v4445 = vand.u32 %v289, 4294901760
      %4446 = vmatpush1.msra.mxu0 %v4445
      %v4447 = vand.u32 %v322, 4294901760
      %4448 = vmatprep.subr.mxu0 %v4447
      %v4449 = vand.u32 %v321, 4294901760
      %4450 = vmatpush1.msra.mxu0 %v4449
      %4451 = vmatprep.subr.mxu0 0.0
      %4452 = vmatpush1.msra.mxu0 0.0
      %4453 = vmatprep.subr.mxu0 0.0
      %4454 = vmatpush1.msra.mxu0 0.0
      %4455 = vmatprep.subr.mxu0 0.0
      %4456 = vmatpush1.msra.mxu0 0.0
      %4457 = vmatprep.subr.mxu0 0.0
      %4458 = vmatpush1.msra.mxu0 0.0
      %4459 = vmatprep.subr.mxu0 0.0
      %4460 = vmatpush1.msra.mxu0 0.0
      %4461 = vmatprep.subr.mxu0 0.0
      %4462 = vmatpush1.msra.mxu0 0.0
      %4463 = vmatprep.subr.mxu0 0.0
      %4464 = vmatpush1.msra.mxu0 0.0
      %4465 = vmatprep.subr.mxu0 0.0
      %4466 = vmatpush1.msra.mxu0 0.0
      %4467 = vmatprep.subr.mxu0 0.0
      %4468 = vmatpush1.msra.mxu0 0.0
      %4469 = vmatprep.subr.mxu0 0.0
      %4470 = vmatpush1.msra.mxu0 0.0
      %4471 = vmatprep.subr.mxu0 0.0
      %4472 = vmatpush1.msra.mxu0 0.0
      %4473 = vmatprep.subr.mxu0 0.0
      %4474 = vmatpush1.msra.mxu0 0.0
      %4475 = vmatprep.subr.mxu0 0.0
      %4476 = vmatpush1.msra.mxu0 0.0
      %4477 = vmatprep.subr.mxu0 0.0
      %4478 = vmatpush1.msra.mxu0 0.0
      %4479 = vmatprep.subr.mxu0 0.0
      %4480 = vmatpush1.msra.mxu0 0.0
      %4481 = vmatprep.subr.mxu0 0.0
      %4482 = vmatpush1.msra.mxu0 0.0
      %4483 = vmatprep.subr.mxu0 0.0
      %4484 = vmatpush1.msra.mxu0 0.0
      %4485 = vmatprep.subr.mxu0 0.0
      %4486 = vmatpush1.msra.mxu0 0.0
      %4487 = vmatprep.subr.mxu0 0.0
      %4488 = vmatpush1.msra.mxu0 0.0
      %4489 = vmatprep.subr.mxu0 0.0
      %4490 = vmatpush1.msra.mxu0 0.0
      %4491 = vmatprep.subr.mxu0 0.0
      %4492 = vmatpush1.msra.mxu0 0.0
      %4493 = vmatprep.subr.mxu0 0.0
      %4494 = vmatpush1.msra.mxu0 0.0
      %4495 = vmatprep.subr.mxu0 0.0
      %4496 = vmatpush1.msra.mxu0 0.0
      %4497 = vmatprep.subr.mxu0 0.0
      %4498 = vmatpush1.msra.mxu0 0.0
      %4499 = vmatprep.subr.mxu0 0.0
      %4500 = vmatpush1.msra.mxu0 0.0
      %4501 = vmatprep.subr.mxu0 0.0
      %4502 = vmatpush1.msra.mxu0 0.0
      %4503 = vmatprep.subr.mxu0 0.0
      %4504 = vmatpush1.msra.mxu0 0.0
      %4505 = vmatprep.subr.mxu0 0.0
      %4506 = vmatpush1.msra.mxu0 0.0
      %4507 = vmatprep.mubr.f32.mxu0 0.0
      %v4508 = vand.u32 %v347, 4294901760
      %v4509 = vsub.f32 %v347, %v4508
      %v4510 = vand.u32 %v4509, 4294901760
      %4511 = vmatmul.mubr.f32.gmra.mrb[0].mxu0 %v4510
      %v4512 = vpop.f32.mrb[0].mxu0
      %v4513 = vadd.f32 %v4431, %v4512
      %v4514 = vpop.f32.mrb[0].mxu0
      %v4515 = vadd.f32 %v4433, %v4514
      %4516 = vdwg.mxu0
      %v4517 = vand.u32 %v226, 4294901760
      %v4518 = vsub.f32 %v226, %v4517
      %v4519 = vand.u32 %v4518, 4294901760
      %4520 = vmatprep.subr.mxu0 %v4519
      %v4521 = vand.u32 %v225, 4294901760
      %v4522 = vsub.f32 %v225, %v4521
      %v4523 = vand.u32 %v4522, 4294901760
      %4524 = vmatpush1.msra.mxu0 %v4523
      %v4525 = vand.u32 %v258, 4294901760
      %v4526 = vsub.f32 %v258, %v4525
      %v4527 = vand.u32 %v4526, 4294901760
      %4528 = vmatprep.subr.mxu0 %v4527
      %v4529 = vand.u32 %v257, 4294901760
      %v4530 = vsub.f32 %v257, %v4529
      %v4531 = vand.u32 %v4530, 4294901760
      %4532 = vmatpush1.msra.mxu0 %v4531
      %v4533 = vand.u32 %v290, 4294901760
      %v4534 = vsub.f32 %v290, %v4533
      %v4535 = vand.u32 %v4534, 4294901760
      %4536 = vmatprep.subr.mxu0 %v4535
      %v4537 = vand.u32 %v289, 4294901760
      %v4538 = vsub.f32 %v289, %v4537
      %v4539 = vand.u32 %v4538, 4294901760
      %4540 = vmatpush1.msra.mxu0 %v4539
      %v4541 = vand.u32 %v322, 4294901760
      %v4542 = vsub.f32 %v322, %v4541
      %v4543 = vand.u32 %v4542, 4294901760
      %4544 = vmatprep.subr.mxu0 %v4543
      %v4545 = vand.u32 %v321, 4294901760
      %v4546 = vsub.f32 %v321, %v4545
      %v4547 = vand.u32 %v4546, 4294901760
      %4548 = vmatpush1.msra.mxu0 %v4547
      %4549 = vmatprep.subr.mxu0 0.0
      %4550 = vmatpush1.msra.mxu0 0.0
      %4551 = vmatprep.subr.mxu0 0.0
      %4552 = vmatpush1.msra.mxu0 0.0
      %4553 = vmatprep.subr.mxu0 0.0
      %4554 = vmatpush1.msra.mxu0 0.0
      %4555 = vmatprep.subr.mxu0 0.0
      %4556 = vmatpush1.msra.mxu0 0.0
      %4557 = vmatprep.subr.mxu0 0.0
      %4558 = vmatpush1.msra.mxu0 0.0
      %4559 = vmatprep.subr.mxu0 0.0
      %4560 = vmatpush1.msra.mxu0 0.0
      %4561 = vmatprep.subr.mxu0 0.0
      %4562 = vmatpush1.msra.mxu0 0.0
      %4563 = vmatprep.subr.mxu0 0.0
      %4564 = vmatpush1.msra.mxu0 0.0
      %4565 = vmatprep.subr.mxu0 0.0
      %4566 = vmatpush1.msra.mxu0 0.0
      %4567 = vmatprep.subr.mxu0 0.0
      %4568 = vmatpush1.msra.mxu0 0.0
      %4569 = vmatprep.subr.mxu0 0.0
      %4570 = vmatpush1.msra.mxu0 0.0
      %4571 = vmatprep.subr.mxu0 0.0
      %4572 = vmatpush1.msra.mxu0 0.0
      %4573 = vmatprep.subr.mxu0 0.0
      %4574 = vmatpush1.msra.mxu0 0.0
      %4575 = vmatprep.subr.mxu0 0.0
      %4576 = vmatpush1.msra.mxu0 0.0
      %4577 = vmatprep.subr.mxu0 0.0
      %4578 = vmatpush1.msra.mxu0 0.0
      %4579 = vmatprep.subr.mxu0 0.0
      %4580 = vmatpush1.msra.mxu0 0.0
      %4581 = vmatprep.subr.mxu0 0.0
      %4582 = vmatpush1.msra.mxu0 0.0
      %4583 = vmatprep.subr.mxu0 0.0
      %4584 = vmatpush1.msra.mxu0 0.0
      %4585 = vmatprep.subr.mxu0 0.0
      %4586 = vmatpush1.msra.mxu0 0.0
      %4587 = vmatprep.subr.mxu0 0.0
      %4588 = vmatpush1.msra.mxu0 0.0
      %4589 = vmatprep.subr.mxu0 0.0
      %4590 = vmatpush1.msra.mxu0 0.0
      %4591 = vmatprep.subr.mxu0 0.0
      %4592 = vmatpush1.msra.mxu0 0.0
      %4593 = vmatprep.subr.mxu0 0.0
      %4594 = vmatpush1.msra.mxu0 0.0
      %4595 = vmatprep.subr.mxu0 0.0
      %4596 = vmatpush1.msra.mxu0 0.0
      %4597 = vmatprep.subr.mxu0 0.0
      %4598 = vmatpush1.msra.mxu0 0.0
      %4599 = vmatprep.subr.mxu0 0.0
      %4600 = vmatpush1.msra.mxu0 0.0
      %4601 = vmatprep.subr.mxu0 0.0
      %4602 = vmatpush1.msra.mxu0 0.0
      %4603 = vmatprep.subr.mxu0 0.0
      %4604 = vmatpush1.msra.mxu0 0.0
      %4605 = vmatprep.mubr.f32.mxu0 0.0
      %v4606 = vand.u32 %v347, 4294901760
      %4607 = vmatmul.mubr.f32.gmra.mrb[0].mxu0 %v4606
      %v4608 = vpop.f32.mrb[0].mxu0
      %v4609 = vadd.f32 %v4513, %v4608
      %v4610 = vpop.f32.mrb[0].mxu0
      %v4611 = vadd.f32 %v4515, %v4610
      %4612 = vdwg.mxu0
      %v4613 = vand.u32 %v226, 4294901760
      %4614 = vmatprep.subr.mxu0 %v4613
      %v4615 = vand.u32 %v225, 4294901760
      %4616 = vmatpush1.msra.mxu0 %v4615
      %v4617 = vand.u32 %v258, 4294901760
      %4618 = vmatprep.subr.mxu0 %v4617
      %v4619 = vand.u32 %v257, 4294901760
      %4620 = vmatpush1.msra.mxu0 %v4619
      %v4621 = vand.u32 %v290, 4294901760
      %4622 = vmatprep.subr.mxu0 %v4621
      %v4623 = vand.u32 %v289, 4294901760
      %4624 = vmatpush1.msra.mxu0 %v4623
      %v4625 = vand.u32 %v322, 4294901760
      %4626 = vmatprep.subr.mxu0 %v4625
      %v4627 = vand.u32 %v321, 4294901760
      %4628 = vmatpush1.msra.mxu0 %v4627
      %4629 = vmatprep.subr.mxu0 0.0
      %4630 = vmatpush1.msra.mxu0 0.0
      %4631 = vmatprep.subr.mxu0 0.0
      %4632 = vmatpush1.msra.mxu0 0.0
      %4633 = vmatprep.subr.mxu0 0.0
      %4634 = vmatpush1.msra.mxu0 0.0
      %4635 = vmatprep.subr.mxu0 0.0
      %4636 = vmatpush1.msra.mxu0 0.0
      %4637 = vmatprep.subr.mxu0 0.0
      %4638 = vmatpush1.msra.mxu0 0.0
      %4639 = vmatprep.subr.mxu0 0.0
      %4640 = vmatpush1.msra.mxu0 0.0
      %4641 = vmatprep.subr.mxu0 0.0
      %4642 = vmatpush1.msra.mxu0 0.0
      %4643 = vmatprep.subr.mxu0 0.0
      %4644 = vmatpush1.msra.mxu0 0.0
      %4645 = vmatprep.subr.mxu0 0.0
      %4646 = vmatpush1.msra.mxu0 0.0
      %4647 = vmatprep.subr.mxu0 0.0
      %4648 = vmatpush1.msra.mxu0 0.0
      %4649 = vmatprep.subr.mxu0 0.0
      %4650 = vmatpush1.msra.mxu0 0.0
      %4651 = vmatprep.subr.mxu0 0.0
      %4652 = vmatpush1.msra.mxu0 0.0
      %4653 = vmatprep.subr.mxu0 0.0
      %4654 = vmatpush1.msra.mxu0 0.0
      %4655 = vmatprep.subr.mxu0 0.0
      %4656 = vmatpush1.msra.mxu0 0.0
      %4657 = vmatprep.subr.mxu0 0.0
      %4658 = vmatpush1.msra.mxu0 0.0
      %4659 = vmatprep.subr.mxu0 0.0
      %4660 = vmatpush1.msra.mxu0 0.0
      %4661 = vmatprep.subr.mxu0 0.0
      %4662 = vmatpush1.msra.mxu0 0.0
      %4663 = vmatprep.subr.mxu0 0.0
      %4664 = vmatpush1.msra.mxu0 0.0
      %4665 = vmatprep.subr.mxu0 0.0
      %4666 = vmatpush1.msra.mxu0 0.0
      %4667 = vmatprep.subr.mxu0 0.0
      %4668 = vmatpush1.msra.mxu0 0.0
      %4669 = vmatprep.subr.mxu0 0.0
      %4670 = vmatpush1.msra.mxu0 0.0
      %4671 = vmatprep.subr.mxu0 0.0
      %4672 = vmatpush1.msra.mxu0 0.0
      %4673 = vmatprep.subr.mxu0 0.0
      %4674 = vmatpush1.msra.mxu0 0.0
      %4675 = vmatprep.subr.mxu0 0.0
      %4676 = vmatpush1.msra.mxu0 0.0
      %4677 = vmatprep.subr.mxu0 0.0
      %4678 = vmatpush1.msra.mxu0 0.0
      %4679 = vmatprep.subr.mxu0 0.0
      %4680 = vmatpush1.msra.mxu0 0.0
      %4681 = vmatprep.subr.mxu0 0.0
      %4682 = vmatpush1.msra.mxu0 0.0
      %4683 = vmatprep.subr.mxu0 0.0
      %4684 = vmatpush1.msra.mxu0 0.0
      %4685 = vmatprep.mubr.f32.mxu0 0.0
      %v4686 = vand.u32 %v347, 4294901760
      %4687 = vmatmul.mubr.f32.gmra.mrb[0].mxu0 %v4686
      %v4688 = vpop.f32.mrb[0].mxu0
      %v4689 = vadd.f32 %v4609, %v4688
      %v4690 = vpop.f32.mrb[0].mxu0
      %v4691 = vadd.f32 %v4611, %v4690
      %4692 = vdwg.mxu0
      %v4693 = vand.u32 %v228, 4294901760
      %4694 = vmatprep.subr.mxu0 %v4693
      %v4695 = vand.u32 %v227, 4294901760
      %4696 = vmatpush1.msra.mxu0 %v4695
      %v4697 = vand.u32 %v260, 4294901760
      %4698 = vmatprep.subr.mxu0 %v4697
      %v4699 = vand.u32 %v259, 4294901760
      %4700 = vmatpush1.msra.mxu0 %v4699
      %v4701 = vand.u32 %v292, 4294901760
      %4702 = vmatprep.subr.mxu0 %v4701
      %v4703 = vand.u32 %v291, 4294901760
      %4704 = vmatpush1.msra.mxu0 %v4703
      %v4705 = vand.u32 %v324, 4294901760
      %4706 = vmatprep.subr.mxu0 %v4705
      %v4707 = vand.u32 %v323, 4294901760
      %4708 = vmatpush1.msra.mxu0 %v4707
      %4709 = vmatprep.subr.mxu0 0.0
      %4710 = vmatpush1.msra.mxu0 0.0
      %4711 = vmatprep.subr.mxu0 0.0
      %4712 = vmatpush1.msra.mxu0 0.0
      %4713 = vmatprep.subr.mxu0 0.0
      %4714 = vmatpush1.msra.mxu0 0.0
      %4715 = vmatprep.subr.mxu0 0.0
      %4716 = vmatpush1.msra.mxu0 0.0
      %4717 = vmatprep.subr.mxu0 0.0
      %4718 = vmatpush1.msra.mxu0 0.0
      %4719 = vmatprep.subr.mxu0 0.0
      %4720 = vmatpush1.msra.mxu0 0.0
      %4721 = vmatprep.subr.mxu0 0.0
      %4722 = vmatpush1.msra.mxu0 0.0
      %4723 = vmatprep.subr.mxu0 0.0
      %4724 = vmatpush1.msra.mxu0 0.0
      %4725 = vmatprep.subr.mxu0 0.0
      %4726 = vmatpush1.msra.mxu0 0.0
      %4727 = vmatprep.subr.mxu0 0.0
      %4728 = vmatpush1.msra.mxu0 0.0
      %4729 = vmatprep.subr.mxu0 0.0
      %4730 = vmatpush1.msra.mxu0 0.0
      %4731 = vmatprep.subr.mxu0 0.0
      %4732 = vmatpush1.msra.mxu0 0.0
      %4733 = vmatprep.subr.mxu0 0.0
      %4734 = vmatpush1.msra.mxu0 0.0
      %4735 = vmatprep.subr.mxu0 0.0
      %4736 = vmatpush1.msra.mxu0 0.0
      %4737 = vmatprep.subr.mxu0 0.0
      %4738 = vmatpush1.msra.mxu0 0.0
      %4739 = vmatprep.subr.mxu0 0.0
      %4740 = vmatpush1.msra.mxu0 0.0
      %4741 = vmatprep.subr.mxu0 0.0
      %4742 = vmatpush1.msra.mxu0 0.0
      %4743 = vmatprep.subr.mxu0 0.0
      %4744 = vmatpush1.msra.mxu0 0.0
      %4745 = vmatprep.subr.mxu0 0.0
      %4746 = vmatpush1.msra.mxu0 0.0
      %4747 = vmatprep.subr.mxu0 0.0
      %4748 = vmatpush1.msra.mxu0 0.0
      %4749 = vmatprep.subr.mxu0 0.0
      %4750 = vmatpush1.msra.mxu0 0.0
      %4751 = vmatprep.subr.mxu0 0.0
      %4752 = vmatpush1.msra.mxu0 0.0
      %4753 = vmatprep.subr.mxu0 0.0
      %4754 = vmatpush1.msra.mxu0 0.0
      %4755 = vmatprep.subr.mxu0 0.0
      %4756 = vmatpush1.msra.mxu0 0.0
      %4757 = vmatprep.subr.mxu0 0.0
      %4758 = vmatpush1.msra.mxu0 0.0
      %4759 = vmatprep.subr.mxu0 0.0
      %4760 = vmatpush1.msra.mxu0 0.0
      %4761 = vmatprep.subr.mxu0 0.0
      %4762 = vmatpush1.msra.mxu0 0.0
      %4763 = vmatprep.subr.mxu0 0.0
      %4764 = vmatpush1.msra.mxu0 0.0
      %4765 = vmatprep.mubr.f32.mxu0 0.0
      %v4766 = vand.u32 %v347, 4294901760
      %v4767 = vsub.f32 %v347, %v4766
      %v4768 = vand.u32 %v4767, 4294901760
      %v4769 = vsub.f32 %v4767, %v4768
      %v4770 = vand.u32 %v4769, 4294901760
      %4771 = vmatmul.mubr.f32.gmra.mrb[0].mxu0 %v4770
      %v4772 = vpop.f32.mrb[0].mxu0
      %v4773 = vadd.f32 %v343, %v4772
      %v4774 = vpop.f32.mrb[0].mxu0
      %v4775 = vadd.f32 %v343, %v4774
      %4776 = vdwg.mxu0
      %v4777 = vand.u32 %v228, 4294901760
      %v4778 = vsub.f32 %v228, %v4777
      %v4779 = vand.u32 %v4778, 4294901760
      %v4780 = vsub.f32 %v4778, %v4779
      %v4781 = vand.u32 %v4780, 4294901760
      %4782 = vmatprep.subr.mxu0 %v4781
      %v4783 = vand.u32 %v227, 4294901760
      %v4784 = vsub.f32 %v227, %v4783
      %v4785 = vand.u32 %v4784, 4294901760
      %v4786 = vsub.f32 %v4784, %v4785
      %v4787 = vand.u32 %v4786, 4294901760
      %4788 = vmatpush1.msra.mxu0 %v4787
      %v4789 = vand.u32 %v260, 4294901760
      %v4790 = vsub.f32 %v260, %v4789
      %v4791 = vand.u32 %v4790, 4294901760
      %v4792 = vsub.f32 %v4790, %v4791
      %v4793 = vand.u32 %v4792, 4294901760
      %4794 = vmatprep.subr.mxu0 %v4793
      %v4795 = vand.u32 %v259, 4294901760
      %v4796 = vsub.f32 %v259, %v4795
      %v4797 = vand.u32 %v4796, 4294901760
      %v4798 = vsub.f32 %v4796, %v4797
      %v4799 = vand.u32 %v4798, 4294901760
      %4800 = vmatpush1.msra.mxu0 %v4799
      %v4801 = vand.u32 %v292, 4294901760
      %v4802 = vsub.f32 %v292, %v4801
      %v4803 = vand.u32 %v4802, 4294901760
      %v4804 = vsub.f32 %v4802, %v4803
      %v4805 = vand.u32 %v4804, 4294901760
      %4806 = vmatprep.subr.mxu0 %v4805
      %v4807 = vand.u32 %v291, 4294901760
      %v4808 = vsub.f32 %v291, %v4807
      %v4809 = vand.u32 %v4808, 4294901760
      %v4810 = vsub.f32 %v4808, %v4809
      %v4811 = vand.u32 %v4810, 4294901760
      %4812 = vmatpush1.msra.mxu0 %v4811
      %v4813 = vand.u32 %v324, 4294901760
      %v4814 = vsub.f32 %v324, %v4813
      %v4815 = vand.u32 %v4814, 4294901760
      %v4816 = vsub.f32 %v4814, %v4815
      %v4817 = vand.u32 %v4816, 4294901760
      %4818 = vmatprep.subr.mxu0 %v4817
      %v4819 = vand.u32 %v323, 4294901760
      %v4820 = vsub.f32 %v323, %v4819
      %v4821 = vand.u32 %v4820, 4294901760
      %v4822 = vsub.f32 %v4820, %v4821
      %v4823 = vand.u32 %v4822, 4294901760
      %4824 = vmatpush1.msra.mxu0 %v4823
      %4825 = vmatprep.subr.mxu0 0.0
      %4826 = vmatpush1.msra.mxu0 0.0
      %4827 = vmatprep.subr.mxu0 0.0
      %4828 = vmatpush1.msra.mxu0 0.0
      %4829 = vmatprep.subr.mxu0 0.0
      %4830 = vmatpush1.msra.mxu0 0.0
      %4831 = vmatprep.subr.mxu0 0.0
      %4832 = vmatpush1.msra.mxu0 0.0
      %4833 = vmatprep.subr.mxu0 0.0
      %4834 = vmatpush1.msra.mxu0 0.0
      %4835 = vmatprep.subr.mxu0 0.0
      %4836 = vmatpush1.msra.mxu0 0.0
      %4837 = vmatprep.subr.mxu0 0.0
      %4838 = vmatpush1.msra.mxu0 0.0
      %4839 = vmatprep.subr.mxu0 0.0
      %4840 = vmatpush1.msra.mxu0 0.0
      %4841 = vmatprep.subr.mxu0 0.0
      %4842 = vmatpush1.msra.mxu0 0.0
      %4843 = vmatprep.subr.mxu0 0.0
      %4844 = vmatpush1.msra.mxu0 0.0
      %4845 = vmatprep.subr.mxu0 0.0
      %4846 = vmatpush1.msra.mxu0 0.0
      %4847 = vmatprep.subr.mxu0 0.0
      %4848 = vmatpush1.msra.mxu0 0.0
      %4849 = vmatprep.subr.mxu0 0.0
      %4850 = vmatpush1.msra.mxu0 0.0
      %4851 = vmatprep.subr.mxu0 0.0
      %4852 = vmatpush1.msra.mxu0 0.0
      %4853 = vmatprep.subr.mxu0 0.0
      %4854 = vmatpush1.msra.mxu0 0.0
      %4855 = vmatprep.subr.mxu0 0.0
      %4856 = vmatpush1.msra.mxu0 0.0
      %4857 = vmatprep.subr.mxu0 0.0
      %4858 = vmatpush1.msra.mxu0 0.0
      %4859 = vmatprep.subr.mxu0 0.0
      %4860 = vmatpush1.msra.mxu0 0.0
      %4861 = vmatprep.subr.mxu0 0.0
      %4862 = vmatpush1.msra.mxu0 0.0
      %4863 = vmatprep.subr.mxu0 0.0
      %4864 = vmatpush1.msra.mxu0 0.0
      %4865 = vmatprep.subr.mxu0 0.0
      %4866 = vmatpush1.msra.mxu0 0.0
      %4867 = vmatprep.subr.mxu0 0.0
      %4868 = vmatpush1.msra.mxu0 0.0
      %4869 = vmatprep.subr.mxu0 0.0
      %4870 = vmatpush1.msra.mxu0 0.0
      %4871 = vmatprep.subr.mxu0 0.0
      %4872 = vmatpush1.msra.mxu0 0.0
      %4873 = vmatprep.subr.mxu0 0.0
      %4874 = vmatpush1.msra.mxu0 0.0
      %4875 = vmatprep.subr.mxu0 0.0
      %4876 = vmatpush1.msra.mxu0 0.0
      %4877 = vmatprep.subr.mxu0 0.0
      %4878 = vmatpush1.msra.mxu0 0.0
      %4879 = vmatprep.subr.mxu0 0.0
      %4880 = vmatpush1.msra.mxu0 0.0
      %4881 = vmatprep.mubr.f32.mxu0 0.0
      %v4882 = vand.u32 %v347, 4294901760
      %4883 = vmatmul.mubr.f32.gmra.mrb[0].mxu0 %v4882
      %v4884 = vpop.f32.mrb[0].mxu0
      %v4885 = vadd.f32 %v4773, %v4884
      %v4886 = vpop.f32.mrb[0].mxu0
      %v4887 = vadd.f32 %v4775, %v4886
      %4888 = vdwg.mxu0
      %v4889 = vand.u32 %v228, 4294901760
      %v4890 = vsub.f32 %v228, %v4889
      %4891 = vmatprep.subr.mxu0 %v4890
      %v4892 = vand.u32 %v227, 4294901760
      %v4893 = vsub.f32 %v227, %v4892
      %4894 = vmatpush1.msra.mxu0 %v4893
      %v4895 = vand.u32 %v260, 4294901760
      %v4896 = vsub.f32 %v260, %v4895
      %4897 = vmatprep.subr.mxu0 %v4896
      %v4898 = vand.u32 %v259, 4294901760
      %v4899 = vsub.f32 %v259, %v4898
      %4900 = vmatpush1.msra.mxu0 %v4899
      %v4901 = vand.u32 %v292, 4294901760
      %v4902 = vsub.f32 %v292, %v4901
      %4903 = vmatprep.subr.mxu0 %v4902
      %v4904 = vand.u32 %v291, 4294901760
      %v4905 = vsub.f32 %v291, %v4904
      %4906 = vmatpush1.msra.mxu0 %v4905
      %v4907 = vand.u32 %v324, 4294901760
      %v4908 = vsub.f32 %v324, %v4907
      %4909 = vmatprep.subr.mxu0 %v4908
      %v4910 = vand.u32 %v323, 4294901760
      %v4911 = vsub.f32 %v323, %v4910
      %4912 = vmatpush1.msra.mxu0 %v4911
      %4913 = vmatprep.subr.mxu0 0.0
      %4914 = vmatpush1.msra.mxu0 0.0
      %4915 = vmatprep.subr.mxu0 0.0
      %4916 = vmatpush1.msra.mxu0 0.0
      %4917 = vmatprep.subr.mxu0 0.0
      %4918 = vmatpush1.msra.mxu0 0.0
      %4919 = vmatprep.subr.mxu0 0.0
      %4920 = vmatpush1.msra.mxu0 0.0
      %4921 = vmatprep.subr.mxu0 0.0
      %4922 = vmatpush1.msra.mxu0 0.0
      %4923 = vmatprep.subr.mxu0 0.0
      %4924 = vmatpush1.msra.mxu0 0.0
      %4925 = vmatprep.subr.mxu0 0.0
      %4926 = vmatpush1.msra.mxu0 0.0
      %4927 = vmatprep.subr.mxu0 0.0
      %4928 = vmatpush1.msra.mxu0 0.0
      %4929 = vmatprep.subr.mxu0 0.0
      %4930 = vmatpush1.msra.mxu0 0.0
      %4931 = vmatprep.subr.mxu0 0.0
      %4932 = vmatpush1.msra.mxu0 0.0
      %4933 = vmatprep.subr.mxu0 0.0
      %4934 = vmatpush1.msra.mxu0 0.0
      %4935 = vmatprep.subr.mxu0 0.0
      %4936 = vmatpush1.msra.mxu0 0.0
      %4937 = vmatprep.subr.mxu0 0.0
      %4938 = vmatpush1.msra.mxu0 0.0
      %4939 = vmatprep.subr.mxu0 0.0
      %4940 = vmatpush1.msra.mxu0 0.0
      %4941 = vmatprep.subr.mxu0 0.0
      %4942 = vmatpush1.msra.mxu0 0.0
      %4943 = vmatprep.subr.mxu0 0.0
      %4944 = vmatpush1.msra.mxu0 0.0
      %4945 = vmatprep.subr.mxu0 0.0
      %4946 = vmatpush1.msra.mxu0 0.0
      %4947 = vmatprep.subr.mxu0 0.0
      %4948 = vmatpush1.msra.mxu0 0.0
      %4949 = vmatprep.subr.mxu0 0.0
      %4950 = vmatpush1.msra.mxu0 0.0
      %4951 = vmatprep.subr.mxu0 0.0
      %4952 = vmatpush1.msra.mxu0 0.0
      %4953 = vmatprep.subr.mxu0 0.0
      %4954 = vmatpush1.msra.mxu0 0.0
      %4955 = vmatprep.subr.mxu0 0.0
      %4956 = vmatpush1.msra.mxu0 0.0
      %4957 = vmatprep.subr.mxu0 0.0
      %4958 = vmatpush1.msra.mxu0 0.0
      %4959 = vmatprep.subr.mxu0 0.0
      %4960 = vmatpush1.msra.mxu0 0.0
      %4961 = vmatprep.subr.mxu0 0.0
      %4962 = vmatpush1.msra.mxu0 0.0
      %4963 = vmatprep.subr.mxu0 0.0
      %4964 = vmatpush1.msra.mxu0 0.0
      %4965 = vmatprep.subr.mxu0 0.0
      %4966 = vmatpush1.msra.mxu0 0.0
      %4967 = vmatprep.subr.mxu0 0.0
      %4968 = vmatpush1.msra.mxu0 0.0
      %4969 = vmatprep.mubr.f32.mxu0 0.0
      %v4970 = vand.u32 %v347, 4294901760
      %v4971 = vsub.f32 %v347, %v4970
      %4972 = vmatmul.mubr.f32.gmra.mrb[0].mxu0 %v4971
      %v4973 = vpop.f32.mrb[0].mxu0
      %v4974 = vadd.f32 %v4885, %v4973
      %v4975 = vpop.f32.mrb[0].mxu0
      %v4976 = vadd.f32 %v4887, %v4975
      %4977 = vdwg.mxu0
      %v4978 = vand.u32 %v228, 4294901760
      %4979 = vmatprep.subr.mxu0 %v4978
      %v4980 = vand.u32 %v227, 4294901760
      %4981 = vmatpush1.msra.mxu0 %v4980
      %v4982 = vand.u32 %v260, 4294901760
      %4983 = vmatprep.subr.mxu0 %v4982
      %v4984 = vand.u32 %v259, 4294901760
      %4985 = vmatpush1.msra.mxu0 %v4984
      %v4986 = vand.u32 %v292, 4294901760
      %4987 = vmatprep.subr.mxu0 %v4986
      %v4988 = vand.u32 %v291, 4294901760
      %4989 = vmatpush1.msra.mxu0 %v4988
      %v4990 = vand.u32 %v324, 4294901760
      %4991 = vmatprep.subr.mxu0 %v4990
      %v4992 = vand.u32 %v323, 4294901760
      %4993 = vmatpush1.msra.mxu0 %v4992
      %4994 = vmatprep.subr.mxu0 0.0
      %4995 = vmatpush1.msra.mxu0 0.0
      %4996 = vmatprep.subr.mxu0 0.0
      %4997 = vmatpush1.msra.mxu0 0.0
      %4998 = vmatprep.subr.mxu0 0.0
      %4999 = vmatpush1.msra.mxu0 0.0
      %5000 = vmatprep.subr.mxu0 0.0
      %5001 = vmatpush1.msra.mxu0 0.0
      %5002 = vmatprep.subr.mxu0 0.0
      %5003 = vmatpush1.msra.mxu0 0.0
      %5004 = vmatprep.subr.mxu0 0.0
      %5005 = vmatpush1.msra.mxu0 0.0
      %5006 = vmatprep.subr.mxu0 0.0
      %5007 = vmatpush1.msra.mxu0 0.0
      %5008 = vmatprep.subr.mxu0 0.0
      %5009 = vmatpush1.msra.mxu0 0.0
      %5010 = vmatprep.subr.mxu0 0.0
      %5011 = vmatpush1.msra.mxu0 0.0
      %5012 = vmatprep.subr.mxu0 0.0
      %5013 = vmatpush1.msra.mxu0 0.0
      %5014 = vmatprep.subr.mxu0 0.0
      %5015 = vmatpush1.msra.mxu0 0.0
      %5016 = vmatprep.subr.mxu0 0.0
      %5017 = vmatpush1.msra.mxu0 0.0
      %5018 = vmatprep.subr.mxu0 0.0
      %5019 = vmatpush1.msra.mxu0 0.0
      %5020 = vmatprep.subr.mxu0 0.0
      %5021 = vmatpush1.msra.mxu0 0.0
      %5022 = vmatprep.subr.mxu0 0.0
      %5023 = vmatpush1.msra.mxu0 0.0
      %5024 = vmatprep.subr.mxu0 0.0
      %5025 = vmatpush1.msra.mxu0 0.0
      %5026 = vmatprep.subr.mxu0 0.0
      %5027 = vmatpush1.msra.mxu0 0.0
      %5028 = vmatprep.subr.mxu0 0.0
      %5029 = vmatpush1.msra.mxu0 0.0
      %5030 = vmatprep.subr.mxu0 0.0
      %5031 = vmatpush1.msra.mxu0 0.0
      %5032 = vmatprep.subr.mxu0 0.0
      %5033 = vmatpush1.msra.mxu0 0.0
      %5034 = vmatprep.subr.mxu0 0.0
      %5035 = vmatpush1.msra.mxu0 0.0
      %5036 = vmatprep.subr.mxu0 0.0
      %5037 = vmatpush1.msra.mxu0 0.0
      %5038 = vmatprep.subr.mxu0 0.0
      %5039 = vmatpush1.msra.mxu0 0.0
      %5040 = vmatprep.subr.mxu0 0.0
      %5041 = vmatpush1.msra.mxu0 0.0
      %5042 = vmatprep.subr.mxu0 0.0
      %5043 = vmatpush1.msra.mxu0 0.0
      %5044 = vmatprep.subr.mxu0 0.0
      %5045 = vmatpush1.msra.mxu0 0.0
      %5046 = vmatprep.subr.mxu0 0.0
      %5047 = vmatpush1.msra.mxu0 0.0
      %5048 = vmatprep.subr.mxu0 0.0
      %5049 = vmatpush1.msra.mxu0 0.0
      %5050 = vmatprep.mubr.f32.mxu0 0.0
      %v5051 = vand.u32 %v347, 4294901760
      %v5052 = vsub.f32 %v347, %v5051
      %v5053 = vand.u32 %v5052, 4294901760
      %5054 = vmatmul.mubr.f32.gmra.mrb[0].mxu0 %v5053
      %v5055 = vpop.f32.mrb[0].mxu0
      %v5056 = vadd.f32 %v4974, %v5055
      %v5057 = vpop.f32.mrb[0].mxu0
      %v5058 = vadd.f32 %v4976, %v5057
      %5059 = vdwg.mxu0
      %v5060 = vand.u32 %v228, 4294901760
      %v5061 = vsub.f32 %v228, %v5060
      %v5062 = vand.u32 %v5061, 4294901760
      %5063 = vmatprep.subr.mxu0 %v5062
      %v5064 = vand.u32 %v227, 4294901760
      %v5065 = vsub.f32 %v227, %v5064
      %v5066 = vand.u32 %v5065, 4294901760
      %5067 = vmatpush1.msra.mxu0 %v5066
      %v5068 = vand.u32 %v260, 4294901760
      %v5069 = vsub.f32 %v260, %v5068
      %v5070 = vand.u32 %v5069, 4294901760
      %5071 = vmatprep.subr.mxu0 %v5070
      %v5072 = vand.u32 %v259, 4294901760
      %v5073 = vsub.f32 %v259, %v5072
      %v5074 = vand.u32 %v5073, 4294901760
      %5075 = vmatpush1.msra.mxu0 %v5074
      %v5076 = vand.u32 %v292, 4294901760
      %v5077 = vsub.f32 %v292, %v5076
      %v5078 = vand.u32 %v5077, 4294901760
      %5079 = vmatprep.subr.mxu0 %v5078
      %v5080 = vand.u32 %v291, 4294901760
      %v5081 = vsub.f32 %v291, %v5080
      %v5082 = vand.u32 %v5081, 4294901760
      %5083 = vmatpush1.msra.mxu0 %v5082
      %v5084 = vand.u32 %v324, 4294901760
      %v5085 = vsub.f32 %v324, %v5084
      %v5086 = vand.u32 %v5085, 4294901760
      %5087 = vmatprep.subr.mxu0 %v5086
      %v5088 = vand.u32 %v323, 4294901760
      %v5089 = vsub.f32 %v323, %v5088
      %v5090 = vand.u32 %v5089, 4294901760
      %5091 = vmatpush1.msra.mxu0 %v5090
      %5092 = vmatprep.subr.mxu0 0.0
      %5093 = vmatpush1.msra.mxu0 0.0
      %5094 = vmatprep.subr.mxu0 0.0
      %5095 = vmatpush1.msra.mxu0 0.0
      %5096 = vmatprep.subr.mxu0 0.0
      %5097 = vmatpush1.msra.mxu0 0.0
      %5098 = vmatprep.subr.mxu0 0.0
      %5099 = vmatpush1.msra.mxu0 0.0
      %5100 = vmatprep.subr.mxu0 0.0
      %5101 = vmatpush1.msra.mxu0 0.0
      %5102 = vmatprep.subr.mxu0 0.0
      %5103 = vmatpush1.msra.mxu0 0.0
      %5104 = vmatprep.subr.mxu0 0.0
      %5105 = vmatpush1.msra.mxu0 0.0
      %5106 = vmatprep.subr.mxu0 0.0
      %5107 = vmatpush1.msra.mxu0 0.0
      %5108 = vmatprep.subr.mxu0 0.0
      %5109 = vmatpush1.msra.mxu0 0.0
      %5110 = vmatprep.subr.mxu0 0.0
      %5111 = vmatpush1.msra.mxu0 0.0
      %5112 = vmatprep.subr.mxu0 0.0
      %5113 = vmatpush1.msra.mxu0 0.0
      %5114 = vmatprep.subr.mxu0 0.0
      %5115 = vmatpush1.msra.mxu0 0.0
      %5116 = vmatprep.subr.mxu0 0.0
      %5117 = vmatpush1.msra.mxu0 0.0
      %5118 = vmatprep.subr.mxu0 0.0
      %5119 = vmatpush1.msra.mxu0 0.0
      %5120 = vmatprep.subr.mxu0 0.0
      %5121 = vmatpush1.msra.mxu0 0.0
      %5122 = vmatprep.subr.mxu0 0.0
      %5123 = vmatpush1.msra.mxu0 0.0
      %5124 = vmatprep.subr.mxu0 0.0
      %5125 = vmatpush1.msra.mxu0 0.0
      %5126 = vmatprep.subr.mxu0 0.0
      %5127 = vmatpush1.msra.mxu0 0.0
      %5128 = vmatprep.subr.mxu0 0.0
      %5129 = vmatpush1.msra.mxu0 0.0
      %5130 = vmatprep.subr.mxu0 0.0
      %5131 = vmatpush1.msra.mxu0 0.0
      %5132 = vmatprep.subr.mxu0 0.0
      %5133 = vmatpush1.msra.mxu0 0.0
      %5134 = vmatprep.subr.mxu0 0.0
      %5135 = vmatpush1.msra.mxu0 0.0
      %5136 = vmatprep.subr.mxu0 0.0
      %5137 = vmatpush1.msra.mxu0 0.0
      %5138 = vmatprep.subr.mxu0 0.0
      %5139 = vmatpush1.msra.mxu0 0.0
      %5140 = vmatprep.subr.mxu0 0.0
      %5141 = vmatpush1.msra.mxu0 0.0
      %5142 = vmatprep.subr.mxu0 0.0
      %5143 = vmatpush1.msra.mxu0 0.0
      %5144 = vmatprep.subr.mxu0 0.0
      %5145 = vmatpush1.msra.mxu0 0.0
      %5146 = vmatprep.subr.mxu0 0.0
      %5147 = vmatpush1.msra.mxu0 0.0
      %5148 = vmatprep.mubr.f32.mxu0 0.0
      %v5149 = vand.u32 %v347, 4294901760
      %5150 = vmatmul.mubr.f32.gmra.mrb[0].mxu0 %v5149
      %v5151 = vpop.f32.mrb[0].mxu0
      %v5152 = vadd.f32 %v5056, %v5151
      %v5153 = vpop.f32.mrb[0].mxu0
      %v5154 = vadd.f32 %v5058, %v5153
      %5155 = vdwg.mxu0
      %v5156 = vand.u32 %v228, 4294901760
      %5157 = vmatprep.subr.mxu0 %v5156
      %v5158 = vand.u32 %v227, 4294901760
      %5159 = vmatpush1.msra.mxu0 %v5158
      %v5160 = vand.u32 %v260, 4294901760
      %5161 = vmatprep.subr.mxu0 %v5160
      %v5162 = vand.u32 %v259, 4294901760
      %5163 = vmatpush1.msra.mxu0 %v5162
      %v5164 = vand.u32 %v292, 4294901760
      %5165 = vmatprep.subr.mxu0 %v5164
      %v5166 = vand.u32 %v291, 4294901760
      %5167 = vmatpush1.msra.mxu0 %v5166
      %v5168 = vand.u32 %v324, 4294901760
      %5169 = vmatprep.subr.mxu0 %v5168
      %v5170 = vand.u32 %v323, 4294901760
      %5171 = vmatpush1.msra.mxu0 %v5170
      %5172 = vmatprep.subr.mxu0 0.0
      %5173 = vmatpush1.msra.mxu0 0.0
      %5174 = vmatprep.subr.mxu0 0.0
      %5175 = vmatpush1.msra.mxu0 0.0
      %5176 = vmatprep.subr.mxu0 0.0
      %5177 = vmatpush1.msra.mxu0 0.0
      %5178 = vmatprep.subr.mxu0 0.0
      %5179 = vmatpush1.msra.mxu0 0.0
      %5180 = vmatprep.subr.mxu0 0.0
      %5181 = vmatpush1.msra.mxu0 0.0
      %5182 = vmatprep.subr.mxu0 0.0
      %5183 = vmatpush1.msra.mxu0 0.0
      %5184 = vmatprep.subr.mxu0 0.0
      %5185 = vmatpush1.msra.mxu0 0.0
      %5186 = vmatprep.subr.mxu0 0.0
      %5187 = vmatpush1.msra.mxu0 0.0
      %5188 = vmatprep.subr.mxu0 0.0
      %5189 = vmatpush1.msra.mxu0 0.0
      %5190 = vmatprep.subr.mxu0 0.0
      %5191 = vmatpush1.msra.mxu0 0.0
      %5192 = vmatprep.subr.mxu0 0.0
      %5193 = vmatpush1.msra.mxu0 0.0
      %5194 = vmatprep.subr.mxu0 0.0
      %5195 = vmatpush1.msra.mxu0 0.0
      %5196 = vmatprep.subr.mxu0 0.0
      %5197 = vmatpush1.msra.mxu0 0.0
      %5198 = vmatprep.subr.mxu0 0.0
      %5199 = vmatpush1.msra.mxu0 0.0
      %5200 = vmatprep.subr.mxu0 0.0
      %5201 = vmatpush1.msra.mxu0 0.0
      %5202 = vmatprep.subr.mxu0 0.0
      %5203 = vmatpush1.msra.mxu0 0.0
      %5204 = vmatprep.subr.mxu0 0.0
      %5205 = vmatpush1.msra.mxu0 0.0
      %5206 = vmatprep.subr.mxu0 0.0
      %5207 = vmatpush1.msra.mxu0 0.0
      %5208 = vmatprep.subr.mxu0 0.0
      %5209 = vmatpush1.msra.mxu0 0.0
      %5210 = vmatprep.subr.mxu0 0.0
      %5211 = vmatpush1.msra.mxu0 0.0
      %5212 = vmatprep.subr.mxu0 0.0
      %5213 = vmatpush1.msra.mxu0 0.0
      %5214 = vmatprep.subr.mxu0 0.0
      %5215 = vmatpush1.msra.mxu0 0.0
      %5216 = vmatprep.subr.mxu0 0.0
      %5217 = vmatpush1.msra.mxu0 0.0
      %5218 = vmatprep.subr.mxu0 0.0
      %5219 = vmatpush1.msra.mxu0 0.0
      %5220 = vmatprep.subr.mxu0 0.0
      %5221 = vmatpush1.msra.mxu0 0.0
      %5222 = vmatprep.subr.mxu0 0.0
      %5223 = vmatpush1.msra.mxu0 0.0
      %5224 = vmatprep.subr.mxu0 0.0
      %5225 = vmatpush1.msra.mxu0 0.0
      %5226 = vmatprep.subr.mxu0 0.0
      %5227 = vmatpush1.msra.mxu0 0.0
      %5228 = vmatprep.mubr.f32.mxu0 0.0
      %v5229 = vand.u32 %v347, 4294901760
      %5230 = vmatmul.mubr.f32.gmra.mrb[0].mxu0 %v5229
      %v5231 = vpop.f32.mrb[0].mxu0
      %v5232 = vadd.f32 %v5152, %v5231
      %v5233 = vpop.f32.mrb[0].mxu0
      %v5234 = vadd.f32 %v5154, %v5233
      %5235 = vdwg.mxu0
      %v5236 = vand.u32 %v230, 4294901760
      %5237 = vmatprep.subr.mxu0 %v5236
      %v5238 = vand.u32 %v229, 4294901760
      %5239 = vmatpush1.msra.mxu0 %v5238
      %v5240 = vand.u32 %v262, 4294901760
      %5241 = vmatprep.subr.mxu0 %v5240
      %v5242 = vand.u32 %v261, 4294901760
      %5243 = vmatpush1.msra.mxu0 %v5242
      %v5244 = vand.u32 %v294, 4294901760
      %5245 = vmatprep.subr.mxu0 %v5244
      %v5246 = vand.u32 %v293, 4294901760
      %5247 = vmatpush1.msra.mxu0 %v5246
      %v5248 = vand.u32 %v326, 4294901760
      %5249 = vmatprep.subr.mxu0 %v5248
      %v5250 = vand.u32 %v325, 4294901760
      %5251 = vmatpush1.msra.mxu0 %v5250
      %5252 = vmatprep.subr.mxu0 0.0
      %5253 = vmatpush1.msra.mxu0 0.0
      %5254 = vmatprep.subr.mxu0 0.0
      %5255 = vmatpush1.msra.mxu0 0.0
      %5256 = vmatprep.subr.mxu0 0.0
      %5257 = vmatpush1.msra.mxu0 0.0
      %5258 = vmatprep.subr.mxu0 0.0
      %5259 = vmatpush1.msra.mxu0 0.0
      %5260 = vmatprep.subr.mxu0 0.0
      %5261 = vmatpush1.msra.mxu0 0.0
      %5262 = vmatprep.subr.mxu0 0.0
      %5263 = vmatpush1.msra.mxu0 0.0
      %5264 = vmatprep.subr.mxu0 0.0
      %5265 = vmatpush1.msra.mxu0 0.0
      %5266 = vmatprep.subr.mxu0 0.0
      %5267 = vmatpush1.msra.mxu0 0.0
      %5268 = vmatprep.subr.mxu0 0.0
      %5269 = vmatpush1.msra.mxu0 0.0
      %5270 = vmatprep.subr.mxu0 0.0
      %5271 = vmatpush1.msra.mxu0 0.0
      %5272 = vmatprep.subr.mxu0 0.0
      %5273 = vmatpush1.msra.mxu0 0.0
      %5274 = vmatprep.subr.mxu0 0.0
      %5275 = vmatpush1.msra.mxu0 0.0
      %5276 = vmatprep.subr.mxu0 0.0
      %5277 = vmatpush1.msra.mxu0 0.0
      %5278 = vmatprep.subr.mxu0 0.0
      %5279 = vmatpush1.msra.mxu0 0.0
      %5280 = vmatprep.subr.mxu0 0.0
      %5281 = vmatpush1.msra.mxu0 0.0
      %5282 = vmatprep.subr.mxu0 0.0
      %5283 = vmatpush1.msra.mxu0 0.0
      %5284 = vmatprep.subr.mxu0 0.0
      %5285 = vmatpush1.msra.mxu0 0.0
      %5286 = vmatprep.subr.mxu0 0.0
      %5287 = vmatpush1.msra.mxu0 0.0
      %5288 = vmatprep.subr.mxu0 0.0
      %5289 = vmatpush1.msra.mxu0 0.0
      %5290 = vmatprep.subr.mxu0 0.0
      %5291 = vmatpush1.msra.mxu0 0.0
      %5292 = vmatprep.subr.mxu0 0.0
      %5293 = vmatpush1.msra.mxu0 0.0
      %5294 = vmatprep.subr.mxu0 0.0
      %5295 = vmatpush1.msra.mxu0 0.0
      %5296 = vmatprep.subr.mxu0 0.0
      %5297 = vmatpush1.msra.mxu0 0.0
      %5298 = vmatprep.subr.mxu0 0.0
      %5299 = vmatpush1.msra.mxu0 0.0
      %5300 = vmatprep.subr.mxu0 0.0
      %5301 = vmatpush1.msra.mxu0 0.0
      %5302 = vmatprep.subr.mxu0 0.0
      %5303 = vmatpush1.msra.mxu0 0.0
      %5304 = vmatprep.subr.mxu0 0.0
      %5305 = vmatpush1.msra.mxu0 0.0
      %5306 = vmatprep.subr.mxu0 0.0
      %5307 = vmatpush1.msra.mxu0 0.0
      %5308 = vmatprep.mubr.f32.mxu0 0.0
      %v5309 = vand.u32 %v347, 4294901760
      %v5310 = vsub.f32 %v347, %v5309
      %v5311 = vand.u32 %v5310, 4294901760
      %v5312 = vsub.f32 %v5310, %v5311
      %v5313 = vand.u32 %v5312, 4294901760
      %5314 = vmatmul.mubr.f32.gmra.mrb[0].mxu0 %v5313
      %v5315 = vpop.f32.mrb[0].mxu0
      %v5316 = vadd.f32 %v343, %v5315
      %v5317 = vpop.f32.mrb[0].mxu0
      %v5318 = vadd.f32 %v343, %v5317
      %5319 = vdwg.mxu0
      %v5320 = vand.u32 %v230, 4294901760
      %v5321 = vsub.f32 %v230, %v5320
      %v5322 = vand.u32 %v5321, 4294901760
      %v5323 = vsub.f32 %v5321, %v5322
      %v5324 = vand.u32 %v5323, 4294901760
      %5325 = vmatprep.subr.mxu0 %v5324
      %v5326 = vand.u32 %v229, 4294901760
      %v5327 = vsub.f32 %v229, %v5326
      %v5328 = vand.u32 %v5327, 4294901760
      %v5329 = vsub.f32 %v5327, %v5328
      %v5330 = vand.u32 %v5329, 4294901760
      %5331 = vmatpush1.msra.mxu0 %v5330
      %v5332 = vand.u32 %v262, 4294901760
      %v5333 = vsub.f32 %v262, %v5332
      %v5334 = vand.u32 %v5333, 4294901760
      %v5335 = vsub.f32 %v5333, %v5334
      %v5336 = vand.u32 %v5335, 4294901760
      %5337 = vmatprep.subr.mxu0 %v5336
      %v5338 = vand.u32 %v261, 4294901760
      %v5339 = vsub.f32 %v261, %v5338
      %v5340 = vand.u32 %v5339, 4294901760
      %v5341 = vsub.f32 %v5339, %v5340
      %v5342 = vand.u32 %v5341, 4294901760
      %5343 = vmatpush1.msra.mxu0 %v5342
      %v5344 = vand.u32 %v294, 4294901760
      %v5345 = vsub.f32 %v294, %v5344
      %v5346 = vand.u32 %v5345, 4294901760
      %v5347 = vsub.f32 %v5345, %v5346
      %v5348 = vand.u32 %v5347, 4294901760
      %5349 = vmatprep.subr.mxu0 %v5348
      %v5350 = vand.u32 %v293, 4294901760
      %v5351 = vsub.f32 %v293, %v5350
      %v5352 = vand.u32 %v5351, 4294901760
      %v5353 = vsub.f32 %v5351, %v5352
      %v5354 = vand.u32 %v5353, 4294901760
      %5355 = vmatpush1.msra.mxu0 %v5354
      %v5356 = vand.u32 %v326, 4294901760
      %v5357 = vsub.f32 %v326, %v5356
      %v5358 = vand.u32 %v5357, 4294901760
      %v5359 = vsub.f32 %v5357, %v5358
      %v5360 = vand.u32 %v5359, 4294901760
      %5361 = vmatprep.subr.mxu0 %v5360
      %v5362 = vand.u32 %v325, 4294901760
      %v5363 = vsub.f32 %v325, %v5362
      %v5364 = vand.u32 %v5363, 4294901760
      %v5365 = vsub.f32 %v5363, %v5364
      %v5366 = vand.u32 %v5365, 4294901760
      %5367 = vmatpush1.msra.mxu0 %v5366
      %5368 = vmatprep.subr.mxu0 0.0
      %5369 = vmatpush1.msra.mxu0 0.0
      %5370 = vmatprep.subr.mxu0 0.0
      %5371 = vmatpush1.msra.mxu0 0.0
      %5372 = vmatprep.subr.mxu0 0.0
      %5373 = vmatpush1.msra.mxu0 0.0
      %5374 = vmatprep.subr.mxu0 0.0
      %5375 = vmatpush1.msra.mxu0 0.0
      %5376 = vmatprep.subr.mxu0 0.0
      %5377 = vmatpush1.msra.mxu0 0.0
      %5378 = vmatprep.subr.mxu0 0.0
      %5379 = vmatpush1.msra.mxu0 0.0
      %5380 = vmatprep.subr.mxu0 0.0
      %5381 = vmatpush1.msra.mxu0 0.0
      %5382 = vmatprep.subr.mxu0 0.0
      %5383 = vmatpush1.msra.mxu0 0.0
      %5384 = vmatprep.subr.mxu0 0.0
      %5385 = vmatpush1.msra.mxu0 0.0
      %5386 = vmatprep.subr.mxu0 0.0
      %5387 = vmatpush1.msra.mxu0 0.0
      %5388 = vmatprep.subr.mxu0 0.0
      %5389 = vmatpush1.msra.mxu0 0.0
      %5390 = vmatprep.subr.mxu0 0.0
      %5391 = vmatpush1.msra.mxu0 0.0
      %5392 = vmatprep.subr.mxu0 0.0
      %5393 = vmatpush1.msra.mxu0 0.0
      %5394 = vmatprep.subr.mxu0 0.0
      %5395 = vmatpush1.msra.mxu0 0.0
      %5396 = vmatprep.subr.mxu0 0.0
      %5397 = vmatpush1.msra.mxu0 0.0
      %5398 = vmatprep.subr.mxu0 0.0
      %5399 = vmatpush1.msra.mxu0 0.0
      %5400 = vmatprep.subr.mxu0 0.0
      %5401 = vmatpush1.msra.mxu0 0.0
      %5402 = vmatprep.subr.mxu0 0.0
      %5403 = vmatpush1.msra.mxu0 0.0
      %5404 = vmatprep.subr.mxu0 0.0
      %5405 = vmatpush1.msra.mxu0 0.0
      %5406 = vmatprep.subr.mxu0 0.0
      %5407 = vmatpush1.msra.mxu0 0.0
      %5408 = vmatprep.subr.mxu0 0.0
      %5409 = vmatpush1.msra.mxu0 0.0
      %5410 = vmatprep.subr.mxu0 0.0
      %5411 = vmatpush1.msra.mxu0 0.0
      %5412 = vmatprep.subr.mxu0 0.0
      %5413 = vmatpush1.msra.mxu0 0.0
      %5414 = vmatprep.subr.mxu0 0.0
      %5415 = vmatpush1.msra.mxu0 0.0
      %5416 = vmatprep.subr.mxu0 0.0
      %5417 = vmatpush1.msra.mxu0 0.0
      %5418 = vmatprep.subr.mxu0 0.0
      %5419 = vmatpush1.msra.mxu0 0.0
      %5420 = vmatprep.subr.mxu0 0.0
      %5421 = vmatpush1.msra.mxu0 0.0
      %5422 = vmatprep.subr.mxu0 0.0
      %5423 = vmatpush1.msra.mxu0 0.0
      %5424 = vmatprep.mubr.f32.mxu0 0.0
      %v5425 = vand.u32 %v347, 4294901760
      %5426 = vmatmul.mubr.f32.gmra.mrb[0].mxu0 %v5425
      %v5427 = vpop.f32.mrb[0].mxu0
      %v5428 = vadd.f32 %v5316, %v5427
      %v5429 = vpop.f32.mrb[0].mxu0
      %v5430 = vadd.f32 %v5318, %v5429
      %5431 = vdwg.mxu0
      %v5432 = vand.u32 %v230, 4294901760
      %v5433 = vsub.f32 %v230, %v5432
      %5434 = vmatprep.subr.mxu0 %v5433
      %v5435 = vand.u32 %v229, 4294901760
      %v5436 = vsub.f32 %v229, %v5435
      %5437 = vmatpush1.msra.mxu0 %v5436
      %v5438 = vand.u32 %v262, 4294901760
      %v5439 = vsub.f32 %v262, %v5438
      %5440 = vmatprep.subr.mxu0 %v5439
      %v5441 = vand.u32 %v261, 4294901760
      %v5442 = vsub.f32 %v261, %v5441
      %5443 = vmatpush1.msra.mxu0 %v5442
      %v5444 = vand.u32 %v294, 4294901760
      %v5445 = vsub.f32 %v294, %v5444
      %5446 = vmatprep.subr.mxu0 %v5445
      %v5447 = vand.u32 %v293, 4294901760
      %v5448 = vsub.f32 %v293, %v5447
      %5449 = vmatpush1.msra.mxu0 %v5448
      %v5450 = vand.u32 %v326, 4294901760
      %v5451 = vsub.f32 %v326, %v5450
      %5452 = vmatprep.subr.mxu0 %v5451
      %v5453 = vand.u32 %v325, 4294901760
      %v5454 = vsub.f32 %v325, %v5453
      %5455 = vmatpush1.msra.mxu0 %v5454
      %5456 = vmatprep.subr.mxu0 0.0
      %5457 = vmatpush1.msra.mxu0 0.0
      %5458 = vmatprep.subr.mxu0 0.0
      %5459 = vmatpush1.msra.mxu0 0.0
      %5460 = vmatprep.subr.mxu0 0.0
      %5461 = vmatpush1.msra.mxu0 0.0
      %5462 = vmatprep.subr.mxu0 0.0
      %5463 = vmatpush1.msra.mxu0 0.0
      %5464 = vmatprep.subr.mxu0 0.0
      %5465 = vmatpush1.msra.mxu0 0.0
      %5466 = vmatprep.subr.mxu0 0.0
      %5467 = vmatpush1.msra.mxu0 0.0
      %5468 = vmatprep.subr.mxu0 0.0
      %5469 = vmatpush1.msra.mxu0 0.0
      %5470 = vmatprep.subr.mxu0 0.0
      %5471 = vmatpush1.msra.mxu0 0.0
      %5472 = vmatprep.subr.mxu0 0.0
      %5473 = vmatpush1.msra.mxu0 0.0
      %5474 = vmatprep.subr.mxu0 0.0
      %5475 = vmatpush1.msra.mxu0 0.0
      %5476 = vmatprep.subr.mxu0 0.0
      %5477 = vmatpush1.msra.mxu0 0.0
      %5478 = vmatprep.subr.mxu0 0.0
      %5479 = vmatpush1.msra.mxu0 0.0
      %5480 = vmatprep.subr.mxu0 0.0
      %5481 = vmatpush1.msra.mxu0 0.0
      %5482 = vmatprep.subr.mxu0 0.0
      %5483 = vmatpush1.msra.mxu0 0.0
      %5484 = vmatprep.subr.mxu0 0.0
      %5485 = vmatpush1.msra.mxu0 0.0
      %5486 = vmatprep.subr.mxu0 0.0
      %5487 = vmatpush1.msra.mxu0 0.0
      %5488 = vmatprep.subr.mxu0 0.0
      %5489 = vmatpush1.msra.mxu0 0.0
      %5490 = vmatprep.subr.mxu0 0.0
      %5491 = vmatpush1.msra.mxu0 0.0
      %5492 = vmatprep.subr.mxu0 0.0
      %5493 = vmatpush1.msra.mxu0 0.0
      %5494 = vmatprep.subr.mxu0 0.0
      %5495 = vmatpush1.msra.mxu0 0.0
      %5496 = vmatprep.subr.mxu0 0.0
      %5497 = vmatpush1.msra.mxu0 0.0
      %5498 = vmatprep.subr.mxu0 0.0
      %5499 = vmatpush1.msra.mxu0 0.0
      %5500 = vmatprep.subr.mxu0 0.0
      %5501 = vmatpush1.msra.mxu0 0.0
      %5502 = vmatprep.subr.mxu0 0.0
      %5503 = vmatpush1.msra.mxu0 0.0
      %5504 = vmatprep.subr.mxu0 0.0
      %5505 = vmatpush1.msra.mxu0 0.0
      %5506 = vmatprep.subr.mxu0 0.0
      %5507 = vmatpush1.msra.mxu0 0.0
      %5508 = vmatprep.subr.mxu0 0.0
      %5509 = vmatpush1.msra.mxu0 0.0
      %5510 = vmatprep.subr.mxu0 0.0
      %5511 = vmatpush1.msra.mxu0 0.0
      %5512 = vmatprep.mubr.f32.mxu0 0.0
      %v5513 = vand.u32 %v347, 4294901760
      %v5514 = vsub.f32 %v347, %v5513
      %5515 = vmatmul.mubr.f32.gmra.mrb[0].mxu0 %v5514
      %v5516 = vpop.f32.mrb[0].mxu0
      %v5517 = vadd.f32 %v5428, %v5516
      %v5518 = vpop.f32.mrb[0].mxu0
      %v5519 = vadd.f32 %v5430, %v5518
      %5520 = vdwg.mxu0
      %v5521 = vand.u32 %v230, 4294901760
      %5522 = vmatprep.subr.mxu0 %v5521
      %v5523 = vand.u32 %v229, 4294901760
      %5524 = vmatpush1.msra.mxu0 %v5523
      %v5525 = vand.u32 %v262, 4294901760
      %5526 = vmatprep.subr.mxu0 %v5525
      %v5527 = vand.u32 %v261, 4294901760
      %5528 = vmatpush1.msra.mxu0 %v5527
      %v5529 = vand.u32 %v294, 4294901760
      %5530 = vmatprep.subr.mxu0 %v5529
      %v5531 = vand.u32 %v293, 4294901760
      %5532 = vmatpush1.msra.mxu0 %v5531
      %v5533 = vand.u32 %v326, 4294901760
      %5534 = vmatprep.subr.mxu0 %v5533
      %v5535 = vand.u32 %v325, 4294901760
      %5536 = vmatpush1.msra.mxu0 %v5535
      %5537 = vmatprep.subr.mxu0 0.0
      %5538 = vmatpush1.msra.mxu0 0.0
      %5539 = vmatprep.subr.mxu0 0.0
      %5540 = vmatpush1.msra.mxu0 0.0
      %5541 = vmatprep.subr.mxu0 0.0
      %5542 = vmatpush1.msra.mxu0 0.0
      %5543 = vmatprep.subr.mxu0 0.0
      %5544 = vmatpush1.msra.mxu0 0.0
      %5545 = vmatprep.subr.mxu0 0.0
      %5546 = vmatpush1.msra.mxu0 0.0
      %5547 = vmatprep.subr.mxu0 0.0
      %5548 = vmatpush1.msra.mxu0 0.0
      %5549 = vmatprep.subr.mxu0 0.0
      %5550 = vmatpush1.msra.mxu0 0.0
      %5551 = vmatprep.subr.mxu0 0.0
      %5552 = vmatpush1.msra.mxu0 0.0
      %5553 = vmatprep.subr.mxu0 0.0
      %5554 = vmatpush1.msra.mxu0 0.0
      %5555 = vmatprep.subr.mxu0 0.0
      %5556 = vmatpush1.msra.mxu0 0.0
      %5557 = vmatprep.subr.mxu0 0.0
      %5558 = vmatpush1.msra.mxu0 0.0
      %5559 = vmatprep.subr.mxu0 0.0
      %5560 = vmatpush1.msra.mxu0 0.0
      %5561 = vmatprep.subr.mxu0 0.0
      %5562 = vmatpush1.msra.mxu0 0.0
      %5563 = vmatprep.subr.mxu0 0.0
      %5564 = vmatpush1.msra.mxu0 0.0
      %5565 = vmatprep.subr.mxu0 0.0
      %5566 = vmatpush1.msra.mxu0 0.0
      %5567 = vmatprep.subr.mxu0 0.0
      %5568 = vmatpush1.msra.mxu0 0.0
      %5569 = vmatprep.subr.mxu0 0.0
      %5570 = vmatpush1.msra.mxu0 0.0
      %5571 = vmatprep.subr.mxu0 0.0
      %5572 = vmatpush1.msra.mxu0 0.0
      %5573 = vmatprep.subr.mxu0 0.0
      %5574 = vmatpush1.msra.mxu0 0.0
      %5575 = vmatprep.subr.mxu0 0.0
      %5576 = vmatpush1.msra.mxu0 0.0
      %5577 = vmatprep.subr.mxu0 0.0
      %5578 = vmatpush1.msra.mxu0 0.0
      %5579 = vmatprep.subr.mxu0 0.0
      %5580 = vmatpush1.msra.mxu0 0.0
      %5581 = vmatprep.subr.mxu0 0.0
      %5582 = vmatpush1.msra.mxu0 0.0
      %5583 = vmatprep.subr.mxu0 0.0
      %5584 = vmatpush1.msra.mxu0 0.0
      %5585 = vmatprep.subr.mxu0 0.0
      %5586 = vmatpush1.msra.mxu0 0.0
      %5587 = vmatprep.subr.mxu0 0.0
      %5588 = vmatpush1.msra.mxu0 0.0
      %5589 = vmatprep.subr.mxu0 0.0
      %5590 = vmatpush1.msra.mxu0 0.0
      %5591 = vmatprep.subr.mxu0 0.0
      %5592 = vmatpush1.msra.mxu0 0.0
      %5593 = vmatprep.mubr.f32.mxu0 0.0
      %v5594 = vand.u32 %v347, 4294901760
      %v5595 = vsub.f32 %v347, %v5594
      %v5596 = vand.u32 %v5595, 4294901760
      %5597 = vmatmul.mubr.f32.gmra.mrb[0].mxu0 %v5596
      %v5598 = vpop.f32.mrb[0].mxu0
      %v5599 = vadd.f32 %v5517, %v5598
      %v5600 = vpop.f32.mrb[0].mxu0
      %v5601 = vadd.f32 %v5519, %v5600
      %5602 = vdwg.mxu0
      %v5603 = vand.u32 %v230, 4294901760
      %v5604 = vsub.f32 %v230, %v5603
      %v5605 = vand.u32 %v5604, 4294901760
      %5606 = vmatprep.subr.mxu0 %v5605
      %v5607 = vand.u32 %v229, 4294901760
      %v5608 = vsub.f32 %v229, %v5607
      %v5609 = vand.u32 %v5608, 4294901760
      %5610 = vmatpush1.msra.mxu0 %v5609
      %v5611 = vand.u32 %v262, 4294901760
      %v5612 = vsub.f32 %v262, %v5611
      %v5613 = vand.u32 %v5612, 4294901760
      %5614 = vmatprep.subr.mxu0 %v5613
      %v5615 = vand.u32 %v261, 4294901760
      %v5616 = vsub.f32 %v261, %v5615
      %v5617 = vand.u32 %v5616, 4294901760
      %5618 = vmatpush1.msra.mxu0 %v5617
      %v5619 = vand.u32 %v294, 4294901760
      %v5620 = vsub.f32 %v294, %v5619
      %v5621 = vand.u32 %v5620, 4294901760
      %5622 = vmatprep.subr.mxu0 %v5621
      %v5623 = vand.u32 %v293, 4294901760
      %v5624 = vsub.f32 %v293, %v5623
      %v5625 = vand.u32 %v5624, 4294901760
      %5626 = vmatpush1.msra.mxu0 %v5625
      %v5627 = vand.u32 %v326, 4294901760
      %v5628 = vsub.f32 %v326, %v5627
      %v5629 = vand.u32 %v5628, 4294901760
      %5630 = vmatprep.subr.mxu0 %v5629
      %v5631 = vand.u32 %v325, 4294901760
      %v5632 = vsub.f32 %v325, %v5631
      %v5633 = vand.u32 %v5632, 4294901760
      %5634 = vmatpush1.msra.mxu0 %v5633
      %5635 = vmatprep.subr.mxu0 0.0
      %5636 = vmatpush1.msra.mxu0 0.0
      %5637 = vmatprep.subr.mxu0 0.0
      %5638 = vmatpush1.msra.mxu0 0.0
      %5639 = vmatprep.subr.mxu0 0.0
      %5640 = vmatpush1.msra.mxu0 0.0
      %5641 = vmatprep.subr.mxu0 0.0
      %5642 = vmatpush1.msra.mxu0 0.0
      %5643 = vmatprep.subr.mxu0 0.0
      %5644 = vmatpush1.msra.mxu0 0.0
      %5645 = vmatprep.subr.mxu0 0.0
      %5646 = vmatpush1.msra.mxu0 0.0
      %5647 = vmatprep.subr.mxu0 0.0
      %5648 = vmatpush1.msra.mxu0 0.0
      %5649 = vmatprep.subr.mxu0 0.0
      %5650 = vmatpush1.msra.mxu0 0.0
      %5651 = vmatprep.subr.mxu0 0.0
      %5652 = vmatpush1.msra.mxu0 0.0
      %5653 = vmatprep.subr.mxu0 0.0
      %5654 = vmatpush1.msra.mxu0 0.0
      %5655 = vmatprep.subr.mxu0 0.0
      %5656 = vmatpush1.msra.mxu0 0.0
      %5657 = vmatprep.subr.mxu0 0.0
      %5658 = vmatpush1.msra.mxu0 0.0
      %5659 = vmatprep.subr.mxu0 0.0
      %5660 = vmatpush1.msra.mxu0 0.0
      %5661 = vmatprep.subr.mxu0 0.0
      %5662 = vmatpush1.msra.mxu0 0.0
      %5663 = vmatprep.subr.mxu0 0.0
      %5664 = vmatpush1.msra.mxu0 0.0
      %5665 = vmatprep.subr.mxu0 0.0
      %5666 = vmatpush1.msra.mxu0 0.0
      %5667 = vmatprep.subr.mxu0 0.0
      %5668 = vmatpush1.msra.mxu0 0.0
      %5669 = vmatprep.subr.mxu0 0.0
      %5670 = vmatpush1.msra.mxu0 0.0
      %5671 = vmatprep.subr.mxu0 0.0
      %5672 = vmatpush1.msra.mxu0 0.0
      %5673 = vmatprep.subr.mxu0 0.0
      %5674 = vmatpush1.msra.mxu0 0.0
      %5675 = vmatprep.subr.mxu0 0.0
      %5676 = vmatpush1.msra.mxu0 0.0
      %5677 = vmatprep.subr.mxu0 0.0
      %5678 = vmatpush1.msra.mxu0 0.0
      %5679 = vmatprep.subr.mxu0 0.0
      %5680 = vmatpush1.msra.mxu0 0.0
      %5681 = vmatprep.subr.mxu0 0.0
      %5682 = vmatpush1.msra.mxu0 0.0
      %5683 = vmatprep.subr.mxu0 0.0
      %5684 = vmatpush1.msra.mxu0 0.0
      %5685 = vmatprep.subr.mxu0 0.0
      %5686 = vmatpush1.msra.mxu0 0.0
      %5687 = vmatprep.subr.mxu0 0.0
      %5688 = vmatpush1.msra.mxu0 0.0
      %5689 = vmatprep.subr.mxu0 0.0
      %5690 = vmatpush1.msra.mxu0 0.0
      %5691 = vmatprep.mubr.f32.mxu0 0.0
      %v5692 = vand.u32 %v347, 4294901760
      %5693 = vmatmul.mubr.f32.gmra.mrb[0].mxu0 %v5692
      %v5694 = vpop.f32.mrb[0].mxu0
      %v5695 = vadd.f32 %v5599, %v5694
      %v5696 = vpop.f32.mrb[0].mxu0
      %v5697 = vadd.f32 %v5601, %v5696
      %5698 = vdwg.mxu0
      %v5699 = vand.u32 %v230, 4294901760
      %5700 = vmatprep.subr.mxu0 %v5699
      %v5701 = vand.u32 %v229, 4294901760
      %5702 = vmatpush1.msra.mxu0 %v5701
      %v5703 = vand.u32 %v262, 4294901760
      %5704 = vmatprep.subr.mxu0 %v5703
      %v5705 = vand.u32 %v261, 4294901760
      %5706 = vmatpush1.msra.mxu0 %v5705
      %v5707 = vand.u32 %v294, 4294901760
      %5708 = vmatprep.subr.mxu0 %v5707
      %v5709 = vand.u32 %v293, 4294901760
      %5710 = vmatpush1.msra.mxu0 %v5709
      %v5711 = vand.u32 %v326, 4294901760
      %5712 = vmatprep.subr.mxu0 %v5711
      %v5713 = vand.u32 %v325, 4294901760
      %5714 = vmatpush1.msra.mxu0 %v5713
      %5715 = vmatprep.subr.mxu0 0.0
      %5716 = vmatpush1.msra.mxu0 0.0
      %5717 = vmatprep.subr.mxu0 0.0
      %5718 = vmatpush1.msra.mxu0 0.0
      %5719 = vmatprep.subr.mxu0 0.0
      %5720 = vmatpush1.msra.mxu0 0.0
      %5721 = vmatprep.subr.mxu0 0.0
      %5722 = vmatpush1.msra.mxu0 0.0
      %5723 = vmatprep.subr.mxu0 0.0
      %5724 = vmatpush1.msra.mxu0 0.0
      %5725 = vmatprep.subr.mxu0 0.0
      %5726 = vmatpush1.msra.mxu0 0.0
      %5727 = vmatprep.subr.mxu0 0.0
      %5728 = vmatpush1.msra.mxu0 0.0
      %5729 = vmatprep.subr.mxu0 0.0
      %5730 = vmatpush1.msra.mxu0 0.0
      %5731 = vmatprep.subr.mxu0 0.0
      %5732 = vmatpush1.msra.mxu0 0.0
      %5733 = vmatprep.subr.mxu0 0.0
      %5734 = vmatpush1.msra.mxu0 0.0
      %5735 = vmatprep.subr.mxu0 0.0
      %5736 = vmatpush1.msra.mxu0 0.0
      %5737 = vmatprep.subr.mxu0 0.0
      %5738 = vmatpush1.msra.mxu0 0.0
      %5739 = vmatprep.subr.mxu0 0.0
      %5740 = vmatpush1.msra.mxu0 0.0
      %5741 = vmatprep.subr.mxu0 0.0
      %5742 = vmatpush1.msra.mxu0 0.0
      %5743 = vmatprep.subr.mxu0 0.0
      %5744 = vmatpush1.msra.mxu0 0.0
      %5745 = vmatprep.subr.mxu0 0.0
      %5746 = vmatpush1.msra.mxu0 0.0
      %5747 = vmatprep.subr.mxu0 0.0
      %5748 = vmatpush1.msra.mxu0 0.0
      %5749 = vmatprep.subr.mxu0 0.0
      %5750 = vmatpush1.msra.mxu0 0.0
      %5751 = vmatprep.subr.mxu0 0.0
      %5752 = vmatpush1.msra.mxu0 0.0
      %5753 = vmatprep.subr.mxu0 0.0
      %5754 = vmatpush1.msra.mxu0 0.0
      %5755 = vmatprep.subr.mxu0 0.0
      %5756 = vmatpush1.msra.mxu0 0.0
      %5757 = vmatprep.subr.mxu0 0.0
      %5758 = vmatpush1.msra.mxu0 0.0
      %5759 = vmatprep.subr.mxu0 0.0
      %5760 = vmatpush1.msra.mxu0 0.0
      %5761 = vmatprep.subr.mxu0 0.0
      %5762 = vmatpush1.msra.mxu0 0.0
      %5763 = vmatprep.subr.mxu0 0.0
      %5764 = vmatpush1.msra.mxu0 0.0
      %5765 = vmatprep.subr.mxu0 0.0
      %5766 = vmatpush1.msra.mxu0 0.0
      %5767 = vmatprep.subr.mxu0 0.0
      %5768 = vmatpush1.msra.mxu0 0.0
      %5769 = vmatprep.subr.mxu0 0.0
      %5770 = vmatpush1.msra.mxu0 0.0
      %5771 = vmatprep.mubr.f32.mxu0 0.0
      %v5772 = vand.u32 %v347, 4294901760
      %5773 = vmatmul.mubr.f32.gmra.mrb[0].mxu0 %v5772
      %v5774 = vpop.f32.mrb[0].mxu0
      %v5775 = vadd.f32 %v5695, %v5774
      %v5776 = vpop.f32.mrb[0].mxu0
      %v5777 = vadd.f32 %v5697, %v5776
      %5778 = vdwg.mxu0
      %v5779 = vand.u32 %v232, 4294901760
      %5780 = vmatprep.subr.mxu0 %v5779
      %v5781 = vand.u32 %v231, 4294901760
      %5782 = vmatpush1.msra.mxu0 %v5781
      %v5783 = vand.u32 %v264, 4294901760
      %5784 = vmatprep.subr.mxu0 %v5783
      %v5785 = vand.u32 %v263, 4294901760
      %5786 = vmatpush1.msra.mxu0 %v5785
      %v5787 = vand.u32 %v296, 4294901760
      %5788 = vmatprep.subr.mxu0 %v5787
      %v5789 = vand.u32 %v295, 4294901760
      %5790 = vmatpush1.msra.mxu0 %v5789
      %v5791 = vand.u32 %v328, 4294901760
      %5792 = vmatprep.subr.mxu0 %v5791
      %v5793 = vand.u32 %v327, 4294901760
      %5794 = vmatpush1.msra.mxu0 %v5793
      %5795 = vmatprep.subr.mxu0 0.0
      %5796 = vmatpush1.msra.mxu0 0.0
      %5797 = vmatprep.subr.mxu0 0.0
      %5798 = vmatpush1.msra.mxu0 0.0
      %5799 = vmatprep.subr.mxu0 0.0
      %5800 = vmatpush1.msra.mxu0 0.0
      %5801 = vmatprep.subr.mxu0 0.0
      %5802 = vmatpush1.msra.mxu0 0.0
      %5803 = vmatprep.subr.mxu0 0.0
      %5804 = vmatpush1.msra.mxu0 0.0
      %5805 = vmatprep.subr.mxu0 0.0
      %5806 = vmatpush1.msra.mxu0 0.0
      %5807 = vmatprep.subr.mxu0 0.0
      %5808 = vmatpush1.msra.mxu0 0.0
      %5809 = vmatprep.subr.mxu0 0.0
      %5810 = vmatpush1.msra.mxu0 0.0
      %5811 = vmatprep.subr.mxu0 0.0
      %5812 = vmatpush1.msra.mxu0 0.0
      %5813 = vmatprep.subr.mxu0 0.0
      %5814 = vmatpush1.msra.mxu0 0.0
      %5815 = vmatprep.subr.mxu0 0.0
      %5816 = vmatpush1.msra.mxu0 0.0
      %5817 = vmatprep.subr.mxu0 0.0
      %5818 = vmatpush1.msra.mxu0 0.0
      %5819 = vmatprep.subr.mxu0 0.0
      %5820 = vmatpush1.msra.mxu0 0.0
      %5821 = vmatprep.subr.mxu0 0.0
      %5822 = vmatpush1.msra.mxu0 0.0
      %5823 = vmatprep.subr.mxu0 0.0
      %5824 = vmatpush1.msra.mxu0 0.0
      %5825 = vmatprep.subr.mxu0 0.0
      %5826 = vmatpush1.msra.mxu0 0.0
      %5827 = vmatprep.subr.mxu0 0.0
      %5828 = vmatpush1.msra.mxu0 0.0
      %5829 = vmatprep.subr.mxu0 0.0
      %5830 = vmatpush1.msra.mxu0 0.0
      %5831 = vmatprep.subr.mxu0 0.0
      %5832 = vmatpush1.msra.mxu0 0.0
      %5833 = vmatprep.subr.mxu0 0.0
      %5834 = vmatpush1.msra.mxu0 0.0
      %5835 = vmatprep.subr.mxu0 0.0
      %5836 = vmatpush1.msra.mxu0 0.0
      %5837 = vmatprep.subr.mxu0 0.0
      %5838 = vmatpush1.msra.mxu0 0.0
      %5839 = vmatprep.subr.mxu0 0.0
      %5840 = vmatpush1.msra.mxu0 0.0
      %5841 = vmatprep.subr.mxu0 0.0
      %5842 = vmatpush1.msra.mxu0 0.0
      %5843 = vmatprep.subr.mxu0 0.0
      %5844 = vmatpush1.msra.mxu0 0.0
      %5845 = vmatprep.subr.mxu0 0.0
      %5846 = vmatpush1.msra.mxu0 0.0
      %5847 = vmatprep.subr.mxu0 0.0
      %5848 = vmatpush1.msra.mxu0 0.0
      %5849 = vmatprep.subr.mxu0 0.0
      %5850 = vmatpush1.msra.mxu0 0.0
      %5851 = vmatprep.mubr.f32.mxu0 0.0
      %v5852 = vand.u32 %v347, 4294901760
      %v5853 = vsub.f32 %v347, %v5852
      %v5854 = vand.u32 %v5853, 4294901760
      %v5855 = vsub.f32 %v5853, %v5854
      %v5856 = vand.u32 %v5855, 4294901760
      %5857 = vmatmul.mubr.f32.gmra.mrb[0].mxu0 %v5856
      %v5858 = vpop.f32.mrb[0].mxu0
      %v5859 = vadd.f32 %v343, %v5858
      %v5860 = vpop.f32.mrb[0].mxu0
      %v5861 = vadd.f32 %v343, %v5860
      %5862 = vdwg.mxu0
      %v5863 = vand.u32 %v232, 4294901760
      %v5864 = vsub.f32 %v232, %v5863
      %v5865 = vand.u32 %v5864, 4294901760
      %v5866 = vsub.f32 %v5864, %v5865
      %v5867 = vand.u32 %v5866, 4294901760
      %5868 = vmatprep.subr.mxu0 %v5867
      %v5869 = vand.u32 %v231, 4294901760
      %v5870 = vsub.f32 %v231, %v5869
      %v5871 = vand.u32 %v5870, 4294901760
      %v5872 = vsub.f32 %v5870, %v5871
      %v5873 = vand.u32 %v5872, 4294901760
      %5874 = vmatpush1.msra.mxu0 %v5873
      %v5875 = vand.u32 %v264, 4294901760
      %v5876 = vsub.f32 %v264, %v5875
      %v5877 = vand.u32 %v5876, 4294901760
      %v5878 = vsub.f32 %v5876, %v5877
      %v5879 = vand.u32 %v5878, 4294901760
      %5880 = vmatprep.subr.mxu0 %v5879
      %v5881 = vand.u32 %v263, 4294901760
      %v5882 = vsub.f32 %v263, %v5881
      %v5883 = vand.u32 %v5882, 4294901760
      %v5884 = vsub.f32 %v5882, %v5883
      %v5885 = vand.u32 %v5884, 4294901760
      %5886 = vmatpush1.msra.mxu0 %v5885
      %v5887 = vand.u32 %v296, 4294901760
      %v5888 = vsub.f32 %v296, %v5887
      %v5889 = vand.u32 %v5888, 4294901760
      %v5890 = vsub.f32 %v5888, %v5889
      %v5891 = vand.u32 %v5890, 4294901760
      %5892 = vmatprep.subr.mxu0 %v5891
      %v5893 = vand.u32 %v295, 4294901760
      %v5894 = vsub.f32 %v295, %v5893
      %v5895 = vand.u32 %v5894, 4294901760
      %v5896 = vsub.f32 %v5894, %v5895
      %v5897 = vand.u32 %v5896, 4294901760
      %5898 = vmatpush1.msra.mxu0 %v5897
      %v5899 = vand.u32 %v328, 4294901760
      %v5900 = vsub.f32 %v328, %v5899
      %v5901 = vand.u32 %v5900, 4294901760
      %v5902 = vsub.f32 %v5900, %v5901
      %v5903 = vand.u32 %v5902, 4294901760
      %5904 = vmatprep.subr.mxu0 %v5903
      %v5905 = vand.u32 %v327, 4294901760
      %v5906 = vsub.f32 %v327, %v5905
      %v5907 = vand.u32 %v5906, 4294901760
      %v5908 = vsub.f32 %v5906, %v5907
      %v5909 = vand.u32 %v5908, 4294901760
      %5910 = vmatpush1.msra.mxu0 %v5909
      %5911 = vmatprep.subr.mxu0 0.0
      %5912 = vmatpush1.msra.mxu0 0.0
      %5913 = vmatprep.subr.mxu0 0.0
      %5914 = vmatpush1.msra.mxu0 0.0
      %5915 = vmatprep.subr.mxu0 0.0
      %5916 = vmatpush1.msra.mxu0 0.0
      %5917 = vmatprep.subr.mxu0 0.0
      %5918 = vmatpush1.msra.mxu0 0.0
      %5919 = vmatprep.subr.mxu0 0.0
      %5920 = vmatpush1.msra.mxu0 0.0
      %5921 = vmatprep.subr.mxu0 0.0
      %5922 = vmatpush1.msra.mxu0 0.0
      %5923 = vmatprep.subr.mxu0 0.0
      %5924 = vmatpush1.msra.mxu0 0.0
      %5925 = vmatprep.subr.mxu0 0.0
      %5926 = vmatpush1.msra.mxu0 0.0
      %5927 = vmatprep.subr.mxu0 0.0
      %5928 = vmatpush1.msra.mxu0 0.0
      %5929 = vmatprep.subr.mxu0 0.0
      %5930 = vmatpush1.msra.mxu0 0.0
      %5931 = vmatprep.subr.mxu0 0.0
      %5932 = vmatpush1.msra.mxu0 0.0
      %5933 = vmatprep.subr.mxu0 0.0
      %5934 = vmatpush1.msra.mxu0 0.0
      %5935 = vmatprep.subr.mxu0 0.0
      %5936 = vmatpush1.msra.mxu0 0.0
      %5937 = vmatprep.subr.mxu0 0.0
      %5938 = vmatpush1.msra.mxu0 0.0
      %5939 = vmatprep.subr.mxu0 0.0
      %5940 = vmatpush1.msra.mxu0 0.0
      %5941 = vmatprep.subr.mxu0 0.0
      %5942 = vmatpush1.msra.mxu0 0.0
      %5943 = vmatprep.subr.mxu0 0.0
      %5944 = vmatpush1.msra.mxu0 0.0
      %5945 = vmatprep.subr.mxu0 0.0
      %5946 = vmatpush1.msra.mxu0 0.0
      %5947 = vmatprep.subr.mxu0 0.0
      %5948 = vmatpush1.msra.mxu0 0.0
      %5949 = vmatprep.subr.mxu0 0.0
      %5950 = vmatpush1.msra.mxu0 0.0
      %5951 = vmatprep.subr.mxu0 0.0
      %5952 = vmatpush1.msra.mxu0 0.0
      %5953 = vmatprep.subr.mxu0 0.0
      %5954 = vmatpush1.msra.mxu0 0.0
      %5955 = vmatprep.subr.mxu0 0.0
      %5956 = vmatpush1.msra.mxu0 0.0
      %5957 = vmatprep.subr.mxu0 0.0
      %5958 = vmatpush1.msra.mxu0 0.0
      %5959 = vmatprep.subr.mxu0 0.0
      %5960 = vmatpush1.msra.mxu0 0.0
      %5961 = vmatprep.subr.mxu0 0.0
      %5962 = vmatpush1.msra.mxu0 0.0
      %5963 = vmatprep.subr.mxu0 0.0
      %5964 = vmatpush1.msra.mxu0 0.0
      %5965 = vmatprep.subr.mxu0 0.0
      %5966 = vmatpush1.msra.mxu0 0.0
      %5967 = vmatprep.mubr.f32.mxu0 0.0
      %v5968 = vand.u32 %v347, 4294901760
      %5969 = vmatmul.mubr.f32.gmra.mrb[0].mxu0 %v5968
      %v5970 = vpop.f32.mrb[0].mxu0
      %v5971 = vadd.f32 %v5859, %v5970
      %v5972 = vpop.f32.mrb[0].mxu0
      %v5973 = vadd.f32 %v5861, %v5972
      %5974 = vdwg.mxu0
      %v5975 = vand.u32 %v232, 4294901760
      %v5976 = vsub.f32 %v232, %v5975
      %5977 = vmatprep.subr.mxu0 %v5976
      %v5978 = vand.u32 %v231, 4294901760
      %v5979 = vsub.f32 %v231, %v5978
      %5980 = vmatpush1.msra.mxu0 %v5979
      %v5981 = vand.u32 %v264, 4294901760
      %v5982 = vsub.f32 %v264, %v5981
      %5983 = vmatprep.subr.mxu0 %v5982
      %v5984 = vand.u32 %v263, 4294901760
      %v5985 = vsub.f32 %v263, %v5984
      %5986 = vmatpush1.msra.mxu0 %v5985
      %v5987 = vand.u32 %v296, 4294901760
      %v5988 = vsub.f32 %v296, %v5987
      %5989 = vmatprep.subr.mxu0 %v5988
      %v5990 = vand.u32 %v295, 4294901760
      %v5991 = vsub.f32 %v295, %v5990
      %5992 = vmatpush1.msra.mxu0 %v5991
      %v5993 = vand.u32 %v328, 4294901760
      %v5994 = vsub.f32 %v328, %v5993
      %5995 = vmatprep.subr.mxu0 %v5994
      %v5996 = vand.u32 %v327, 4294901760
      %v5997 = vsub.f32 %v327, %v5996
      %5998 = vmatpush1.msra.mxu0 %v5997
      %5999 = vmatprep.subr.mxu0 0.0
      %6000 = vmatpush1.msra.mxu0 0.0
      %6001 = vmatprep.subr.mxu0 0.0
      %6002 = vmatpush1.msra.mxu0 0.0
      %6003 = vmatprep.subr.mxu0 0.0
      %6004 = vmatpush1.msra.mxu0 0.0
      %6005 = vmatprep.subr.mxu0 0.0
      %6006 = vmatpush1.msra.mxu0 0.0
      %6007 = vmatprep.subr.mxu0 0.0
      %6008 = vmatpush1.msra.mxu0 0.0
      %6009 = vmatprep.subr.mxu0 0.0
      %6010 = vmatpush1.msra.mxu0 0.0
      %6011 = vmatprep.subr.mxu0 0.0
      %6012 = vmatpush1.msra.mxu0 0.0
      %6013 = vmatprep.subr.mxu0 0.0
      %6014 = vmatpush1.msra.mxu0 0.0
      %6015 = vmatprep.subr.mxu0 0.0
      %6016 = vmatpush1.msra.mxu0 0.0
      %6017 = vmatprep.subr.mxu0 0.0
      %6018 = vmatpush1.msra.mxu0 0.0
      %6019 = vmatprep.subr.mxu0 0.0
      %6020 = vmatpush1.msra.mxu0 0.0
      %6021 = vmatprep.subr.mxu0 0.0
      %6022 = vmatpush1.msra.mxu0 0.0
      %6023 = vmatprep.subr.mxu0 0.0
      %6024 = vmatpush1.msra.mxu0 0.0
      %6025 = vmatprep.subr.mxu0 0.0
      %6026 = vmatpush1.msra.mxu0 0.0
      %6027 = vmatprep.subr.mxu0 0.0
      %6028 = vmatpush1.msra.mxu0 0.0
      %6029 = vmatprep.subr.mxu0 0.0
      %6030 = vmatpush1.msra.mxu0 0.0
      %6031 = vmatprep.subr.mxu0 0.0
      %6032 = vmatpush1.msra.mxu0 0.0
      %6033 = vmatprep.subr.mxu0 0.0
      %6034 = vmatpush1.msra.mxu0 0.0
      %6035 = vmatprep.subr.mxu0 0.0
      %6036 = vmatpush1.msra.mxu0 0.0
      %6037 = vmatprep.subr.mxu0 0.0
      %6038 = vmatpush1.msra.mxu0 0.0
      %6039 = vmatprep.subr.mxu0 0.0
      %6040 = vmatpush1.msra.mxu0 0.0
      %6041 = vmatprep.subr.mxu0 0.0
      %6042 = vmatpush1.msra.mxu0 0.0
      %6043 = vmatprep.subr.mxu0 0.0
      %6044 = vmatpush1.msra.mxu0 0.0
      %6045 = vmatprep.subr.mxu0 0.0
      %6046 = vmatpush1.msra.mxu0 0.0
      %6047 = vmatprep.subr.mxu0 0.0
      %6048 = vmatpush1.msra.mxu0 0.0
      %6049 = vmatprep.subr.mxu0 0.0
      %6050 = vmatpush1.msra.mxu0 0.0
      %6051 = vmatprep.subr.mxu0 0.0
      %6052 = vmatpush1.msra.mxu0 0.0
      %6053 = vmatprep.subr.mxu0 0.0
      %6054 = vmatpush1.msra.mxu0 0.0
      %6055 = vmatprep.mubr.f32.mxu0 0.0
      %v6056 = vand.u32 %v347, 4294901760
      %v6057 = vsub.f32 %v347, %v6056
      %6058 = vmatmul.mubr.f32.gmra.mrb[0].mxu0 %v6057
      %v6059 = vpop.f32.mrb[0].mxu0
      %v6060 = vadd.f32 %v5971, %v6059
      %v6061 = vpop.f32.mrb[0].mxu0
      %v6062 = vadd.f32 %v5973, %v6061
      %6063 = vdwg.mxu0
      %v6064 = vand.u32 %v232, 4294901760
      %6065 = vmatprep.subr.mxu0 %v6064
      %v6066 = vand.u32 %v231, 4294901760
      %6067 = vmatpush1.msra.mxu0 %v6066
      %v6068 = vand.u32 %v264, 4294901760
      %6069 = vmatprep.subr.mxu0 %v6068
      %v6070 = vand.u32 %v263, 4294901760
      %6071 = vmatpush1.msra.mxu0 %v6070
      %v6072 = vand.u32 %v296, 4294901760
      %6073 = vmatprep.subr.mxu0 %v6072
      %v6074 = vand.u32 %v295, 4294901760
      %6075 = vmatpush1.msra.mxu0 %v6074
      %v6076 = vand.u32 %v328, 4294901760
      %6077 = vmatprep.subr.mxu0 %v6076
      %v6078 = vand.u32 %v327, 4294901760
      %6079 = vmatpush1.msra.mxu0 %v6078
      %6080 = vmatprep.subr.mxu0 0.0
      %6081 = vmatpush1.msra.mxu0 0.0
      %6082 = vmatprep.subr.mxu0 0.0
      %6083 = vmatpush1.msra.mxu0 0.0
      %6084 = vmatprep.subr.mxu0 0.0
      %6085 = vmatpush1.msra.mxu0 0.0
      %6086 = vmatprep.subr.mxu0 0.0
      %6087 = vmatpush1.msra.mxu0 0.0
      %6088 = vmatprep.subr.mxu0 0.0
      %6089 = vmatpush1.msra.mxu0 0.0
      %6090 = vmatprep.subr.mxu0 0.0
      %6091 = vmatpush1.msra.mxu0 0.0
      %6092 = vmatprep.subr.mxu0 0.0
      %6093 = vmatpush1.msra.mxu0 0.0
      %6094 = vmatprep.subr.mxu0 0.0
      %6095 = vmatpush1.msra.mxu0 0.0
      %6096 = vmatprep.subr.mxu0 0.0
      %6097 = vmatpush1.msra.mxu0 0.0
      %6098 = vmatprep.subr.mxu0 0.0
      %6099 = vmatpush1.msra.mxu0 0.0
      %6100 = vmatprep.subr.mxu0 0.0
      %6101 = vmatpush1.msra.mxu0 0.0
      %6102 = vmatprep.subr.mxu0 0.0
      %6103 = vmatpush1.msra.mxu0 0.0
      %6104 = vmatprep.subr.mxu0 0.0
      %6105 = vmatpush1.msra.mxu0 0.0
      %6106 = vmatprep.subr.mxu0 0.0
      %6107 = vmatpush1.msra.mxu0 0.0
      %6108 = vmatprep.subr.mxu0 0.0
      %6109 = vmatpush1.msra.mxu0 0.0
      %6110 = vmatprep.subr.mxu0 0.0
      %6111 = vmatpush1.msra.mxu0 0.0
      %6112 = vmatprep.subr.mxu0 0.0
      %6113 = vmatpush1.msra.mxu0 0.0
      %6114 = vmatprep.subr.mxu0 0.0
      %6115 = vmatpush1.msra.mxu0 0.0
      %6116 = vmatprep.subr.mxu0 0.0
      %6117 = vmatpush1.msra.mxu0 0.0
      %6118 = vmatprep.subr.mxu0 0.0
      %6119 = vmatpush1.msra.mxu0 0.0
      %6120 = vmatprep.subr.mxu0 0.0
      %6121 = vmatpush1.msra.mxu0 0.0
      %6122 = vmatprep.subr.mxu0 0.0
      %6123 = vmatpush1.msra.mxu0 0.0
      %6124 = vmatprep.subr.mxu0 0.0
      %6125 = vmatpush1.msra.mxu0 0.0
      %6126 = vmatprep.subr.mxu0 0.0
      %6127 = vmatpush1.msra.mxu0 0.0
      %6128 = vmatprep.subr.mxu0 0.0
      %6129 = vmatpush1.msra.mxu0 0.0
      %6130 = vmatprep.subr.mxu0 0.0
      %6131 = vmatpush1.msra.mxu0 0.0
      %6132 = vmatprep.subr.mxu0 0.0
      %6133 = vmatpush1.msra.mxu0 0.0
      %6134 = vmatprep.subr.mxu0 0.0
      %6135 = vmatpush1.msra.mxu0 0.0
      %6136 = vmatprep.mubr.f32.mxu0 0.0
      %v6137 = vand.u32 %v347, 4294901760
      %v6138 = vsub.f32 %v347, %v6137
      %v6139 = vand.u32 %v6138, 4294901760
      %6140 = vmatmul.mubr.f32.gmra.mrb[0].mxu0 %v6139
      %v6141 = vpop.f32.mrb[0].mxu0
      %v6142 = vadd.f32 %v6060, %v6141
      %v6143 = vpop.f32.mrb[0].mxu0
      %v6144 = vadd.f32 %v6062, %v6143
      %6145 = vdwg.mxu0
      %v6146 = vand.u32 %v232, 4294901760
      %v6147 = vsub.f32 %v232, %v6146
      %v6148 = vand.u32 %v6147, 4294901760
      %6149 = vmatprep.subr.mxu0 %v6148
      %v6150 = vand.u32 %v231, 4294901760
      %v6151 = vsub.f32 %v231, %v6150
      %v6152 = vand.u32 %v6151, 4294901760
      %6153 = vmatpush1.msra.mxu0 %v6152
      %v6154 = vand.u32 %v264, 4294901760
      %v6155 = vsub.f32 %v264, %v6154
      %v6156 = vand.u32 %v6155, 4294901760
      %6157 = vmatprep.subr.mxu0 %v6156
      %v6158 = vand.u32 %v263, 4294901760
      %v6159 = vsub.f32 %v263, %v6158
      %v6160 = vand.u32 %v6159, 4294901760
      %6161 = vmatpush1.msra.mxu0 %v6160
      %v6162 = vand.u32 %v296, 4294901760
      %v6163 = vsub.f32 %v296, %v6162
      %v6164 = vand.u32 %v6163, 4294901760
      %6165 = vmatprep.subr.mxu0 %v6164
      %v6166 = vand.u32 %v295, 4294901760
      %v6167 = vsub.f32 %v295, %v6166
      %v6168 = vand.u32 %v6167, 4294901760
      %6169 = vmatpush1.msra.mxu0 %v6168
      %v6170 = vand.u32 %v328, 4294901760
      %v6171 = vsub.f32 %v328, %v6170
      %v6172 = vand.u32 %v6171, 4294901760
      %6173 = vmatprep.subr.mxu0 %v6172
      %v6174 = vand.u32 %v327, 4294901760
      %v6175 = vsub.f32 %v327, %v6174
      %v6176 = vand.u32 %v6175, 4294901760
      %6177 = vmatpush1.msra.mxu0 %v6176
      %6178 = vmatprep.subr.mxu0 0.0
      %6179 = vmatpush1.msra.mxu0 0.0
      %6180 = vmatprep.subr.mxu0 0.0
      %6181 = vmatpush1.msra.mxu0 0.0
      %6182 = vmatprep.subr.mxu0 0.0
      %6183 = vmatpush1.msra.mxu0 0.0
      %6184 = vmatprep.subr.mxu0 0.0
      %6185 = vmatpush1.msra.mxu0 0.0
      %6186 = vmatprep.subr.mxu0 0.0
      %6187 = vmatpush1.msra.mxu0 0.0
      %6188 = vmatprep.subr.mxu0 0.0
      %6189 = vmatpush1.msra.mxu0 0.0
      %6190 = vmatprep.subr.mxu0 0.0
      %6191 = vmatpush1.msra.mxu0 0.0
      %6192 = vmatprep.subr.mxu0 0.0
      %6193 = vmatpush1.msra.mxu0 0.0
      %6194 = vmatprep.subr.mxu0 0.0
      %6195 = vmatpush1.msra.mxu0 0.0
      %6196 = vmatprep.subr.mxu0 0.0
      %6197 = vmatpush1.msra.mxu0 0.0
      %6198 = vmatprep.subr.mxu0 0.0
      %6199 = vmatpush1.msra.mxu0 0.0
      %6200 = vmatprep.subr.mxu0 0.0
      %6201 = vmatpush1.msra.mxu0 0.0
      %6202 = vmatprep.subr.mxu0 0.0
      %6203 = vmatpush1.msra.mxu0 0.0
      %6204 = vmatprep.subr.mxu0 0.0
      %6205 = vmatpush1.msra.mxu0 0.0
      %6206 = vmatprep.subr.mxu0 0.0
      %6207 = vmatpush1.msra.mxu0 0.0
      %6208 = vmatprep.subr.mxu0 0.0
      %6209 = vmatpush1.msra.mxu0 0.0
      %6210 = vmatprep.subr.mxu0 0.0
      %6211 = vmatpush1.msra.mxu0 0.0
      %6212 = vmatprep.subr.mxu0 0.0
      %6213 = vmatpush1.msra.mxu0 0.0
      %6214 = vmatprep.subr.mxu0 0.0
      %6215 = vmatpush1.msra.mxu0 0.0
      %6216 = vmatprep.subr.mxu0 0.0
      %6217 = vmatpush1.msra.mxu0 0.0
      %6218 = vmatprep.subr.mxu0 0.0
      %6219 = vmatpush1.msra.mxu0 0.0
      %6220 = vmatprep.subr.mxu0 0.0
      %6221 = vmatpush1.msra.mxu0 0.0
      %6222 = vmatprep.subr.mxu0 0.0
      %6223 = vmatpush1.msra.mxu0 0.0
      %6224 = vmatprep.subr.mxu0 0.0
      %6225 = vmatpush1.msra.mxu0 0.0
      %6226 = vmatprep.subr.mxu0 0.0
      %6227 = vmatpush1.msra.mxu0 0.0
      %6228 = vmatprep.subr.mxu0 0.0
      %6229 = vmatpush1.msra.mxu0 0.0
      %6230 = vmatprep.subr.mxu0 0.0
      %6231 = vmatpush1.msra.mxu0 0.0
      %6232 = vmatprep.subr.mxu0 0.0
      %6233 = vmatpush1.msra.mxu0 0.0
      %6234 = vmatprep.mubr.f32.mxu0 0.0
      %v6235 = vand.u32 %v347, 4294901760
      %6236 = vmatmul.mubr.f32.gmra.mrb[0].mxu0 %v6235
      %v6237 = vpop.f32.mrb[0].mxu0
      %v6238 = vadd.f32 %v6142, %v6237
      %v6239 = vpop.f32.mrb[0].mxu0
      %v6240 = vadd.f32 %v6144, %v6239
      %6241 = vdwg.mxu0
      %v6242 = vand.u32 %v232, 4294901760
      %6243 = vmatprep.subr.mxu0 %v6242
      %v6244 = vand.u32 %v231, 4294901760
      %6245 = vmatpush1.msra.mxu0 %v6244
      %v6246 = vand.u32 %v264, 4294901760
      %6247 = vmatprep.subr.mxu0 %v6246
      %v6248 = vand.u32 %v263, 4294901760
      %6249 = vmatpush1.msra.mxu0 %v6248
      %v6250 = vand.u32 %v296, 4294901760
      %6251 = vmatprep.subr.mxu0 %v6250
      %v6252 = vand.u32 %v295, 4294901760
      %6253 = vmatpush1.msra.mxu0 %v6252
      %v6254 = vand.u32 %v328, 4294901760
      %6255 = vmatprep.subr.mxu0 %v6254
      %v6256 = vand.u32 %v327, 4294901760
      %6257 = vmatpush1.msra.mxu0 %v6256
      %6258 = vmatprep.subr.mxu0 0.0
      %6259 = vmatpush1.msra.mxu0 0.0
      %6260 = vmatprep.subr.mxu0 0.0
      %6261 = vmatpush1.msra.mxu0 0.0
      %6262 = vmatprep.subr.mxu0 0.0
      %6263 = vmatpush1.msra.mxu0 0.0
      %6264 = vmatprep.subr.mxu0 0.0
      %6265 = vmatpush1.msra.mxu0 0.0
      %6266 = vmatprep.subr.mxu0 0.0
      %6267 = vmatpush1.msra.mxu0 0.0
      %6268 = vmatprep.subr.mxu0 0.0
      %6269 = vmatpush1.msra.mxu0 0.0
      %6270 = vmatprep.subr.mxu0 0.0
      %6271 = vmatpush1.msra.mxu0 0.0
      %6272 = vmatprep.subr.mxu0 0.0
      %6273 = vmatpush1.msra.mxu0 0.0
      %6274 = vmatprep.subr.mxu0 0.0
      %6275 = vmatpush1.msra.mxu0 0.0
      %6276 = vmatprep.subr.mxu0 0.0
      %6277 = vmatpush1.msra.mxu0 0.0
      %6278 = vmatprep.subr.mxu0 0.0
      %6279 = vmatpush1.msra.mxu0 0.0
      %6280 = vmatprep.subr.mxu0 0.0
      %6281 = vmatpush1.msra.mxu0 0.0
      %6282 = vmatprep.subr.mxu0 0.0
      %6283 = vmatpush1.msra.mxu0 0.0
      %6284 = vmatprep.subr.mxu0 0.0
      %6285 = vmatpush1.msra.mxu0 0.0
      %6286 = vmatprep.subr.mxu0 0.0
      %6287 = vmatpush1.msra.mxu0 0.0
      %6288 = vmatprep.subr.mxu0 0.0
      %6289 = vmatpush1.msra.mxu0 0.0
      %6290 = vmatprep.subr.mxu0 0.0
      %6291 = vmatpush1.msra.mxu0 0.0
      %6292 = vmatprep.subr.mxu0 0.0
      %6293 = vmatpush1.msra.mxu0 0.0
      %6294 = vmatprep.subr.mxu0 0.0
      %6295 = vmatpush1.msra.mxu0 0.0
      %6296 = vmatprep.subr.mxu0 0.0
      %6297 = vmatpush1.msra.mxu0 0.0
      %6298 = vmatprep.subr.mxu0 0.0
      %6299 = vmatpush1.msra.mxu0 0.0
      %6300 = vmatprep.subr.mxu0 0.0
      %6301 = vmatpush1.msra.mxu0 0.0
      %6302 = vmatprep.subr.mxu0 0.0
      %6303 = vmatpush1.msra.mxu0 0.0
      %6304 = vmatprep.subr.mxu0 0.0
      %6305 = vmatpush1.msra.mxu0 0.0
      %6306 = vmatprep.subr.mxu0 0.0
      %6307 = vmatpush1.msra.mxu0 0.0
      %6308 = vmatprep.subr.mxu0 0.0
      %6309 = vmatpush1.msra.mxu0 0.0
      %6310 = vmatprep.subr.mxu0 0.0
      %6311 = vmatpush1.msra.mxu0 0.0
      %6312 = vmatprep.subr.mxu0 0.0
      %6313 = vmatpush1.msra.mxu0 0.0
      %6314 = vmatprep.mubr.f32.mxu0 0.0
      %v6315 = vand.u32 %v347, 4294901760
      %6316 = vmatmul.mubr.f32.gmra.mrb[0].mxu0 %v6315
      %v6317 = vpop.f32.mrb[0].mxu0
      %v6318 = vadd.f32 %v6238, %v6317
      %v6319 = vpop.f32.mrb[0].mxu0
      %v6320 = vadd.f32 %v6240, %v6319
      %6321 = vdwg.mxu0
      %v6322 = vand.u32 %v234, 4294901760
      %6323 = vmatprep.subr.mxu0 %v6322
      %v6324 = vand.u32 %v233, 4294901760
      %6325 = vmatpush1.msra.mxu0 %v6324
      %v6326 = vand.u32 %v266, 4294901760
      %6327 = vmatprep.subr.mxu0 %v6326
      %v6328 = vand.u32 %v265, 4294901760
      %6329 = vmatpush1.msra.mxu0 %v6328
      %v6330 = vand.u32 %v298, 4294901760
      %6331 = vmatprep.subr.mxu0 %v6330
      %v6332 = vand.u32 %v297, 4294901760
      %6333 = vmatpush1.msra.mxu0 %v6332
      %v6334 = vand.u32 %v330, 4294901760
      %6335 = vmatprep.subr.mxu0 %v6334
      %v6336 = vand.u32 %v329, 4294901760
      %6337 = vmatpush1.msra.mxu0 %v6336
      %6338 = vmatprep.subr.mxu0 0.0
      %6339 = vmatpush1.msra.mxu0 0.0
      %6340 = vmatprep.subr.mxu0 0.0
      %6341 = vmatpush1.msra.mxu0 0.0
      %6342 = vmatprep.subr.mxu0 0.0
      %6343 = vmatpush1.msra.mxu0 0.0
      %6344 = vmatprep.subr.mxu0 0.0
      %6345 = vmatpush1.msra.mxu0 0.0
      %6346 = vmatprep.subr.mxu0 0.0
      %6347 = vmatpush1.msra.mxu0 0.0
      %6348 = vmatprep.subr.mxu0 0.0
      %6349 = vmatpush1.msra.mxu0 0.0
      %6350 = vmatprep.subr.mxu0 0.0
      %6351 = vmatpush1.msra.mxu0 0.0
      %6352 = vmatprep.subr.mxu0 0.0
      %6353 = vmatpush1.msra.mxu0 0.0
      %6354 = vmatprep.subr.mxu0 0.0
      %6355 = vmatpush1.msra.mxu0 0.0
      %6356 = vmatprep.subr.mxu0 0.0
      %6357 = vmatpush1.msra.mxu0 0.0
      %6358 = vmatprep.subr.mxu0 0.0
      %6359 = vmatpush1.msra.mxu0 0.0
      %6360 = vmatprep.subr.mxu0 0.0
      %6361 = vmatpush1.msra.mxu0 0.0
      %6362 = vmatprep.subr.mxu0 0.0
      %6363 = vmatpush1.msra.mxu0 0.0
      %6364 = vmatprep.subr.mxu0 0.0
      %6365 = vmatpush1.msra.mxu0 0.0
      %6366 = vmatprep.subr.mxu0 0.0
      %6367 = vmatpush1.msra.mxu0 0.0
      %6368 = vmatprep.subr.mxu0 0.0
      %6369 = vmatpush1.msra.mxu0 0.0
      %6370 = vmatprep.subr.mxu0 0.0
      %6371 = vmatpush1.msra.mxu0 0.0
      %6372 = vmatprep.subr.mxu0 0.0
      %6373 = vmatpush1.msra.mxu0 0.0
      %6374 = vmatprep.subr.mxu0 0.0
      %6375 = vmatpush1.msra.mxu0 0.0
      %6376 = vmatprep.subr.mxu0 0.0
      %6377 = vmatpush1.msra.mxu0 0.0
      %6378 = vmatprep.subr.mxu0 0.0
      %6379 = vmatpush1.msra.mxu0 0.0
      %6380 = vmatprep.subr.mxu0 0.0
      %6381 = vmatpush1.msra.mxu0 0.0
      %6382 = vmatprep.subr.mxu0 0.0
      %6383 = vmatpush1.msra.mxu0 0.0
      %6384 = vmatprep.subr.mxu0 0.0
      %6385 = vmatpush1.msra.mxu0 0.0
      %6386 = vmatprep.subr.mxu0 0.0
      %6387 = vmatpush1.msra.mxu0 0.0
      %6388 = vmatprep.subr.mxu0 0.0
      %6389 = vmatpush1.msra.mxu0 0.0
      %6390 = vmatprep.subr.mxu0 0.0
      %6391 = vmatpush1.msra.mxu0 0.0
      %6392 = vmatprep.subr.mxu0 0.0
      %6393 = vmatpush1.msra.mxu0 0.0
      %6394 = vmatprep.mubr.f32.mxu0 0.0
      %v6395 = vand.u32 %v347, 4294901760
      %v6396 = vsub.f32 %v347, %v6395
      %v6397 = vand.u32 %v6396, 4294901760
      %v6398 = vsub.f32 %v6396, %v6397
      %v6399 = vand.u32 %v6398, 4294901760
      %6400 = vmatmul.mubr.f32.gmra.mrb[0].mxu0 %v6399
      %v6401 = vpop.f32.mrb[0].mxu0
      %v6402 = vadd.f32 %v343, %v6401
      %v6403 = vpop.f32.mrb[0].mxu0
      %v6404 = vadd.f32 %v343, %v6403
      %6405 = vdwg.mxu0
      %v6406 = vand.u32 %v234, 4294901760
      %v6407 = vsub.f32 %v234, %v6406
      %v6408 = vand.u32 %v6407, 4294901760
      %v6409 = vsub.f32 %v6407, %v6408
      %v6410 = vand.u32 %v6409, 4294901760
      %6411 = vmatprep.subr.mxu0 %v6410
      %v6412 = vand.u32 %v233, 4294901760
      %v6413 = vsub.f32 %v233, %v6412
      %v6414 = vand.u32 %v6413, 4294901760
      %v6415 = vsub.f32 %v6413, %v6414
      %v6416 = vand.u32 %v6415, 4294901760
      %6417 = vmatpush1.msra.mxu0 %v6416
      %v6418 = vand.u32 %v266, 4294901760
      %v6419 = vsub.f32 %v266, %v6418
      %v6420 = vand.u32 %v6419, 4294901760
      %v6421 = vsub.f32 %v6419, %v6420
      %v6422 = vand.u32 %v6421, 4294901760
      %6423 = vmatprep.subr.mxu0 %v6422
      %v6424 = vand.u32 %v265, 4294901760
      %v6425 = vsub.f32 %v265, %v6424
      %v6426 = vand.u32 %v6425, 4294901760
      %v6427 = vsub.f32 %v6425, %v6426
      %v6428 = vand.u32 %v6427, 4294901760
      %6429 = vmatpush1.msra.mxu0 %v6428
      %v6430 = vand.u32 %v298, 4294901760
      %v6431 = vsub.f32 %v298, %v6430
      %v6432 = vand.u32 %v6431, 4294901760
      %v6433 = vsub.f32 %v6431, %v6432
      %v6434 = vand.u32 %v6433, 4294901760
      %6435 = vmatprep.subr.mxu0 %v6434
      %v6436 = vand.u32 %v297, 4294901760
      %v6437 = vsub.f32 %v297, %v6436
      %v6438 = vand.u32 %v6437, 4294901760
      %v6439 = vsub.f32 %v6437, %v6438
      %v6440 = vand.u32 %v6439, 4294901760
      %6441 = vmatpush1.msra.mxu0 %v6440
      %v6442 = vand.u32 %v330, 4294901760
      %v6443 = vsub.f32 %v330, %v6442
      %v6444 = vand.u32 %v6443, 4294901760
      %v6445 = vsub.f32 %v6443, %v6444
      %v6446 = vand.u32 %v6445, 4294901760
      %6447 = vmatprep.subr.mxu0 %v6446
      %v6448 = vand.u32 %v329, 4294901760
      %v6449 = vsub.f32 %v329, %v6448
      %v6450 = vand.u32 %v6449, 4294901760
      %v6451 = vsub.f32 %v6449, %v6450
      %v6452 = vand.u32 %v6451, 4294901760
      %6453 = vmatpush1.msra.mxu0 %v6452
      %6454 = vmatprep.subr.mxu0 0.0
      %6455 = vmatpush1.msra.mxu0 0.0
      %6456 = vmatprep.subr.mxu0 0.0
      %6457 = vmatpush1.msra.mxu0 0.0
      %6458 = vmatprep.subr.mxu0 0.0
      %6459 = vmatpush1.msra.mxu0 0.0
      %6460 = vmatprep.subr.mxu0 0.0
      %6461 = vmatpush1.msra.mxu0 0.0
      %6462 = vmatprep.subr.mxu0 0.0
      %6463 = vmatpush1.msra.mxu0 0.0
      %6464 = vmatprep.subr.mxu0 0.0
      %6465 = vmatpush1.msra.mxu0 0.0
      %6466 = vmatprep.subr.mxu0 0.0
      %6467 = vmatpush1.msra.mxu0 0.0
      %6468 = vmatprep.subr.mxu0 0.0
      %6469 = vmatpush1.msra.mxu0 0.0
      %6470 = vmatprep.subr.mxu0 0.0
      %6471 = vmatpush1.msra.mxu0 0.0
      %6472 = vmatprep.subr.mxu0 0.0
      %6473 = vmatpush1.msra.mxu0 0.0
      %6474 = vmatprep.subr.mxu0 0.0
      %6475 = vmatpush1.msra.mxu0 0.0
      %6476 = vmatprep.subr.mxu0 0.0
      %6477 = vmatpush1.msra.mxu0 0.0
      %6478 = vmatprep.subr.mxu0 0.0
      %6479 = vmatpush1.msra.mxu0 0.0
      %6480 = vmatprep.subr.mxu0 0.0
      %6481 = vmatpush1.msra.mxu0 0.0
      %6482 = vmatprep.subr.mxu0 0.0
      %6483 = vmatpush1.msra.mxu0 0.0
      %6484 = vmatprep.subr.mxu0 0.0
      %6485 = vmatpush1.msra.mxu0 0.0
      %6486 = vmatprep.subr.mxu0 0.0
      %6487 = vmatpush1.msra.mxu0 0.0
      %6488 = vmatprep.subr.mxu0 0.0
      %6489 = vmatpush1.msra.mxu0 0.0
      %6490 = vmatprep.subr.mxu0 0.0
      %6491 = vmatpush1.msra.mxu0 0.0
      %6492 = vmatprep.subr.mxu0 0.0
      %6493 = vmatpush1.msra.mxu0 0.0
      %6494 = vmatprep.subr.mxu0 0.0
      %6495 = vmatpush1.msra.mxu0 0.0
      %6496 = vmatprep.subr.mxu0 0.0
      %6497 = vmatpush1.msra.mxu0 0.0
      %6498 = vmatprep.subr.mxu0 0.0
      %6499 = vmatpush1.msra.mxu0 0.0
      %6500 = vmatprep.subr.mxu0 0.0
      %6501 = vmatpush1.msra.mxu0 0.0
      %6502 = vmatprep.subr.mxu0 0.0
      %6503 = vmatpush1.msra.mxu0 0.0
      %6504 = vmatprep.subr.mxu0 0.0
      %6505 = vmatpush1.msra.mxu0 0.0
      %6506 = vmatprep.subr.mxu0 0.0
      %6507 = vmatpush1.msra.mxu0 0.0
      %6508 = vmatprep.subr.mxu0 0.0
      %6509 = vmatpush1.msra.mxu0 0.0
      %6510 = vmatprep.mubr.f32.mxu0 0.0
      %v6511 = vand.u32 %v347, 4294901760
      %6512 = vmatmul.mubr.f32.gmra.mrb[0].mxu0 %v6511
      %v6513 = vpop.f32.mrb[0].mxu0
      %v6514 = vadd.f32 %v6402, %v6513
      %v6515 = vpop.f32.mrb[0].mxu0
      %v6516 = vadd.f32 %v6404, %v6515
      %6517 = vdwg.mxu0
      %v6518 = vand.u32 %v234, 4294901760
      %v6519 = vsub.f32 %v234, %v6518
      %6520 = vmatprep.subr.mxu0 %v6519
      %v6521 = vand.u32 %v233, 4294901760
      %v6522 = vsub.f32 %v233, %v6521
      %6523 = vmatpush1.msra.mxu0 %v6522
      %v6524 = vand.u32 %v266, 4294901760
      %v6525 = vsub.f32 %v266, %v6524
      %6526 = vmatprep.subr.mxu0 %v6525
      %v6527 = vand.u32 %v265, 4294901760
      %v6528 = vsub.f32 %v265, %v6527
      %6529 = vmatpush1.msra.mxu0 %v6528
      %v6530 = vand.u32 %v298, 4294901760
      %v6531 = vsub.f32 %v298, %v6530
      %6532 = vmatprep.subr.mxu0 %v6531
      %v6533 = vand.u32 %v297, 4294901760
      %v6534 = vsub.f32 %v297, %v6533
      %6535 = vmatpush1.msra.mxu0 %v6534
      %v6536 = vand.u32 %v330, 4294901760
      %v6537 = vsub.f32 %v330, %v6536
      %6538 = vmatprep.subr.mxu0 %v6537
      %v6539 = vand.u32 %v329, 4294901760
      %v6540 = vsub.f32 %v329, %v6539
      %6541 = vmatpush1.msra.mxu0 %v6540
      %6542 = vmatprep.subr.mxu0 0.0
      %6543 = vmatpush1.msra.mxu0 0.0
      %6544 = vmatprep.subr.mxu0 0.0
      %6545 = vmatpush1.msra.mxu0 0.0
      %6546 = vmatprep.subr.mxu0 0.0
      %6547 = vmatpush1.msra.mxu0 0.0
      %6548 = vmatprep.subr.mxu0 0.0
      %6549 = vmatpush1.msra.mxu0 0.0
      %6550 = vmatprep.subr.mxu0 0.0
      %6551 = vmatpush1.msra.mxu0 0.0
      %6552 = vmatprep.subr.mxu0 0.0
      %6553 = vmatpush1.msra.mxu0 0.0
      %6554 = vmatprep.subr.mxu0 0.0
      %6555 = vmatpush1.msra.mxu0 0.0
      %6556 = vmatprep.subr.mxu0 0.0
      %6557 = vmatpush1.msra.mxu0 0.0
      %6558 = vmatprep.subr.mxu0 0.0
      %6559 = vmatpush1.msra.mxu0 0.0
      %6560 = vmatprep.subr.mxu0 0.0
      %6561 = vmatpush1.msra.mxu0 0.0
      %6562 = vmatprep.subr.mxu0 0.0
      %6563 = vmatpush1.msra.mxu0 0.0
      %6564 = vmatprep.subr.mxu0 0.0
      %6565 = vmatpush1.msra.mxu0 0.0
      %6566 = vmatprep.subr.mxu0 0.0
      %6567 = vmatpush1.msra.mxu0 0.0
      %6568 = vmatprep.subr.mxu0 0.0
      %6569 = vmatpush1.msra.mxu0 0.0
      %6570 = vmatprep.subr.mxu0 0.0
      %6571 = vmatpush1.msra.mxu0 0.0
      %6572 = vmatprep.subr.mxu0 0.0
      %6573 = vmatpush1.msra.mxu0 0.0
      %6574 = vmatprep.subr.mxu0 0.0
      %6575 = vmatpush1.msra.mxu0 0.0
      %6576 = vmatprep.subr.mxu0 0.0
      %6577 = vmatpush1.msra.mxu0 0.0
      %6578 = vmatprep.subr.mxu0 0.0
      %6579 = vmatpush1.msra.mxu0 0.0
      %6580 = vmatprep.subr.mxu0 0.0
      %6581 = vmatpush1.msra.mxu0 0.0
      %6582 = vmatprep.subr.mxu0 0.0
      %6583 = vmatpush1.msra.mxu0 0.0
      %6584 = vmatprep.subr.mxu0 0.0
      %6585 = vmatpush1.msra.mxu0 0.0
      %6586 = vmatprep.subr.mxu0 0.0
      %6587 = vmatpush1.msra.mxu0 0.0
      %6588 = vmatprep.subr.mxu0 0.0
      %6589 = vmatpush1.msra.mxu0 0.0
      %6590 = vmatprep.subr.mxu0 0.0
      %6591 = vmatpush1.msra.mxu0 0.0
      %6592 = vmatprep.subr.mxu0 0.0
      %6593 = vmatpush1.msra.mxu0 0.0
      %6594 = vmatprep.subr.mxu0 0.0
      %6595 = vmatpush1.msra.mxu0 0.0
      %6596 = vmatprep.subr.mxu0 0.0
      %6597 = vmatpush1.msra.mxu0 0.0
      %6598 = vmatprep.mubr.f32.mxu0 0.0
      %v6599 = vand.u32 %v347, 4294901760
      %v6600 = vsub.f32 %v347, %v6599
      %6601 = vmatmul.mubr.f32.gmra.mrb[0].mxu0 %v6600
      %v6602 = vpop.f32.mrb[0].mxu0
      %v6603 = vadd.f32 %v6514, %v6602
      %v6604 = vpop.f32.mrb[0].mxu0
      %v6605 = vadd.f32 %v6516, %v6604
      %6606 = vdwg.mxu0
      %v6607 = vand.u32 %v234, 4294901760
      %6608 = vmatprep.subr.mxu0 %v6607
      %v6609 = vand.u32 %v233, 4294901760
      %6610 = vmatpush1.msra.mxu0 %v6609
      %v6611 = vand.u32 %v266, 4294901760
      %6612 = vmatprep.subr.mxu0 %v6611
      %v6613 = vand.u32 %v265, 4294901760
      %6614 = vmatpush1.msra.mxu0 %v6613
      %v6615 = vand.u32 %v298, 4294901760
      %6616 = vmatprep.subr.mxu0 %v6615
      %v6617 = vand.u32 %v297, 4294901760
      %6618 = vmatpush1.msra.mxu0 %v6617
      %v6619 = vand.u32 %v330, 4294901760
      %6620 = vmatprep.subr.mxu0 %v6619
      %v6621 = vand.u32 %v329, 4294901760
      %6622 = vmatpush1.msra.mxu0 %v6621
      %6623 = vmatprep.subr.mxu0 0.0
      %6624 = vmatpush1.msra.mxu0 0.0
      %6625 = vmatprep.subr.mxu0 0.0
      %6626 = vmatpush1.msra.mxu0 0.0
      %6627 = vmatprep.subr.mxu0 0.0
      %6628 = vmatpush1.msra.mxu0 0.0
      %6629 = vmatprep.subr.mxu0 0.0
      %6630 = vmatpush1.msra.mxu0 0.0
      %6631 = vmatprep.subr.mxu0 0.0
      %6632 = vmatpush1.msra.mxu0 0.0
      %6633 = vmatprep.subr.mxu0 0.0
      %6634 = vmatpush1.msra.mxu0 0.0
      %6635 = vmatprep.subr.mxu0 0.0
      %6636 = vmatpush1.msra.mxu0 0.0
      %6637 = vmatprep.subr.mxu0 0.0
      %6638 = vmatpush1.msra.mxu0 0.0
      %6639 = vmatprep.subr.mxu0 0.0
      %6640 = vmatpush1.msra.mxu0 0.0
      %6641 = vmatprep.subr.mxu0 0.0
      %6642 = vmatpush1.msra.mxu0 0.0
      %6643 = vmatprep.subr.mxu0 0.0
      %6644 = vmatpush1.msra.mxu0 0.0
      %6645 = vmatprep.subr.mxu0 0.0
      %6646 = vmatpush1.msra.mxu0 0.0
      %6647 = vmatprep.subr.mxu0 0.0
      %6648 = vmatpush1.msra.mxu0 0.0
      %6649 = vmatprep.subr.mxu0 0.0
      %6650 = vmatpush1.msra.mxu0 0.0
      %6651 = vmatprep.subr.mxu0 0.0
      %6652 = vmatpush1.msra.mxu0 0.0
      %6653 = vmatprep.subr.mxu0 0.0
      %6654 = vmatpush1.msra.mxu0 0.0
      %6655 = vmatprep.subr.mxu0 0.0
      %6656 = vmatpush1.msra.mxu0 0.0
      %6657 = vmatprep.subr.mxu0 0.0
      %6658 = vmatpush1.msra.mxu0 0.0
      %6659 = vmatprep.subr.mxu0 0.0
      %6660 = vmatpush1.msra.mxu0 0.0
      %6661 = vmatprep.subr.mxu0 0.0
      %6662 = vmatpush1.msra.mxu0 0.0
      %6663 = vmatprep.subr.mxu0 0.0
      %6664 = vmatpush1.msra.mxu0 0.0
      %6665 = vmatprep.subr.mxu0 0.0
      %6666 = vmatpush1.msra.mxu0 0.0
      %6667 = vmatprep.subr.mxu0 0.0
      %6668 = vmatpush1.msra.mxu0 0.0
      %6669 = vmatprep.subr.mxu0 0.0
      %6670 = vmatpush1.msra.mxu0 0.0
      %6671 = vmatprep.subr.mxu0 0.0
      %6672 = vmatpush1.msra.mxu0 0.0
      %6673 = vmatprep.subr.mxu0 0.0
      %6674 = vmatpush1.msra.mxu0 0.0
      %6675 = vmatprep.subr.mxu0 0.0
      %6676 = vmatpush1.msra.mxu0 0.0
      %6677 = vmatprep.subr.mxu0 0.0
      %6678 = vmatpush1.msra.mxu0 0.0
      %6679 = vmatprep.mubr.f32.mxu0 0.0
      %v6680 = vand.u32 %v347, 4294901760
      %v6681 = vsub.f32 %v347, %v6680
      %v6682 = vand.u32 %v6681, 4294901760
      %6683 = vmatmul.mubr.f32.gmra.mrb[0].mxu0 %v6682
      %v6684 = vpop.f32.mrb[0].mxu0
      %v6685 = vadd.f32 %v6603, %v6684
      %v6686 = vpop.f32.mrb[0].mxu0
      %v6687 = vadd.f32 %v6605, %v6686
      %6688 = vdwg.mxu0
      %v6689 = vand.u32 %v234, 4294901760
      %v6690 = vsub.f32 %v234, %v6689
      %v6691 = vand.u32 %v6690, 4294901760
      %6692 = vmatprep.subr.mxu0 %v6691
      %v6693 = vand.u32 %v233, 4294901760
      %v6694 = vsub.f32 %v233, %v6693
      %v6695 = vand.u32 %v6694, 4294901760
      %6696 = vmatpush1.msra.mxu0 %v6695
      %v6697 = vand.u32 %v266, 4294901760
      %v6698 = vsub.f32 %v266, %v6697
      %v6699 = vand.u32 %v6698, 4294901760
      %6700 = vmatprep.subr.mxu0 %v6699
      %v6701 = vand.u32 %v265, 4294901760
      %v6702 = vsub.f32 %v265, %v6701
      %v6703 = vand.u32 %v6702, 4294901760
      %6704 = vmatpush1.msra.mxu0 %v6703
      %v6705 = vand.u32 %v298, 4294901760
      %v6706 = vsub.f32 %v298, %v6705
      %v6707 = vand.u32 %v6706, 4294901760
      %6708 = vmatprep.subr.mxu0 %v6707
      %v6709 = vand.u32 %v297, 4294901760
      %v6710 = vsub.f32 %v297, %v6709
      %v6711 = vand.u32 %v6710, 4294901760
      %6712 = vmatpush1.msra.mxu0 %v6711
      %v6713 = vand.u32 %v330, 4294901760
      %v6714 = vsub.f32 %v330, %v6713
      %v6715 = vand.u32 %v6714, 4294901760
      %6716 = vmatprep.subr.mxu0 %v6715
      %v6717 = vand.u32 %v329, 4294901760
      %v6718 = vsub.f32 %v329, %v6717
      %v6719 = vand.u32 %v6718, 4294901760
      %6720 = vmatpush1.msra.mxu0 %v6719
      %6721 = vmatprep.subr.mxu0 0.0
      %6722 = vmatpush1.msra.mxu0 0.0
      %6723 = vmatprep.subr.mxu0 0.0
      %6724 = vmatpush1.msra.mxu0 0.0
      %6725 = vmatprep.subr.mxu0 0.0
      %6726 = vmatpush1.msra.mxu0 0.0
      %6727 = vmatprep.subr.mxu0 0.0
      %6728 = vmatpush1.msra.mxu0 0.0
      %6729 = vmatprep.subr.mxu0 0.0
      %6730 = vmatpush1.msra.mxu0 0.0
      %6731 = vmatprep.subr.mxu0 0.0
      %6732 = vmatpush1.msra.mxu0 0.0
      %6733 = vmatprep.subr.mxu0 0.0
      %6734 = vmatpush1.msra.mxu0 0.0
      %6735 = vmatprep.subr.mxu0 0.0
      %6736 = vmatpush1.msra.mxu0 0.0
      %6737 = vmatprep.subr.mxu0 0.0
      %6738 = vmatpush1.msra.mxu0 0.0
      %6739 = vmatprep.subr.mxu0 0.0
      %6740 = vmatpush1.msra.mxu0 0.0
      %6741 = vmatprep.subr.mxu0 0.0
      %6742 = vmatpush1.msra.mxu0 0.0
      %6743 = vmatprep.subr.mxu0 0.0
      %6744 = vmatpush1.msra.mxu0 0.0
      %6745 = vmatprep.subr.mxu0 0.0
      %6746 = vmatpush1.msra.mxu0 0.0
      %6747 = vmatprep.subr.mxu0 0.0
      %6748 = vmatpush1.msra.mxu0 0.0
      %6749 = vmatprep.subr.mxu0 0.0
      %6750 = vmatpush1.msra.mxu0 0.0
      %6751 = vmatprep.subr.mxu0 0.0
      %6752 = vmatpush1.msra.mxu0 0.0
      %6753 = vmatprep.subr.mxu0 0.0
      %6754 = vmatpush1.msra.mxu0 0.0
      %6755 = vmatprep.subr.mxu0 0.0
      %6756 = vmatpush1.msra.mxu0 0.0
      %6757 = vmatprep.subr.mxu0 0.0
      %6758 = vmatpush1.msra.mxu0 0.0
      %6759 = vmatprep.subr.mxu0 0.0
      %6760 = vmatpush1.msra.mxu0 0.0
      %6761 = vmatprep.subr.mxu0 0.0
      %6762 = vmatpush1.msra.mxu0 0.0
      %6763 = vmatprep.subr.mxu0 0.0
      %6764 = vmatpush1.msra.mxu0 0.0
      %6765 = vmatprep.subr.mxu0 0.0
      %6766 = vmatpush1.msra.mxu0 0.0
      %6767 = vmatprep.subr.mxu0 0.0
      %6768 = vmatpush1.msra.mxu0 0.0
      %6769 = vmatprep.subr.mxu0 0.0
      %6770 = vmatpush1.msra.mxu0 0.0
      %6771 = vmatprep.subr.mxu0 0.0
      %6772 = vmatpush1.msra.mxu0 0.0
      %6773 = vmatprep.subr.mxu0 0.0
      %6774 = vmatpush1.msra.mxu0 0.0
      %6775 = vmatprep.subr.mxu0 0.0
      %6776 = vmatpush1.msra.mxu0 0.0
      %6777 = vmatprep.mubr.f32.mxu0 0.0
      %v6778 = vand.u32 %v347, 4294901760
      %6779 = vmatmul.mubr.f32.gmra.mrb[0].mxu0 %v6778
      %v6780 = vpop.f32.mrb[0].mxu0
      %v6781 = vadd.f32 %v6685, %v6780
      %v6782 = vpop.f32.mrb[0].mxu0
      %v6783 = vadd.f32 %v6687, %v6782
      %6784 = vdwg.mxu0
      %v6785 = vand.u32 %v234, 4294901760
      %6786 = vmatprep.subr.mxu0 %v6785
      %v6787 = vand.u32 %v233, 4294901760
      %6788 = vmatpush1.msra.mxu0 %v6787
      %v6789 = vand.u32 %v266, 4294901760
      %6790 = vmatprep.subr.mxu0 %v6789
      %v6791 = vand.u32 %v265, 4294901760
      %6792 = vmatpush1.msra.mxu0 %v6791
      %v6793 = vand.u32 %v298, 4294901760
      %6794 = vmatprep.subr.mxu0 %v6793
      %v6795 = vand.u32 %v297, 4294901760
      %6796 = vmatpush1.msra.mxu0 %v6795
      %v6797 = vand.u32 %v330, 4294901760
      %6798 = vmatprep.subr.mxu0 %v6797
      %v6799 = vand.u32 %v329, 4294901760
      %6800 = vmatpush1.msra.mxu0 %v6799
      %6801 = vmatprep.subr.mxu0 0.0
      %6802 = vmatpush1.msra.mxu0 0.0
      %6803 = vmatprep.subr.mxu0 0.0
      %6804 = vmatpush1.msra.mxu0 0.0
      %6805 = vmatprep.subr.mxu0 0.0
      %6806 = vmatpush1.msra.mxu0 0.0
      %6807 = vmatprep.subr.mxu0 0.0
      %6808 = vmatpush1.msra.mxu0 0.0
      %6809 = vmatprep.subr.mxu0 0.0
      %6810 = vmatpush1.msra.mxu0 0.0
      %6811 = vmatprep.subr.mxu0 0.0
      %6812 = vmatpush1.msra.mxu0 0.0
      %6813 = vmatprep.subr.mxu0 0.0
      %6814 = vmatpush1.msra.mxu0 0.0
      %6815 = vmatprep.subr.mxu0 0.0
      %6816 = vmatpush1.msra.mxu0 0.0
      %6817 = vmatprep.subr.mxu0 0.0
      %6818 = vmatpush1.msra.mxu0 0.0
      %6819 = vmatprep.subr.mxu0 0.0
      %6820 = vmatpush1.msra.mxu0 0.0
      %6821 = vmatprep.subr.mxu0 0.0
      %6822 = vmatpush1.msra.mxu0 0.0
      %6823 = vmatprep.subr.mxu0 0.0
      %6824 = vmatpush1.msra.mxu0 0.0
      %6825 = vmatprep.subr.mxu0 0.0
      %6826 = vmatpush1.msra.mxu0 0.0
      %6827 = vmatprep.subr.mxu0 0.0
      %6828 = vmatpush1.msra.mxu0 0.0
      %6829 = vmatprep.subr.mxu0 0.0
      %6830 = vmatpush1.msra.mxu0 0.0
      %6831 = vmatprep.subr.mxu0 0.0
      %6832 = vmatpush1.msra.mxu0 0.0
      %6833 = vmatprep.subr.mxu0 0.0
      %6834 = vmatpush1.msra.mxu0 0.0
      %6835 = vmatprep.subr.mxu0 0.0
      %6836 = vmatpush1.msra.mxu0 0.0
      %6837 = vmatprep.subr.mxu0 0.0
      %6838 = vmatpush1.msra.mxu0 0.0
      %6839 = vmatprep.subr.mxu0 0.0
      %6840 = vmatpush1.msra.mxu0 0.0
      %6841 = vmatprep.subr.mxu0 0.0
      %6842 = vmatpush1.msra.mxu0 0.0
      %6843 = vmatprep.subr.mxu0 0.0
      %6844 = vmatpush1.msra.mxu0 0.0
      %6845 = vmatprep.subr.mxu0 0.0
      %6846 = vmatpush1.msra.mxu0 0.0
      %6847 = vmatprep.subr.mxu0 0.0
      %6848 = vmatpush1.msra.mxu0 0.0
      %6849 = vmatprep.subr.mxu0 0.0
      %6850 = vmatpush1.msra.mxu0 0.0
      %6851 = vmatprep.subr.mxu0 0.0
      %6852 = vmatpush1.msra.mxu0 0.0
      %6853 = vmatprep.subr.mxu0 0.0
      %6854 = vmatpush1.msra.mxu0 0.0
      %6855 = vmatprep.subr.mxu0 0.0
      %6856 = vmatpush1.msra.mxu0 0.0
      %6857 = vmatprep.mubr.f32.mxu0 0.0
      %v6858 = vand.u32 %v347, 4294901760
      %6859 = vmatmul.mubr.f32.gmra.mrb[0].mxu0 %v6858
      %v6860 = vpop.f32.mrb[0].mxu0
      %v6861 = vadd.f32 %v6781, %v6860
      %v6862 = vpop.f32.mrb[0].mxu0
      %v6863 = vadd.f32 %v6783, %v6862
      %6864 = vdwg.mxu0
      %v6865 = vand.u32 %v236, 4294901760
      %6866 = vmatprep.subr.mxu0 %v6865
      %v6867 = vand.u32 %v235, 4294901760
      %6868 = vmatpush1.msra.mxu0 %v6867
      %v6869 = vand.u32 %v268, 4294901760
      %6870 = vmatprep.subr.mxu0 %v6869
      %v6871 = vand.u32 %v267, 4294901760
      %6872 = vmatpush1.msra.mxu0 %v6871
      %v6873 = vand.u32 %v300, 4294901760
      %6874 = vmatprep.subr.mxu0 %v6873
      %v6875 = vand.u32 %v299, 4294901760
      %6876 = vmatpush1.msra.mxu0 %v6875
      %v6877 = vand.u32 %v332, 4294901760
      %6878 = vmatprep.subr.mxu0 %v6877
      %v6879 = vand.u32 %v331, 4294901760
      %6880 = vmatpush1.msra.mxu0 %v6879
      %6881 = vmatprep.subr.mxu0 0.0
      %6882 = vmatpush1.msra.mxu0 0.0
      %6883 = vmatprep.subr.mxu0 0.0
      %6884 = vmatpush1.msra.mxu0 0.0
      %6885 = vmatprep.subr.mxu0 0.0
      %6886 = vmatpush1.msra.mxu0 0.0
      %6887 = vmatprep.subr.mxu0 0.0
      %6888 = vmatpush1.msra.mxu0 0.0
      %6889 = vmatprep.subr.mxu0 0.0
      %6890 = vmatpush1.msra.mxu0 0.0
      %6891 = vmatprep.subr.mxu0 0.0
      %6892 = vmatpush1.msra.mxu0 0.0
      %6893 = vmatprep.subr.mxu0 0.0
      %6894 = vmatpush1.msra.mxu0 0.0
      %6895 = vmatprep.subr.mxu0 0.0
      %6896 = vmatpush1.msra.mxu0 0.0
      %6897 = vmatprep.subr.mxu0 0.0
      %6898 = vmatpush1.msra.mxu0 0.0
      %6899 = vmatprep.subr.mxu0 0.0
      %6900 = vmatpush1.msra.mxu0 0.0
      %6901 = vmatprep.subr.mxu0 0.0
      %6902 = vmatpush1.msra.mxu0 0.0
      %6903 = vmatprep.subr.mxu0 0.0
      %6904 = vmatpush1.msra.mxu0 0.0
      %6905 = vmatprep.subr.mxu0 0.0
      %6906 = vmatpush1.msra.mxu0 0.0
      %6907 = vmatprep.subr.mxu0 0.0
      %6908 = vmatpush1.msra.mxu0 0.0
      %6909 = vmatprep.subr.mxu0 0.0
      %6910 = vmatpush1.msra.mxu0 0.0
      %6911 = vmatprep.subr.mxu0 0.0
      %6912 = vmatpush1.msra.mxu0 0.0
      %6913 = vmatprep.subr.mxu0 0.0
      %6914 = vmatpush1.msra.mxu0 0.0
      %6915 = vmatprep.subr.mxu0 0.0
      %6916 = vmatpush1.msra.mxu0 0.0
      %6917 = vmatprep.subr.mxu0 0.0
      %6918 = vmatpush1.msra.mxu0 0.0
      %6919 = vmatprep.subr.mxu0 0.0
      %6920 = vmatpush1.msra.mxu0 0.0
      %6921 = vmatprep.subr.mxu0 0.0
      %6922 = vmatpush1.msra.mxu0 0.0
      %6923 = vmatprep.subr.mxu0 0.0
      %6924 = vmatpush1.msra.mxu0 0.0
      %6925 = vmatprep.subr.mxu0 0.0
      %6926 = vmatpush1.msra.mxu0 0.0
      %6927 = vmatprep.subr.mxu0 0.0
      %6928 = vmatpush1.msra.mxu0 0.0
      %6929 = vmatprep.subr.mxu0 0.0
      %6930 = vmatpush1.msra.mxu0 0.0
      %6931 = vmatprep.subr.mxu0 0.0
      %6932 = vmatpush1.msra.mxu0 0.0
      %6933 = vmatprep.subr.mxu0 0.0
      %6934 = vmatpush1.msra.mxu0 0.0
      %6935 = vmatprep.subr.mxu0 0.0
      %6936 = vmatpush1.msra.mxu0 0.0
      %6937 = vmatprep.mubr.f32.mxu0 0.0
      %v6938 = vand.u32 %v347, 4294901760
      %v6939 = vsub.f32 %v347, %v6938
      %v6940 = vand.u32 %v6939, 4294901760
      %v6941 = vsub.f32 %v6939, %v6940
      %v6942 = vand.u32 %v6941, 4294901760
      %6943 = vmatmul.mubr.f32.gmra.mrb[0].mxu0 %v6942
      %v6944 = vpop.f32.mrb[0].mxu0
      %v6945 = vadd.f32 %v343, %v6944
      %v6946 = vpop.f32.mrb[0].mxu0
      %v6947 = vadd.f32 %v343, %v6946
      %6948 = vdwg.mxu0
      %v6949 = vand.u32 %v236, 4294901760
      %v6950 = vsub.f32 %v236, %v6949
      %v6951 = vand.u32 %v6950, 4294901760
      %v6952 = vsub.f32 %v6950, %v6951
      %v6953 = vand.u32 %v6952, 4294901760
      %6954 = vmatprep.subr.mxu0 %v6953
      %v6955 = vand.u32 %v235, 4294901760
      %v6956 = vsub.f32 %v235, %v6955
      %v6957 = vand.u32 %v6956, 4294901760
      %v6958 = vsub.f32 %v6956, %v6957
      %v6959 = vand.u32 %v6958, 4294901760
      %6960 = vmatpush1.msra.mxu0 %v6959
      %v6961 = vand.u32 %v268, 4294901760
      %v6962 = vsub.f32 %v268, %v6961
      %v6963 = vand.u32 %v6962, 4294901760
      %v6964 = vsub.f32 %v6962, %v6963
      %v6965 = vand.u32 %v6964, 4294901760
      %6966 = vmatprep.subr.mxu0 %v6965
      %v6967 = vand.u32 %v267, 4294901760
      %v6968 = vsub.f32 %v267, %v6967
      %v6969 = vand.u32 %v6968, 4294901760
      %v6970 = vsub.f32 %v6968, %v6969
      %v6971 = vand.u32 %v6970, 4294901760
      %6972 = vmatpush1.msra.mxu0 %v6971
      %v6973 = vand.u32 %v300, 4294901760
      %v6974 = vsub.f32 %v300, %v6973
      %v6975 = vand.u32 %v6974, 4294901760
      %v6976 = vsub.f32 %v6974, %v6975
      %v6977 = vand.u32 %v6976, 4294901760
      %6978 = vmatprep.subr.mxu0 %v6977
      %v6979 = vand.u32 %v299, 4294901760
      %v6980 = vsub.f32 %v299, %v6979
      %v6981 = vand.u32 %v6980, 4294901760
      %v6982 = vsub.f32 %v6980, %v6981
      %v6983 = vand.u32 %v6982, 4294901760
      %6984 = vmatpush1.msra.mxu0 %v6983
      %v6985 = vand.u32 %v332, 4294901760
      %v6986 = vsub.f32 %v332, %v6985
      %v6987 = vand.u32 %v6986, 4294901760
      %v6988 = vsub.f32 %v6986, %v6987
      %v6989 = vand.u32 %v6988, 4294901760
      %6990 = vmatprep.subr.mxu0 %v6989
      %v6991 = vand.u32 %v331, 4294901760
      %v6992 = vsub.f32 %v331, %v6991
      %v6993 = vand.u32 %v6992, 4294901760
      %v6994 = vsub.f32 %v6992, %v6993
      %v6995 = vand.u32 %v6994, 4294901760
      %6996 = vmatpush1.msra.mxu0 %v6995
      %6997 = vmatprep.subr.mxu0 0.0
      %6998 = vmatpush1.msra.mxu0 0.0
      %6999 = vmatprep.subr.mxu0 0.0
      %7000 = vmatpush1.msra.mxu0 0.0
      %7001 = vmatprep.subr.mxu0 0.0
      %7002 = vmatpush1.msra.mxu0 0.0
      %7003 = vmatprep.subr.mxu0 0.0
      %7004 = vmatpush1.msra.mxu0 0.0
      %7005 = vmatprep.subr.mxu0 0.0
      %7006 = vmatpush1.msra.mxu0 0.0
      %7007 = vmatprep.subr.mxu0 0.0
      %7008 = vmatpush1.msra.mxu0 0.0
      %7009 = vmatprep.subr.mxu0 0.0
      %7010 = vmatpush1.msra.mxu0 0.0
      %7011 = vmatprep.subr.mxu0 0.0
      %7012 = vmatpush1.msra.mxu0 0.0
      %7013 = vmatprep.subr.mxu0 0.0
      %7014 = vmatpush1.msra.mxu0 0.0
      %7015 = vmatprep.subr.mxu0 0.0
      %7016 = vmatpush1.msra.mxu0 0.0
      %7017 = vmatprep.subr.mxu0 0.0
      %7018 = vmatpush1.msra.mxu0 0.0
      %7019 = vmatprep.subr.mxu0 0.0
      %7020 = vmatpush1.msra.mxu0 0.0
      %7021 = vmatprep.subr.mxu0 0.0
      %7022 = vmatpush1.msra.mxu0 0.0
      %7023 = vmatprep.subr.mxu0 0.0
      %7024 = vmatpush1.msra.mxu0 0.0
      %7025 = vmatprep.subr.mxu0 0.0
      %7026 = vmatpush1.msra.mxu0 0.0
      %7027 = vmatprep.subr.mxu0 0.0
      %7028 = vmatpush1.msra.mxu0 0.0
      %7029 = vmatprep.subr.mxu0 0.0
      %7030 = vmatpush1.msra.mxu0 0.0
      %7031 = vmatprep.subr.mxu0 0.0
      %7032 = vmatpush1.msra.mxu0 0.0
      %7033 = vmatprep.subr.mxu0 0.0
      %7034 = vmatpush1.msra.mxu0 0.0
      %7035 = vmatprep.subr.mxu0 0.0
      %7036 = vmatpush1.msra.mxu0 0.0
      %7037 = vmatprep.subr.mxu0 0.0
      %7038 = vmatpush1.msra.mxu0 0.0
      %7039 = vmatprep.subr.mxu0 0.0
      %7040 = vmatpush1.msra.mxu0 0.0
      %7041 = vmatprep.subr.mxu0 0.0
      %7042 = vmatpush1.msra.mxu0 0.0
      %7043 = vmatprep.subr.mxu0 0.0
      %7044 = vmatpush1.msra.mxu0 0.0
      %7045 = vmatprep.subr.mxu0 0.0
      %7046 = vmatpush1.msra.mxu0 0.0
      %7047 = vmatprep.subr.mxu0 0.0
      %7048 = vmatpush1.msra.mxu0 0.0
      %7049 = vmatprep.subr.mxu0 0.0
      %7050 = vmatpush1.msra.mxu0 0.0
      %7051 = vmatprep.subr.mxu0 0.0
      %7052 = vmatpush1.msra.mxu0 0.0
      %7053 = vmatprep.mubr.f32.mxu0 0.0
      %v7054 = vand.u32 %v347, 4294901760
      %7055 = vmatmul.mubr.f32.gmra.mrb[0].mxu0 %v7054
      %v7056 = vpop.f32.mrb[0].mxu0
      %v7057 = vadd.f32 %v6945, %v7056
      %v7058 = vpop.f32.mrb[0].mxu0
      %v7059 = vadd.f32 %v6947, %v7058
      %7060 = vdwg.mxu0
      %v7061 = vand.u32 %v236, 4294901760
      %v7062 = vsub.f32 %v236, %v7061
      %7063 = vmatprep.subr.mxu0 %v7062
      %v7064 = vand.u32 %v235, 4294901760
      %v7065 = vsub.f32 %v235, %v7064
      %7066 = vmatpush1.msra.mxu0 %v7065
      %v7067 = vand.u32 %v268, 4294901760
      %v7068 = vsub.f32 %v268, %v7067
      %7069 = vmatprep.subr.mxu0 %v7068
      %v7070 = vand.u32 %v267, 4294901760
      %v7071 = vsub.f32 %v267, %v7070
      %7072 = vmatpush1.msra.mxu0 %v7071
      %v7073 = vand.u32 %v300, 4294901760
      %v7074 = vsub.f32 %v300, %v7073
      %7075 = vmatprep.subr.mxu0 %v7074
      %v7076 = vand.u32 %v299, 4294901760
      %v7077 = vsub.f32 %v299, %v7076
      %7078 = vmatpush1.msra.mxu0 %v7077
      %v7079 = vand.u32 %v332, 4294901760
      %v7080 = vsub.f32 %v332, %v7079
      %7081 = vmatprep.subr.mxu0 %v7080
      %v7082 = vand.u32 %v331, 4294901760
      %v7083 = vsub.f32 %v331, %v7082
      %7084 = vmatpush1.msra.mxu0 %v7083
      %7085 = vmatprep.subr.mxu0 0.0
      %7086 = vmatpush1.msra.mxu0 0.0
      %7087 = vmatprep.subr.mxu0 0.0
      %7088 = vmatpush1.msra.mxu0 0.0
      %7089 = vmatprep.subr.mxu0 0.0
      %7090 = vmatpush1.msra.mxu0 0.0
      %7091 = vmatprep.subr.mxu0 0.0
      %7092 = vmatpush1.msra.mxu0 0.0
      %7093 = vmatprep.subr.mxu0 0.0
      %7094 = vmatpush1.msra.mxu0 0.0
      %7095 = vmatprep.subr.mxu0 0.0
      %7096 = vmatpush1.msra.mxu0 0.0
      %7097 = vmatprep.subr.mxu0 0.0
      %7098 = vmatpush1.msra.mxu0 0.0
      %7099 = vmatprep.subr.mxu0 0.0
      %7100 = vmatpush1.msra.mxu0 0.0
      %7101 = vmatprep.subr.mxu0 0.0
      %7102 = vmatpush1.msra.mxu0 0.0
      %7103 = vmatprep.subr.mxu0 0.0
      %7104 = vmatpush1.msra.mxu0 0.0
      %7105 = vmatprep.subr.mxu0 0.0
      %7106 = vmatpush1.msra.mxu0 0.0
      %7107 = vmatprep.subr.mxu0 0.0
      %7108 = vmatpush1.msra.mxu0 0.0
      %7109 = vmatprep.subr.mxu0 0.0
      %7110 = vmatpush1.msra.mxu0 0.0
      %7111 = vmatprep.subr.mxu0 0.0
      %7112 = vmatpush1.msra.mxu0 0.0
      %7113 = vmatprep.subr.mxu0 0.0
      %7114 = vmatpush1.msra.mxu0 0.0
      %7115 = vmatprep.subr.mxu0 0.0
      %7116 = vmatpush1.msra.mxu0 0.0
      %7117 = vmatprep.subr.mxu0 0.0
      %7118 = vmatpush1.msra.mxu0 0.0
      %7119 = vmatprep.subr.mxu0 0.0
      %7120 = vmatpush1.msra.mxu0 0.0
      %7121 = vmatprep.subr.mxu0 0.0
      %7122 = vmatpush1.msra.mxu0 0.0
      %7123 = vmatprep.subr.mxu0 0.0
      %7124 = vmatpush1.msra.mxu0 0.0
      %7125 = vmatprep.subr.mxu0 0.0
      %7126 = vmatpush1.msra.mxu0 0.0
      %7127 = vmatprep.subr.mxu0 0.0
      %7128 = vmatpush1.msra.mxu0 0.0
      %7129 = vmatprep.subr.mxu0 0.0
      %7130 = vmatpush1.msra.mxu0 0.0
      %7131 = vmatprep.subr.mxu0 0.0
      %7132 = vmatpush1.msra.mxu0 0.0
      %7133 = vmatprep.subr.mxu0 0.0
      %7134 = vmatpush1.msra.mxu0 0.0
      %7135 = vmatprep.subr.mxu0 0.0
      %7136 = vmatpush1.msra.mxu0 0.0
      %7137 = vmatprep.subr.mxu0 0.0
      %7138 = vmatpush1.msra.mxu0 0.0
      %7139 = vmatprep.subr.mxu0 0.0
      %7140 = vmatpush1.msra.mxu0 0.0
      %7141 = vmatprep.mubr.f32.mxu0 0.0
      %v7142 = vand.u32 %v347, 4294901760
      %v7143 = vsub.f32 %v347, %v7142
      %7144 = vmatmul.mubr.f32.gmra.mrb[0].mxu0 %v7143
      %v7145 = vpop.f32.mrb[0].mxu0
      %v7146 = vadd.f32 %v7057, %v7145
      %v7147 = vpop.f32.mrb[0].mxu0
      %v7148 = vadd.f32 %v7059, %v7147
      %7149 = vdwg.mxu0
      %v7150 = vand.u32 %v236, 4294901760
      %7151 = vmatprep.subr.mxu0 %v7150
      %v7152 = vand.u32 %v235, 4294901760
      %7153 = vmatpush1.msra.mxu0 %v7152
      %v7154 = vand.u32 %v268, 4294901760
      %7155 = vmatprep.subr.mxu0 %v7154
      %v7156 = vand.u32 %v267, 4294901760
      %7157 = vmatpush1.msra.mxu0 %v7156
      %v7158 = vand.u32 %v300, 4294901760
      %7159 = vmatprep.subr.mxu0 %v7158
      %v7160 = vand.u32 %v299, 4294901760
      %7161 = vmatpush1.msra.mxu0 %v7160
      %v7162 = vand.u32 %v332, 4294901760
      %7163 = vmatprep.subr.mxu0 %v7162
      %v7164 = vand.u32 %v331, 4294901760
      %7165 = vmatpush1.msra.mxu0 %v7164
      %7166 = vmatprep.subr.mxu0 0.0
      %7167 = vmatpush1.msra.mxu0 0.0
      %7168 = vmatprep.subr.mxu0 0.0
      %7169 = vmatpush1.msra.mxu0 0.0
      %7170 = vmatprep.subr.mxu0 0.0
      %7171 = vmatpush1.msra.mxu0 0.0
      %7172 = vmatprep.subr.mxu0 0.0
      %7173 = vmatpush1.msra.mxu0 0.0
      %7174 = vmatprep.subr.mxu0 0.0
      %7175 = vmatpush1.msra.mxu0 0.0
      %7176 = vmatprep.subr.mxu0 0.0
      %7177 = vmatpush1.msra.mxu0 0.0
      %7178 = vmatprep.subr.mxu0 0.0
      %7179 = vmatpush1.msra.mxu0 0.0
      %7180 = vmatprep.subr.mxu0 0.0
      %7181 = vmatpush1.msra.mxu0 0.0
      %7182 = vmatprep.subr.mxu0 0.0
      %7183 = vmatpush1.msra.mxu0 0.0
      %7184 = vmatprep.subr.mxu0 0.0
      %7185 = vmatpush1.msra.mxu0 0.0
      %7186 = vmatprep.subr.mxu0 0.0
      %7187 = vmatpush1.msra.mxu0 0.0
      %7188 = vmatprep.subr.mxu0 0.0
      %7189 = vmatpush1.msra.mxu0 0.0
      %7190 = vmatprep.subr.mxu0 0.0
      %7191 = vmatpush1.msra.mxu0 0.0
      %7192 = vmatprep.subr.mxu0 0.0
      %7193 = vmatpush1.msra.mxu0 0.0
      %7194 = vmatprep.subr.mxu0 0.0
      %7195 = vmatpush1.msra.mxu0 0.0
      %7196 = vmatprep.subr.mxu0 0.0
      %7197 = vmatpush1.msra.mxu0 0.0
      %7198 = vmatprep.subr.mxu0 0.0
      %7199 = vmatpush1.msra.mxu0 0.0
      %7200 = vmatprep.subr.mxu0 0.0
      %7201 = vmatpush1.msra.mxu0 0.0
      %7202 = vmatprep.subr.mxu0 0.0
      %7203 = vmatpush1.msra.mxu0 0.0
      %7204 = vmatprep.subr.mxu0 0.0
      %7205 = vmatpush1.msra.mxu0 0.0
      %7206 = vmatprep.subr.mxu0 0.0
      %7207 = vmatpush1.msra.mxu0 0.0
      %7208 = vmatprep.subr.mxu0 0.0
      %7209 = vmatpush1.msra.mxu0 0.0
      %7210 = vmatprep.subr.mxu0 0.0
      %7211 = vmatpush1.msra.mxu0 0.0
      %7212 = vmatprep.subr.mxu0 0.0
      %7213 = vmatpush1.msra.mxu0 0.0
      %7214 = vmatprep.subr.mxu0 0.0
      %7215 = vmatpush1.msra.mxu0 0.0
      %7216 = vmatprep.subr.mxu0 0.0
      %7217 = vmatpush1.msra.mxu0 0.0
      %7218 = vmatprep.subr.mxu0 0.0
      %7219 = vmatpush1.msra.mxu0 0.0
      %7220 = vmatprep.subr.mxu0 0.0
      %7221 = vmatpush1.msra.mxu0 0.0
      %7222 = vmatprep.mubr.f32.mxu0 0.0
      %v7223 = vand.u32 %v347, 4294901760
      %v7224 = vsub.f32 %v347, %v7223
      %v7225 = vand.u32 %v7224, 4294901760
      %7226 = vmatmul.mubr.f32.gmra.mrb[0].mxu0 %v7225
      %v7227 = vpop.f32.mrb[0].mxu0
      %v7228 = vadd.f32 %v7146, %v7227
      %v7229 = vpop.f32.mrb[0].mxu0
      %v7230 = vadd.f32 %v7148, %v7229
      %7231 = vdwg.mxu0
      %v7232 = vand.u32 %v236, 4294901760
      %v7233 = vsub.f32 %v236, %v7232
      %v7234 = vand.u32 %v7233, 4294901760
      %7235 = vmatprep.subr.mxu0 %v7234
      %v7236 = vand.u32 %v235, 4294901760
      %v7237 = vsub.f32 %v235, %v7236
      %v7238 = vand.u32 %v7237, 4294901760
      %7239 = vmatpush1.msra.mxu0 %v7238
      %v7240 = vand.u32 %v268, 4294901760
      %v7241 = vsub.f32 %v268, %v7240
      %v7242 = vand.u32 %v7241, 4294901760
      %7243 = vmatprep.subr.mxu0 %v7242
      %v7244 = vand.u32 %v267, 4294901760
      %v7245 = vsub.f32 %v267, %v7244
      %v7246 = vand.u32 %v7245, 4294901760
      %7247 = vmatpush1.msra.mxu0 %v7246
      %v7248 = vand.u32 %v300, 4294901760
      %v7249 = vsub.f32 %v300, %v7248
      %v7250 = vand.u32 %v7249, 4294901760
      %7251 = vmatprep.subr.mxu0 %v7250
      %v7252 = vand.u32 %v299, 4294901760
      %v7253 = vsub.f32 %v299, %v7252
      %v7254 = vand.u32 %v7253, 4294901760
      %7255 = vmatpush1.msra.mxu0 %v7254
      %v7256 = vand.u32 %v332, 4294901760
      %v7257 = vsub.f32 %v332, %v7256
      %v7258 = vand.u32 %v7257, 4294901760
      %7259 = vmatprep.subr.mxu0 %v7258
      %v7260 = vand.u32 %v331, 4294901760
      %v7261 = vsub.f32 %v331, %v7260
      %v7262 = vand.u32 %v7261, 4294901760
      %7263 = vmatpush1.msra.mxu0 %v7262
      %7264 = vmatprep.subr.mxu0 0.0
      %7265 = vmatpush1.msra.mxu0 0.0
      %7266 = vmatprep.subr.mxu0 0.0
      %7267 = vmatpush1.msra.mxu0 0.0
      %7268 = vmatprep.subr.mxu0 0.0
      %7269 = vmatpush1.msra.mxu0 0.0
      %7270 = vmatprep.subr.mxu0 0.0
      %7271 = vmatpush1.msra.mxu0 0.0
      %7272 = vmatprep.subr.mxu0 0.0
      %7273 = vmatpush1.msra.mxu0 0.0
      %7274 = vmatprep.subr.mxu0 0.0
      %7275 = vmatpush1.msra.mxu0 0.0
      %7276 = vmatprep.subr.mxu0 0.0
      %7277 = vmatpush1.msra.mxu0 0.0
      %7278 = vmatprep.subr.mxu0 0.0
      %7279 = vmatpush1.msra.mxu0 0.0
      %7280 = vmatprep.subr.mxu0 0.0
      %7281 = vmatpush1.msra.mxu0 0.0
      %7282 = vmatprep.subr.mxu0 0.0
      %7283 = vmatpush1.msra.mxu0 0.0
      %7284 = vmatprep.subr.mxu0 0.0
      %7285 = vmatpush1.msra.mxu0 0.0
      %7286 = vmatprep.subr.mxu0 0.0
      %7287 = vmatpush1.msra.mxu0 0.0
      %7288 = vmatprep.subr.mxu0 0.0
      %7289 = vmatpush1.msra.mxu0 0.0
      %7290 = vmatprep.subr.mxu0 0.0
      %7291 = vmatpush1.msra.mxu0 0.0
      %7292 = vmatprep.subr.mxu0 0.0
      %7293 = vmatpush1.msra.mxu0 0.0
      %7294 = vmatprep.subr.mxu0 0.0
      %7295 = vmatpush1.msra.mxu0 0.0
      %7296 = vmatprep.subr.mxu0 0.0
      %7297 = vmatpush1.msra.mxu0 0.0
      %7298 = vmatprep.subr.mxu0 0.0
      %7299 = vmatpush1.msra.mxu0 0.0
      %7300 = vmatprep.subr.mxu0 0.0
      %7301 = vmatpush1.msra.mxu0 0.0
      %7302 = vmatprep.subr.mxu0 0.0
      %7303 = vmatpush1.msra.mxu0 0.0
      %7304 = vmatprep.subr.mxu0 0.0
      %7305 = vmatpush1.msra.mxu0 0.0
      %7306 = vmatprep.subr.mxu0 0.0
      %7307 = vmatpush1.msra.mxu0 0.0
      %7308 = vmatprep.subr.mxu0 0.0
      %7309 = vmatpush1.msra.mxu0 0.0
      %7310 = vmatprep.subr.mxu0 0.0
      %7311 = vmatpush1.msra.mxu0 0.0
      %7312 = vmatprep.subr.mxu0 0.0
      %7313 = vmatpush1.msra.mxu0 0.0
      %7314 = vmatprep.subr.mxu0 0.0
      %7315 = vmatpush1.msra.mxu0 0.0
      %7316 = vmatprep.subr.mxu0 0.0
      %7317 = vmatpush1.msra.mxu0 0.0
      %7318 = vmatprep.subr.mxu0 0.0
      %7319 = vmatpush1.msra.mxu0 0.0
      %7320 = vmatprep.mubr.f32.mxu0 0.0
      %v7321 = vand.u32 %v347, 4294901760
      %7322 = vmatmul.mubr.f32.gmra.mrb[0].mxu0 %v7321
      %v7323 = vpop.f32.mrb[0].mxu0
      %v7324 = vadd.f32 %v7228, %v7323
      %v7325 = vpop.f32.mrb[0].mxu0
      %v7326 = vadd.f32 %v7230, %v7325
      %7327 = vdwg.mxu0
      %v7328 = vand.u32 %v236, 4294901760
      %7329 = vmatprep.subr.mxu0 %v7328
      %v7330 = vand.u32 %v235, 4294901760
      %7331 = vmatpush1.msra.mxu0 %v7330
      %v7332 = vand.u32 %v268, 4294901760
      %7333 = vmatprep.subr.mxu0 %v7332
      %v7334 = vand.u32 %v267, 4294901760
      %7335 = vmatpush1.msra.mxu0 %v7334
      %v7336 = vand.u32 %v300, 4294901760
      %7337 = vmatprep.subr.mxu0 %v7336
      %v7338 = vand.u32 %v299, 4294901760
      %7339 = vmatpush1.msra.mxu0 %v7338
      %v7340 = vand.u32 %v332, 4294901760
      %7341 = vmatprep.subr.mxu0 %v7340
      %v7342 = vand.u32 %v331, 4294901760
      %7343 = vmatpush1.msra.mxu0 %v7342
      %7344 = vmatprep.subr.mxu0 0.0
      %7345 = vmatpush1.msra.mxu0 0.0
      %7346 = vmatprep.subr.mxu0 0.0
      %7347 = vmatpush1.msra.mxu0 0.0
      %7348 = vmatprep.subr.mxu0 0.0
      %7349 = vmatpush1.msra.mxu0 0.0
      %7350 = vmatprep.subr.mxu0 0.0
      %7351 = vmatpush1.msra.mxu0 0.0
      %7352 = vmatprep.subr.mxu0 0.0
      %7353 = vmatpush1.msra.mxu0 0.0
      %7354 = vmatprep.subr.mxu0 0.0
      %7355 = vmatpush1.msra.mxu0 0.0
      %7356 = vmatprep.subr.mxu0 0.0
      %7357 = vmatpush1.msra.mxu0 0.0
      %7358 = vmatprep.subr.mxu0 0.0
      %7359 = vmatpush1.msra.mxu0 0.0
      %7360 = vmatprep.subr.mxu0 0.0
      %7361 = vmatpush1.msra.mxu0 0.0
      %7362 = vmatprep.subr.mxu0 0.0
      %7363 = vmatpush1.msra.mxu0 0.0
      %7364 = vmatprep.subr.mxu0 0.0
      %7365 = vmatpush1.msra.mxu0 0.0
      %7366 = vmatprep.subr.mxu0 0.0
      %7367 = vmatpush1.msra.mxu0 0.0
      %7368 = vmatprep.subr.mxu0 0.0
      %7369 = vmatpush1.msra.mxu0 0.0
      %7370 = vmatprep.subr.mxu0 0.0
      %7371 = vmatpush1.msra.mxu0 0.0
      %7372 = vmatprep.subr.mxu0 0.0
      %7373 = vmatpush1.msra.mxu0 0.0
      %7374 = vmatprep.subr.mxu0 0.0
      %7375 = vmatpush1.msra.mxu0 0.0
      %7376 = vmatprep.subr.mxu0 0.0
      %7377 = vmatpush1.msra.mxu0 0.0
      %7378 = vmatprep.subr.mxu0 0.0
      %7379 = vmatpush1.msra.mxu0 0.0
      %7380 = vmatprep.subr.mxu0 0.0
      %7381 = vmatpush1.msra.mxu0 0.0
      %7382 = vmatprep.subr.mxu0 0.0
      %7383 = vmatpush1.msra.mxu0 0.0
      %7384 = vmatprep.subr.mxu0 0.0
      %7385 = vmatpush1.msra.mxu0 0.0
      %7386 = vmatprep.subr.mxu0 0.0
      %7387 = vmatpush1.msra.mxu0 0.0
      %7388 = vmatprep.subr.mxu0 0.0
      %7389 = vmatpush1.msra.mxu0 0.0
      %7390 = vmatprep.subr.mxu0 0.0
      %7391 = vmatpush1.msra.mxu0 0.0
      %7392 = vmatprep.subr.mxu0 0.0
      %7393 = vmatpush1.msra.mxu0 0.0
      %7394 = vmatprep.subr.mxu0 0.0
      %7395 = vmatpush1.msra.mxu0 0.0
      %7396 = vmatprep.subr.mxu0 0.0
      %7397 = vmatpush1.msra.mxu0 0.0
      %7398 = vmatprep.subr.mxu0 0.0
      %7399 = vmatpush1.msra.mxu0 0.0
      %7400 = vmatprep.mubr.f32.mxu0 0.0
      %v7401 = vand.u32 %v347, 4294901760
      %7402 = vmatmul.mubr.f32.gmra.mrb[0].mxu0 %v7401
      %v7403 = vpop.f32.mrb[0].mxu0
      %v7404 = vadd.f32 %v7324, %v7403
      %v7405 = vpop.f32.mrb[0].mxu0
      %v7406 = vadd.f32 %v7326, %v7405
      %7407 = vdwg.mxu0
      %v7408 = vand.u32 %v238, 4294901760
      %7409 = vmatprep.subr.mxu0 %v7408
      %v7410 = vand.u32 %v237, 4294901760
      %7411 = vmatpush1.msra.mxu0 %v7410
      %v7412 = vand.u32 %v270, 4294901760
      %7413 = vmatprep.subr.mxu0 %v7412
      %v7414 = vand.u32 %v269, 4294901760
      %7415 = vmatpush1.msra.mxu0 %v7414
      %v7416 = vand.u32 %v302, 4294901760
      %7417 = vmatprep.subr.mxu0 %v7416
      %v7418 = vand.u32 %v301, 4294901760
      %7419 = vmatpush1.msra.mxu0 %v7418
      %v7420 = vand.u32 %v334, 4294901760
      %7421 = vmatprep.subr.mxu0 %v7420
      %v7422 = vand.u32 %v333, 4294901760
      %7423 = vmatpush1.msra.mxu0 %v7422
      %7424 = vmatprep.subr.mxu0 0.0
      %7425 = vmatpush1.msra.mxu0 0.0
      %7426 = vmatprep.subr.mxu0 0.0
      %7427 = vmatpush1.msra.mxu0 0.0
      %7428 = vmatprep.subr.mxu0 0.0
      %7429 = vmatpush1.msra.mxu0 0.0
      %7430 = vmatprep.subr.mxu0 0.0
      %7431 = vmatpush1.msra.mxu0 0.0
      %7432 = vmatprep.subr.mxu0 0.0
      %7433 = vmatpush1.msra.mxu0 0.0
      %7434 = vmatprep.subr.mxu0 0.0
      %7435 = vmatpush1.msra.mxu0 0.0
      %7436 = vmatprep.subr.mxu0 0.0
      %7437 = vmatpush1.msra.mxu0 0.0
      %7438 = vmatprep.subr.mxu0 0.0
      %7439 = vmatpush1.msra.mxu0 0.0
      %7440 = vmatprep.subr.mxu0 0.0
      %7441 = vmatpush1.msra.mxu0 0.0
      %7442 = vmatprep.subr.mxu0 0.0
      %7443 = vmatpush1.msra.mxu0 0.0
      %7444 = vmatprep.subr.mxu0 0.0
      %7445 = vmatpush1.msra.mxu0 0.0
      %7446 = vmatprep.subr.mxu0 0.0
      %7447 = vmatpush1.msra.mxu0 0.0
      %7448 = vmatprep.subr.mxu0 0.0
      %7449 = vmatpush1.msra.mxu0 0.0
      %7450 = vmatprep.subr.mxu0 0.0
      %7451 = vmatpush1.msra.mxu0 0.0
      %7452 = vmatprep.subr.mxu0 0.0
      %7453 = vmatpush1.msra.mxu0 0.0
      %7454 = vmatprep.subr.mxu0 0.0
      %7455 = vmatpush1.msra.mxu0 0.0
      %7456 = vmatprep.subr.mxu0 0.0
      %7457 = vmatpush1.msra.mxu0 0.0
      %7458 = vmatprep.subr.mxu0 0.0
      %7459 = vmatpush1.msra.mxu0 0.0
      %7460 = vmatprep.subr.mxu0 0.0
      %7461 = vmatpush1.msra.mxu0 0.0
      %7462 = vmatprep.subr.mxu0 0.0
      %7463 = vmatpush1.msra.mxu0 0.0
      %7464 = vmatprep.subr.mxu0 0.0
      %7465 = vmatpush1.msra.mxu0 0.0
      %7466 = vmatprep.subr.mxu0 0.0
      %7467 = vmatpush1.msra.mxu0 0.0
      %7468 = vmatprep.subr.mxu0 0.0
      %7469 = vmatpush1.msra.mxu0 0.0
      %7470 = vmatprep.subr.mxu0 0.0
      %7471 = vmatpush1.msra.mxu0 0.0
      %7472 = vmatprep.subr.mxu0 0.0
      %7473 = vmatpush1.msra.mxu0 0.0
      %7474 = vmatprep.subr.mxu0 0.0
      %7475 = vmatpush1.msra.mxu0 0.0
      %7476 = vmatprep.subr.mxu0 0.0
      %7477 = vmatpush1.msra.mxu0 0.0
      %7478 = vmatprep.subr.mxu0 0.0
      %7479 = vmatpush1.msra.mxu0 0.0
      %7480 = vmatprep.mubr.f32.mxu0 0.0
      %v7481 = vand.u32 %v347, 4294901760
      %v7482 = vsub.f32 %v347, %v7481
      %v7483 = vand.u32 %v7482, 4294901760
      %v7484 = vsub.f32 %v7482, %v7483
      %v7485 = vand.u32 %v7484, 4294901760
      %7486 = vmatmul.mubr.f32.gmra.mrb[0].mxu0 %v7485
      %v7487 = vpop.f32.mrb[0].mxu0
      %v7488 = vadd.f32 %v343, %v7487
      %v7489 = vpop.f32.mrb[0].mxu0
      %v7490 = vadd.f32 %v343, %v7489
      %7491 = vdwg.mxu0
      %v7492 = vand.u32 %v238, 4294901760
      %v7493 = vsub.f32 %v238, %v7492
      %v7494 = vand.u32 %v7493, 4294901760
      %v7495 = vsub.f32 %v7493, %v7494
      %v7496 = vand.u32 %v7495, 4294901760
      %7497 = vmatprep.subr.mxu0 %v7496
      %v7498 = vand.u32 %v237, 4294901760
      %v7499 = vsub.f32 %v237, %v7498
      %v7500 = vand.u32 %v7499, 4294901760
      %v7501 = vsub.f32 %v7499, %v7500
      %v7502 = vand.u32 %v7501, 4294901760
      %7503 = vmatpush1.msra.mxu0 %v7502
      %v7504 = vand.u32 %v270, 4294901760
      %v7505 = vsub.f32 %v270, %v7504
      %v7506 = vand.u32 %v7505, 4294901760
      %v7507 = vsub.f32 %v7505, %v7506
      %v7508 = vand.u32 %v7507, 4294901760
      %7509 = vmatprep.subr.mxu0 %v7508
      %v7510 = vand.u32 %v269, 4294901760
      %v7511 = vsub.f32 %v269, %v7510
      %v7512 = vand.u32 %v7511, 4294901760
      %v7513 = vsub.f32 %v7511, %v7512
      %v7514 = vand.u32 %v7513, 4294901760
      %7515 = vmatpush1.msra.mxu0 %v7514
      %v7516 = vand.u32 %v302, 4294901760
      %v7517 = vsub.f32 %v302, %v7516
      %v7518 = vand.u32 %v7517, 4294901760
      %v7519 = vsub.f32 %v7517, %v7518
      %v7520 = vand.u32 %v7519, 4294901760
      %7521 = vmatprep.subr.mxu0 %v7520
      %v7522 = vand.u32 %v301, 4294901760
      %v7523 = vsub.f32 %v301, %v7522
      %v7524 = vand.u32 %v7523, 4294901760
      %v7525 = vsub.f32 %v7523, %v7524
      %v7526 = vand.u32 %v7525, 4294901760
      %7527 = vmatpush1.msra.mxu0 %v7526
      %v7528 = vand.u32 %v334, 4294901760
      %v7529 = vsub.f32 %v334, %v7528
      %v7530 = vand.u32 %v7529, 4294901760
      %v7531 = vsub.f32 %v7529, %v7530
      %v7532 = vand.u32 %v7531, 4294901760
      %7533 = vmatprep.subr.mxu0 %v7532
      %v7534 = vand.u32 %v333, 4294901760
      %v7535 = vsub.f32 %v333, %v7534
      %v7536 = vand.u32 %v7535, 4294901760
      %v7537 = vsub.f32 %v7535, %v7536
      %v7538 = vand.u32 %v7537, 4294901760
      %7539 = vmatpush1.msra.mxu0 %v7538
      %7540 = vmatprep.subr.mxu0 0.0
      %7541 = vmatpush1.msra.mxu0 0.0
      %7542 = vmatprep.subr.mxu0 0.0
      %7543 = vmatpush1.msra.mxu0 0.0
      %7544 = vmatprep.subr.mxu0 0.0
      %7545 = vmatpush1.msra.mxu0 0.0
      %7546 = vmatprep.subr.mxu0 0.0
      %7547 = vmatpush1.msra.mxu0 0.0
      %7548 = vmatprep.subr.mxu0 0.0
      %7549 = vmatpush1.msra.mxu0 0.0
      %7550 = vmatprep.subr.mxu0 0.0
      %7551 = vmatpush1.msra.mxu0 0.0
      %7552 = vmatprep.subr.mxu0 0.0
      %7553 = vmatpush1.msra.mxu0 0.0
      %7554 = vmatprep.subr.mxu0 0.0
      %7555 = vmatpush1.msra.mxu0 0.0
      %7556 = vmatprep.subr.mxu0 0.0
      %7557 = vmatpush1.msra.mxu0 0.0
      %7558 = vmatprep.subr.mxu0 0.0
      %7559 = vmatpush1.msra.mxu0 0.0
      %7560 = vmatprep.subr.mxu0 0.0
      %7561 = vmatpush1.msra.mxu0 0.0
      %7562 = vmatprep.subr.mxu0 0.0
      %7563 = vmatpush1.msra.mxu0 0.0
      %7564 = vmatprep.subr.mxu0 0.0
      %7565 = vmatpush1.msra.mxu0 0.0
      %7566 = vmatprep.subr.mxu0 0.0
      %7567 = vmatpush1.msra.mxu0 0.0
      %7568 = vmatprep.subr.mxu0 0.0
      %7569 = vmatpush1.msra.mxu0 0.0
      %7570 = vmatprep.subr.mxu0 0.0
      %7571 = vmatpush1.msra.mxu0 0.0
      %7572 = vmatprep.subr.mxu0 0.0
      %7573 = vmatpush1.msra.mxu0 0.0
      %7574 = vmatprep.subr.mxu0 0.0
      %7575 = vmatpush1.msra.mxu0 0.0
      %7576 = vmatprep.subr.mxu0 0.0
      %7577 = vmatpush1.msra.mxu0 0.0
      %7578 = vmatprep.subr.mxu0 0.0
      %7579 = vmatpush1.msra.mxu0 0.0
      %7580 = vmatprep.subr.mxu0 0.0
      %7581 = vmatpush1.msra.mxu0 0.0
      %7582 = vmatprep.subr.mxu0 0.0
      %7583 = vmatpush1.msra.mxu0 0.0
      %7584 = vmatprep.subr.mxu0 0.0
      %7585 = vmatpush1.msra.mxu0 0.0
      %7586 = vmatprep.subr.mxu0 0.0
      %7587 = vmatpush1.msra.mxu0 0.0
      %7588 = vmatprep.subr.mxu0 0.0
      %7589 = vmatpush1.msra.mxu0 0.0
      %7590 = vmatprep.subr.mxu0 0.0
      %7591 = vmatpush1.msra.mxu0 0.0
      %7592 = vmatprep.subr.mxu0 0.0
      %7593 = vmatpush1.msra.mxu0 0.0
      %7594 = vmatprep.subr.mxu0 0.0
      %7595 = vmatpush1.msra.mxu0 0.0
      %7596 = vmatprep.mubr.f32.mxu0 0.0
      %v7597 = vand.u32 %v347, 4294901760
      %7598 = vmatmul.mubr.f32.gmra.mrb[0].mxu0 %v7597
      %v7599 = vpop.f32.mrb[0].mxu0
      %v7600 = vadd.f32 %v7488, %v7599
      %v7601 = vpop.f32.mrb[0].mxu0
      %v7602 = vadd.f32 %v7490, %v7601
      %7603 = vdwg.mxu0
      %v7604 = vand.u32 %v238, 4294901760
      %v7605 = vsub.f32 %v238, %v7604
      %7606 = vmatprep.subr.mxu0 %v7605
      %v7607 = vand.u32 %v237, 4294901760
      %v7608 = vsub.f32 %v237, %v7607
      %7609 = vmatpush1.msra.mxu0 %v7608
      %v7610 = vand.u32 %v270, 4294901760
      %v7611 = vsub.f32 %v270, %v7610
      %7612 = vmatprep.subr.mxu0 %v7611
      %v7613 = vand.u32 %v269, 4294901760
      %v7614 = vsub.f32 %v269, %v7613
      %7615 = vmatpush1.msra.mxu0 %v7614
      %v7616 = vand.u32 %v302, 4294901760
      %v7617 = vsub.f32 %v302, %v7616
      %7618 = vmatprep.subr.mxu0 %v7617
      %v7619 = vand.u32 %v301, 4294901760
      %v7620 = vsub.f32 %v301, %v7619
      %7621 = vmatpush1.msra.mxu0 %v7620
      %v7622 = vand.u32 %v334, 4294901760
      %v7623 = vsub.f32 %v334, %v7622
      %7624 = vmatprep.subr.mxu0 %v7623
      %v7625 = vand.u32 %v333, 4294901760
      %v7626 = vsub.f32 %v333, %v7625
      %7627 = vmatpush1.msra.mxu0 %v7626
      %7628 = vmatprep.subr.mxu0 0.0
      %7629 = vmatpush1.msra.mxu0 0.0
      %7630 = vmatprep.subr.mxu0 0.0
      %7631 = vmatpush1.msra.mxu0 0.0
      %7632 = vmatprep.subr.mxu0 0.0
      %7633 = vmatpush1.msra.mxu0 0.0
      %7634 = vmatprep.subr.mxu0 0.0
      %7635 = vmatpush1.msra.mxu0 0.0
      %7636 = vmatprep.subr.mxu0 0.0
      %7637 = vmatpush1.msra.mxu0 0.0
      %7638 = vmatprep.subr.mxu0 0.0
      %7639 = vmatpush1.msra.mxu0 0.0
      %7640 = vmatprep.subr.mxu0 0.0
      %7641 = vmatpush1.msra.mxu0 0.0
      %7642 = vmatprep.subr.mxu0 0.0
      %7643 = vmatpush1.msra.mxu0 0.0
      %7644 = vmatprep.subr.mxu0 0.0
      %7645 = vmatpush1.msra.mxu0 0.0
      %7646 = vmatprep.subr.mxu0 0.0
      %7647 = vmatpush1.msra.mxu0 0.0
      %7648 = vmatprep.subr.mxu0 0.0
      %7649 = vmatpush1.msra.mxu0 0.0
      %7650 = vmatprep.subr.mxu0 0.0
      %7651 = vmatpush1.msra.mxu0 0.0
      %7652 = vmatprep.subr.mxu0 0.0
      %7653 = vmatpush1.msra.mxu0 0.0
      %7654 = vmatprep.subr.mxu0 0.0
      %7655 = vmatpush1.msra.mxu0 0.0
      %7656 = vmatprep.subr.mxu0 0.0
      %7657 = vmatpush1.msra.mxu0 0.0
      %7658 = vmatprep.subr.mxu0 0.0
      %7659 = vmatpush1.msra.mxu0 0.0
      %7660 = vmatprep.subr.mxu0 0.0
      %7661 = vmatpush1.msra.mxu0 0.0
      %7662 = vmatprep.subr.mxu0 0.0
      %7663 = vmatpush1.msra.mxu0 0.0
      %7664 = vmatprep.subr.mxu0 0.0
      %7665 = vmatpush1.msra.mxu0 0.0
      %7666 = vmatprep.subr.mxu0 0.0
      %7667 = vmatpush1.msra.mxu0 0.0
      %7668 = vmatprep.subr.mxu0 0.0
      %7669 = vmatpush1.msra.mxu0 0.0
      %7670 = vmatprep.subr.mxu0 0.0
      %7671 = vmatpush1.msra.mxu0 0.0
      %7672 = vmatprep.subr.mxu0 0.0
      %7673 = vmatpush1.msra.mxu0 0.0
      %7674 = vmatprep.subr.mxu0 0.0
      %7675 = vmatpush1.msra.mxu0 0.0
      %7676 = vmatprep.subr.mxu0 0.0
      %7677 = vmatpush1.msra.mxu0 0.0
      %7678 = vmatprep.subr.mxu0 0.0
      %7679 = vmatpush1.msra.mxu0 0.0
      %7680 = vmatprep.subr.mxu0 0.0
      %7681 = vmatpush1.msra.mxu0 0.0
      %7682 = vmatprep.subr.mxu0 0.0
      %7683 = vmatpush1.msra.mxu0 0.0
      %7684 = vmatprep.mubr.f32.mxu0 0.0
      %v7685 = vand.u32 %v347, 4294901760
      %v7686 = vsub.f32 %v347, %v7685
      %7687 = vmatmul.mubr.f32.gmra.mrb[0].mxu0 %v7686
      %v7688 = vpop.f32.mrb[0].mxu0
      %v7689 = vadd.f32 %v7600, %v7688
      %v7690 = vpop.f32.mrb[0].mxu0
      %v7691 = vadd.f32 %v7602, %v7690
      %7692 = vdwg.mxu0
      %v7693 = vand.u32 %v238, 4294901760
      %7694 = vmatprep.subr.mxu0 %v7693
      %v7695 = vand.u32 %v237, 4294901760
      %7696 = vmatpush1.msra.mxu0 %v7695
      %v7697 = vand.u32 %v270, 4294901760
      %7698 = vmatprep.subr.mxu0 %v7697
      %v7699 = vand.u32 %v269, 4294901760
      %7700 = vmatpush1.msra.mxu0 %v7699
      %v7701 = vand.u32 %v302, 4294901760
      %7702 = vmatprep.subr.mxu0 %v7701
      %v7703 = vand.u32 %v301, 4294901760
      %7704 = vmatpush1.msra.mxu0 %v7703
      %v7705 = vand.u32 %v334, 4294901760
      %7706 = vmatprep.subr.mxu0 %v7705
      %v7707 = vand.u32 %v333, 4294901760
      %7708 = vmatpush1.msra.mxu0 %v7707
      %7709 = vmatprep.subr.mxu0 0.0
      %7710 = vmatpush1.msra.mxu0 0.0
      %7711 = vmatprep.subr.mxu0 0.0
      %7712 = vmatpush1.msra.mxu0 0.0
      %7713 = vmatprep.subr.mxu0 0.0
      %7714 = vmatpush1.msra.mxu0 0.0
      %7715 = vmatprep.subr.mxu0 0.0
      %7716 = vmatpush1.msra.mxu0 0.0
      %7717 = vmatprep.subr.mxu0 0.0
      %7718 = vmatpush1.msra.mxu0 0.0
      %7719 = vmatprep.subr.mxu0 0.0
      %7720 = vmatpush1.msra.mxu0 0.0
      %7721 = vmatprep.subr.mxu0 0.0
      %7722 = vmatpush1.msra.mxu0 0.0
      %7723 = vmatprep.subr.mxu0 0.0
      %7724 = vmatpush1.msra.mxu0 0.0
      %7725 = vmatprep.subr.mxu0 0.0
      %7726 = vmatpush1.msra.mxu0 0.0
      %7727 = vmatprep.subr.mxu0 0.0
      %7728 = vmatpush1.msra.mxu0 0.0
      %7729 = vmatprep.subr.mxu0 0.0
      %7730 = vmatpush1.msra.mxu0 0.0
      %7731 = vmatprep.subr.mxu0 0.0
      %7732 = vmatpush1.msra.mxu0 0.0
      %7733 = vmatprep.subr.mxu0 0.0
      %7734 = vmatpush1.msra.mxu0 0.0
      %7735 = vmatprep.subr.mxu0 0.0
      %7736 = vmatpush1.msra.mxu0 0.0
      %7737 = vmatprep.subr.mxu0 0.0
      %7738 = vmatpush1.msra.mxu0 0.0
      %7739 = vmatprep.subr.mxu0 0.0
      %7740 = vmatpush1.msra.mxu0 0.0
      %7741 = vmatprep.subr.mxu0 0.0
      %7742 = vmatpush1.msra.mxu0 0.0
      %7743 = vmatprep.subr.mxu0 0.0
      %7744 = vmatpush1.msra.mxu0 0.0
      %7745 = vmatprep.subr.mxu0 0.0
      %7746 = vmatpush1.msra.mxu0 0.0
      %7747 = vmatprep.subr.mxu0 0.0
      %7748 = vmatpush1.msra.mxu0 0.0
      %7749 = vmatprep.subr.mxu0 0.0
      %7750 = vmatpush1.msra.mxu0 0.0
      %7751 = vmatprep.subr.mxu0 0.0
      %7752 = vmatpush1.msra.mxu0 0.0
      %7753 = vmatprep.subr.mxu0 0.0
      %7754 = vmatpush1.msra.mxu0 0.0
      %7755 = vmatprep.subr.mxu0 0.0
      %7756 = vmatpush1.msra.mxu0 0.0
      %7757 = vmatprep.subr.mxu0 0.0
      %7758 = vmatpush1.msra.mxu0 0.0
      %7759 = vmatprep.subr.mxu0 0.0
      %7760 = vmatpush1.msra.mxu0 0.0
      %7761 = vmatprep.subr.mxu0 0.0
      %7762 = vmatpush1.msra.mxu0 0.0
      %7763 = vmatprep.subr.mxu0 0.0
      %7764 = vmatpush1.msra.mxu0 0.0
      %7765 = vmatprep.mubr.f32.mxu0 0.0
      %v7766 = vand.u32 %v347, 4294901760
      %v7767 = vsub.f32 %v347, %v7766
      %v7768 = vand.u32 %v7767, 4294901760
      %7769 = vmatmul.mubr.f32.gmra.mrb[0].mxu0 %v7768
      %v7770 = vpop.f32.mrb[0].mxu0
      %v7771 = vadd.f32 %v7689, %v7770
      %v7772 = vpop.f32.mrb[0].mxu0
      %v7773 = vadd.f32 %v7691, %v7772
      %7774 = vdwg.mxu0
      %v7775 = vand.u32 %v238, 4294901760
      %v7776 = vsub.f32 %v238, %v7775
      %v7777 = vand.u32 %v7776, 4294901760
      %7778 = vmatprep.subr.mxu0 %v7777
      %v7779 = vand.u32 %v237, 4294901760
      %v7780 = vsub.f32 %v237, %v7779
      %v7781 = vand.u32 %v7780, 4294901760
      %7782 = vmatpush1.msra.mxu0 %v7781
      %v7783 = vand.u32 %v270, 4294901760
      %v7784 = vsub.f32 %v270, %v7783
      %v7785 = vand.u32 %v7784, 4294901760
      %7786 = vmatprep.subr.mxu0 %v7785
      %v7787 = vand.u32 %v269, 4294901760
      %v7788 = vsub.f32 %v269, %v7787
      %v7789 = vand.u32 %v7788, 4294901760
      %7790 = vmatpush1.msra.mxu0 %v7789
      %v7791 = vand.u32 %v302, 4294901760
      %v7792 = vsub.f32 %v302, %v7791
      %v7793 = vand.u32 %v7792, 4294901760
      %7794 = vmatprep.subr.mxu0 %v7793
      %v7795 = vand.u32 %v301, 4294901760
      %v7796 = vsub.f32 %v301, %v7795
      %v7797 = vand.u32 %v7796, 4294901760
      %7798 = vmatpush1.msra.mxu0 %v7797
      %v7799 = vand.u32 %v334, 4294901760
      %v7800 = vsub.f32 %v334, %v7799
      %v7801 = vand.u32 %v7800, 4294901760
      %7802 = vmatprep.subr.mxu0 %v7801
      %v7803 = vand.u32 %v333, 4294901760
      %v7804 = vsub.f32 %v333, %v7803
      %v7805 = vand.u32 %v7804, 4294901760
      %7806 = vmatpush1.msra.mxu0 %v7805
      %7807 = vmatprep.subr.mxu0 0.0
      %7808 = vmatpush1.msra.mxu0 0.0
      %7809 = vmatprep.subr.mxu0 0.0
      %7810 = vmatpush1.msra.mxu0 0.0
      %7811 = vmatprep.subr.mxu0 0.0
      %7812 = vmatpush1.msra.mxu0 0.0
      %7813 = vmatprep.subr.mxu0 0.0
      %7814 = vmatpush1.msra.mxu0 0.0
      %7815 = vmatprep.subr.mxu0 0.0
      %7816 = vmatpush1.msra.mxu0 0.0
      %7817 = vmatprep.subr.mxu0 0.0
      %7818 = vmatpush1.msra.mxu0 0.0
      %7819 = vmatprep.subr.mxu0 0.0
      %7820 = vmatpush1.msra.mxu0 0.0
      %7821 = vmatprep.subr.mxu0 0.0
      %7822 = vmatpush1.msra.mxu0 0.0
      %7823 = vmatprep.subr.mxu0 0.0
      %7824 = vmatpush1.msra.mxu0 0.0
      %7825 = vmatprep.subr.mxu0 0.0
      %7826 = vmatpush1.msra.mxu0 0.0
      %7827 = vmatprep.subr.mxu0 0.0
      %7828 = vmatpush1.msra.mxu0 0.0
      %7829 = vmatprep.subr.mxu0 0.0
      %7830 = vmatpush1.msra.mxu0 0.0
      %7831 = vmatprep.subr.mxu0 0.0
      %7832 = vmatpush1.msra.mxu0 0.0
      %7833 = vmatprep.subr.mxu0 0.0
      %7834 = vmatpush1.msra.mxu0 0.0
      %7835 = vmatprep.subr.mxu0 0.0
      %7836 = vmatpush1.msra.mxu0 0.0
      %7837 = vmatprep.subr.mxu0 0.0
      %7838 = vmatpush1.msra.mxu0 0.0
      %7839 = vmatprep.subr.mxu0 0.0
      %7840 = vmatpush1.msra.mxu0 0.0
      %7841 = vmatprep.subr.mxu0 0.0
      %7842 = vmatpush1.msra.mxu0 0.0
      %7843 = vmatprep.subr.mxu0 0.0
      %7844 = vmatpush1.msra.mxu0 0.0
      %7845 = vmatprep.subr.mxu0 0.0
      %7846 = vmatpush1.msra.mxu0 0.0
      %7847 = vmatprep.subr.mxu0 0.0
      %7848 = vmatpush1.msra.mxu0 0.0
      %7849 = vmatprep.subr.mxu0 0.0
      %7850 = vmatpush1.msra.mxu0 0.0
      %7851 = vmatprep.subr.mxu0 0.0
      %7852 = vmatpush1.msra.mxu0 0.0
      %7853 = vmatprep.subr.mxu0 0.0
      %7854 = vmatpush1.msra.mxu0 0.0
      %7855 = vmatprep.subr.mxu0 0.0
      %7856 = vmatpush1.msra.mxu0 0.0
      %7857 = vmatprep.subr.mxu0 0.0
      %7858 = vmatpush1.msra.mxu0 0.0
      %7859 = vmatprep.subr.mxu0 0.0
      %7860 = vmatpush1.msra.mxu0 0.0
      %7861 = vmatprep.subr.mxu0 0.0
      %7862 = vmatpush1.msra.mxu0 0.0
      %7863 = vmatprep.mubr.f32.mxu0 0.0
      %v7864 = vand.u32 %v347, 4294901760
      %7865 = vmatmul.mubr.f32.gmra.mrb[0].mxu0 %v7864
      %v7866 = vpop.f32.mrb[0].mxu0
      %v7867 = vadd.f32 %v7771, %v7866
      %v7868 = vpop.f32.mrb[0].mxu0
      %v7869 = vadd.f32 %v7773, %v7868
      %7870 = vdwg.mxu0
      %v7871 = vand.u32 %v238, 4294901760
      %7872 = vmatprep.subr.mxu0 %v7871
      %v7873 = vand.u32 %v237, 4294901760
      %7874 = vmatpush1.msra.mxu0 %v7873
      %v7875 = vand.u32 %v270, 4294901760
      %7876 = vmatprep.subr.mxu0 %v7875
      %v7877 = vand.u32 %v269, 4294901760
      %7878 = vmatpush1.msra.mxu0 %v7877
      %v7879 = vand.u32 %v302, 4294901760
      %7880 = vmatprep.subr.mxu0 %v7879
      %v7881 = vand.u32 %v301, 4294901760
      %7882 = vmatpush1.msra.mxu0 %v7881
      %v7883 = vand.u32 %v334, 4294901760
      %7884 = vmatprep.subr.mxu0 %v7883
      %v7885 = vand.u32 %v333, 4294901760
      %7886 = vmatpush1.msra.mxu0 %v7885
      %7887 = vmatprep.subr.mxu0 0.0
      %7888 = vmatpush1.msra.mxu0 0.0
      %7889 = vmatprep.subr.mxu0 0.0
      %7890 = vmatpush1.msra.mxu0 0.0
      %7891 = vmatprep.subr.mxu0 0.0
      %7892 = vmatpush1.msra.mxu0 0.0
      %7893 = vmatprep.subr.mxu0 0.0
      %7894 = vmatpush1.msra.mxu0 0.0
      %7895 = vmatprep.subr.mxu0 0.0
      %7896 = vmatpush1.msra.mxu0 0.0
      %7897 = vmatprep.subr.mxu0 0.0
      %7898 = vmatpush1.msra.mxu0 0.0
      %7899 = vmatprep.subr.mxu0 0.0
      %7900 = vmatpush1.msra.mxu0 0.0
      %7901 = vmatprep.subr.mxu0 0.0
      %7902 = vmatpush1.msra.mxu0 0.0
      %7903 = vmatprep.subr.mxu0 0.0
      %7904 = vmatpush1.msra.mxu0 0.0
      %7905 = vmatprep.subr.mxu0 0.0
      %7906 = vmatpush1.msra.mxu0 0.0
      %7907 = vmatprep.subr.mxu0 0.0
      %7908 = vmatpush1.msra.mxu0 0.0
      %7909 = vmatprep.subr.mxu0 0.0
      %7910 = vmatpush1.msra.mxu0 0.0
      %7911 = vmatprep.subr.mxu0 0.0
      %7912 = vmatpush1.msra.mxu0 0.0
      %7913 = vmatprep.subr.mxu0 0.0
      %7914 = vmatpush1.msra.mxu0 0.0
      %7915 = vmatprep.subr.mxu0 0.0
      %7916 = vmatpush1.msra.mxu0 0.0
      %7917 = vmatprep.subr.mxu0 0.0
      %7918 = vmatpush1.msra.mxu0 0.0
      %7919 = vmatprep.subr.mxu0 0.0
      %7920 = vmatpush1.msra.mxu0 0.0
      %7921 = vmatprep.subr.mxu0 0.0
      %7922 = vmatpush1.msra.mxu0 0.0
      %7923 = vmatprep.subr.mxu0 0.0
      %7924 = vmatpush1.msra.mxu0 0.0
      %7925 = vmatprep.subr.mxu0 0.0
      %7926 = vmatpush1.msra.mxu0 0.0
      %7927 = vmatprep.subr.mxu0 0.0
      %7928 = vmatpush1.msra.mxu0 0.0
      %7929 = vmatprep.subr.mxu0 0.0
      %7930 = vmatpush1.msra.mxu0 0.0
      %7931 = vmatprep.subr.mxu0 0.0
      %7932 = vmatpush1.msra.mxu0 0.0
      %7933 = vmatprep.subr.mxu0 0.0
      %7934 = vmatpush1.msra.mxu0 0.0
      %7935 = vmatprep.subr.mxu0 0.0
      %7936 = vmatpush1.msra.mxu0 0.0
      %7937 = vmatprep.subr.mxu0 0.0
      %7938 = vmatpush1.msra.mxu0 0.0
      %7939 = vmatprep.subr.mxu0 0.0
      %7940 = vmatpush1.msra.mxu0 0.0
      %7941 = vmatprep.subr.mxu0 0.0
      %7942 = vmatpush1.msra.mxu0 0.0
      %7943 = vmatprep.mubr.f32.mxu0 0.0
      %v7944 = vand.u32 %v347, 4294901760
      %7945 = vmatmul.mubr.f32.gmra.mrb[0].mxu0 %v7944
      %v7946 = vpop.f32.mrb[0].mxu0
      %v7947 = vadd.f32 %v7867, %v7946
      %v7948 = vpop.f32.mrb[0].mxu0
      %v7949 = vadd.f32 %v7869, %v7948
      %7950 = vdwg.mxu0
      %v7951 = vand.u32 %v240, 4294901760
      %7952 = vmatprep.subr.mxu0 %v7951
      %v7953 = vand.u32 %v239, 4294901760
      %7954 = vmatpush1.msra.mxu0 %v7953
      %v7955 = vand.u32 %v272, 4294901760
      %7956 = vmatprep.subr.mxu0 %v7955
      %v7957 = vand.u32 %v271, 4294901760
      %7958 = vmatpush1.msra.mxu0 %v7957
      %v7959 = vand.u32 %v304, 4294901760
      %7960 = vmatprep.subr.mxu0 %v7959
      %v7961 = vand.u32 %v303, 4294901760
      %7962 = vmatpush1.msra.mxu0 %v7961
      %v7963 = vand.u32 %v336, 4294901760
      %7964 = vmatprep.subr.mxu0 %v7963
      %v7965 = vand.u32 %v335, 4294901760
      %7966 = vmatpush1.msra.mxu0 %v7965
      %7967 = vmatprep.subr.mxu0 0.0
      %7968 = vmatpush1.msra.mxu0 0.0
      %7969 = vmatprep.subr.mxu0 0.0
      %7970 = vmatpush1.msra.mxu0 0.0
      %7971 = vmatprep.subr.mxu0 0.0
      %7972 = vmatpush1.msra.mxu0 0.0
      %7973 = vmatprep.subr.mxu0 0.0
      %7974 = vmatpush1.msra.mxu0 0.0
      %7975 = vmatprep.subr.mxu0 0.0
      %7976 = vmatpush1.msra.mxu0 0.0
      %7977 = vmatprep.subr.mxu0 0.0
      %7978 = vmatpush1.msra.mxu0 0.0
      %7979 = vmatprep.subr.mxu0 0.0
      %7980 = vmatpush1.msra.mxu0 0.0
      %7981 = vmatprep.subr.mxu0 0.0
      %7982 = vmatpush1.msra.mxu0 0.0
      %7983 = vmatprep.subr.mxu0 0.0
      %7984 = vmatpush1.msra.mxu0 0.0
      %7985 = vmatprep.subr.mxu0 0.0
      %7986 = vmatpush1.msra.mxu0 0.0
      %7987 = vmatprep.subr.mxu0 0.0
      %7988 = vmatpush1.msra.mxu0 0.0
      %7989 = vmatprep.subr.mxu0 0.0
      %7990 = vmatpush1.msra.mxu0 0.0
      %7991 = vmatprep.subr.mxu0 0.0
      %7992 = vmatpush1.msra.mxu0 0.0
      %7993 = vmatprep.subr.mxu0 0.0
      %7994 = vmatpush1.msra.mxu0 0.0
      %7995 = vmatprep.subr.mxu0 0.0
      %7996 = vmatpush1.msra.mxu0 0.0
      %7997 = vmatprep.subr.mxu0 0.0
      %7998 = vmatpush1.msra.mxu0 0.0
      %7999 = vmatprep.subr.mxu0 0.0
      %8000 = vmatpush1.msra.mxu0 0.0
      %8001 = vmatprep.subr.mxu0 0.0
      %8002 = vmatpush1.msra.mxu0 0.0
      %8003 = vmatprep.subr.mxu0 0.0
      %8004 = vmatpush1.msra.mxu0 0.0
      %8005 = vmatprep.subr.mxu0 0.0
      %8006 = vmatpush1.msra.mxu0 0.0
      %8007 = vmatprep.subr.mxu0 0.0
      %8008 = vmatpush1.msra.mxu0 0.0
      %8009 = vmatprep.subr.mxu0 0.0
      %8010 = vmatpush1.msra.mxu0 0.0
      %8011 = vmatprep.subr.mxu0 0.0
      %8012 = vmatpush1.msra.mxu0 0.0
      %8013 = vmatprep.subr.mxu0 0.0
      %8014 = vmatpush1.msra.mxu0 0.0
      %8015 = vmatprep.subr.mxu0 0.0
      %8016 = vmatpush1.msra.mxu0 0.0
      %8017 = vmatprep.subr.mxu0 0.0
      %8018 = vmatpush1.msra.mxu0 0.0
      %8019 = vmatprep.subr.mxu0 0.0
      %8020 = vmatpush1.msra.mxu0 0.0
      %8021 = vmatprep.subr.mxu0 0.0
      %8022 = vmatpush1.msra.mxu0 0.0
      %8023 = vmatprep.mubr.f32.mxu0 0.0
      %v8024 = vand.u32 %v347, 4294901760
      %v8025 = vsub.f32 %v347, %v8024
      %v8026 = vand.u32 %v8025, 4294901760
      %v8027 = vsub.f32 %v8025, %v8026
      %v8028 = vand.u32 %v8027, 4294901760
      %8029 = vmatmul.mubr.f32.gmra.mrb[0].mxu0 %v8028
      %v8030 = vpop.f32.mrb[0].mxu0
      %v8031 = vadd.f32 %v343, %v8030
      %v8032 = vpop.f32.mrb[0].mxu0
      %v8033 = vadd.f32 %v343, %v8032
      %8034 = vdwg.mxu0
      %v8035 = vand.u32 %v240, 4294901760
      %v8036 = vsub.f32 %v240, %v8035
      %v8037 = vand.u32 %v8036, 4294901760
      %v8038 = vsub.f32 %v8036, %v8037
      %v8039 = vand.u32 %v8038, 4294901760
      %8040 = vmatprep.subr.mxu0 %v8039
      %v8041 = vand.u32 %v239, 4294901760
      %v8042 = vsub.f32 %v239, %v8041
      %v8043 = vand.u32 %v8042, 4294901760
      %v8044 = vsub.f32 %v8042, %v8043
      %v8045 = vand.u32 %v8044, 4294901760
      %8046 = vmatpush1.msra.mxu0 %v8045
      %v8047 = vand.u32 %v272, 4294901760
      %v8048 = vsub.f32 %v272, %v8047
      %v8049 = vand.u32 %v8048, 4294901760
      %v8050 = vsub.f32 %v8048, %v8049
      %v8051 = vand.u32 %v8050, 4294901760
      %8052 = vmatprep.subr.mxu0 %v8051
      %v8053 = vand.u32 %v271, 4294901760
      %v8054 = vsub.f32 %v271, %v8053
      %v8055 = vand.u32 %v8054, 4294901760
      %v8056 = vsub.f32 %v8054, %v8055
      %v8057 = vand.u32 %v8056, 4294901760
      %8058 = vmatpush1.msra.mxu0 %v8057
      %v8059 = vand.u32 %v304, 4294901760
      %v8060 = vsub.f32 %v304, %v8059
      %v8061 = vand.u32 %v8060, 4294901760
      %v8062 = vsub.f32 %v8060, %v8061
      %v8063 = vand.u32 %v8062, 4294901760
      %8064 = vmatprep.subr.mxu0 %v8063
      %v8065 = vand.u32 %v303, 4294901760
      %v8066 = vsub.f32 %v303, %v8065
      %v8067 = vand.u32 %v8066, 4294901760
      %v8068 = vsub.f32 %v8066, %v8067
      %v8069 = vand.u32 %v8068, 4294901760
      %8070 = vmatpush1.msra.mxu0 %v8069
      %v8071 = vand.u32 %v336, 4294901760
      %v8072 = vsub.f32 %v336, %v8071
      %v8073 = vand.u32 %v8072, 4294901760
      %v8074 = vsub.f32 %v8072, %v8073
      %v8075 = vand.u32 %v8074, 4294901760
      %8076 = vmatprep.subr.mxu0 %v8075
      %v8077 = vand.u32 %v335, 4294901760
      %v8078 = vsub.f32 %v335, %v8077
      %v8079 = vand.u32 %v8078, 4294901760
      %v8080 = vsub.f32 %v8078, %v8079
      %v8081 = vand.u32 %v8080, 4294901760
      %8082 = vmatpush1.msra.mxu0 %v8081
      %8083 = vmatprep.subr.mxu0 0.0
      %8084 = vmatpush1.msra.mxu0 0.0
      %8085 = vmatprep.subr.mxu0 0.0
      %8086 = vmatpush1.msra.mxu0 0.0
      %8087 = vmatprep.subr.mxu0 0.0
      %8088 = vmatpush1.msra.mxu0 0.0
      %8089 = vmatprep.subr.mxu0 0.0
      %8090 = vmatpush1.msra.mxu0 0.0
      %8091 = vmatprep.subr.mxu0 0.0
      %8092 = vmatpush1.msra.mxu0 0.0
      %8093 = vmatprep.subr.mxu0 0.0
      %8094 = vmatpush1.msra.mxu0 0.0
      %8095 = vmatprep.subr.mxu0 0.0
      %8096 = vmatpush1.msra.mxu0 0.0
      %8097 = vmatprep.subr.mxu0 0.0
      %8098 = vmatpush1.msra.mxu0 0.0
      %8099 = vmatprep.subr.mxu0 0.0
      %8100 = vmatpush1.msra.mxu0 0.0
      %8101 = vmatprep.subr.mxu0 0.0
      %8102 = vmatpush1.msra.mxu0 0.0
      %8103 = vmatprep.subr.mxu0 0.0
      %8104 = vmatpush1.msra.mxu0 0.0
      %8105 = vmatprep.subr.mxu0 0.0
      %8106 = vmatpush1.msra.mxu0 0.0
      %8107 = vmatprep.subr.mxu0 0.0
      %8108 = vmatpush1.msra.mxu0 0.0
      %8109 = vmatprep.subr.mxu0 0.0
      %8110 = vmatpush1.msra.mxu0 0.0
      %8111 = vmatprep.subr.mxu0 0.0
      %8112 = vmatpush1.msra.mxu0 0.0
      %8113 = vmatprep.subr.mxu0 0.0
      %8114 = vmatpush1.msra.mxu0 0.0
      %8115 = vmatprep.subr.mxu0 0.0
      %8116 = vmatpush1.msra.mxu0 0.0
      %8117 = vmatprep.subr.mxu0 0.0
      %8118 = vmatpush1.msra.mxu0 0.0
      %8119 = vmatprep.subr.mxu0 0.0
      %8120 = vmatpush1.msra.mxu0 0.0
      %8121 = vmatprep.subr.mxu0 0.0
      %8122 = vmatpush1.msra.mxu0 0.0
      %8123 = vmatprep.subr.mxu0 0.0
      %8124 = vmatpush1.msra.mxu0 0.0
      %8125 = vmatprep.subr.mxu0 0.0
      %8126 = vmatpush1.msra.mxu0 0.0
      %8127 = vmatprep.subr.mxu0 0.0
      %8128 = vmatpush1.msra.mxu0 0.0
      %8129 = vmatprep.subr.mxu0 0.0
      %8130 = vmatpush1.msra.mxu0 0.0
      %8131 = vmatprep.subr.mxu0 0.0
      %8132 = vmatpush1.msra.mxu0 0.0
      %8133 = vmatprep.subr.mxu0 0.0
      %8134 = vmatpush1.msra.mxu0 0.0
      %8135 = vmatprep.subr.mxu0 0.0
      %8136 = vmatpush1.msra.mxu0 0.0
      %8137 = vmatprep.subr.mxu0 0.0
      %8138 = vmatpush1.msra.mxu0 0.0
      %8139 = vmatprep.mubr.f32.mxu0 0.0
      %v8140 = vand.u32 %v347, 4294901760
      %8141 = vmatmul.mubr.f32.gmra.mrb[0].mxu0 %v8140
      %v8142 = vpop.f32.mrb[0].mxu0
      %v8143 = vadd.f32 %v8031, %v8142
      %v8144 = vpop.f32.mrb[0].mxu0
      %v8145 = vadd.f32 %v8033, %v8144
      %8146 = vdwg.mxu0
      %v8147 = vand.u32 %v240, 4294901760
      %v8148 = vsub.f32 %v240, %v8147
      %8149 = vmatprep.subr.mxu0 %v8148
      %v8150 = vand.u32 %v239, 4294901760
      %v8151 = vsub.f32 %v239, %v8150
      %8152 = vmatpush1.msra.mxu0 %v8151
      %v8153 = vand.u32 %v272, 4294901760
      %v8154 = vsub.f32 %v272, %v8153
      %8155 = vmatprep.subr.mxu0 %v8154
      %v8156 = vand.u32 %v271, 4294901760
      %v8157 = vsub.f32 %v271, %v8156
      %8158 = vmatpush1.msra.mxu0 %v8157
      %v8159 = vand.u32 %v304, 4294901760
      %v8160 = vsub.f32 %v304, %v8159
      %8161 = vmatprep.subr.mxu0 %v8160
      %v8162 = vand.u32 %v303, 4294901760
      %v8163 = vsub.f32 %v303, %v8162
      %8164 = vmatpush1.msra.mxu0 %v8163
      %v8165 = vand.u32 %v336, 4294901760
      %v8166 = vsub.f32 %v336, %v8165
      %8167 = vmatprep.subr.mxu0 %v8166
      %v8168 = vand.u32 %v335, 4294901760
      %v8169 = vsub.f32 %v335, %v8168
      %8170 = vmatpush1.msra.mxu0 %v8169
      %8171 = vmatprep.subr.mxu0 0.0
      %8172 = vmatpush1.msra.mxu0 0.0
      %8173 = vmatprep.subr.mxu0 0.0
      %8174 = vmatpush1.msra.mxu0 0.0
      %8175 = vmatprep.subr.mxu0 0.0
      %8176 = vmatpush1.msra.mxu0 0.0
      %8177 = vmatprep.subr.mxu0 0.0
      %8178 = vmatpush1.msra.mxu0 0.0
      %8179 = vmatprep.subr.mxu0 0.0
      %8180 = vmatpush1.msra.mxu0 0.0
      %8181 = vmatprep.subr.mxu0 0.0
      %8182 = vmatpush1.msra.mxu0 0.0
      %8183 = vmatprep.subr.mxu0 0.0
      %8184 = vmatpush1.msra.mxu0 0.0
      %8185 = vmatprep.subr.mxu0 0.0
      %8186 = vmatpush1.msra.mxu0 0.0
      %8187 = vmatprep.subr.mxu0 0.0
      %8188 = vmatpush1.msra.mxu0 0.0
      %8189 = vmatprep.subr.mxu0 0.0
      %8190 = vmatpush1.msra.mxu0 0.0
      %8191 = vmatprep.subr.mxu0 0.0
      %8192 = vmatpush1.msra.mxu0 0.0
      %8193 = vmatprep.subr.mxu0 0.0
      %8194 = vmatpush1.msra.mxu0 0.0
      %8195 = vmatprep.subr.mxu0 0.0
      %8196 = vmatpush1.msra.mxu0 0.0
      %8197 = vmatprep.subr.mxu0 0.0
      %8198 = vmatpush1.msra.mxu0 0.0
      %8199 = vmatprep.subr.mxu0 0.0
      %8200 = vmatpush1.msra.mxu0 0.0
      %8201 = vmatprep.subr.mxu0 0.0
      %8202 = vmatpush1.msra.mxu0 0.0
      %8203 = vmatprep.subr.mxu0 0.0
      %8204 = vmatpush1.msra.mxu0 0.0
      %8205 = vmatprep.subr.mxu0 0.0
      %8206 = vmatpush1.msra.mxu0 0.0
      %8207 = vmatprep.subr.mxu0 0.0
      %8208 = vmatpush1.msra.mxu0 0.0
      %8209 = vmatprep.subr.mxu0 0.0
      %8210 = vmatpush1.msra.mxu0 0.0
      %8211 = vmatprep.subr.mxu0 0.0
      %8212 = vmatpush1.msra.mxu0 0.0
      %8213 = vmatprep.subr.mxu0 0.0
      %8214 = vmatpush1.msra.mxu0 0.0
      %8215 = vmatprep.subr.mxu0 0.0
      %8216 = vmatpush1.msra.mxu0 0.0
      %8217 = vmatprep.subr.mxu0 0.0
      %8218 = vmatpush1.msra.mxu0 0.0
      %8219 = vmatprep.subr.mxu0 0.0
      %8220 = vmatpush1.msra.mxu0 0.0
      %8221 = vmatprep.subr.mxu0 0.0
      %8222 = vmatpush1.msra.mxu0 0.0
      %8223 = vmatprep.subr.mxu0 0.0
      %8224 = vmatpush1.msra.mxu0 0.0
      %8225 = vmatprep.subr.mxu0 0.0
      %8226 = vmatpush1.msra.mxu0 0.0
      %8227 = vmatprep.mubr.f32.mxu0 0.0
      %v8228 = vand.u32 %v347, 4294901760
      %v8229 = vsub.f32 %v347, %v8228
      %8230 = vmatmul.mubr.f32.gmra.mrb[0].mxu0 %v8229
      %v8231 = vpop.f32.mrb[0].mxu0
      %v8232 = vadd.f32 %v8143, %v8231
      %v8233 = vpop.f32.mrb[0].mxu0
      %v8234 = vadd.f32 %v8145, %v8233
      %8235 = vdwg.mxu0
      %v8236 = vand.u32 %v240, 4294901760
      %8237 = vmatprep.subr.mxu0 %v8236
      %v8238 = vand.u32 %v239, 4294901760
      %8239 = vmatpush1.msra.mxu0 %v8238
      %v8240 = vand.u32 %v272, 4294901760
      %8241 = vmatprep.subr.mxu0 %v8240
      %v8242 = vand.u32 %v271, 4294901760
      %8243 = vmatpush1.msra.mxu0 %v8242
      %v8244 = vand.u32 %v304, 4294901760
      %8245 = vmatprep.subr.mxu0 %v8244
      %v8246 = vand.u32 %v303, 4294901760
      %8247 = vmatpush1.msra.mxu0 %v8246
      %v8248 = vand.u32 %v336, 4294901760
      %8249 = vmatprep.subr.mxu0 %v8248
      %v8250 = vand.u32 %v335, 4294901760
      %8251 = vmatpush1.msra.mxu0 %v8250
      %8252 = vmatprep.subr.mxu0 0.0
      %8253 = vmatpush1.msra.mxu0 0.0
      %8254 = vmatprep.subr.mxu0 0.0
      %8255 = vmatpush1.msra.mxu0 0.0
      %8256 = vmatprep.subr.mxu0 0.0
      %8257 = vmatpush1.msra.mxu0 0.0
      %8258 = vmatprep.subr.mxu0 0.0
      %8259 = vmatpush1.msra.mxu0 0.0
      %8260 = vmatprep.subr.mxu0 0.0
      %8261 = vmatpush1.msra.mxu0 0.0
      %8262 = vmatprep.subr.mxu0 0.0
      %8263 = vmatpush1.msra.mxu0 0.0
      %8264 = vmatprep.subr.mxu0 0.0
      %8265 = vmatpush1.msra.mxu0 0.0
      %8266 = vmatprep.subr.mxu0 0.0
      %8267 = vmatpush1.msra.mxu0 0.0
      %8268 = vmatprep.subr.mxu0 0.0
      %8269 = vmatpush1.msra.mxu0 0.0
      %8270 = vmatprep.subr.mxu0 0.0
      %8271 = vmatpush1.msra.mxu0 0.0
      %8272 = vmatprep.subr.mxu0 0.0
      %8273 = vmatpush1.msra.mxu0 0.0
      %8274 = vmatprep.subr.mxu0 0.0
      %8275 = vmatpush1.msra.mxu0 0.0
      %8276 = vmatprep.subr.mxu0 0.0
      %8277 = vmatpush1.msra.mxu0 0.0
      %8278 = vmatprep.subr.mxu0 0.0
      %8279 = vmatpush1.msra.mxu0 0.0
      %8280 = vmatprep.subr.mxu0 0.0
      %8281 = vmatpush1.msra.mxu0 0.0
      %8282 = vmatprep.subr.mxu0 0.0
      %8283 = vmatpush1.msra.mxu0 0.0
      %8284 = vmatprep.subr.mxu0 0.0
      %8285 = vmatpush1.msra.mxu0 0.0
      %8286 = vmatprep.subr.mxu0 0.0
      %8287 = vmatpush1.msra.mxu0 0.0
      %8288 = vmatprep.subr.mxu0 0.0
      %8289 = vmatpush1.msra.mxu0 0.0
      %8290 = vmatprep.subr.mxu0 0.0
      %8291 = vmatpush1.msra.mxu0 0.0
      %8292 = vmatprep.subr.mxu0 0.0
      %8293 = vmatpush1.msra.mxu0 0.0
      %8294 = vmatprep.subr.mxu0 0.0
      %8295 = vmatpush1.msra.mxu0 0.0
      %8296 = vmatprep.subr.mxu0 0.0
      %8297 = vmatpush1.msra.mxu0 0.0
      %8298 = vmatprep.subr.mxu0 0.0
      %8299 = vmatpush1.msra.mxu0 0.0
      %8300 = vmatprep.subr.mxu0 0.0
      %8301 = vmatpush1.msra.mxu0 0.0
      %8302 = vmatprep.subr.mxu0 0.0
      %8303 = vmatpush1.msra.mxu0 0.0
      %8304 = vmatprep.subr.mxu0 0.0
      %8305 = vmatpush1.msra.mxu0 0.0
      %8306 = vmatprep.subr.mxu0 0.0
      %8307 = vmatpush1.msra.mxu0 0.0
      %8308 = vmatprep.mubr.f32.mxu0 0.0
      %v8309 = vand.u32 %v347, 4294901760
      %v8310 = vsub.f32 %v347, %v8309
      %v8311 = vand.u32 %v8310, 4294901760
      %8312 = vmatmul.mubr.f32.gmra.mrb[0].mxu0 %v8311
      %v8313 = vpop.f32.mrb[0].mxu0
      %v8314 = vadd.f32 %v8232, %v8313
      %v8315 = vpop.f32.mrb[0].mxu0
      %v8316 = vadd.f32 %v8234, %v8315
      %8317 = vdwg.mxu0
      %v8318 = vand.u32 %v240, 4294901760
      %v8319 = vsub.f32 %v240, %v8318
      %v8320 = vand.u32 %v8319, 4294901760
      %8321 = vmatprep.subr.mxu0 %v8320
      %v8322 = vand.u32 %v239, 4294901760
      %v8323 = vsub.f32 %v239, %v8322
      %v8324 = vand.u32 %v8323, 4294901760
      %8325 = vmatpush1.msra.mxu0 %v8324
      %v8326 = vand.u32 %v272, 4294901760
      %v8327 = vsub.f32 %v272, %v8326
      %v8328 = vand.u32 %v8327, 4294901760
      %8329 = vmatprep.subr.mxu0 %v8328
      %v8330 = vand.u32 %v271, 4294901760
      %v8331 = vsub.f32 %v271, %v8330
      %v8332 = vand.u32 %v8331, 4294901760
      %8333 = vmatpush1.msra.mxu0 %v8332
      %v8334 = vand.u32 %v304, 4294901760
      %v8335 = vsub.f32 %v304, %v8334
      %v8336 = vand.u32 %v8335, 4294901760
      %8337 = vmatprep.subr.mxu0 %v8336
      %v8338 = vand.u32 %v303, 4294901760
      %v8339 = vsub.f32 %v303, %v8338
      %v8340 = vand.u32 %v8339, 4294901760
      %8341 = vmatpush1.msra.mxu0 %v8340
      %v8342 = vand.u32 %v336, 4294901760
      %v8343 = vsub.f32 %v336, %v8342
      %v8344 = vand.u32 %v8343, 4294901760
      %8345 = vmatprep.subr.mxu0 %v8344
      %v8346 = vand.u32 %v335, 4294901760
      %v8347 = vsub.f32 %v335, %v8346
      %v8348 = vand.u32 %v8347, 4294901760
      %8349 = vmatpush1.msra.mxu0 %v8348
      %8350 = vmatprep.subr.mxu0 0.0
      %8351 = vmatpush1.msra.mxu0 0.0
      %8352 = vmatprep.subr.mxu0 0.0
      %8353 = vmatpush1.msra.mxu0 0.0
      %8354 = vmatprep.subr.mxu0 0.0
      %8355 = vmatpush1.msra.mxu0 0.0
      %8356 = vmatprep.subr.mxu0 0.0
      %8357 = vmatpush1.msra.mxu0 0.0
      %8358 = vmatprep.subr.mxu0 0.0
      %8359 = vmatpush1.msra.mxu0 0.0
      %8360 = vmatprep.subr.mxu0 0.0
      %8361 = vmatpush1.msra.mxu0 0.0
      %8362 = vmatprep.subr.mxu0 0.0
      %8363 = vmatpush1.msra.mxu0 0.0
      %8364 = vmatprep.subr.mxu0 0.0
      %8365 = vmatpush1.msra.mxu0 0.0
      %8366 = vmatprep.subr.mxu0 0.0
      %8367 = vmatpush1.msra.mxu0 0.0
      %8368 = vmatprep.subr.mxu0 0.0
      %8369 = vmatpush1.msra.mxu0 0.0
      %8370 = vmatprep.subr.mxu0 0.0
      %8371 = vmatpush1.msra.mxu0 0.0
      %8372 = vmatprep.subr.mxu0 0.0
      %8373 = vmatpush1.msra.mxu0 0.0
      %8374 = vmatprep.subr.mxu0 0.0
      %8375 = vmatpush1.msra.mxu0 0.0
      %8376 = vmatprep.subr.mxu0 0.0
      %8377 = vmatpush1.msra.mxu0 0.0
      %8378 = vmatprep.subr.mxu0 0.0
      %8379 = vmatpush1.msra.mxu0 0.0
      %8380 = vmatprep.subr.mxu0 0.0
      %8381 = vmatpush1.msra.mxu0 0.0
      %8382 = vmatprep.subr.mxu0 0.0
      %8383 = vmatpush1.msra.mxu0 0.0
      %8384 = vmatprep.subr.mxu0 0.0
      %8385 = vmatpush1.msra.mxu0 0.0
      %8386 = vmatprep.subr.mxu0 0.0
      %8387 = vmatpush1.msra.mxu0 0.0
      %8388 = vmatprep.subr.mxu0 0.0
      %8389 = vmatpush1.msra.mxu0 0.0
      %8390 = vmatprep.subr.mxu0 0.0
      %8391 = vmatpush1.msra.mxu0 0.0
      %8392 = vmatprep.subr.mxu0 0.0
      %8393 = vmatpush1.msra.mxu0 0.0
      %8394 = vmatprep.subr.mxu0 0.0
      %8395 = vmatpush1.msra.mxu0 0.0
      %8396 = vmatprep.subr.mxu0 0.0
      %8397 = vmatpush1.msra.mxu0 0.0
      %8398 = vmatprep.subr.mxu0 0.0
      %8399 = vmatpush1.msra.mxu0 0.0
      %8400 = vmatprep.subr.mxu0 0.0
      %8401 = vmatpush1.msra.mxu0 0.0
      %8402 = vmatprep.subr.mxu0 0.0
      %8403 = vmatpush1.msra.mxu0 0.0
      %8404 = vmatprep.subr.mxu0 0.0
      %8405 = vmatpush1.msra.mxu0 0.0
      %8406 = vmatprep.mubr.f32.mxu0 0.0
      %v8407 = vand.u32 %v347, 4294901760
      %8408 = vmatmul.mubr.f32.gmra.mrb[0].mxu0 %v8407
      %v8409 = vpop.f32.mrb[0].mxu0
      %v8410 = vadd.f32 %v8314, %v8409
      %v8411 = vpop.f32.mrb[0].mxu0
      %v8412 = vadd.f32 %v8316, %v8411
      %8413 = vdwg.mxu0
      %v8414 = vand.u32 %v240, 4294901760
      %8415 = vmatprep.subr.mxu0 %v8414
      %v8416 = vand.u32 %v239, 4294901760
      %8417 = vmatpush1.msra.mxu0 %v8416
      %v8418 = vand.u32 %v272, 4294901760
      %8419 = vmatprep.subr.mxu0 %v8418
      %v8420 = vand.u32 %v271, 4294901760
      %8421 = vmatpush1.msra.mxu0 %v8420
      %v8422 = vand.u32 %v304, 4294901760
      %8423 = vmatprep.subr.mxu0 %v8422
      %v8424 = vand.u32 %v303, 4294901760
      %8425 = vmatpush1.msra.mxu0 %v8424
      %v8426 = vand.u32 %v336, 4294901760
      %8427 = vmatprep.subr.mxu0 %v8426
      %v8428 = vand.u32 %v335, 4294901760
      %8429 = vmatpush1.msra.mxu0 %v8428
      %8430 = vmatprep.subr.mxu0 0.0
      %8431 = vmatpush1.msra.mxu0 0.0
      %8432 = vmatprep.subr.mxu0 0.0
      %8433 = vmatpush1.msra.mxu0 0.0
      %8434 = vmatprep.subr.mxu0 0.0
      %8435 = vmatpush1.msra.mxu0 0.0
      %8436 = vmatprep.subr.mxu0 0.0
      %8437 = vmatpush1.msra.mxu0 0.0
      %8438 = vmatprep.subr.mxu0 0.0
      %8439 = vmatpush1.msra.mxu0 0.0
      %8440 = vmatprep.subr.mxu0 0.0
      %8441 = vmatpush1.msra.mxu0 0.0
      %8442 = vmatprep.subr.mxu0 0.0
      %8443 = vmatpush1.msra.mxu0 0.0
      %8444 = vmatprep.subr.mxu0 0.0
      %8445 = vmatpush1.msra.mxu0 0.0
      %8446 = vmatprep.subr.mxu0 0.0
      %8447 = vmatpush1.msra.mxu0 0.0
      %8448 = vmatprep.subr.mxu0 0.0
      %8449 = vmatpush1.msra.mxu0 0.0
      %8450 = vmatprep.subr.mxu0 0.0
      %8451 = vmatpush1.msra.mxu0 0.0
      %8452 = vmatprep.subr.mxu0 0.0
      %8453 = vmatpush1.msra.mxu0 0.0
      %8454 = vmatprep.subr.mxu0 0.0
      %8455 = vmatpush1.msra.mxu0 0.0
      %8456 = vmatprep.subr.mxu0 0.0
      %8457 = vmatpush1.msra.mxu0 0.0
      %8458 = vmatprep.subr.mxu0 0.0
      %8459 = vmatpush1.msra.mxu0 0.0
      %8460 = vmatprep.subr.mxu0 0.0
      %8461 = vmatpush1.msra.mxu0 0.0
      %8462 = vmatprep.subr.mxu0 0.0
      %8463 = vmatpush1.msra.mxu0 0.0
      %8464 = vmatprep.subr.mxu0 0.0
      %8465 = vmatpush1.msra.mxu0 0.0
      %8466 = vmatprep.subr.mxu0 0.0
      %8467 = vmatpush1.msra.mxu0 0.0
      %8468 = vmatprep.subr.mxu0 0.0
      %8469 = vmatpush1.msra.mxu0 0.0
      %8470 = vmatprep.subr.mxu0 0.0
      %8471 = vmatpush1.msra.mxu0 0.0
      %8472 = vmatprep.subr.mxu0 0.0
      %8473 = vmatpush1.msra.mxu0 0.0
      %8474 = vmatprep.subr.mxu0 0.0
      %8475 = vmatpush1.msra.mxu0 0.0
      %8476 = vmatprep.subr.mxu0 0.0
      %8477 = vmatpush1.msra.mxu0 0.0
      %8478 = vmatprep.subr.mxu0 0.0
      %8479 = vmatpush1.msra.mxu0 0.0
      %8480 = vmatprep.subr.mxu0 0.0
      %8481 = vmatpush1.msra.mxu0 0.0
      %8482 = vmatprep.subr.mxu0 0.0
      %8483 = vmatpush1.msra.mxu0 0.0
      %8484 = vmatprep.subr.mxu0 0.0
      %8485 = vmatpush1.msra.mxu0 0.0
      %8486 = vmatprep.mubr.f32.mxu0 0.0
      %v8487 = vand.u32 %v347, 4294901760
      %8488 = vmatmul.mubr.f32.gmra.mrb[0].mxu0 %v8487
      %v8489 = vpop.f32.mrb[0].mxu0
      %v8490 = vadd.f32 %v8410, %v8489
      %v8491 = vpop.f32.mrb[0].mxu0
      %v8492 = vadd.f32 %v8412, %v8491
      %8493 = vdwg.mxu0
      %v8494 = vand.u32 %v242, 4294901760
      %8495 = vmatprep.subr.mxu0 %v8494
      %v8496 = vand.u32 %v241, 4294901760
      %8497 = vmatpush1.msra.mxu0 %v8496
      %v8498 = vand.u32 %v274, 4294901760
      %8499 = vmatprep.subr.mxu0 %v8498
      %v8500 = vand.u32 %v273, 4294901760
      %8501 = vmatpush1.msra.mxu0 %v8500
      %v8502 = vand.u32 %v306, 4294901760
      %8503 = vmatprep.subr.mxu0 %v8502
      %v8504 = vand.u32 %v305, 4294901760
      %8505 = vmatpush1.msra.mxu0 %v8504
      %v8506 = vand.u32 %v338, 4294901760
      %8507 = vmatprep.subr.mxu0 %v8506
      %v8508 = vand.u32 %v337, 4294901760
      %8509 = vmatpush1.msra.mxu0 %v8508
      %8510 = vmatprep.subr.mxu0 0.0
      %8511 = vmatpush1.msra.mxu0 0.0
      %8512 = vmatprep.subr.mxu0 0.0
      %8513 = vmatpush1.msra.mxu0 0.0
      %8514 = vmatprep.subr.mxu0 0.0
      %8515 = vmatpush1.msra.mxu0 0.0
      %8516 = vmatprep.subr.mxu0 0.0
      %8517 = vmatpush1.msra.mxu0 0.0
      %8518 = vmatprep.subr.mxu0 0.0
      %8519 = vmatpush1.msra.mxu0 0.0
      %8520 = vmatprep.subr.mxu0 0.0
      %8521 = vmatpush1.msra.mxu0 0.0
      %8522 = vmatprep.subr.mxu0 0.0
      %8523 = vmatpush1.msra.mxu0 0.0
      %8524 = vmatprep.subr.mxu0 0.0
      %8525 = vmatpush1.msra.mxu0 0.0
      %8526 = vmatprep.subr.mxu0 0.0
      %8527 = vmatpush1.msra.mxu0 0.0
      %8528 = vmatprep.subr.mxu0 0.0
      %8529 = vmatpush1.msra.mxu0 0.0
      %8530 = vmatprep.subr.mxu0 0.0
      %8531 = vmatpush1.msra.mxu0 0.0
      %8532 = vmatprep.subr.mxu0 0.0
      %8533 = vmatpush1.msra.mxu0 0.0
      %8534 = vmatprep.subr.mxu0 0.0
      %8535 = vmatpush1.msra.mxu0 0.0
      %8536 = vmatprep.subr.mxu0 0.0
      %8537 = vmatpush1.msra.mxu0 0.0
      %8538 = vmatprep.subr.mxu0 0.0
      %8539 = vmatpush1.msra.mxu0 0.0
      %8540 = vmatprep.subr.mxu0 0.0
      %8541 = vmatpush1.msra.mxu0 0.0
      %8542 = vmatprep.subr.mxu0 0.0
      %8543 = vmatpush1.msra.mxu0 0.0
      %8544 = vmatprep.subr.mxu0 0.0
      %8545 = vmatpush1.msra.mxu0 0.0
      %8546 = vmatprep.subr.mxu0 0.0
      %8547 = vmatpush1.msra.mxu0 0.0
      %8548 = vmatprep.subr.mxu0 0.0
      %8549 = vmatpush1.msra.mxu0 0.0
      %8550 = vmatprep.subr.mxu0 0.0
      %8551 = vmatpush1.msra.mxu0 0.0
      %8552 = vmatprep.subr.mxu0 0.0
      %8553 = vmatpush1.msra.mxu0 0.0
      %8554 = vmatprep.subr.mxu0 0.0
      %8555 = vmatpush1.msra.mxu0 0.0
      %8556 = vmatprep.subr.mxu0 0.0
      %8557 = vmatpush1.msra.mxu0 0.0
      %8558 = vmatprep.subr.mxu0 0.0
      %8559 = vmatpush1.msra.mxu0 0.0
      %8560 = vmatprep.subr.mxu0 0.0
      %8561 = vmatpush1.msra.mxu0 0.0
      %8562 = vmatprep.subr.mxu0 0.0
      %8563 = vmatpush1.msra.mxu0 0.0
      %8564 = vmatprep.subr.mxu0 0.0
      %8565 = vmatpush1.msra.mxu0 0.0
      %8566 = vmatprep.mubr.f32.mxu0 0.0
      %v8567 = vand.u32 %v347, 4294901760
      %v8568 = vsub.f32 %v347, %v8567
      %v8569 = vand.u32 %v8568, 4294901760
      %v8570 = vsub.f32 %v8568, %v8569
      %v8571 = vand.u32 %v8570, 4294901760
      %8572 = vmatmul.mubr.f32.gmra.mrb[0].mxu0 %v8571
      %v8573 = vpop.f32.mrb[0].mxu0
      %v8574 = vadd.f32 %v343, %v8573
      %v8575 = vpop.f32.mrb[0].mxu0
      %v8576 = vadd.f32 %v343, %v8575
      %8577 = vdwg.mxu0
      %v8578 = vand.u32 %v242, 4294901760
      %v8579 = vsub.f32 %v242, %v8578
      %v8580 = vand.u32 %v8579, 4294901760
      %v8581 = vsub.f32 %v8579, %v8580
      %v8582 = vand.u32 %v8581, 4294901760
      %8583 = vmatprep.subr.mxu0 %v8582
      %v8584 = vand.u32 %v241, 4294901760
      %v8585 = vsub.f32 %v241, %v8584
      %v8586 = vand.u32 %v8585, 4294901760
      %v8587 = vsub.f32 %v8585, %v8586
      %v8588 = vand.u32 %v8587, 4294901760
      %8589 = vmatpush1.msra.mxu0 %v8588
      %v8590 = vand.u32 %v274, 4294901760
      %v8591 = vsub.f32 %v274, %v8590
      %v8592 = vand.u32 %v8591, 4294901760
      %v8593 = vsub.f32 %v8591, %v8592
      %v8594 = vand.u32 %v8593, 4294901760
      %8595 = vmatprep.subr.mxu0 %v8594
      %v8596 = vand.u32 %v273, 4294901760
      %v8597 = vsub.f32 %v273, %v8596
      %v8598 = vand.u32 %v8597, 4294901760
      %v8599 = vsub.f32 %v8597, %v8598
      %v8600 = vand.u32 %v8599, 4294901760
      %8601 = vmatpush1.msra.mxu0 %v8600
      %v8602 = vand.u32 %v306, 4294901760
      %v8603 = vsub.f32 %v306, %v8602
      %v8604 = vand.u32 %v8603, 4294901760
      %v8605 = vsub.f32 %v8603, %v8604
      %v8606 = vand.u32 %v8605, 4294901760
      %8607 = vmatprep.subr.mxu0 %v8606
      %v8608 = vand.u32 %v305, 4294901760
      %v8609 = vsub.f32 %v305, %v8608
      %v8610 = vand.u32 %v8609, 4294901760
      %v8611 = vsub.f32 %v8609, %v8610
      %v8612 = vand.u32 %v8611, 4294901760
      %8613 = vmatpush1.msra.mxu0 %v8612
      %v8614 = vand.u32 %v338, 4294901760
      %v8615 = vsub.f32 %v338, %v8614
      %v8616 = vand.u32 %v8615, 4294901760
      %v8617 = vsub.f32 %v8615, %v8616
      %v8618 = vand.u32 %v8617, 4294901760
      %8619 = vmatprep.subr.mxu0 %v8618
      %v8620 = vand.u32 %v337, 4294901760
      %v8621 = vsub.f32 %v337, %v8620
      %v8622 = vand.u32 %v8621, 4294901760
      %v8623 = vsub.f32 %v8621, %v8622
      %v8624 = vand.u32 %v8623, 4294901760
      %8625 = vmatpush1.msra.mxu0 %v8624
      %8626 = vmatprep.subr.mxu0 0.0
      %8627 = vmatpush1.msra.mxu0 0.0
      %8628 = vmatprep.subr.mxu0 0.0
      %8629 = vmatpush1.msra.mxu0 0.0
      %8630 = vmatprep.subr.mxu0 0.0
      %8631 = vmatpush1.msra.mxu0 0.0
      %8632 = vmatprep.subr.mxu0 0.0
      %8633 = vmatpush1.msra.mxu0 0.0
      %8634 = vmatprep.subr.mxu0 0.0
      %8635 = vmatpush1.msra.mxu0 0.0
      %8636 = vmatprep.subr.mxu0 0.0
      %8637 = vmatpush1.msra.mxu0 0.0
      %8638 = vmatprep.subr.mxu0 0.0
      %8639 = vmatpush1.msra.mxu0 0.0
      %8640 = vmatprep.subr.mxu0 0.0
      %8641 = vmatpush1.msra.mxu0 0.0
      %8642 = vmatprep.subr.mxu0 0.0
      %8643 = vmatpush1.msra.mxu0 0.0
      %8644 = vmatprep.subr.mxu0 0.0
      %8645 = vmatpush1.msra.mxu0 0.0
      %8646 = vmatprep.subr.mxu0 0.0
      %8647 = vmatpush1.msra.mxu0 0.0
      %8648 = vmatprep.subr.mxu0 0.0
      %8649 = vmatpush1.msra.mxu0 0.0
      %8650 = vmatprep.subr.mxu0 0.0
      %8651 = vmatpush1.msra.mxu0 0.0
      %8652 = vmatprep.subr.mxu0 0.0
      %8653 = vmatpush1.msra.mxu0 0.0
      %8654 = vmatprep.subr.mxu0 0.0
      %8655 = vmatpush1.msra.mxu0 0.0
      %8656 = vmatprep.subr.mxu0 0.0
      %8657 = vmatpush1.msra.mxu0 0.0
      %8658 = vmatprep.subr.mxu0 0.0
      %8659 = vmatpush1.msra.mxu0 0.0
      %8660 = vmatprep.subr.mxu0 0.0
      %8661 = vmatpush1.msra.mxu0 0.0
      %8662 = vmatprep.subr.mxu0 0.0
      %8663 = vmatpush1.msra.mxu0 0.0
      %8664 = vmatprep.subr.mxu0 0.0
      %8665 = vmatpush1.msra.mxu0 0.0
      %8666 = vmatprep.subr.mxu0 0.0
      %8667 = vmatpush1.msra.mxu0 0.0
      %8668 = vmatprep.subr.mxu0 0.0
      %8669 = vmatpush1.msra.mxu0 0.0
      %8670 = vmatprep.subr.mxu0 0.0
      %8671 = vmatpush1.msra.mxu0 0.0
      %8672 = vmatprep.subr.mxu0 0.0
      %8673 = vmatpush1.msra.mxu0 0.0
      %8674 = vmatprep.subr.mxu0 0.0
      %8675 = vmatpush1.msra.mxu0 0.0
      %8676 = vmatprep.subr.mxu0 0.0
      %8677 = vmatpush1.msra.mxu0 0.0
      %8678 = vmatprep.subr.mxu0 0.0
      %8679 = vmatpush1.msra.mxu0 0.0
      %8680 = vmatprep.subr.mxu0 0.0
      %8681 = vmatpush1.msra.mxu0 0.0
      %8682 = vmatprep.mubr.f32.mxu0 0.0
      %v8683 = vand.u32 %v347, 4294901760
      %8684 = vmatmul.mubr.f32.gmra.mrb[0].mxu0 %v8683
      %v8685 = vpop.f32.mrb[0].mxu0
      %v8686 = vadd.f32 %v8574, %v8685
      %v8687 = vpop.f32.mrb[0].mxu0
      %v8688 = vadd.f32 %v8576, %v8687
      %8689 = vdwg.mxu0
      %v8690 = vand.u32 %v242, 4294901760
      %v8691 = vsub.f32 %v242, %v8690
      %8692 = vmatprep.subr.mxu0 %v8691
      %v8693 = vand.u32 %v241, 4294901760
      %v8694 = vsub.f32 %v241, %v8693
      %8695 = vmatpush1.msra.mxu0 %v8694
      %v8696 = vand.u32 %v274, 4294901760
      %v8697 = vsub.f32 %v274, %v8696
      %8698 = vmatprep.subr.mxu0 %v8697
      %v8699 = vand.u32 %v273, 4294901760
      %v8700 = vsub.f32 %v273, %v8699
      %8701 = vmatpush1.msra.mxu0 %v8700
      %v8702 = vand.u32 %v306, 4294901760
      %v8703 = vsub.f32 %v306, %v8702
      %8704 = vmatprep.subr.mxu0 %v8703
      %v8705 = vand.u32 %v305, 4294901760
      %v8706 = vsub.f32 %v305, %v8705
      %8707 = vmatpush1.msra.mxu0 %v8706
      %v8708 = vand.u32 %v338, 4294901760
      %v8709 = vsub.f32 %v338, %v8708
      %8710 = vmatprep.subr.mxu0 %v8709
      %v8711 = vand.u32 %v337, 4294901760
      %v8712 = vsub.f32 %v337, %v8711
      %8713 = vmatpush1.msra.mxu0 %v8712
      %8714 = vmatprep.subr.mxu0 0.0
      %8715 = vmatpush1.msra.mxu0 0.0
      %8716 = vmatprep.subr.mxu0 0.0
      %8717 = vmatpush1.msra.mxu0 0.0
      %8718 = vmatprep.subr.mxu0 0.0
      %8719 = vmatpush1.msra.mxu0 0.0
      %8720 = vmatprep.subr.mxu0 0.0
      %8721 = vmatpush1.msra.mxu0 0.0
      %8722 = vmatprep.subr.mxu0 0.0
      %8723 = vmatpush1.msra.mxu0 0.0
      %8724 = vmatprep.subr.mxu0 0.0
      %8725 = vmatpush1.msra.mxu0 0.0
      %8726 = vmatprep.subr.mxu0 0.0
      %8727 = vmatpush1.msra.mxu0 0.0
      %8728 = vmatprep.subr.mxu0 0.0
      %8729 = vmatpush1.msra.mxu0 0.0
      %8730 = vmatprep.subr.mxu0 0.0
      %8731 = vmatpush1.msra.mxu0 0.0
      %8732 = vmatprep.subr.mxu0 0.0
      %8733 = vmatpush1.msra.mxu0 0.0
      %8734 = vmatprep.subr.mxu0 0.0
      %8735 = vmatpush1.msra.mxu0 0.0
      %8736 = vmatprep.subr.mxu0 0.0
      %8737 = vmatpush1.msra.mxu0 0.0
      %8738 = vmatprep.subr.mxu0 0.0
      %8739 = vmatpush1.msra.mxu0 0.0
      %8740 = vmatprep.subr.mxu0 0.0
      %8741 = vmatpush1.msra.mxu0 0.0
      %8742 = vmatprep.subr.mxu0 0.0
      %8743 = vmatpush1.msra.mxu0 0.0
      %8744 = vmatprep.subr.mxu0 0.0
      %8745 = vmatpush1.msra.mxu0 0.0
      %8746 = vmatprep.subr.mxu0 0.0
      %8747 = vmatpush1.msra.mxu0 0.0
      %8748 = vmatprep.subr.mxu0 0.0
      %8749 = vmatpush1.msra.mxu0 0.0
      %8750 = vmatprep.subr.mxu0 0.0
      %8751 = vmatpush1.msra.mxu0 0.0
      %8752 = vmatprep.subr.mxu0 0.0
      %8753 = vmatpush1.msra.mxu0 0.0
      %8754 = vmatprep.subr.mxu0 0.0
      %8755 = vmatpush1.msra.mxu0 0.0
      %8756 = vmatprep.subr.mxu0 0.0
      %8757 = vmatpush1.msra.mxu0 0.0
      %8758 = vmatprep.subr.mxu0 0.0
      %8759 = vmatpush1.msra.mxu0 0.0
      %8760 = vmatprep.subr.mxu0 0.0
      %8761 = vmatpush1.msra.mxu0 0.0
      %8762 = vmatprep.subr.mxu0 0.0
      %8763 = vmatpush1.msra.mxu0 0.0
      %8764 = vmatprep.subr.mxu0 0.0
      %8765 = vmatpush1.msra.mxu0 0.0
      %8766 = vmatprep.subr.mxu0 0.0
      %8767 = vmatpush1.msra.mxu0 0.0
      %8768 = vmatprep.subr.mxu0 0.0
      %8769 = vmatpush1.msra.mxu0 0.0
      %8770 = vmatprep.mubr.f32.mxu0 0.0
      %v8771 = vand.u32 %v347, 4294901760
      %v8772 = vsub.f32 %v347, %v8771
      %8773 = vmatmul.mubr.f32.gmra.mrb[0].mxu0 %v8772
      %v8774 = vpop.f32.mrb[0].mxu0
      %v8775 = vadd.f32 %v8686, %v8774
      %v8776 = vpop.f32.mrb[0].mxu0
      %v8777 = vadd.f32 %v8688, %v8776
      %8778 = vdwg.mxu0
      %v8779 = vand.u32 %v242, 4294901760
      %8780 = vmatprep.subr.mxu0 %v8779
      %v8781 = vand.u32 %v241, 4294901760
      %8782 = vmatpush1.msra.mxu0 %v8781
      %v8783 = vand.u32 %v274, 4294901760
      %8784 = vmatprep.subr.mxu0 %v8783
      %v8785 = vand.u32 %v273, 4294901760
      %8786 = vmatpush1.msra.mxu0 %v8785
      %v8787 = vand.u32 %v306, 4294901760
      %8788 = vmatprep.subr.mxu0 %v8787
      %v8789 = vand.u32 %v305, 4294901760
      %8790 = vmatpush1.msra.mxu0 %v8789
      %v8791 = vand.u32 %v338, 4294901760
      %8792 = vmatprep.subr.mxu0 %v8791
      %v8793 = vand.u32 %v337, 4294901760
      %8794 = vmatpush1.msra.mxu0 %v8793
      %8795 = vmatprep.subr.mxu0 0.0
      %8796 = vmatpush1.msra.mxu0 0.0
      %8797 = vmatprep.subr.mxu0 0.0
      %8798 = vmatpush1.msra.mxu0 0.0
      %8799 = vmatprep.subr.mxu0 0.0
      %8800 = vmatpush1.msra.mxu0 0.0
      %8801 = vmatprep.subr.mxu0 0.0
      %8802 = vmatpush1.msra.mxu0 0.0
      %8803 = vmatprep.subr.mxu0 0.0
      %8804 = vmatpush1.msra.mxu0 0.0
      %8805 = vmatprep.subr.mxu0 0.0
      %8806 = vmatpush1.msra.mxu0 0.0
      %8807 = vmatprep.subr.mxu0 0.0
      %8808 = vmatpush1.msra.mxu0 0.0
      %8809 = vmatprep.subr.mxu0 0.0
      %8810 = vmatpush1.msra.mxu0 0.0
      %8811 = vmatprep.subr.mxu0 0.0
      %8812 = vmatpush1.msra.mxu0 0.0
      %8813 = vmatprep.subr.mxu0 0.0
      %8814 = vmatpush1.msra.mxu0 0.0
      %8815 = vmatprep.subr.mxu0 0.0
      %8816 = vmatpush1.msra.mxu0 0.0
      %8817 = vmatprep.subr.mxu0 0.0
      %8818 = vmatpush1.msra.mxu0 0.0
      %8819 = vmatprep.subr.mxu0 0.0
      %8820 = vmatpush1.msra.mxu0 0.0
      %8821 = vmatprep.subr.mxu0 0.0
      %8822 = vmatpush1.msra.mxu0 0.0
      %8823 = vmatprep.subr.mxu0 0.0
      %8824 = vmatpush1.msra.mxu0 0.0
      %8825 = vmatprep.subr.mxu0 0.0
      %8826 = vmatpush1.msra.mxu0 0.0
      %8827 = vmatprep.subr.mxu0 0.0
      %8828 = vmatpush1.msra.mxu0 0.0
      %8829 = vmatprep.subr.mxu0 0.0
      %8830 = vmatpush1.msra.mxu0 0.0
      %8831 = vmatprep.subr.mxu0 0.0
      %8832 = vmatpush1.msra.mxu0 0.0
      %8833 = vmatprep.subr.mxu0 0.0
      %8834 = vmatpush1.msra.mxu0 0.0
      %8835 = vmatprep.subr.mxu0 0.0
      %8836 = vmatpush1.msra.mxu0 0.0
      %8837 = vmatprep.subr.mxu0 0.0
      %8838 = vmatpush1.msra.mxu0 0.0
      %8839 = vmatprep.subr.mxu0 0.0
      %8840 = vmatpush1.msra.mxu0 0.0
      %8841 = vmatprep.subr.mxu0 0.0
      %8842 = vmatpush1.msra.mxu0 0.0
      %8843 = vmatprep.subr.mxu0 0.0
      %8844 = vmatpush1.msra.mxu0 0.0
      %8845 = vmatprep.subr.mxu0 0.0
      %8846 = vmatpush1.msra.mxu0 0.0
      %8847 = vmatprep.subr.mxu0 0.0
      %8848 = vmatpush1.msra.mxu0 0.0
      %8849 = vmatprep.subr.mxu0 0.0
      %8850 = vmatpush1.msra.mxu0 0.0
      %8851 = vmatprep.mubr.f32.mxu0 0.0
      %v8852 = vand.u32 %v347, 4294901760
      %v8853 = vsub.f32 %v347, %v8852
      %v8854 = vand.u32 %v8853, 4294901760
      %8855 = vmatmul.mubr.f32.gmra.mrb[0].mxu0 %v8854
      %v8856 = vpop.f32.mrb[0].mxu0
      %v8857 = vadd.f32 %v8775, %v8856
      %v8858 = vpop.f32.mrb[0].mxu0
      %v8859 = vadd.f32 %v8777, %v8858
      %8860 = vdwg.mxu0
      %v8861 = vand.u32 %v242, 4294901760
      %v8862 = vsub.f32 %v242, %v8861
      %v8863 = vand.u32 %v8862, 4294901760
      %8864 = vmatprep.subr.mxu0 %v8863
      %v8865 = vand.u32 %v241, 4294901760
      %v8866 = vsub.f32 %v241, %v8865
      %v8867 = vand.u32 %v8866, 4294901760
      %8868 = vmatpush1.msra.mxu0 %v8867
      %v8869 = vand.u32 %v274, 4294901760
      %v8870 = vsub.f32 %v274, %v8869
      %v8871 = vand.u32 %v8870, 4294901760
      %8872 = vmatprep.subr.mxu0 %v8871
      %v8873 = vand.u32 %v273, 4294901760
      %v8874 = vsub.f32 %v273, %v8873
      %v8875 = vand.u32 %v8874, 4294901760
      %8876 = vmatpush1.msra.mxu0 %v8875
      %v8877 = vand.u32 %v306, 4294901760
      %v8878 = vsub.f32 %v306, %v8877
      %v8879 = vand.u32 %v8878, 4294901760
      %8880 = vmatprep.subr.mxu0 %v8879
      %v8881 = vand.u32 %v305, 4294901760
      %v8882 = vsub.f32 %v305, %v8881
      %v8883 = vand.u32 %v8882, 4294901760
      %8884 = vmatpush1.msra.mxu0 %v8883
      %v8885 = vand.u32 %v338, 4294901760
      %v8886 = vsub.f32 %v338, %v8885
      %v8887 = vand.u32 %v8886, 4294901760
      %8888 = vmatprep.subr.mxu0 %v8887
      %v8889 = vand.u32 %v337, 4294901760
      %v8890 = vsub.f32 %v337, %v8889
      %v8891 = vand.u32 %v8890, 4294901760
      %8892 = vmatpush1.msra.mxu0 %v8891
      %8893 = vmatprep.subr.mxu0 0.0
      %8894 = vmatpush1.msra.mxu0 0.0
      %8895 = vmatprep.subr.mxu0 0.0
      %8896 = vmatpush1.msra.mxu0 0.0
      %8897 = vmatprep.subr.mxu0 0.0
      %8898 = vmatpush1.msra.mxu0 0.0
      %8899 = vmatprep.subr.mxu0 0.0
      %8900 = vmatpush1.msra.mxu0 0.0
      %8901 = vmatprep.subr.mxu0 0.0
      %8902 = vmatpush1.msra.mxu0 0.0
      %8903 = vmatprep.subr.mxu0 0.0
      %8904 = vmatpush1.msra.mxu0 0.0
      %8905 = vmatprep.subr.mxu0 0.0
      %8906 = vmatpush1.msra.mxu0 0.0
      %8907 = vmatprep.subr.mxu0 0.0
      %8908 = vmatpush1.msra.mxu0 0.0
      %8909 = vmatprep.subr.mxu0 0.0
      %8910 = vmatpush1.msra.mxu0 0.0
      %8911 = vmatprep.subr.mxu0 0.0
      %8912 = vmatpush1.msra.mxu0 0.0
      %8913 = vmatprep.subr.mxu0 0.0
      %8914 = vmatpush1.msra.mxu0 0.0
      %8915 = vmatprep.subr.mxu0 0.0
      %8916 = vmatpush1.msra.mxu0 0.0
      %8917 = vmatprep.subr.mxu0 0.0
      %8918 = vmatpush1.msra.mxu0 0.0
      %8919 = vmatprep.subr.mxu0 0.0
      %8920 = vmatpush1.msra.mxu0 0.0
      %8921 = vmatprep.subr.mxu0 0.0
      %8922 = vmatpush1.msra.mxu0 0.0
      %8923 = vmatprep.subr.mxu0 0.0
      %8924 = vmatpush1.msra.mxu0 0.0
      %8925 = vmatprep.subr.mxu0 0.0
      %8926 = vmatpush1.msra.mxu0 0.0
      %8927 = vmatprep.subr.mxu0 0.0
      %8928 = vmatpush1.msra.mxu0 0.0
      %8929 = vmatprep.subr.mxu0 0.0
      %8930 = vmatpush1.msra.mxu0 0.0
      %8931 = vmatprep.subr.mxu0 0.0
      %8932 = vmatpush1.msra.mxu0 0.0
      %8933 = vmatprep.subr.mxu0 0.0
      %8934 = vmatpush1.msra.mxu0 0.0
      %8935 = vmatprep.subr.mxu0 0.0
      %8936 = vmatpush1.msra.mxu0 0.0
      %8937 = vmatprep.subr.mxu0 0.0
      %8938 = vmatpush1.msra.mxu0 0.0
      %8939 = vmatprep.subr.mxu0 0.0
      %8940 = vmatpush1.msra.mxu0 0.0
      %8941 = vmatprep.subr.mxu0 0.0
      %8942 = vmatpush1.msra.mxu0 0.0
      %8943 = vmatprep.subr.mxu0 0.0
      %8944 = vmatpush1.msra.mxu0 0.0
      %8945 = vmatprep.subr.mxu0 0.0
      %8946 = vmatpush1.msra.mxu0 0.0
      %8947 = vmatprep.subr.mxu0 0.0
      %8948 = vmatpush1.msra.mxu0 0.0
      %8949 = vmatprep.mubr.f32.mxu0 0.0
      %v8950 = vand.u32 %v347, 4294901760
      %8951 = vmatmul.mubr.f32.gmra.mrb[0].mxu0 %v8950
      %v8952 = vpop.f32.mrb[0].mxu0
      %v8953 = vadd.f32 %v8857, %v8952
      %v8954 = vpop.f32.mrb[0].mxu0
      %v8955 = vadd.f32 %v8859, %v8954
      %8956 = vdwg.mxu0
      %v8957 = vand.u32 %v242, 4294901760
      %8958 = vmatprep.subr.mxu0 %v8957
      %v8959 = vand.u32 %v241, 4294901760
      %8960 = vmatpush1.msra.mxu0 %v8959
      %v8961 = vand.u32 %v274, 4294901760
      %8962 = vmatprep.subr.mxu0 %v8961
      %v8963 = vand.u32 %v273, 4294901760
      %8964 = vmatpush1.msra.mxu0 %v8963
      %v8965 = vand.u32 %v306, 4294901760
      %8966 = vmatprep.subr.mxu0 %v8965
      %v8967 = vand.u32 %v305, 4294901760
      %8968 = vmatpush1.msra.mxu0 %v8967
      %v8969 = vand.u32 %v338, 4294901760
      %8970 = vmatprep.subr.mxu0 %v8969
      %v8971 = vand.u32 %v337, 4294901760
      %8972 = vmatpush1.msra.mxu0 %v8971
      %8973 = vmatprep.subr.mxu0 0.0
      %8974 = vmatpush1.msra.mxu0 0.0
      %8975 = vmatprep.subr.mxu0 0.0
      %8976 = vmatpush1.msra.mxu0 0.0
      %8977 = vmatprep.subr.mxu0 0.0
      %8978 = vmatpush1.msra.mxu0 0.0
      %8979 = vmatprep.subr.mxu0 0.0
      %8980 = vmatpush1.msra.mxu0 0.0
      %8981 = vmatprep.subr.mxu0 0.0
      %8982 = vmatpush1.msra.mxu0 0.0
      %8983 = vmatprep.subr.mxu0 0.0
      %8984 = vmatpush1.msra.mxu0 0.0
      %8985 = vmatprep.subr.mxu0 0.0
      %8986 = vmatpush1.msra.mxu0 0.0
      %8987 = vmatprep.subr.mxu0 0.0
      %8988 = vmatpush1.msra.mxu0 0.0
      %8989 = vmatprep.subr.mxu0 0.0
      %8990 = vmatpush1.msra.mxu0 0.0
      %8991 = vmatprep.subr.mxu0 0.0
      %8992 = vmatpush1.msra.mxu0 0.0
      %8993 = vmatprep.subr.mxu0 0.0
      %8994 = vmatpush1.msra.mxu0 0.0
      %8995 = vmatprep.subr.mxu0 0.0
      %8996 = vmatpush1.msra.mxu0 0.0
      %8997 = vmatprep.subr.mxu0 0.0
      %8998 = vmatpush1.msra.mxu0 0.0
      %8999 = vmatprep.subr.mxu0 0.0
      %9000 = vmatpush1.msra.mxu0 0.0
      %9001 = vmatprep.subr.mxu0 0.0
      %9002 = vmatpush1.msra.mxu0 0.0
      %9003 = vmatprep.subr.mxu0 0.0
      %9004 = vmatpush1.msra.mxu0 0.0
      %9005 = vmatprep.subr.mxu0 0.0
      %9006 = vmatpush1.msra.mxu0 0.0
      %9007 = vmatprep.subr.mxu0 0.0
      %9008 = vmatpush1.msra.mxu0 0.0
      %9009 = vmatprep.subr.mxu0 0.0
      %9010 = vmatpush1.msra.mxu0 0.0
      %9011 = vmatprep.subr.mxu0 0.0
      %9012 = vmatpush1.msra.mxu0 0.0
      %9013 = vmatprep.subr.mxu0 0.0
      %9014 = vmatpush1.msra.mxu0 0.0
      %9015 = vmatprep.subr.mxu0 0.0
      %9016 = vmatpush1.msra.mxu0 0.0
      %9017 = vmatprep.subr.mxu0 0.0
      %9018 = vmatpush1.msra.mxu0 0.0
      %9019 = vmatprep.subr.mxu0 0.0
      %9020 = vmatpush1.msra.mxu0 0.0
      %9021 = vmatprep.subr.mxu0 0.0
      %9022 = vmatpush1.msra.mxu0 0.0
      %9023 = vmatprep.subr.mxu0 0.0
      %9024 = vmatpush1.msra.mxu0 0.0
      %9025 = vmatprep.subr.mxu0 0.0
      %9026 = vmatpush1.msra.mxu0 0.0
      %9027 = vmatprep.subr.mxu0 0.0
      %9028 = vmatpush1.msra.mxu0 0.0
      %9029 = vmatprep.mubr.f32.mxu0 0.0
      %v9030 = vand.u32 %v347, 4294901760
      %9031 = vmatmul.mubr.f32.gmra.mrb[0].mxu0 %v9030
      %v9032 = vpop.f32.mrb[0].mxu0
      %v9033 = vadd.f32 %v8953, %v9032
      %v9034 = vpop.f32.mrb[0].mxu0
      %v9035 = vadd.f32 %v8955, %v9034
      %9036 = vdwg.mxu0
      %v9069 = vcombine.low %v888, %v890
      %v9070 = vcombine.low %v1431, %v1433
      %v9072 = vunpack.c.l.s4 1983009808
      %v9073 = vunpack.c.0.s8 %v9072
      %v9074 = vlaneseq
      %v9075 = vshrl.u32 %v9074, 7
      %v9076 = vsub.s32 %v9073, %v9075
      %v9077 = vrot.slane %v9069, %v9076
      %v9079 = vunpack.c.l.s4 1983009808
      %v9080 = vunpack.c.0.s8 %v9079
      %v9081 = vlaneseq
      %v9082 = vshrl.u32 %v9081, 7
      %v9083 = vsub.s32 %v9080, %v9082
      %v9084 = vrot.slane %v9070, %v9083
      %v9085 = vcombine.low %v9077, %v9084
      %v9086 = vcombine.low %v1974, %v1976
      %v9087 = vcombine.low %v2517, %v2519
      %v9089 = vunpack.c.l.s4 1983009808
      %v9090 = vunpack.c.0.s8 %v9089
      %v9091 = vlaneseq
      %v9092 = vshrl.u32 %v9091, 7
      %v9093 = vsub.s32 %v9090, %v9092
      %v9094 = vrot.slane %v9086, %v9093
      %v9096 = vunpack.c.l.s4 1983009808
      %v9097 = vunpack.c.0.s8 %v9096
      %v9098 = vlaneseq
      %v9099 = vshrl.u32 %v9098, 7
      %v9100 = vsub.s32 %v9097, %v9099
      %v9101 = vrot.slane %v9087, %v9100
      %v9102 = vcombine.low %v9094, %v9101
      %v9103 = vcombine.low %v3060, %v3062
      %v9104 = vcombine.low %v3603, %v3605
      %v9106 = vunpack.c.l.s4 1983009808
      %v9107 = vunpack.c.0.s8 %v9106
      %v9108 = vlaneseq
      %v9109 = vshrl.u32 %v9108, 7
      %v9110 = vsub.s32 %v9107, %v9109
      %v9111 = vrot.slane %v9103, %v9110
      %v9113 = vunpack.c.l.s4 1983009808
      %v9114 = vunpack.c.0.s8 %v9113
      %v9115 = vlaneseq
      %v9116 = vshrl.u32 %v9115, 7
      %v9117 = vsub.s32 %v9114, %v9116
      %v9118 = vrot.slane %v9104, %v9117
      %v9119 = vcombine.low %v9111, %v9118
      %v9120 = vcombine.low %v4146, %v4148
      %v9121 = vcombine.low %v4689, %v4691
      %v9123 = vunpack.c.l.s4 1983009808
      %v9124 = vunpack.c.0.s8 %v9123
      %v9125 = vlaneseq
      %v9126 = vshrl.u32 %v9125, 7
      %v9127 = vsub.s32 %v9124, %v9126
      %v9128 = vrot.slane %v9120, %v9127
      %v9130 = vunpack.c.l.s4 1983009808
      %v9131 = vunpack.c.0.s8 %v9130
      %v9132 = vlaneseq
      %v9133 = vshrl.u32 %v9132, 7
      %v9134 = vsub.s32 %v9131, %v9133
      %v9135 = vrot.slane %v9121, %v9134
      %v9136 = vcombine.low %v9128, %v9135
      %v9137 = vcombine.low %v5232, %v5234
      %v9138 = vcombine.low %v5775, %v5777
      %v9140 = vunpack.c.l.s4 1983009808
      %v9141 = vunpack.c.0.s8 %v9140
      %v9142 = vlaneseq
      %v9143 = vshrl.u32 %v9142, 7
      %v9144 = vsub.s32 %v9141, %v9143
      %v9145 = vrot.slane %v9137, %v9144
      %v9147 = vunpack.c.l.s4 1983009808
      %v9148 = vunpack.c.0.s8 %v9147
      %v9149 = vlaneseq
      %v9150 = vshrl.u32 %v9149, 7
      %v9151 = vsub.s32 %v9148, %v9150
      %v9152 = vrot.slane %v9138, %v9151
      %v9153 = vcombine.low %v9145, %v9152
      %v9154 = vcombine.low %v6318, %v6320
      %v9155 = vcombine.low %v6861, %v6863
      %v9157 = vunpack.c.l.s4 1983009808
      %v9158 = vunpack.c.0.s8 %v9157
      %v9159 = vlaneseq
      %v9160 = vshrl.u32 %v9159, 7
      %v9161 = vsub.s32 %v9158, %v9160
      %v9162 = vrot.slane %v9154, %v9161
      %v9164 = vunpack.c.l.s4 1983009808
      %v9165 = vunpack.c.0.s8 %v9164
      %v9166 = vlaneseq
      %v9167 = vshrl.u32 %v9166, 7
      %v9168 = vsub.s32 %v9165, %v9167
      %v9169 = vrot.slane %v9155, %v9168
      %v9170 = vcombine.low %v9162, %v9169
      %v9171 = vcombine.low %v7404, %v7406
      %v9172 = vcombine.low %v7947, %v7949
      %v9174 = vunpack.c.l.s4 1983009808
      %v9175 = vunpack.c.0.s8 %v9174
      %v9176 = vlaneseq
      %v9177 = vshrl.u32 %v9176, 7
      %v9178 = vsub.s32 %v9175, %v9177
      %v9179 = vrot.slane %v9171, %v9178
      %v9181 = vunpack.c.l.s4 1983009808
      %v9182 = vunpack.c.0.s8 %v9181
      %v9183 = vlaneseq
      %v9184 = vshrl.u32 %v9183, 7
      %v9185 = vsub.s32 %v9182, %v9184
      %v9186 = vrot.slane %v9172, %v9185
      %v9187 = vcombine.low %v9179, %v9186
      %v9188 = vcombine.low %v8490, %v8492
      %v9189 = vcombine.low %v9033, %v9035
      %v9191 = vunpack.c.l.s4 1983009808
      %v9192 = vunpack.c.0.s8 %v9191
      %v9193 = vlaneseq
      %v9194 = vshrl.u32 %v9193, 7
      %v9195 = vsub.s32 %v9192, %v9194
      %v9196 = vrot.slane %v9188, %v9195
      %v9198 = vunpack.c.l.s4 1983009808
      %v9199 = vunpack.c.0.s8 %v9198
      %v9200 = vlaneseq
      %v9201 = vshrl.u32 %v9200, 7
      %v9202 = vsub.s32 %v9199, %v9201
      %v9203 = vrot.slane %v9189, %v9202
      %v9204 = vcombine.low %v9196, %v9203
      %9213 = vst [vmem:[%s208] sm:$0xff] %v9085
      %9214 = vst [vmem:[%s208 + $0x8] sm:$0xff] %v9102
      %9215 = vst [vmem:[%s208 + $0x10] sm:$0xff] %v9119
      %9216 = vst [vmem:[%s208 + $0x18] sm:$0xff] %v9136
      %9217 = vst [vmem:[%s208 + $0x20] sm:$0xff] %v9153
      %9218 = vst [vmem:[%s208 + $0x28] sm:$0xff] %v9170
      %9219 = vst [vmem:[%s208 + $0x30] sm:$0xff] %v9187
      %9220 = vst [vmem:[%s208 + $0x38] sm:$0xff] %v9204
      %s9221 = smul.u32 32, %s19
      %p9222 = scmp.lt.s32.totalorder %s18, 1
      %s9223 = scalar_select %p9222, %s18, 1
      %p9224 = scmp.lt.s32.totalorder %s9221, 31
      %s9225 = scalar_select %p9224, %s9221, 31
      %s9226 = smul.addr %s9223, 32
      %s9227 = sadd.s32 %s9225, %s9226
      %s9228 = smul.addr %s9227, 2
      %s9229 = scalar_lea.vmem %s3, %s9228
      // Predicated region
      $region33: #{outconv_1x1x1.1} parent=31 // pred_check
        %p9230 = pneg %p116
      $region34: #{outconv_1x1x1.1} parent=31 // pred_check_branch
        %9232 = sbr.rel (%p9230) target = $region36
      $region35: #{outconv_1x1x1.1} parent=31 // pred_region
        %s9233 = smul.u32 32, %s19
      $region36: #{outconv_1x1x1.1} parent=31 // pred_fallthru
        _
    $region32: #{outconv_1x1x1.1} parent=5 // pred_fallthru
      _
    %p9234 = scmp.le.s32.totalorder 2, %s9
    // Predicated region
    $region37: #{outconv_1x1x1.1} parent=5 // pred_check
      %p9235 = pneg %p9234
    $region38: #{outconv_1x1x1.1} parent=5 // pred_check_branch
      %9237 = sbr.rel (%p9235) target = $region40
    $region39: #{outconv_1x1x1.1} parent=5 // pred_region
      %s9238 = ssub.s32 %s9, 2
      // Predicated region
      $region41: #{outconv_1x1x1.1} parent=39 // pred_check
        %p9239 = pneg %p122
      $region42: #{outconv_1x1x1.1} parent=39 // pred_check_branch
        %9241 = sbr.rel (%p9239) target = $region44
      $region43: #{outconv_1x1x1.1} parent=39 // pred_region
        %s9242 = smul.u32 32, %s21
        %p9243 = scmp.lt.s32.totalorder %s20, 1
        %s9244 = scalar_select %p9243, %s20, 1
        %p9245 = scmp.lt.s32.totalorder %s9242, 31
        %s9246 = scalar_select %p9245, %s9242, 31
        %s9247 = smul.addr %s9244, 32
        %s9248 = sadd.s32 %s9246, %s9247
        %s9249 = smul.addr %s9248, 2
        %s9250 = scalar_lea.vmem %s3, %s9249
      $region44: #{outconv_1x1x1.1} parent=39 // pred_fallthru
        _
    $region40: #{outconv_1x1x1.1} parent=5 // pred_fallthru
      _
  $region6: #{outconv_1x1x1.1} parent=0 // loop_footer
    %s13 = sadd.s32 1, %s9
  $region7: #{outconv_1x1x1.1} parent=0 // loop_footer_branch
    %8 = sbr.rel target = $region3
  $region8: #{outconv_1x1x1.1} parent=0 // loop_exit
    _

</llo_original>
